<compile_context>
chip_gen: v7x
topology: tpu7x:2x2x1
jax: 0.10.0
libtpu: 0.0.40
codegen_flags: <defaults>
</compile_context>

<pallas_src>
import math

import jax
import jax.numpy as jnp
from jax.experimental import pallas as pl
from jax.experimental.pallas import tpu as pltpu

EMBED = 512          # CLIP projection dim
FUSION_HID = 1024    # fusion hidden (Linear(512*2, 1024))
GPT_HID = 768        # GPT-2 hidden size (Linear(1024, 768) feeds inputs_embeds)
GPT_INNER = 1024     # TODO(synk): real GPT-2 MLP inner dim is 3072
VOCAB = 256          # TODO(synk): real GPT-2 vocab is 50257 (synthetic lm_head)
TOK_DIM = 64         # synthetic CLIP token-embedding width
PIX_DIM = 3 * 32 * 32
LN_EPS = 1e-5
_INV_SQRT2 = 1.0 / math.sqrt(2.0)

# ---------------------------------------------------------------------------
# slab layout: all small (1, N) f32 params packed into one contiguous input.
# Every size is a multiple of 128, so every static offset is lane-aligned.
# ---------------------------------------------------------------------------
_SLAB_ENTRIES = [
    # biases / LayerNorm params / position embedding
    ("fus_b1", FUSION_HID), ("fus_ln_g", FUSION_HID), ("fus_ln_b", FUSION_HID),
    ("fus_b2", GPT_HID), ("gpt_wpe0", GPT_HID),
    ("gpt_ln1_g", GPT_HID), ("gpt_ln1_b", GPT_HID),
    ("gpt_bv", GPT_HID), ("gpt_bproj", GPT_HID),
    ("gpt_ln2_g", GPT_HID), ("gpt_ln2_b", GPT_HID),
    ("gpt_bfc", GPT_INNER), ("gpt_bmp", GPT_HID),
    ("gpt_lnf_g", GPT_HID), ("gpt_lnf_b", GPT_HID),
    # per-output-channel int8 dequant scales
    ("clip_img_s", EMBED), ("clip_txt_s", EMBED),
    ("fus_w1_img_s", FUSION_HID), ("fus_w1_txt_s", FUSION_HID),
    ("fus_w2_s", GPT_HID),
    ("gpt_wv_s", GPT_HID), ("gpt_wproj_s", GPT_HID),
    ("gpt_wfc_s", GPT_INNER), ("gpt_wmp_s", GPT_HID),
    ("gpt_wlm_s", VOCAB),
]
_SLAB_OFF = {}
_off = 0
for _name, _n in _SLAB_ENTRIES:
    _SLAB_OFF[_name] = (_off, _n)
    _off += _n
SLAB_LEN = _off


# ---------------------------------------------------------------------------
# in-kernel helpers (f32 elementwise math — v5e has no bf16 VPU/EUP path)
# ---------------------------------------------------------------------------
def _gelu_exact(x):
    # matches torch.nn.GELU() default (erf formulation)
    return 0.5 * x * (1.0 + jax.lax.erf(x * _INV_SQRT2))


def _layernorm(x, g, b):
    mu = jnp.mean(x, axis=-1, keepdims=True)
    var = jnp.mean((x - mu) ** 2, axis=-1, keepdims=True)
    return (x - mu) * jax.lax.rsqrt(var + LN_EPS) * g + b


def _l2norm(x):
    return x * jax.lax.rsqrt(jnp.sum(x * x, axis=-1, keepdims=True) + 1e-12)


def _mm_q(x, wq_ref, scale):
    # Weight-only int8 quantization: int8 streamed from HBM, dequantized in
    # VMEM (int8 -> f32 -> bf16), bf16 MXU matmul with f32 accumulation,
    # per-output-channel scale applied after the matmul:
    #   x @ (wq * scale_col) == (x @ wq) * scale_col
    w = wq_ref[...].astype(jnp.float32).astype(jnp.bfloat16)
    acc = jnp.dot(x.astype(jnp.bfloat16), w, preferred_element_type=jnp.float32)
    return acc * scale


# ---------------------------------------------------------------------------
# Fused kernel: CLIP projections + L2 norm, fusion MLP, synthetic GPT-2 head.
# TODO(synk): pretrained CLIPModel / 12-layer GPT-2 (+ LoRA/DoRA adapters)
# cannot be loaded here; replaced by deterministic synthetic equivalents.
# ---------------------------------------------------------------------------
def fused_forward_kernel(pix_ref, pool_ref, slab_ref,
                         clip_img_ref, clip_txt_ref,
                         w1i_ref, w1t_ref, w2_ref,
                         wv_ref, wproj_ref, wfc_ref, wmp_ref, wlm_ref,
                         logits_ref):
    def sl(name):
        off, n = _SLAB_OFF[name]
        return slab_ref[:, off:off + n]          # static, lane-aligned slice

    # ---- synthetic frozen CLIP projections + L2 normalisation ----
    img = _l2norm(_mm_q(pix_ref[...], clip_img_ref, sl("clip_img_s")))
    txt = _l2norm(_mm_q(pool_ref[...], clip_txt_ref, sl("clip_txt_s")))

    # NOTE: nn.MultiheadAttention(attn_out) in the reference forward is
    # computed and immediately discarded (never feeds the logits), so its
    # weights / matmuls are elided entirely.

    # ---- fusion MLP: cat([img, txt]) @ W1 == img @ W1[:512] + txt @ W1[512:]
    h = (_mm_q(img, w1i_ref, sl("fus_w1_img_s"))
         + _mm_q(txt, w1t_ref, sl("fus_w1_txt_s")) + sl("fus_b1"))
    h = _gelu_exact(h)
    h = _layernorm(h, sl("fus_ln_g"), sl("fus_ln_b"))
    # nn.Dropout(0.2): identity at inference time.
    fused = _mm_q(h, w2_ref, sl("fus_w2_s")) + sl("fus_b2")     # (B, 768)

    # ---- synthetic GPT-2 block on the single fused token ----
    h = fused + sl("gpt_wpe0")                   # add position-0 embedding
    a_in = _layernorm(h, sl("gpt_ln1_g"), sl("gpt_ln1_b"))
    # single-token causal self-attention: softmax over one key == 1 -> attn=V.
    v = _mm_q(a_in, wv_ref, sl("gpt_wv_s")) + sl("gpt_bv")
    h = h + _mm_q(v, wproj_ref, sl("gpt_wproj_s")) + sl("gpt_bproj")
    m_in = _layernorm(h, sl("gpt_ln2_g"), sl("gpt_ln2_b"))
    m = _gelu_exact(_mm_q(m_in, wfc_ref, sl("gpt_wfc_s")) + sl("gpt_bfc"))
    h = h + _mm_q(m, wmp_ref, sl("gpt_wmp_s")) + sl("gpt_bmp")
    h = _layernorm(h, sl("gpt_lnf_g"), sl("gpt_lnf_b"))
    logits_ref[...] = _mm_q(h, wlm_ref, sl("gpt_wlm_s"))         # (B, VOCAB)


# ---------------------------------------------------------------------------
# pallas_call wrapper: no grid, no pipeline — whole-array single-buffered VMEM.
# ---------------------------------------------------------------------------
def fused_forward(pix_flat, txt_pooled, p):
    B = pix_flat.shape[0]
    b_pad = ((B + 7) // 8) * 8                   # fill whole sublanes
    if b_pad != B:
        pad = ((0, b_pad - B), (0, 0))
        pix_flat = jnp.pad(pix_flat, pad)
        txt_pooled = jnp.pad(txt_pooled, pad)

    ins = [pix_flat, txt_pooled, p["slab"],
           p["clip_img_wq"], p["clip_txt_wq"],
           p["fus_w1_img_q"], p["fus_w1_txt_q"], p["fus_w2_q"],
           p["gpt_wv_q"], p["gpt_wproj_q"], p["gpt_wfc_q"],
           p["gpt_wmp_q"], p["gpt_wlm_q"]]

    vmem_spec = pl.BlockSpec(memory_space=pltpu.MemorySpace.VMEM)
    logits = pl.pallas_call(
        fused_forward_kernel,
        out_shape=jax.ShapeDtypeStruct((b_pad, VOCAB), jnp.float32),
        in_specs=[vmem_spec] * len(ins),
        out_specs=vmem_spec,
        compiler_params=pltpu.CompilerParams(
            vmem_limit_bytes=24 * 1024 * 1024),
    )(*ins)
    return logits[:B]


# ---------------------------------------------------------------------------
# synthetic frozen-CLIP text front-end (tiny gather + mean-pool; plain JAX)
# ---------------------------------------------------------------------------
def clip_text_pool(input_ids, attention_mask, p):
    tok = p["clip_tok_emb"][input_ids]                          # (B, T, 64)
    mask = attention_mask[..., None].astype(jnp.float32)
    return (tok * mask).sum(axis=1) / jnp.maximum(mask.sum(axis=1), 1.0)


# ---------------------------------------------------------------------------
# full forward (mirrors MultimodalModel.forward)
# ---------------------------------------------------------------------------
@jax.jit
def multimodal_forward(pixel_values, input_ids, attention_mask, p):
    B = pixel_values.shape[0]
    pix_flat = pixel_values.reshape(B, -1).astype(jnp.float32)   # (B, 3072)
    pooled = clip_text_pool(input_ids, attention_mask, p)        # (B, 64)
    logits = fused_forward(pix_flat, pooled, p)                  # (B, VOCAB)
    return logits[:, None, :]      # (B, 1, vocab) — logits for the 1-token seq


# ---------------------------------------------------------------------------
# deterministic parameter initialisation
#   * streamed matrices -> int8 + per-output-channel f32 scale
#   * all small vectors (biases, LN params, wpe, scales) -> one f32 slab
# ---------------------------------------------------------------------------
def init_params(key):
    keys = iter(jax.random.split(key, 16))

    def dense(shape, scale=0.02):
        return scale * jax.random.normal(next(keys), shape, jnp.float32)

    def quantize(w):
        amax = jnp.max(jnp.abs(w), axis=0, keepdims=True)        # (1, N)
        scale = jnp.maximum(amax, 1e-8) / 127.0
        wq = jnp.clip(jnp.round(w / scale), -127.0, 127.0).astype(jnp.int8)
        return wq, scale.astype(jnp.float32)

    p = {}
    slab = {}

    # synthetic CLIP encoder (frozen in the reference model)
    p["clip_tok_emb"] = dense((100, TOK_DIM))                    # gather table (plain JAX)
    p["clip_img_wq"], slab["clip_img_s"] = quantize(dense((PIX_DIM, EMBED)))
    p["clip_txt_wq"], slab["clip_txt_s"] = quantize(dense((TOK_DIM, EMBED)))

    # fusion: Linear(1024,1024) split into two 512-row halves, GELU, LN, Linear(1024,768)
    p["fus_w1_img_q"], slab["fus_w1_img_s"] = quantize(dense((EMBED, FUSION_HID)))
    p["fus_w1_txt_q"], slab["fus_w1_txt_s"] = quantize(dense((EMBED, FUSION_HID)))
    p["fus_w2_q"], slab["fus_w2_s"] = quantize(dense((FUSION_HID, GPT_HID)))

    # synthetic GPT-2 head (V-only attention projection — Q/K are dead work)
    p["gpt_wv_q"], slab["gpt_wv_s"] = quantize(dense((GPT_HID, GPT_HID)))
    p["gpt_wproj_q"], slab["gpt_wproj_s"] = quantize(dense((GPT_HID, GPT_HID)))
    p["gpt_wfc_q"], slab["gpt_wfc_s"] = quantize(dense((GPT_HID, GPT_INNER)))
    p["gpt_wmp_q"], slab["gpt_wmp_s"] = quantize(dense((GPT_INNER, GPT_HID)))
    p["gpt_wlm_q"], slab["gpt_wlm_s"] = quantize(dense((GPT_HID, VOCAB)))

    # small vectors
    slab["fus_b1"] = jnp.zeros((1, FUSION_HID), jnp.float32)
    slab["fus_ln_g"] = jnp.ones((1, FUSION_HID), jnp.float32)
    slab["fus_ln_b"] = jnp.zeros((1, FUSION_HID), jnp.float32)
    slab["fus_b2"] = jnp.zeros((1, GPT_HID), jnp.float32)
    slab["gpt_wpe0"] = dense((1, GPT_HID))
    slab["gpt_ln1_g"] = jnp.ones((1, GPT_HID), jnp.float32)
    slab["gpt_ln1_b"] = jnp.zeros((1, GPT_HID), jnp.float32)
    slab["gpt_bv"] = jnp.zeros((1, GPT_HID), jnp.float32)
    slab["gpt_bproj"] = jnp.zeros((1, GPT_HID), jnp.float32)
    slab["gpt_ln2_g"] = jnp.ones((1, GPT_HID), jnp.float32)
    slab["gpt_ln2_b"] = jnp.zeros((1, GPT_HID), jnp.float32)
    slab["gpt_bfc"] = jnp.zeros((1, GPT_INNER), jnp.float32)
    slab["gpt_bmp"] = jnp.zeros((1, GPT_HID), jnp.float32)
    slab["gpt_lnf_g"] = jnp.ones((1, GPT_HID), jnp.float32)
    slab["gpt_lnf_b"] = jnp.zeros((1, GPT_HID), jnp.float32)

    parts = [slab[name].reshape(1, n) for name, n in _SLAB_ENTRIES]
    p["slab"] = jnp.concatenate(parts, axis=1)                   # (1, SLAB_LEN)
    assert p["slab"].shape == (1, SLAB_LEN)
    return p


if __name__ == "__main__":
    key = jax.random.PRNGKey(0)
    k_params, k_pix, k_ids = jax.random.split(key, 3)

    B, T = 2, 8
    params = init_params(k_params)
    pixel_values = jax.random.normal(k_pix, (B, 3, 32, 32), jnp.float32)  # NCHW
    input_ids = jax.random.randint(k_ids, (B, T), 0, 100, dtype=jnp.int32)
    attention_mask = jnp.ones((B, T), jnp.int32)

    logits = multimodal_forward(pixel_values, input_ids, attention_mask, params)
    logits = jax.block_until_ready(logits)
    assert logits.shape == (B, 1, VOCAB)
    assert bool(jnp.all(jnp.isfinite(logits)))
    print("KERNEL_OK")
</pallas_src>

<mosaic_0001>
module attributes {stable_mosaic.version = 11 : i64} {
  func.func @fused_forward_kernel(%arg0: memref<8x3072xf32, #tpu.memory_space<vmem>>, %arg1: memref<8x64xf32, #tpu.memory_space<vmem>>, %arg2: memref<1x19968xf32, #tpu.memory_space<vmem>>, %arg3: memref<3072x512xi8, #tpu.memory_space<vmem>>, %arg4: memref<64x512xi8, #tpu.memory_space<vmem>>, %arg5: memref<512x1024xi8, #tpu.memory_space<vmem>>, %arg6: memref<512x1024xi8, #tpu.memory_space<vmem>>, %arg7: memref<1024x768xi8, #tpu.memory_space<vmem>>, %arg8: memref<768x768xi8, #tpu.memory_space<vmem>>, %arg9: memref<768x768xi8, #tpu.memory_space<vmem>>, %arg10: memref<768x1024xi8, #tpu.memory_space<vmem>>, %arg11: memref<1024x768xi8, #tpu.memory_space<vmem>>, %arg12: memref<768x256xi8, #tpu.memory_space<vmem>>, %arg13: memref<8x256xf32, #tpu.memory_space<vmem>>) attributes {dimension_semantics = [], scalar_prefetch = 0 : i64, scratch_operands = 0 : i64, tpu.core_type = #tpu.core_type<tc>} {
    %c0 = arith.constant 0 : index
    %c0_0 = arith.constant 0 : index
    %0 = vector.load %arg0[%c0, %c0_0] : memref<8x3072xf32, #tpu.memory_space<vmem>>, vector<8x3072xf32>
    %c0_1 = arith.constant 0 : index
    %c12544 = arith.constant 12544 : index
    %1 = vector.load %arg2[%c0_1, %c12544] : memref<1x19968xf32, #tpu.memory_space<vmem>>, vector<1x512xf32>
    %c0_2 = arith.constant 0 : index
    %c0_3 = arith.constant 0 : index
    %2 = vector.load %arg3[%c0_2, %c0_3] : memref<3072x512xi8, #tpu.memory_space<vmem>>, vector<3072x512xi8>
    %3 = arith.sitofp %2 : vector<3072x512xi8> to vector<3072x512xf32>
    %4 = arith.truncf %3 : vector<3072x512xf32> to vector<3072x512xbf16>
    %5 = arith.truncf %0 : vector<8x3072xf32> to vector<8x3072xbf16>
    %cst = arith.constant dense<0.000000e+00> : vector<8x512xf32>
    %6 = tpu.matmul %5, %4, %cst {dimension_numbers = #tpu.dot_dimension_numbers<[1], [0], [0], [1], [0, 0, 1, 1], [], []>} : vector<8x3072xbf16>, vector<3072x512xbf16>, vector<8x512xf32> -> vector<8x512xf32>
    %7 = vector.broadcast %1 : vector<1x512xf32> to vector<8x512xf32>
    %8 = arith.mulf %6, %7 : vector<8x512xf32>
    %9 = arith.mulf %8, %8 : vector<8x512xf32>
    %cst_4 = arith.constant dense<0.000000e+00> : vector<8xf32>
    %10 = vector.multi_reduction <add>, %9, %cst_4 [1] : vector<8x512xf32> to vector<8xf32>
    %11 = vector.shape_cast %10 : vector<8xf32> to vector<8x1xf32>
    %cst_5 = arith.constant 9.99999996E-13 : f32
    %12 = vector.broadcast %cst_5 : f32 to vector<8x1xf32>
    %13 = arith.addf %11, %12 : vector<8x1xf32>
    %14 = math.rsqrt %13 : vector<8x1xf32>
    %15 = vector.broadcast %14 : vector<8x1xf32> to vector<8x512xf32>
    %16 = arith.mulf %8, %15 : vector<8x512xf32>
    %c0_6 = arith.constant 0 : index
    %c0_7 = arith.constant 0 : index
    %17 = vector.load %arg1[%c0_6, %c0_7] : memref<8x64xf32, #tpu.memory_space<vmem>>, vector<8x64xf32>
    %c0_8 = arith.constant 0 : index
    %c13056 = arith.constant 13056 : index
    %18 = vector.load %arg2[%c0_8, %c13056] : memref<1x19968xf32, #tpu.memory_space<vmem>>, vector<1x512xf32>
    %c0_9 = arith.constant 0 : index
    %c0_10 = arith.constant 0 : index
    %19 = vector.load %arg4[%c0_9, %c0_10] : memref<64x512xi8, #tpu.memory_space<vmem>>, vector<64x512xi8>
    %20 = arith.sitofp %19 : vector<64x512xi8> to vector<64x512xf32>
    %21 = arith.truncf %20 : vector<64x512xf32> to vector<64x512xbf16>
    %22 = arith.truncf %17 : vector<8x64xf32> to vector<8x64xbf16>
    %cst_11 = arith.constant dense<0.000000e+00> : vector<8x512xf32>
    %23 = tpu.matmul %22, %21, %cst_11 {dimension_numbers = #tpu.dot_dimension_numbers<[1], [0], [0], [1], [0, 0, 1, 1], [], []>} : vector<8x64xbf16>, vector<64x512xbf16>, vector<8x512xf32> -> vector<8x512xf32>
    %24 = vector.broadcast %18 : vector<1x512xf32> to vector<8x512xf32>
    %25 = arith.mulf %23, %24 : vector<8x512xf32>
    %26 = arith.mulf %25, %25 : vector<8x512xf32>
    %cst_12 = arith.constant dense<0.000000e+00> : vector<8xf32>
    %27 = vector.multi_reduction <add>, %26, %cst_12 [1] : vector<8x512xf32> to vector<8xf32>
    %28 = vector.shape_cast %27 : vector<8xf32> to vector<8x1xf32>
    %cst_13 = arith.constant 9.99999996E-13 : f32
    %29 = vector.broadcast %cst_13 : f32 to vector<8x1xf32>
    %30 = arith.addf %28, %29 : vector<8x1xf32>
    %31 = math.rsqrt %30 : vector<8x1xf32>
    %32 = vector.broadcast %31 : vector<8x1xf32> to vector<8x512xf32>
    %33 = arith.mulf %25, %32 : vector<8x512xf32>
    %c0_14 = arith.constant 0 : index
    %c13568 = arith.constant 13568 : index
    %34 = vector.load %arg2[%c0_14, %c13568] : memref<1x19968xf32, #tpu.memory_space<vmem>>, vector<1x1024xf32>
    %c0_15 = arith.constant 0 : index
    %c0_16 = arith.constant 0 : index
    %35 = vector.load %arg5[%c0_15, %c0_16] : memref<512x1024xi8, #tpu.memory_space<vmem>>, vector<512x1024xi8>
    %36 = arith.sitofp %35 : vector<512x1024xi8> to vector<512x1024xf32>
    %37 = arith.truncf %36 : vector<512x1024xf32> to vector<512x1024xbf16>
    %38 = arith.truncf %16 : vector<8x512xf32> to vector<8x512xbf16>
    %cst_17 = arith.constant dense<0.000000e+00> : vector<8x1024xf32>
    %39 = tpu.matmul %38, %37, %cst_17 {dimension_numbers = #tpu.dot_dimension_numbers<[1], [0], [0], [1], [0, 0, 1, 1], [], []>} : vector<8x512xbf16>, vector<512x1024xbf16>, vector<8x1024xf32> -> vector<8x1024xf32>
    %40 = vector.broadcast %34 : vector<1x1024xf32> to vector<8x1024xf32>
    %41 = arith.mulf %39, %40 : vector<8x1024xf32>
    %c0_18 = arith.constant 0 : index
    %c14592 = arith.constant 14592 : index
    %42 = vector.load %arg2[%c0_18, %c14592] : memref<1x19968xf32, #tpu.memory_space<vmem>>, vector<1x1024xf32>
    %c0_19 = arith.constant 0 : index
    %c0_20 = arith.constant 0 : index
    %43 = vector.load %arg6[%c0_19, %c0_20] : memref<512x1024xi8, #tpu.memory_space<vmem>>, vector<512x1024xi8>
    %44 = arith.sitofp %43 : vector<512x1024xi8> to vector<512x1024xf32>
    %45 = arith.truncf %44 : vector<512x1024xf32> to vector<512x1024xbf16>
    %46 = arith.truncf %33 : vector<8x512xf32> to vector<8x512xbf16>
    %cst_21 = arith.constant dense<0.000000e+00> : vector<8x1024xf32>
    %47 = tpu.matmul %46, %45, %cst_21 {dimension_numbers = #tpu.dot_dimension_numbers<[1], [0], [0], [1], [0, 0, 1, 1], [], []>} : vector<8x512xbf16>, vector<512x1024xbf16>, vector<8x1024xf32> -> vector<8x1024xf32>
    %48 = vector.broadcast %42 : vector<1x1024xf32> to vector<8x1024xf32>
    %49 = arith.mulf %47, %48 : vector<8x1024xf32>
    %50 = arith.addf %41, %49 : vector<8x1024xf32>
    %c0_22 = arith.constant 0 : index
    %c0_23 = arith.constant 0 : index
    %51 = vector.load %arg2[%c0_22, %c0_23] : memref<1x19968xf32, #tpu.memory_space<vmem>>, vector<1x1024xf32>
    %52 = vector.broadcast %51 : vector<1x1024xf32> to vector<8x1024xf32>
    %53 = arith.addf %50, %52 : vector<8x1024xf32>
    %cst_24 = arith.constant 5.000000e-01 : f32
    %54 = vector.broadcast %cst_24 : f32 to vector<8x1024xf32>
    %55 = arith.mulf %54, %53 : vector<8x1024xf32>
    %cst_25 = arith.constant 0.707106769 : f32
    %56 = vector.broadcast %cst_25 : f32 to vector<8x1024xf32>
    %57 = arith.mulf %53, %56 : vector<8x1024xf32>
    %58 = math.erf %57 : vector<8x1024xf32>
    %cst_26 = arith.constant 1.000000e+00 : f32
    %59 = vector.broadcast %cst_26 : f32 to vector<8x1024xf32>
    %60 = arith.addf %59, %58 : vector<8x1024xf32>
    %61 = arith.mulf %55, %60 : vector<8x1024xf32>
    %c0_27 = arith.constant 0 : index
    %c1024 = arith.constant 1024 : index
    %62 = vector.load %arg2[%c0_27, %c1024] : memref<1x19968xf32, #tpu.memory_space<vmem>>, vector<1x1024xf32>
    %c0_28 = arith.constant 0 : index
    %c2048 = arith.constant 2048 : index
    %63 = vector.load %arg2[%c0_28, %c2048] : memref<1x19968xf32, #tpu.memory_space<vmem>>, vector<1x1024xf32>
    %cst_29 = arith.constant dense<0.000000e+00> : vector<8xf32>
    %64 = vector.multi_reduction <add>, %61, %cst_29 [1] : vector<8x1024xf32> to vector<8xf32>
    %65 = vector.shape_cast %64 : vector<8xf32> to vector<8x1xf32>
    %cst_30 = arith.constant 1.024000e+03 : f32
    %66 = vector.broadcast %cst_30 : f32 to vector<8x1xf32>
    %67 = arith.divf %65, %66 : vector<8x1xf32>
    %68 = vector.broadcast %67 : vector<8x1xf32> to vector<8x1024xf32>
    %69 = arith.subf %61, %68 : vector<8x1024xf32>
    %70 = arith.mulf %69, %69 : vector<8x1024xf32>
    %cst_31 = arith.constant dense<0.000000e+00> : vector<8xf32>
    %71 = vector.multi_reduction <add>, %70, %cst_31 [1] : vector<8x1024xf32> to vector<8xf32>
    %72 = vector.shape_cast %71 : vector<8xf32> to vector<8x1xf32>
    %cst_32 = arith.constant 1.024000e+03 : f32
    %73 = vector.broadcast %cst_32 : f32 to vector<8x1xf32>
    %74 = arith.divf %72, %73 : vector<8x1xf32>
    %75 = vector.broadcast %67 : vector<8x1xf32> to vector<8x1024xf32>
    %76 = arith.subf %61, %75 : vector<8x1024xf32>
    %cst_33 = arith.constant 9.99999974E-6 : f32
    %77 = vector.broadcast %cst_33 : f32 to vector<8x1xf32>
    %78 = arith.addf %74, %77 : vector<8x1xf32>
    %79 = math.rsqrt %78 : vector<8x1xf32>
    %80 = vector.broadcast %79 : vector<8x1xf32> to vector<8x1024xf32>
    %81 = arith.mulf %76, %80 : vector<8x1024xf32>
    %82 = vector.broadcast %62 : vector<1x1024xf32> to vector<8x1024xf32>
    %83 = arith.mulf %81, %82 : vector<8x1024xf32>
    %84 = vector.broadcast %63 : vector<1x1024xf32> to vector<8x1024xf32>
    %85 = arith.addf %83, %84 : vector<8x1024xf32>
    %c0_34 = arith.constant 0 : index
    %c15616 = arith.constant 15616 : index
    %86 = vector.load %arg2[%c0_34, %c15616] : memref<1x19968xf32, #tpu.memory_space<vmem>>, vector<1x768xf32>
    %c0_35 = arith.constant 0 : index
    %c0_36 = arith.constant 0 : index
    %87 = vector.load %arg7[%c0_35, %c0_36] : memref<1024x768xi8, #tpu.memory_space<vmem>>, vector<1024x768xi8>
    %88 = arith.sitofp %87 : vector<1024x768xi8> to vector<1024x768xf32>
    %89 = arith.truncf %88 : vector<1024x768xf32> to vector<1024x768xbf16>
    %90 = arith.truncf %85 : vector<8x1024xf32> to vector<8x1024xbf16>
    %cst_37 = arith.constant dense<0.000000e+00> : vector<8x768xf32>
    %91 = tpu.matmul %90, %89, %cst_37 {dimension_numbers = #tpu.dot_dimension_numbers<[1], [0], [0], [1], [0, 0, 1, 1], [], []>} : vector<8x1024xbf16>, vector<1024x768xbf16>, vector<8x768xf32> -> vector<8x768xf32>
    %92 = vector.broadcast %86 : vector<1x768xf32> to vector<8x768xf32>
    %93 = arith.mulf %91, %92 : vector<8x768xf32>
    %c0_38 = arith.constant 0 : index
    %c3072 = arith.constant 3072 : index
    %94 = vector.load %arg2[%c0_38, %c3072] : memref<1x19968xf32, #tpu.memory_space<vmem>>, vector<1x768xf32>
    %95 = vector.broadcast %94 : vector<1x768xf32> to vector<8x768xf32>
    %96 = arith.addf %93, %95 : vector<8x768xf32>
    %c0_39 = arith.constant 0 : index
    %c3840 = arith.constant 3840 : index
    %97 = vector.load %arg2[%c0_39, %c3840] : memref<1x19968xf32, #tpu.memory_space<vmem>>, vector<1x768xf32>
    %98 = vector.broadcast %97 : vector<1x768xf32> to vector<8x768xf32>
    %99 = arith.addf %96, %98 : vector<8x768xf32>
    %c0_40 = arith.constant 0 : index
    %c4608 = arith.constant 4608 : index
    %100 = vector.load %arg2[%c0_40, %c4608] : memref<1x19968xf32, #tpu.memory_space<vmem>>, vector<1x768xf32>
    %c0_41 = arith.constant 0 : index
    %c5376 = arith.constant 5376 : index
    %101 = vector.load %arg2[%c0_41, %c5376] : memref<1x19968xf32, #tpu.memory_space<vmem>>, vector<1x768xf32>
    %cst_42 = arith.constant dense<0.000000e+00> : vector<8xf32>
    %102 = vector.multi_reduction <add>, %99, %cst_42 [1] : vector<8x768xf32> to vector<8xf32>
    %103 = vector.shape_cast %102 : vector<8xf32> to vector<8x1xf32>
    %cst_43 = arith.constant 7.680000e+02 : f32
    %104 = vector.broadcast %cst_43 : f32 to vector<8x1xf32>
    %105 = arith.divf %103, %104 : vector<8x1xf32>
    %106 = vector.broadcast %105 : vector<8x1xf32> to vector<8x768xf32>
    %107 = arith.subf %99, %106 : vector<8x768xf32>
    %108 = arith.mulf %107, %107 : vector<8x768xf32>
    %cst_44 = arith.constant dense<0.000000e+00> : vector<8xf32>
    %109 = vector.multi_reduction <add>, %108, %cst_44 [1] : vector<8x768xf32> to vector<8xf32>
    %110 = vector.shape_cast %109 : vector<8xf32> to vector<8x1xf32>
    %cst_45 = arith.constant 7.680000e+02 : f32
    %111 = vector.broadcast %cst_45 : f32 to vector<8x1xf32>
    %112 = arith.divf %110, %111 : vector<8x1xf32>
    %113 = vector.broadcast %105 : vector<8x1xf32> to vector<8x768xf32>
    %114 = arith.subf %99, %113 : vector<8x768xf32>
    %cst_46 = arith.constant 9.99999974E-6 : f32
    %115 = vector.broadcast %cst_46 : f32 to vector<8x1xf32>
    %116 = arith.addf %112, %115 : vector<8x1xf32>
    %117 = math.rsqrt %116 : vector<8x1xf32>
    %118 = vector.broadcast %117 : vector<8x1xf32> to vector<8x768xf32>
    %119 = arith.mulf %114, %118 : vector<8x768xf32>
    %120 = vector.broadcast %100 : vector<1x768xf32> to vector<8x768xf32>
    %121 = arith.mulf %119, %120 : vector<8x768xf32>
    %122 = vector.broadcast %101 : vector<1x768xf32> to vector<8x768xf32>
    %123 = arith.addf %121, %122 : vector<8x768xf32>
    %c0_47 = arith.constant 0 : index
    %c16384 = arith.constant 16384 : index
    %124 = vector.load %arg2[%c0_47, %c16384] : memref<1x19968xf32, #tpu.memory_space<vmem>>, vector<1x768xf32>
    %c0_48 = arith.constant 0 : index
    %c0_49 = arith.constant 0 : index
    %125 = vector.load %arg8[%c0_48, %c0_49] : memref<768x768xi8, #tpu.memory_space<vmem>>, vector<768x768xi8>
    %126 = arith.sitofp %125 : vector<768x768xi8> to vector<768x768xf32>
    %127 = arith.truncf %126 : vector<768x768xf32> to vector<768x768xbf16>
    %128 = arith.truncf %123 : vector<8x768xf32> to vector<8x768xbf16>
    %cst_50 = arith.constant dense<0.000000e+00> : vector<8x768xf32>
    %129 = tpu.matmul %128, %127, %cst_50 {dimension_numbers = #tpu.dot_dimension_numbers<[1], [0], [0], [1], [0, 0, 1, 1], [], []>} : vector<8x768xbf16>, vector<768x768xbf16>, vector<8x768xf32> -> vector<8x768xf32>
    %130 = vector.broadcast %124 : vector<1x768xf32> to vector<8x768xf32>
    %131 = arith.mulf %129, %130 : vector<8x768xf32>
    %c0_51 = arith.constant 0 : index
    %c6144 = arith.constant 6144 : index
    %132 = vector.load %arg2[%c0_51, %c6144] : memref<1x19968xf32, #tpu.memory_space<vmem>>, vector<1x768xf32>
    %133 = vector.broadcast %132 : vector<1x768xf32> to vector<8x768xf32>
    %134 = arith.addf %131, %133 : vector<8x768xf32>
    %c0_52 = arith.constant 0 : index
    %c17152 = arith.constant 17152 : index
    %135 = vector.load %arg2[%c0_52, %c17152] : memref<1x19968xf32, #tpu.memory_space<vmem>>, vector<1x768xf32>
    %c0_53 = arith.constant 0 : index
    %c0_54 = arith.constant 0 : index
    %136 = vector.load %arg9[%c0_53, %c0_54] : memref<768x768xi8, #tpu.memory_space<vmem>>, vector<768x768xi8>
    %137 = arith.sitofp %136 : vector<768x768xi8> to vector<768x768xf32>
    %138 = arith.truncf %137 : vector<768x768xf32> to vector<768x768xbf16>
    %139 = arith.truncf %134 : vector<8x768xf32> to vector<8x768xbf16>
    %cst_55 = arith.constant dense<0.000000e+00> : vector<8x768xf32>
    %140 = tpu.matmul %139, %138, %cst_55 {dimension_numbers = #tpu.dot_dimension_numbers<[1], [0], [0], [1], [0, 0, 1, 1], [], []>} : vector<8x768xbf16>, vector<768x768xbf16>, vector<8x768xf32> -> vector<8x768xf32>
    %141 = vector.broadcast %135 : vector<1x768xf32> to vector<8x768xf32>
    %142 = arith.mulf %140, %141 : vector<8x768xf32>
    %143 = arith.addf %99, %142 : vector<8x768xf32>
    %c0_56 = arith.constant 0 : index
    %c6912 = arith.constant 6912 : index
    %144 = vector.load %arg2[%c0_56, %c6912] : memref<1x19968xf32, #tpu.memory_space<vmem>>, vector<1x768xf32>
    %145 = vector.broadcast %144 : vector<1x768xf32> to vector<8x768xf32>
    %146 = arith.addf %143, %145 : vector<8x768xf32>
    %c0_57 = arith.constant 0 : index
    %c7680 = arith.constant 7680 : index
    %147 = vector.load %arg2[%c0_57, %c7680] : memref<1x19968xf32, #tpu.memory_space<vmem>>, vector<1x768xf32>
    %c0_58 = arith.constant 0 : index
    %c8448 = arith.constant 8448 : index
    %148 = vector.load %arg2[%c0_58, %c8448] : memref<1x19968xf32, #tpu.memory_space<vmem>>, vector<1x768xf32>
    %cst_59 = arith.constant dense<0.000000e+00> : vector<8xf32>
    %149 = vector.multi_reduction <add>, %146, %cst_59 [1] : vector<8x768xf32> to vector<8xf32>
    %150 = vector.shape_cast %149 : vector<8xf32> to vector<8x1xf32>
    %cst_60 = arith.constant 7.680000e+02 : f32
    %151 = vector.broadcast %cst_60 : f32 to vector<8x1xf32>
    %152 = arith.divf %150, %151 : vector<8x1xf32>
    %153 = vector.broadcast %152 : vector<8x1xf32> to vector<8x768xf32>
    %154 = arith.subf %146, %153 : vector<8x768xf32>
    %155 = arith.mulf %154, %154 : vector<8x768xf32>
    %cst_61 = arith.constant dense<0.000000e+00> : vector<8xf32>
    %156 = vector.multi_reduction <add>, %155, %cst_61 [1] : vector<8x768xf32> to vector<8xf32>
    %157 = vector.shape_cast %156 : vector<8xf32> to vector<8x1xf32>
    %cst_62 = arith.constant 7.680000e+02 : f32
    %158 = vector.broadcast %cst_62 : f32 to vector<8x1xf32>
    %159 = arith.divf %157, %158 : vector<8x1xf32>
    %160 = vector.broadcast %152 : vector<8x1xf32> to vector<8x768xf32>
    %161 = arith.subf %146, %160 : vector<8x768xf32>
    %cst_63 = arith.constant 9.99999974E-6 : f32
    %162 = vector.broadcast %cst_63 : f32 to vector<8x1xf32>
    %163 = arith.addf %159, %162 : vector<8x1xf32>
    %164 = math.rsqrt %163 : vector<8x1xf32>
    %165 = vector.broadcast %164 : vector<8x1xf32> to vector<8x768xf32>
    %166 = arith.mulf %161, %165 : vector<8x768xf32>
    %167 = vector.broadcast %147 : vector<1x768xf32> to vector<8x768xf32>
    %168 = arith.mulf %166, %167 : vector<8x768xf32>
    %169 = vector.broadcast %148 : vector<1x768xf32> to vector<8x768xf32>
    %170 = arith.addf %168, %169 : vector<8x768xf32>
    %c0_64 = arith.constant 0 : index
    %c17920 = arith.constant 17920 : index
    %171 = vector.load %arg2[%c0_64, %c17920] : memref<1x19968xf32, #tpu.memory_space<vmem>>, vector<1x1024xf32>
    %c0_65 = arith.constant 0 : index
    %c0_66 = arith.constant 0 : index
    %172 = vector.load %arg10[%c0_65, %c0_66] : memref<768x1024xi8, #tpu.memory_space<vmem>>, vector<768x1024xi8>
    %173 = arith.sitofp %172 : vector<768x1024xi8> to vector<768x1024xf32>
    %174 = arith.truncf %173 : vector<768x1024xf32> to vector<768x1024xbf16>
    %175 = arith.truncf %170 : vector<8x768xf32> to vector<8x768xbf16>
    %cst_67 = arith.constant dense<0.000000e+00> : vector<8x1024xf32>
    %176 = tpu.matmul %175, %174, %cst_67 {dimension_numbers = #tpu.dot_dimension_numbers<[1], [0], [0], [1], [0, 0, 1, 1], [], []>} : vector<8x768xbf16>, vector<768x1024xbf16>, vector<8x1024xf32> -> vector<8x1024xf32>
    %177 = vector.broadcast %171 : vector<1x1024xf32> to vector<8x1024xf32>
    %178 = arith.mulf %176, %177 : vector<8x1024xf32>
    %c0_68 = arith.constant 0 : index
    %c9216 = arith.constant 9216 : index
    %179 = vector.load %arg2[%c0_68, %c9216] : memref<1x19968xf32, #tpu.memory_space<vmem>>, vector<1x1024xf32>
    %180 = vector.broadcast %179 : vector<1x1024xf32> to vector<8x1024xf32>
    %181 = arith.addf %178, %180 : vector<8x1024xf32>
    %cst_69 = arith.constant 5.000000e-01 : f32
    %182 = vector.broadcast %cst_69 : f32 to vector<8x1024xf32>
    %183 = arith.mulf %182, %181 : vector<8x1024xf32>
    %cst_70 = arith.constant 0.707106769 : f32
    %184 = vector.broadcast %cst_70 : f32 to vector<8x1024xf32>
    %185 = arith.mulf %181, %184 : vector<8x1024xf32>
    %186 = math.erf %185 : vector<8x1024xf32>
    %cst_71 = arith.constant 1.000000e+00 : f32
    %187 = vector.broadcast %cst_71 : f32 to vector<8x1024xf32>
    %188 = arith.addf %187, %186 : vector<8x1024xf32>
    %189 = arith.mulf %183, %188 : vector<8x1024xf32>
    %c0_72 = arith.constant 0 : index
    %c18944 = arith.constant 18944 : index
    %190 = vector.load %arg2[%c0_72, %c18944] : memref<1x19968xf32, #tpu.memory_space<vmem>>, vector<1x768xf32>
    %c0_73 = arith.constant 0 : index
    %c0_74 = arith.constant 0 : index
    %191 = vector.load %arg11[%c0_73, %c0_74] : memref<1024x768xi8, #tpu.memory_space<vmem>>, vector<1024x768xi8>
    %192 = arith.sitofp %191 : vector<1024x768xi8> to vector<1024x768xf32>
    %193 = arith.truncf %192 : vector<1024x768xf32> to vector<1024x768xbf16>
    %194 = arith.truncf %189 : vector<8x1024xf32> to vector<8x1024xbf16>
    %cst_75 = arith.constant dense<0.000000e+00> : vector<8x768xf32>
    %195 = tpu.matmul %194, %193, %cst_75 {dimension_numbers = #tpu.dot_dimension_numbers<[1], [0], [0], [1], [0, 0, 1, 1], [], []>} : vector<8x1024xbf16>, vector<1024x768xbf16>, vector<8x768xf32> -> vector<8x768xf32>
    %196 = vector.broadcast %190 : vector<1x768xf32> to vector<8x768xf32>
    %197 = arith.mulf %195, %196 : vector<8x768xf32>
    %198 = arith.addf %146, %197 : vector<8x768xf32>
    %c0_76 = arith.constant 0 : index
    %c10240 = arith.constant 10240 : index
    %199 = vector.load %arg2[%c0_76, %c10240] : memref<1x19968xf32, #tpu.memory_space<vmem>>, vector<1x768xf32>
    %200 = vector.broadcast %199 : vector<1x768xf32> to vector<8x768xf32>
    %201 = arith.addf %198, %200 : vector<8x768xf32>
    %c0_77 = arith.constant 0 : index
    %c11008 = arith.constant 11008 : index
    %202 = vector.load %arg2[%c0_77, %c11008] : memref<1x19968xf32, #tpu.memory_space<vmem>>, vector<1x768xf32>
    %c0_78 = arith.constant 0 : index
    %c11776 = arith.constant 11776 : index
    %203 = vector.load %arg2[%c0_78, %c11776] : memref<1x19968xf32, #tpu.memory_space<vmem>>, vector<1x768xf32>
    %cst_79 = arith.constant dense<0.000000e+00> : vector<8xf32>
    %204 = vector.multi_reduction <add>, %201, %cst_79 [1] : vector<8x768xf32> to vector<8xf32>
    %205 = vector.shape_cast %204 : vector<8xf32> to vector<8x1xf32>
    %cst_80 = arith.constant 7.680000e+02 : f32
    %206 = vector.broadcast %cst_80 : f32 to vector<8x1xf32>
    %207 = arith.divf %205, %206 : vector<8x1xf32>
    %208 = vector.broadcast %207 : vector<8x1xf32> to vector<8x768xf32>
    %209 = arith.subf %201, %208 : vector<8x768xf32>
    %210 = arith.mulf %209, %209 : vector<8x768xf32>
    %cst_81 = arith.constant dense<0.000000e+00> : vector<8xf32>
    %211 = vector.multi_reduction <add>, %210, %cst_81 [1] : vector<8x768xf32> to vector<8xf32>
    %212 = vector.shape_cast %211 : vector<8xf32> to vector<8x1xf32>
    %cst_82 = arith.constant 7.680000e+02 : f32
    %213 = vector.broadcast %cst_82 : f32 to vector<8x1xf32>
    %214 = arith.divf %212, %213 : vector<8x1xf32>
    %215 = vector.broadcast %207 : vector<8x1xf32> to vector<8x768xf32>
    %216 = arith.subf %201, %215 : vector<8x768xf32>
    %cst_83 = arith.constant 9.99999974E-6 : f32
    %217 = vector.broadcast %cst_83 : f32 to vector<8x1xf32>
    %218 = arith.addf %214, %217 : vector<8x1xf32>
    %219 = math.rsqrt %218 : vector<8x1xf32>
    %220 = vector.broadcast %219 : vector<8x1xf32> to vector<8x768xf32>
    %221 = arith.mulf %216, %220 : vector<8x768xf32>
    %222 = vector.broadcast %202 : vector<1x768xf32> to vector<8x768xf32>
    %223 = arith.mulf %221, %222 : vector<8x768xf32>
    %224 = vector.broadcast %203 : vector<1x768xf32> to vector<8x768xf32>
    %225 = arith.addf %223, %224 : vector<8x768xf32>
    %c0_84 = arith.constant 0 : index
    %c19712 = arith.constant 19712 : index
    %226 = vector.load %arg2[%c0_84, %c19712] : memref<1x19968xf32, #tpu.memory_space<vmem>>, vector<1x256xf32>
    %c0_85 = arith.constant 0 : index
    %c0_86 = arith.constant 0 : index
    %227 = vector.load %arg12[%c0_85, %c0_86] : memref<768x256xi8, #tpu.memory_space<vmem>>, vector<768x256xi8>
    %228 = arith.sitofp %227 : vector<768x256xi8> to vector<768x256xf32>
    %229 = arith.truncf %228 : vector<768x256xf32> to vector<768x256xbf16>
    %230 = arith.truncf %225 : vector<8x768xf32> to vector<8x768xbf16>
    %cst_87 = arith.constant dense<0.000000e+00> : vector<8x256xf32>
    %231 = tpu.matmul %230, %229, %cst_87 {dimension_numbers = #tpu.dot_dimension_numbers<[1], [0], [0], [1], [0, 0, 1, 1], [], []>} : vector<8x768xbf16>, vector<768x256xbf16>, vector<8x256xf32> -> vector<8x256xf32>
    %232 = vector.broadcast %226 : vector<1x256xf32> to vector<8x256xf32>
    %233 = arith.mulf %231, %232 : vector<8x256xf32>
    %c0_88 = arith.constant 0 : index
    %c0_89 = arith.constant 0 : index
    %234 = vector.load %arg13[%c0_88, %c0_89] : memref<8x256xf32, #tpu.memory_space<vmem>>, vector<8x256xf32>
    tpu.vector_store %arg13[%c0_88, %c0_89], %233 {strides = array<i32>} : memref<8x256xf32, #tpu.memory_space<vmem>>, vector<8x256xf32>,
    return
  }
}

</mosaic_0001>

<llo_original>
// kernel: multimodal_forward.1
$region0: #{multimodal_forward.1}
  #allocation0 [shape = 'u32[]', space=smem, size = 0x4, offset = 0x4, fixed_abs, tag = 'smem constant byte address 0x4 - core index']
  #allocation1 [shape = 'u32[144,128]{1,0:T(1,128)}', space=vmem, size = 0x12000, scoped, tag = 'internal scratch']
  %s0 = inlined_call_operand.vmem [shape: f32[8,3072], index: 0, kind: input, shape index: {}]
  %s1 = inlined_call_operand.vmem [shape: f32[8,64], index: 1, kind: input, shape index: {}]
  %s2 = inlined_call_operand.hbm [shape: f32[1,19968], index: 2, kind: input, shape index: {}]
  %s3 = inlined_call_operand.hbm [shape: s8[3072,512], index: 3, kind: input, shape index: {}]
  %s4 = inlined_call_operand.hbm [shape: s8[64,512], index: 4, kind: input, shape index: {}]
  %s5 = inlined_call_operand.hbm [shape: s8[512,1024], index: 5, kind: input, shape index: {}]
  %s6 = inlined_call_operand.hbm [shape: s8[512,1024], index: 6, kind: input, shape index: {}]
  %s7 = inlined_call_operand.hbm [shape: s8[1024,768], index: 7, kind: input, shape index: {}]
  %s8 = inlined_call_operand.hbm [shape: s8[768,768], index: 8, kind: input, shape index: {}]
  %s9 = inlined_call_operand.hbm [shape: s8[768,768], index: 9, kind: input, shape index: {}]
  %s10 = inlined_call_operand.hbm [shape: s8[768,1024], index: 10, kind: input, shape index: {}]
  %s11 = inlined_call_operand.hbm [shape: s8[1024,768], index: 11, kind: input, shape index: {}]
  %s12 = inlined_call_operand.hbm [shape: s8[768,256], index: 12, kind: input, shape index: {}]
  %s13 = inlined_call_operand.vmem [shape: f32[8,256], index: 13, kind: output, shape index: {}]
  %s14 = sld [smem:[#allocation0]]
  $region106: #{multimodal_forward.1} parent=0
    _
  %s16 = ssub.s32 1, %s14
  %s17 = scalar_select 0, %s16, %s14
  $region1: #{multimodal_forward.1} parent=0
    #allocation2 [shape = 'u8[79872]{0}', space=vmem, size = 0x13800, scoped, tag = 'input window, operand 2, single buffered']
    #allocation3 [shape = 's32[1]{0}', space=sflag, size = 0x4, scoped, tag = 'scoped memory for multimodal_forward.1']
    #allocation4 [shape = 'u8[1572864]{0}', space=vmem, size = 0x180000, scoped, tag = 'input window, operand 3, single buffered']
    #allocation5 [shape = 's32[1]{0}', space=sflag, size = 0x4, scoped, tag = 'scoped memory for multimodal_forward.1']
    #allocation6 [shape = 'u8[32768]{0}', space=vmem, size = 0x8000, scoped, tag = 'input window, operand 4, single buffered']
    #allocation7 [shape = 'u8[524288]{0}', space=vmem, size = 0x80000, scoped, tag = 'input window, operand 5, single buffered']
    #allocation8 [shape = 's32[1]{0}', space=sflag, size = 0x4, scoped, tag = 'scoped memory for multimodal_forward.1']
    #allocation9 [shape = 'u8[524288]{0}', space=vmem, size = 0x80000, scoped, tag = 'input window, operand 6, single buffered']
    #allocation10 [shape = 'u8[786432]{0}', space=vmem, size = 0xc0000, scoped, tag = 'input window, operand 7, single buffered']
    #allocation11 [shape = 's32[1]{0}', space=sflag, size = 0x4, scoped, tag = 'scoped memory for multimodal_forward.1']
    #allocation12 [shape = 'u8[589824]{0}', space=vmem, size = 0x90000, scoped, tag = 'input window, operand 8, single buffered']
    #allocation13 [shape = 'u8[589824]{0}', space=vmem, size = 0x90000, scoped, tag = 'input window, operand 9, single buffered']
    #allocation14 [shape = 's32[1]{0}', space=sflag, size = 0x4, scoped, tag = 'scoped memory for multimodal_forward.1']
    #allocation15 [shape = 'u8[786432]{0}', space=vmem, size = 0xc0000, scoped, tag = 'input window, operand 10, single buffered']
    #allocation16 [shape = 'u8[786432]{0}', space=vmem, size = 0xc0000, scoped, tag = 'input window, operand 11, single buffered']
    #allocation17 [shape = 's32[1]{0}', space=sflag, size = 0x4, scoped, tag = 'scoped memory for multimodal_forward.1']
    #allocation18 [shape = 'u8[196608]{0}', space=vmem, size = 0x30000, scoped, tag = 'input window, operand 12, single buffered']
    %18 = vsyncpa [#allocation3], 0
    %19 = vsyncpa [#allocation5], 0
    %20 = vsyncpa [#allocation8], 0
    %21 = vsyncpa [#allocation11], 0
    %22 = vsyncpa [#allocation14], 0
    %23 = vsyncpa [#allocation17], 0
    // Predicated region
    $region2: #{multimodal_forward.1} parent=1 // pred_check
      _
    $region3: #{multimodal_forward.1} parent=1 // pred_check_branch
      %25 = sbr.rel (0) target = $region5
    $region4: #{multimodal_forward.1} parent=1 // pred_region
      _
    $region5: #{multimodal_forward.1} parent=1 // pred_fallthru
      _
    // Predicated region
    $region6: #{multimodal_forward.1} parent=1 // pred_check
      _
    $region7: #{multimodal_forward.1} parent=1 // pred_check_branch
      %27 = sbr.rel (0) target = $region9
    $region8: #{multimodal_forward.1} parent=1 // pred_region
      _
    $region9: #{multimodal_forward.1} parent=1 // pred_fallthru
      _
    // Predicated region
    $region10: #{multimodal_forward.1} parent=1 // pred_check
      _
    $region11: #{multimodal_forward.1} parent=1 // pred_check_branch
      %29 = sbr.rel (0) target = $region13
    $region12: #{multimodal_forward.1} parent=1 // pred_region
      %s31 = ssub.s32 2496, 2496
      %32 = vsyncadd [#allocation3], %s31
      %s34 = sshll.u32 [#allocation2], 4
      %s35 = int_to_ptr.vmem [resolvable:$true] %s34
      %37 = dma.hbm_to_vmem [thread:$0]  %s2, 2496, %s35, [#allocation3]
    $region13: #{multimodal_forward.1} parent=1 // pred_fallthru
      _
    // Predicated region
    $region14: #{multimodal_forward.1} parent=1 // pred_check
      _
    $region15: #{multimodal_forward.1} parent=1 // pred_check_branch
      %39 = sbr.rel (0) target = $region17
    $region16: #{multimodal_forward.1} parent=1 // pred_region
      %s41 = ssub.s32 49152, 49152
      %42 = vsyncadd [#allocation5], %s41
      %s43 = sshll.u32 [#allocation4], 4
      %s44 = int_to_ptr.vmem [resolvable:$true] %s43
      %49 = dma.hbm_to_vmem [thread:$0]  %s3, 49152, %s44, [#allocation5], 512, 512, 32
    $region17: #{multimodal_forward.1} parent=1 // pred_fallthru
      _
    // Predicated region
    $region18: #{multimodal_forward.1} parent=1 // pred_check
      _
    $region19: #{multimodal_forward.1} parent=1 // pred_check_branch
      %51 = sbr.rel (0) target = $region21
    $region20: #{multimodal_forward.1} parent=1 // pred_region
      %s53 = ssub.s32 1024, 1024
      %54 = vsyncadd [#allocation5], %s53
      %s55 = sshll.u32 [#allocation6], 4
      %s56 = int_to_ptr.vmem [resolvable:$true] %s55
      %61 = dma.hbm_to_vmem [thread:$0]  %s4, 1024, %s56, [#allocation5], 512, 512, 32
    $region21: #{multimodal_forward.1} parent=1 // pred_fallthru
      _
    // Predicated region
    $region22: #{multimodal_forward.1} parent=1 // pred_check
      _
    $region23: #{multimodal_forward.1} parent=1 // pred_check_branch
      %63 = sbr.rel (0) target = $region25
    $region24: #{multimodal_forward.1} parent=1 // pred_region
      %s65 = ssub.s32 16384, 16384
      %66 = vsyncadd [#allocation8], %s65
      %s67 = sshll.u32 [#allocation7], 4
      %s68 = int_to_ptr.vmem [resolvable:$true] %s67
      %73 = dma.hbm_to_vmem [thread:$0]  %s5, 16384, %s68, [#allocation8], 1024, 1024, 64
    $region25: #{multimodal_forward.1} parent=1 // pred_fallthru
      _
    // Predicated region
    $region26: #{multimodal_forward.1} parent=1 // pred_check
      _
    $region27: #{multimodal_forward.1} parent=1 // pred_check_branch
      %75 = sbr.rel (0) target = $region29
    $region28: #{multimodal_forward.1} parent=1 // pred_region
      %s77 = ssub.s32 16384, 16384
      %78 = vsyncadd [#allocation8], %s77
      %s79 = sshll.u32 [#allocation9], 4
      %s80 = int_to_ptr.vmem [resolvable:$true] %s79
      %85 = dma.hbm_to_vmem [thread:$0]  %s6, 16384, %s80, [#allocation8], 1024, 1024, 64
    $region29: #{multimodal_forward.1} parent=1 // pred_fallthru
      _
    // Predicated region
    $region30: #{multimodal_forward.1} parent=1 // pred_check
      _
    $region31: #{multimodal_forward.1} parent=1 // pred_check_branch
      %87 = sbr.rel (0) target = $region33
    $region32: #{multimodal_forward.1} parent=1 // pred_region
      %s89 = ssub.s32 24576, 24576
      %90 = vsyncadd [#allocation11], %s89
      %s91 = sshll.u32 [#allocation10], 4
      %s92 = int_to_ptr.vmem [resolvable:$true] %s91
      %97 = dma.hbm_to_vmem [thread:$0]  %s7, 24576, %s92, [#allocation11], 768, 768, 48
    $region33: #{multimodal_forward.1} parent=1 // pred_fallthru
      _
    // Predicated region
    $region34: #{multimodal_forward.1} parent=1 // pred_check
      _
    $region35: #{multimodal_forward.1} parent=1 // pred_check_branch
      %99 = sbr.rel (0) target = $region37
    $region36: #{multimodal_forward.1} parent=1 // pred_region
      %s101 = ssub.s32 18432, 18432
      %102 = vsyncadd [#allocation11], %s101
      %s103 = sshll.u32 [#allocation12], 4
      %s104 = int_to_ptr.vmem [resolvable:$true] %s103
      %109 = dma.hbm_to_vmem [thread:$0]  %s8, 18432, %s104, [#allocation11], 768, 768, 48
    $region37: #{multimodal_forward.1} parent=1 // pred_fallthru
      _
    // Predicated region
    $region38: #{multimodal_forward.1} parent=1 // pred_check
      _
    $region39: #{multimodal_forward.1} parent=1 // pred_check_branch
      %111 = sbr.rel (0) target = $region41
    $region40: #{multimodal_forward.1} parent=1 // pred_region
      %s113 = ssub.s32 18432, 18432
      %114 = vsyncadd [#allocation14], %s113
      %s115 = sshll.u32 [#allocation13], 4
      %s116 = int_to_ptr.vmem [resolvable:$true] %s115
      %121 = dma.hbm_to_vmem [thread:$0]  %s9, 18432, %s116, [#allocation14], 768, 768, 48
    $region41: #{multimodal_forward.1} parent=1 // pred_fallthru
      _
    // Predicated region
    $region42: #{multimodal_forward.1} parent=1 // pred_check
      _
    $region43: #{multimodal_forward.1} parent=1 // pred_check_branch
      %123 = sbr.rel (0) target = $region45
    $region44: #{multimodal_forward.1} parent=1 // pred_region
      %s125 = ssub.s32 24576, 24576
      %126 = vsyncadd [#allocation14], %s125
      %s127 = sshll.u32 [#allocation15], 4
      %s128 = int_to_ptr.vmem [resolvable:$true] %s127
      %133 = dma.hbm_to_vmem [thread:$0]  %s10, 24576, %s128, [#allocation14], 1024, 1024, 64
    $region45: #{multimodal_forward.1} parent=1 // pred_fallthru
      _
    // Predicated region
    $region46: #{multimodal_forward.1} parent=1 // pred_check
      _
    $region47: #{multimodal_forward.1} parent=1 // pred_check_branch
      %135 = sbr.rel (0) target = $region49
    $region48: #{multimodal_forward.1} parent=1 // pred_region
      %s137 = ssub.s32 24576, 24576
      %138 = vsyncadd [#allocation17], %s137
      %s139 = sshll.u32 [#allocation16], 4
      %s140 = int_to_ptr.vmem [resolvable:$true] %s139
      %145 = dma.hbm_to_vmem [thread:$0]  %s11, 24576, %s140, [#allocation17], 768, 768, 48
    $region49: #{multimodal_forward.1} parent=1 // pred_fallthru
      _
    // Predicated region
    $region50: #{multimodal_forward.1} parent=1 // pred_check
      _
    $region51: #{multimodal_forward.1} parent=1 // pred_check_branch
      %147 = sbr.rel (0) target = $region53
    $region52: #{multimodal_forward.1} parent=1 // pred_region
      %s149 = ssub.s32 6144, 6144
      %150 = vsyncadd [#allocation17], %s149
      %s151 = sshll.u32 [#allocation18], 4
      %s152 = int_to_ptr.vmem [resolvable:$true] %s151
      %157 = dma.hbm_to_vmem [thread:$0]  %s12, 6144, %s152, [#allocation17], 256, 256, 16
    $region53: #{multimodal_forward.1} parent=1 // pred_fallthru
      _
    // Predicated region
    $region54: #{multimodal_forward.1} parent=1 // pred_check
      _
    $region55: #{multimodal_forward.1} parent=1 // pred_check_branch
      %159 = sbr.rel (0) target = $region57
    $region56: #{multimodal_forward.1} parent=1 // pred_region
      %160 = dma.done [#allocation3], 2496
    $region57: #{multimodal_forward.1} parent=1 // pred_fallthru
      _
    // Predicated region
    $region58: #{multimodal_forward.1} parent=1 // pred_check
      _
    $region59: #{multimodal_forward.1} parent=1 // pred_check_branch
      %162 = sbr.rel (0) target = $region61
    $region60: #{multimodal_forward.1} parent=1 // pred_region
      %163 = dma.done [#allocation5], 49152
    $region61: #{multimodal_forward.1} parent=1 // pred_fallthru
      _
    // Predicated region
    $region62: #{multimodal_forward.1} parent=1 // pred_check
      _
    $region63: #{multimodal_forward.1} parent=1 // pred_check_branch
      %165 = sbr.rel (0) target = $region65
    $region64: #{multimodal_forward.1} parent=1 // pred_region
      %166 = dma.done [#allocation5], 1024
    $region65: #{multimodal_forward.1} parent=1 // pred_fallthru
      _
    // Predicated region
    $region66: #{multimodal_forward.1} parent=1 // pred_check
      _
    $region67: #{multimodal_forward.1} parent=1 // pred_check_branch
      %168 = sbr.rel (0) target = $region69
    $region68: #{multimodal_forward.1} parent=1 // pred_region
      %169 = dma.done [#allocation8], 16384
    $region69: #{multimodal_forward.1} parent=1 // pred_fallthru
      _
    // Predicated region
    $region70: #{multimodal_forward.1} parent=1 // pred_check
      _
    $region71: #{multimodal_forward.1} parent=1 // pred_check_branch
      %171 = sbr.rel (0) target = $region73
    $region72: #{multimodal_forward.1} parent=1 // pred_region
      %172 = dma.done [#allocation8], 16384
    $region73: #{multimodal_forward.1} parent=1 // pred_fallthru
      _
    // Predicated region
    $region74: #{multimodal_forward.1} parent=1 // pred_check
      _
    $region75: #{multimodal_forward.1} parent=1 // pred_check_branch
      %174 = sbr.rel (0) target = $region77
    $region76: #{multimodal_forward.1} parent=1 // pred_region
      %175 = dma.done [#allocation11], 24576
    $region77: #{multimodal_forward.1} parent=1 // pred_fallthru
      _
    // Predicated region
    $region78: #{multimodal_forward.1} parent=1 // pred_check
      _
    $region79: #{multimodal_forward.1} parent=1 // pred_check_branch
      %177 = sbr.rel (0) target = $region81
    $region80: #{multimodal_forward.1} parent=1 // pred_region
      %178 = dma.done [#allocation11], 18432
    $region81: #{multimodal_forward.1} parent=1 // pred_fallthru
      _
    // Predicated region
    $region82: #{multimodal_forward.1} parent=1 // pred_check
      _
    $region83: #{multimodal_forward.1} parent=1 // pred_check_branch
      %180 = sbr.rel (0) target = $region85
    $region84: #{multimodal_forward.1} parent=1 // pred_region
      %181 = dma.done [#allocation14], 18432
    $region85: #{multimodal_forward.1} parent=1 // pred_fallthru
      _
    // Predicated region
    $region86: #{multimodal_forward.1} parent=1 // pred_check
      _
    $region87: #{multimodal_forward.1} parent=1 // pred_check_branch
      %183 = sbr.rel (0) target = $region89
    $region88: #{multimodal_forward.1} parent=1 // pred_region
      %184 = dma.done [#allocation14], 24576
    $region89: #{multimodal_forward.1} parent=1 // pred_fallthru
      _
    // Predicated region
    $region90: #{multimodal_forward.1} parent=1 // pred_check
      _
    $region91: #{multimodal_forward.1} parent=1 // pred_check_branch
      %186 = sbr.rel (0) target = $region93
    $region92: #{multimodal_forward.1} parent=1 // pred_region
      %187 = dma.done [#allocation17], 24576
    $region93: #{multimodal_forward.1} parent=1 // pred_fallthru
      _
    // Predicated region
    $region94: #{multimodal_forward.1} parent=1 // pred_check
      _
    $region95: #{multimodal_forward.1} parent=1 // pred_check_branch
      %189 = sbr.rel (0) target = $region97
    $region96: #{multimodal_forward.1} parent=1 // pred_region
      %190 = dma.done [#allocation17], 6144
    $region97: #{multimodal_forward.1} parent=1 // pred_fallthru
      _
    %v192 = vld [vmem:[%s0] sm:$0xff]
    %v193 = vld [vmem:[%s0 + $0x8] sm:$0xff]
    %v194 = vld [vmem:[%s0 + $0x10] sm:$0xff]
    %v195 = vld [vmem:[%s0 + $0x18] sm:$0xff]
    %v196 = vld [vmem:[%s0 + $0x20] sm:$0xff]
    %v197 = vld [vmem:[%s0 + $0x28] sm:$0xff]
    %v198 = vld [vmem:[%s0 + $0x30] sm:$0xff]
    %v199 = vld [vmem:[%s0 + $0x38] sm:$0xff]
    %v200 = vld [vmem:[%s0 + $0x40] sm:$0xff]
    %v201 = vld [vmem:[%s0 + $0x48] sm:$0xff]
    %v202 = vld [vmem:[%s0 + $0x50] sm:$0xff]
    %v203 = vld [vmem:[%s0 + $0x58] sm:$0xff]
    %v204 = vld [vmem:[%s0 + $0x60] sm:$0xff]
    %v205 = vld [vmem:[%s0 + $0x68] sm:$0xff]
    %v206 = vld [vmem:[%s0 + $0x70] sm:$0xff]
    %v207 = vld [vmem:[%s0 + $0x78] sm:$0xff]
    %v208 = vld [vmem:[%s0 + $0x80] sm:$0xff]
    %v209 = vld [vmem:[%s0 + $0x88] sm:$0xff]
    %v210 = vld [vmem:[%s0 + $0x90] sm:$0xff]
    %v211 = vld [vmem:[%s0 + $0x98] sm:$0xff]
    %v212 = vld [vmem:[%s0 + $0xa0] sm:$0xff]
    %v213 = vld [vmem:[%s0 + $0xa8] sm:$0xff]
    %v214 = vld [vmem:[%s0 + $0xb0] sm:$0xff]
    %v215 = vld [vmem:[%s0 + $0xb8] sm:$0xff]
    %v216 = vld [vmem:[#allocation2 + $0x62] sm:$0xf]
    %v217 = vld [vmem:[#allocation4] sm:$0xff]
    %v218 = vld [vmem:[#allocation4 + $0x8] sm:$0xff]
    %v219 = vld [vmem:[#allocation4 + $0x10] sm:$0xff]
    %v220 = vld [vmem:[#allocation4 + $0x18] sm:$0xff]
    %v221 = vld [vmem:[#allocation4 + $0x20] sm:$0xff]
    %v222 = vld [vmem:[#allocation4 + $0x28] sm:$0xff]
    %v223 = vld [vmem:[#allocation4 + $0x30] sm:$0xff]
    %v224 = vld [vmem:[#allocation4 + $0x38] sm:$0xff]
    %v225 = vld [vmem:[#allocation4 + $0x40] sm:$0xff]
    %v226 = vld [vmem:[#allocation4 + $0x48] sm:$0xff]
    %v227 = vld [vmem:[#allocation4 + $0x50] sm:$0xff]
    %v228 = vld [vmem:[#allocation4 + $0x58] sm:$0xff]
    %v229 = vld [vmem:[#allocation4 + $0x60] sm:$0xff]
    %v230 = vld [vmem:[#allocation4 + $0x68] sm:$0xff]
    %v231 = vld [vmem:[#allocation4 + $0x70] sm:$0xff]
    %v232 = vld [vmem:[#allocation4 + $0x78] sm:$0xff]
    %v233 = vld [vmem:[#allocation4 + $0x80] sm:$0xff]
    %v234 = vld [vmem:[#allocation4 + $0x88] sm:$0xff]
    %v235 = vld [vmem:[#allocation4 + $0x90] sm:$0xff]
    %v236 = vld [vmem:[#allocation4 + $0x98] sm:$0xff]
    %v237 = vld [vmem:[#allocation4 + $0xa0] sm:$0xff]
    %v238 = vld [vmem:[#allocation4 + $0xa8] sm:$0xff]
    %v239 = vld [vmem:[#allocation4 + $0xb0] sm:$0xff]
    %v240 = vld [vmem:[#allocation4 + $0xb8] sm:$0xff]
    %v241 = vld [vmem:[#allocation4 + $0xc0] sm:$0xff]
    %v242 = vld [vmem:[#allocation4 + $0xc8] sm:$0xff]
    %v243 = vld [vmem:[#allocation4 + $0xd0] sm:$0xff]
    %v244 = vld [vmem:[#allocation4 + $0xd8] sm:$0xff]
    %v245 = vld [vmem:[#allocation4 + $0xe0] sm:$0xff]
    %v246 = vld [vmem:[#allocation4 + $0xe8] sm:$0xff]
    %v247 = vld [vmem:[#allocation4 + $0xf0] sm:$0xff]
    %v248 = vld [vmem:[#allocation4 + $0xf8] sm:$0xff]
    %v249 = vld [vmem:[#allocation4 + $0x100] sm:$0xff]
    %v250 = vld [vmem:[#allocation4 + $0x108] sm:$0xff]
    %v251 = vld [vmem:[#allocation4 + $0x110] sm:$0xff]
    %v252 = vld [vmem:[#allocation4 + $0x118] sm:$0xff]
    %v253 = vld [vmem:[#allocation4 + $0x120] sm:$0xff]
    %v254 = vld [vmem:[#allocation4 + $0x128] sm:$0xff]
    %v255 = vld [vmem:[#allocation4 + $0x130] sm:$0xff]
    %v256 = vld [vmem:[#allocation4 + $0x138] sm:$0xff]
    %v257 = vld [vmem:[#allocation4 + $0x140] sm:$0xff]
    %v258 = vld [vmem:[#allocation4 + $0x148] sm:$0xff]
    %v259 = vld [vmem:[#allocation4 + $0x150] sm:$0xff]
    %v260 = vld [vmem:[#allocation4 + $0x158] sm:$0xff]
    %v261 = vld [vmem:[#allocation4 + $0x160] sm:$0xff]
    %v262 = vld [vmem:[#allocation4 + $0x168] sm:$0xff]
    %v263 = vld [vmem:[#allocation4 + $0x170] sm:$0xff]
    %v264 = vld [vmem:[#allocation4 + $0x178] sm:$0xff]
    %v265 = vld [vmem:[#allocation4 + $0x180] sm:$0xff]
    %v266 = vld [vmem:[#allocation4 + $0x188] sm:$0xff]
    %v267 = vld [vmem:[#allocation4 + $0x190] sm:$0xff]
    %v268 = vld [vmem:[#allocation4 + $0x198] sm:$0xff]
    %v269 = vld [vmem:[#allocation4 + $0x1a0] sm:$0xff]
    %v270 = vld [vmem:[#allocation4 + $0x1a8] sm:$0xff]
    %v271 = vld [vmem:[#allocation4 + $0x1b0] sm:$0xff]
    %v272 = vld [vmem:[#allocation4 + $0x1b8] sm:$0xff]
    %v273 = vld [vmem:[#allocation4 + $0x1c0] sm:$0xff]
    %v274 = vld [vmem:[#allocation4 + $0x1c8] sm:$0xff]
    %v275 = vld [vmem:[#allocation4 + $0x1d0] sm:$0xff]
    %v276 = vld [vmem:[#allocation4 + $0x1d8] sm:$0xff]
    %v277 = vld [vmem:[#allocation4 + $0x1e0] sm:$0xff]
    %v278 = vld [vmem:[#allocation4 + $0x1e8] sm:$0xff]
    %v279 = vld [vmem:[#allocation4 + $0x1f0] sm:$0xff]
    %v280 = vld [vmem:[#allocation4 + $0x1f8] sm:$0xff]
    %v281 = vld [vmem:[#allocation4 + $0x200] sm:$0xff]
    %v282 = vld [vmem:[#allocation4 + $0x208] sm:$0xff]
    %v283 = vld [vmem:[#allocation4 + $0x210] sm:$0xff]
    %v284 = vld [vmem:[#allocation4 + $0x218] sm:$0xff]
    %v285 = vld [vmem:[#allocation4 + $0x220] sm:$0xff]
    %v286 = vld [vmem:[#allocation4 + $0x228] sm:$0xff]
    %v287 = vld [vmem:[#allocation4 + $0x230] sm:$0xff]
    %v288 = vld [vmem:[#allocation4 + $0x238] sm:$0xff]
    %v289 = vld [vmem:[#allocation4 + $0x240] sm:$0xff]
    %v290 = vld [vmem:[#allocation4 + $0x248] sm:$0xff]
    %v291 = vld [vmem:[#allocation4 + $0x250] sm:$0xff]
    %v292 = vld [vmem:[#allocation4 + $0x258] sm:$0xff]
    %v293 = vld [vmem:[#allocation4 + $0x260] sm:$0xff]
    %v294 = vld [vmem:[#allocation4 + $0x268] sm:$0xff]
    %v295 = vld [vmem:[#allocation4 + $0x270] sm:$0xff]
    %v296 = vld [vmem:[#allocation4 + $0x278] sm:$0xff]
    %v297 = vld [vmem:[#allocation4 + $0x280] sm:$0xff]
    %v298 = vld [vmem:[#allocation4 + $0x288] sm:$0xff]
    %v299 = vld [vmem:[#allocation4 + $0x290] sm:$0xff]
    %v300 = vld [vmem:[#allocation4 + $0x298] sm:$0xff]
    %v301 = vld [vmem:[#allocation4 + $0x2a0] sm:$0xff]
    %v302 = vld [vmem:[#allocation4 + $0x2a8] sm:$0xff]
    %v303 = vld [vmem:[#allocation4 + $0x2b0] sm:$0xff]
    %v304 = vld [vmem:[#allocation4 + $0x2b8] sm:$0xff]
    %v305 = vld [vmem:[#allocation4 + $0x2c0] sm:$0xff]
    %v306 = vld [vmem:[#allocation4 + $0x2c8] sm:$0xff]
    %v307 = vld [vmem:[#allocation4 + $0x2d0] sm:$0xff]
    %v308 = vld [vmem:[#allocation4 + $0x2d8] sm:$0xff]
    %v309 = vld [vmem:[#allocation4 + $0x2e0] sm:$0xff]
    %v310 = vld [vmem:[#allocation4 + $0x2e8] sm:$0xff]
    %v311 = vld [vmem:[#allocation4 + $0x2f0] sm:$0xff]
    %v312 = vld [vmem:[#allocation4 + $0x2f8] sm:$0xff]
    %v313 = vld [vmem:[#allocation4 + $0x300] sm:$0xff]
    %v314 = vld [vmem:[#allocation4 + $0x308] sm:$0xff]
    %v315 = vld [vmem:[#allocation4 + $0x310] sm:$0xff]
    %v316 = vld [vmem:[#allocation4 + $0x318] sm:$0xff]
    %v317 = vld [vmem:[#allocation4 + $0x320] sm:$0xff]
    %v318 = vld [vmem:[#allocation4 + $0x328] sm:$0xff]
    %v319 = vld [vmem:[#allocation4 + $0x330] sm:$0xff]
    %v320 = vld [vmem:[#allocation4 + $0x338] sm:$0xff]
    %v321 = vld [vmem:[#allocation4 + $0x340] sm:$0xff]
    %v322 = vld [vmem:[#allocation4 + $0x348] sm:$0xff]
    %v323 = vld [vmem:[#allocation4 + $0x350] sm:$0xff]
    %v324 = vld [vmem:[#allocation4 + $0x358] sm:$0xff]
    %v325 = vld [vmem:[#allocation4 + $0x360] sm:$0xff]
    %v326 = vld [vmem:[#allocation4 + $0x368] sm:$0xff]
    %v327 = vld [vmem:[#allocation4 + $0x370] sm:$0xff]
    %v328 = vld [vmem:[#allocation4 + $0x378] sm:$0xff]
    %v329 = vld [vmem:[#allocation4 + $0x380] sm:$0xff]
    %v330 = vld [vmem:[#allocation4 + $0x388] sm:$0xff]
    %v331 = vld [vmem:[#allocation4 + $0x390] sm:$0xff]
    %v332 = vld [vmem:[#allocation4 + $0x398] sm:$0xff]
    %v333 = vld [vmem:[#allocation4 + $0x3a0] sm:$0xff]
    %v334 = vld [vmem:[#allocation4 + $0x3a8] sm:$0xff]
    %v335 = vld [vmem:[#allocation4 + $0x3b0] sm:$0xff]
    %v336 = vld [vmem:[#allocation4 + $0x3b8] sm:$0xff]
    %v337 = vld [vmem:[#allocation4 + $0x3c0] sm:$0xff]
    %v338 = vld [vmem:[#allocation4 + $0x3c8] sm:$0xff]
    %v339 = vld [vmem:[#allocation4 + $0x3d0] sm:$0xff]
    %v340 = vld [vmem:[#allocation4 + $0x3d8] sm:$0xff]
    %v341 = vld [vmem:[#allocation4 + $0x3e0] sm:$0xff]
    %v342 = vld [vmem:[#allocation4 + $0x3e8] sm:$0xff]
    %v343 = vld [vmem:[#allocation4 + $0x3f0] sm:$0xff]
    %v344 = vld [vmem:[#allocation4 + $0x3f8] sm:$0xff]
    %v345 = vld [vmem:[#allocation4 + $0x400] sm:$0xff]
    %v346 = vld [vmem:[#allocation4 + $0x408] sm:$0xff]
    %v347 = vld [vmem:[#allocation4 + $0x410] sm:$0xff]
    %v348 = vld [vmem:[#allocation4 + $0x418] sm:$0xff]
    %v349 = vld [vmem:[#allocation4 + $0x420] sm:$0xff]
    %v350 = vld [vmem:[#allocation4 + $0x428] sm:$0xff]
    %v351 = vld [vmem:[#allocation4 + $0x430] sm:$0xff]
    %v352 = vld [vmem:[#allocation4 + $0x438] sm:$0xff]
    %v353 = vld [vmem:[#allocation4 + $0x440] sm:$0xff]
    %v354 = vld [vmem:[#allocation4 + $0x448] sm:$0xff]
    %v355 = vld [vmem:[#allocation4 + $0x450] sm:$0xff]
    %v356 = vld [vmem:[#allocation4 + $0x458] sm:$0xff]
    %v357 = vld [vmem:[#allocation4 + $0x460] sm:$0xff]
    %v358 = vld [vmem:[#allocation4 + $0x468] sm:$0xff]
    %v359 = vld [vmem:[#allocation4 + $0x470] sm:$0xff]
    %v360 = vld [vmem:[#allocation4 + $0x478] sm:$0xff]
    %v361 = vld [vmem:[#allocation4 + $0x480] sm:$0xff]
    %v362 = vld [vmem:[#allocation4 + $0x488] sm:$0xff]
    %v363 = vld [vmem:[#allocation4 + $0x490] sm:$0xff]
    %v364 = vld [vmem:[#allocation4 + $0x498] sm:$0xff]
    %v365 = vld [vmem:[#allocation4 + $0x4a0] sm:$0xff]
    %v366 = vld [vmem:[#allocation4 + $0x4a8] sm:$0xff]
    %v367 = vld [vmem:[#allocation4 + $0x4b0] sm:$0xff]
    %v368 = vld [vmem:[#allocation4 + $0x4b8] sm:$0xff]
    %v369 = vld [vmem:[#allocation4 + $0x4c0] sm:$0xff]
    %v370 = vld [vmem:[#allocation4 + $0x4c8] sm:$0xff]
    %v371 = vld [vmem:[#allocation4 + $0x4d0] sm:$0xff]
    %v372 = vld [vmem:[#allocation4 + $0x4d8] sm:$0xff]
    %v373 = vld [vmem:[#allocation4 + $0x4e0] sm:$0xff]
    %v374 = vld [vmem:[#allocation4 + $0x4e8] sm:$0xff]
    %v375 = vld [vmem:[#allocation4 + $0x4f0] sm:$0xff]
    %v376 = vld [vmem:[#allocation4 + $0x4f8] sm:$0xff]
    %v377 = vld [vmem:[#allocation4 + $0x500] sm:$0xff]
    %v378 = vld [vmem:[#allocation4 + $0x508] sm:$0xff]
    %v379 = vld [vmem:[#allocation4 + $0x510] sm:$0xff]
    %v380 = vld [vmem:[#allocation4 + $0x518] sm:$0xff]
    %v381 = vld [vmem:[#allocation4 + $0x520] sm:$0xff]
    %v382 = vld [vmem:[#allocation4 + $0x528] sm:$0xff]
    %v383 = vld [vmem:[#allocation4 + $0x530] sm:$0xff]
    %v384 = vld [vmem:[#allocation4 + $0x538] sm:$0xff]
    %v385 = vld [vmem:[#allocation4 + $0x540] sm:$0xff]
    %v386 = vld [vmem:[#allocation4 + $0x548] sm:$0xff]
    %v387 = vld [vmem:[#allocation4 + $0x550] sm:$0xff]
    %v388 = vld [vmem:[#allocation4 + $0x558] sm:$0xff]
    %v389 = vld [vmem:[#allocation4 + $0x560] sm:$0xff]
    %v390 = vld [vmem:[#allocation4 + $0x568] sm:$0xff]
    %v391 = vld [vmem:[#allocation4 + $0x570] sm:$0xff]
    %v392 = vld [vmem:[#allocation4 + $0x578] sm:$0xff]
    %v393 = vld [vmem:[#allocation4 + $0x580] sm:$0xff]
    %v394 = vld [vmem:[#allocation4 + $0x588] sm:$0xff]
    %v395 = vld [vmem:[#allocation4 + $0x590] sm:$0xff]
    %v396 = vld [vmem:[#allocation4 + $0x598] sm:$0xff]
    %v397 = vld [vmem:[#allocation4 + $0x5a0] sm:$0xff]
    %v398 = vld [vmem:[#allocation4 + $0x5a8] sm:$0xff]
    %v399 = vld [vmem:[#allocation4 + $0x5b0] sm:$0xff]
    %v400 = vld [vmem:[#allocation4 + $0x5b8] sm:$0xff]
    %v401 = vld [vmem:[#allocation4 + $0x5c0] sm:$0xff]
    %v402 = vld [vmem:[#allocation4 + $0x5c8] sm:$0xff]
    %v403 = vld [vmem:[#allocation4 + $0x5d0] sm:$0xff]
    %v404 = vld [vmem:[#allocation4 + $0x5d8] sm:$0xff]
    %v405 = vld [vmem:[#allocation4 + $0x5e0] sm:$0xff]
    %v406 = vld [vmem:[#allocation4 + $0x5e8] sm:$0xff]
    %v407 = vld [vmem:[#allocation4 + $0x5f0] sm:$0xff]
    %v408 = vld [vmem:[#allocation4 + $0x5f8] sm:$0xff]
    %v409 = vld [vmem:[#allocation4 + $0x600] sm:$0xff]
    %v410 = vld [vmem:[#allocation4 + $0x608] sm:$0xff]
    %v411 = vld [vmem:[#allocation4 + $0x610] sm:$0xff]
    %v412 = vld [vmem:[#allocation4 + $0x618] sm:$0xff]
    %v413 = vld [vmem:[#allocation4 + $0x620] sm:$0xff]
    %v414 = vld [vmem:[#allocation4 + $0x628] sm:$0xff]
    %v415 = vld [vmem:[#allocation4 + $0x630] sm:$0xff]
    %v416 = vld [vmem:[#allocation4 + $0x638] sm:$0xff]
    %v417 = vld [vmem:[#allocation4 + $0x640] sm:$0xff]
    %v418 = vld [vmem:[#allocation4 + $0x648] sm:$0xff]
    %v419 = vld [vmem:[#allocation4 + $0x650] sm:$0xff]
    %v420 = vld [vmem:[#allocation4 + $0x658] sm:$0xff]
    %v421 = vld [vmem:[#allocation4 + $0x660] sm:$0xff]
    %v422 = vld [vmem:[#allocation4 + $0x668] sm:$0xff]
    %v423 = vld [vmem:[#allocation4 + $0x670] sm:$0xff]
    %v424 = vld [vmem:[#allocation4 + $0x678] sm:$0xff]
    %v425 = vld [vmem:[#allocation4 + $0x680] sm:$0xff]
    %v426 = vld [vmem:[#allocation4 + $0x688] sm:$0xff]
    %v427 = vld [vmem:[#allocation4 + $0x690] sm:$0xff]
    %v428 = vld [vmem:[#allocation4 + $0x698] sm:$0xff]
    %v429 = vld [vmem:[#allocation4 + $0x6a0] sm:$0xff]
    %v430 = vld [vmem:[#allocation4 + $0x6a8] sm:$0xff]
    %v431 = vld [vmem:[#allocation4 + $0x6b0] sm:$0xff]
    %v432 = vld [vmem:[#allocation4 + $0x6b8] sm:$0xff]
    %v433 = vld [vmem:[#allocation4 + $0x6c0] sm:$0xff]
    %v434 = vld [vmem:[#allocation4 + $0x6c8] sm:$0xff]
    %v435 = vld [vmem:[#allocation4 + $0x6d0] sm:$0xff]
    %v436 = vld [vmem:[#allocation4 + $0x6d8] sm:$0xff]
    %v437 = vld [vmem:[#allocation4 + $0x6e0] sm:$0xff]
    %v438 = vld [vmem:[#allocation4 + $0x6e8] sm:$0xff]
    %v439 = vld [vmem:[#allocation4 + $0x6f0] sm:$0xff]
    %v440 = vld [vmem:[#allocation4 + $0x6f8] sm:$0xff]
    %v441 = vld [vmem:[#allocation4 + $0x700] sm:$0xff]
    %v442 = vld [vmem:[#allocation4 + $0x708] sm:$0xff]
    %v443 = vld [vmem:[#allocation4 + $0x710] sm:$0xff]
    %v444 = vld [vmem:[#allocation4 + $0x718] sm:$0xff]
    %v445 = vld [vmem:[#allocation4 + $0x720] sm:$0xff]
    %v446 = vld [vmem:[#allocation4 + $0x728] sm:$0xff]
    %v447 = vld [vmem:[#allocation4 + $0x730] sm:$0xff]
    %v448 = vld [vmem:[#allocation4 + $0x738] sm:$0xff]
    %v449 = vld [vmem:[#allocation4 + $0x740] sm:$0xff]
    %v450 = vld [vmem:[#allocation4 + $0x748] sm:$0xff]
    %v451 = vld [vmem:[#allocation4 + $0x750] sm:$0xff]
    %v452 = vld [vmem:[#allocation4 + $0x758] sm:$0xff]
    %v453 = vld [vmem:[#allocation4 + $0x760] sm:$0xff]
    %v454 = vld [vmem:[#allocation4 + $0x768] sm:$0xff]
    %v455 = vld [vmem:[#allocation4 + $0x770] sm:$0xff]
    %v456 = vld [vmem:[#allocation4 + $0x778] sm:$0xff]
    %v457 = vld [vmem:[#allocation4 + $0x780] sm:$0xff]
    %v458 = vld [vmem:[#allocation4 + $0x788] sm:$0xff]
    %v459 = vld [vmem:[#allocation4 + $0x790] sm:$0xff]
    %v460 = vld [vmem:[#allocation4 + $0x798] sm:$0xff]
    %v461 = vld [vmem:[#allocation4 + $0x7a0] sm:$0xff]
    %v462 = vld [vmem:[#allocation4 + $0x7a8] sm:$0xff]
    %v463 = vld [vmem:[#allocation4 + $0x7b0] sm:$0xff]
    %v464 = vld [vmem:[#allocation4 + $0x7b8] sm:$0xff]
    %v465 = vld [vmem:[#allocation4 + $0x7c0] sm:$0xff]
    %v466 = vld [vmem:[#allocation4 + $0x7c8] sm:$0xff]
    %v467 = vld [vmem:[#allocation4 + $0x7d0] sm:$0xff]
    %v468 = vld [vmem:[#allocation4 + $0x7d8] sm:$0xff]
    %v469 = vld [vmem:[#allocation4 + $0x7e0] sm:$0xff]
    %v470 = vld [vmem:[#allocation4 + $0x7e8] sm:$0xff]
    %v471 = vld [vmem:[#allocation4 + $0x7f0] sm:$0xff]
    %v472 = vld [vmem:[#allocation4 + $0x7f8] sm:$0xff]
    %v473 = vld [vmem:[#allocation4 + $0x800] sm:$0xff]
    %v474 = vld [vmem:[#allocation4 + $0x808] sm:$0xff]
    %v475 = vld [vmem:[#allocation4 + $0x810] sm:$0xff]
    %v476 = vld [vmem:[#allocation4 + $0x818] sm:$0xff]
    %v477 = vld [vmem:[#allocation4 + $0x820] sm:$0xff]
    %v478 = vld [vmem:[#allocation4 + $0x828] sm:$0xff]
    %v479 = vld [vmem:[#allocation4 + $0x830] sm:$0xff]
    %v480 = vld [vmem:[#allocation4 + $0x838] sm:$0xff]
    %v481 = vld [vmem:[#allocation4 + $0x840] sm:$0xff]
    %v482 = vld [vmem:[#allocation4 + $0x848] sm:$0xff]
    %v483 = vld [vmem:[#allocation4 + $0x850] sm:$0xff]
    %v484 = vld [vmem:[#allocation4 + $0x858] sm:$0xff]
    %v485 = vld [vmem:[#allocation4 + $0x860] sm:$0xff]
    %v486 = vld [vmem:[#allocation4 + $0x868] sm:$0xff]
    %v487 = vld [vmem:[#allocation4 + $0x870] sm:$0xff]
    %v488 = vld [vmem:[#allocation4 + $0x878] sm:$0xff]
    %v489 = vld [vmem:[#allocation4 + $0x880] sm:$0xff]
    %v490 = vld [vmem:[#allocation4 + $0x888] sm:$0xff]
    %v491 = vld [vmem:[#allocation4 + $0x890] sm:$0xff]
    %v492 = vld [vmem:[#allocation4 + $0x898] sm:$0xff]
    %v493 = vld [vmem:[#allocation4 + $0x8a0] sm:$0xff]
    %v494 = vld [vmem:[#allocation4 + $0x8a8] sm:$0xff]
    %v495 = vld [vmem:[#allocation4 + $0x8b0] sm:$0xff]
    %v496 = vld [vmem:[#allocation4 + $0x8b8] sm:$0xff]
    %v497 = vld [vmem:[#allocation4 + $0x8c0] sm:$0xff]
    %v498 = vld [vmem:[#allocation4 + $0x8c8] sm:$0xff]
    %v499 = vld [vmem:[#allocation4 + $0x8d0] sm:$0xff]
    %v500 = vld [vmem:[#allocation4 + $0x8d8] sm:$0xff]
    %v501 = vld [vmem:[#allocation4 + $0x8e0] sm:$0xff]
    %v502 = vld [vmem:[#allocation4 + $0x8e8] sm:$0xff]
    %v503 = vld [vmem:[#allocation4 + $0x8f0] sm:$0xff]
    %v504 = vld [vmem:[#allocation4 + $0x8f8] sm:$0xff]
    %v505 = vld [vmem:[#allocation4 + $0x900] sm:$0xff]
    %v506 = vld [vmem:[#allocation4 + $0x908] sm:$0xff]
    %v507 = vld [vmem:[#allocation4 + $0x910] sm:$0xff]
    %v508 = vld [vmem:[#allocation4 + $0x918] sm:$0xff]
    %v509 = vld [vmem:[#allocation4 + $0x920] sm:$0xff]
    %v510 = vld [vmem:[#allocation4 + $0x928] sm:$0xff]
    %v511 = vld [vmem:[#allocation4 + $0x930] sm:$0xff]
    %v512 = vld [vmem:[#allocation4 + $0x938] sm:$0xff]
    %v513 = vld [vmem:[#allocation4 + $0x940] sm:$0xff]
    %v514 = vld [vmem:[#allocation4 + $0x948] sm:$0xff]
    %v515 = vld [vmem:[#allocation4 + $0x950] sm:$0xff]
    %v516 = vld [vmem:[#allocation4 + $0x958] sm:$0xff]
    %v517 = vld [vmem:[#allocation4 + $0x960] sm:$0xff]
    %v518 = vld [vmem:[#allocation4 + $0x968] sm:$0xff]
    %v519 = vld [vmem:[#allocation4 + $0x970] sm:$0xff]
    %v520 = vld [vmem:[#allocation4 + $0x978] sm:$0xff]
    %v521 = vld [vmem:[#allocation4 + $0x980] sm:$0xff]
    %v522 = vld [vmem:[#allocation4 + $0x988] sm:$0xff]
    %v523 = vld [vmem:[#allocation4 + $0x990] sm:$0xff]
    %v524 = vld [vmem:[#allocation4 + $0x998] sm:$0xff]
    %v525 = vld [vmem:[#allocation4 + $0x9a0] sm:$0xff]
    %v526 = vld [vmem:[#allocation4 + $0x9a8] sm:$0xff]
    %v527 = vld [vmem:[#allocation4 + $0x9b0] sm:$0xff]
    %v528 = vld [vmem:[#allocation4 + $0x9b8] sm:$0xff]
    %v529 = vld [vmem:[#allocation4 + $0x9c0] sm:$0xff]
    %v530 = vld [vmem:[#allocation4 + $0x9c8] sm:$0xff]
    %v531 = vld [vmem:[#allocation4 + $0x9d0] sm:$0xff]
    %v532 = vld [vmem:[#allocation4 + $0x9d8] sm:$0xff]
    %v533 = vld [vmem:[#allocation4 + $0x9e0] sm:$0xff]
    %v534 = vld [vmem:[#allocation4 + $0x9e8] sm:$0xff]
    %v535 = vld [vmem:[#allocation4 + $0x9f0] sm:$0xff]
    %v536 = vld [vmem:[#allocation4 + $0x9f8] sm:$0xff]
    %v537 = vld [vmem:[#allocation4 + $0xa00] sm:$0xff]
    %v538 = vld [vmem:[#allocation4 + $0xa08] sm:$0xff]
    %v539 = vld [vmem:[#allocation4 + $0xa10] sm:$0xff]
    %v540 = vld [vmem:[#allocation4 + $0xa18] sm:$0xff]
    %v541 = vld [vmem:[#allocation4 + $0xa20] sm:$0xff]
    %v542 = vld [vmem:[#allocation4 + $0xa28] sm:$0xff]
    %v543 = vld [vmem:[#allocation4 + $0xa30] sm:$0xff]
    %v544 = vld [vmem:[#allocation4 + $0xa38] sm:$0xff]
    %v545 = vld [vmem:[#allocation4 + $0xa40] sm:$0xff]
    %v546 = vld [vmem:[#allocation4 + $0xa48] sm:$0xff]
    %v547 = vld [vmem:[#allocation4 + $0xa50] sm:$0xff]
    %v548 = vld [vmem:[#allocation4 + $0xa58] sm:$0xff]
    %v549 = vld [vmem:[#allocation4 + $0xa60] sm:$0xff]
    %v550 = vld [vmem:[#allocation4 + $0xa68] sm:$0xff]
    %v551 = vld [vmem:[#allocation4 + $0xa70] sm:$0xff]
    %v552 = vld [vmem:[#allocation4 + $0xa78] sm:$0xff]
    %v553 = vld [vmem:[#allocation4 + $0xa80] sm:$0xff]
    %v554 = vld [vmem:[#allocation4 + $0xa88] sm:$0xff]
    %v555 = vld [vmem:[#allocation4 + $0xa90] sm:$0xff]
    %v556 = vld [vmem:[#allocation4 + $0xa98] sm:$0xff]
    %v557 = vld [vmem:[#allocation4 + $0xaa0] sm:$0xff]
    %v558 = vld [vmem:[#allocation4 + $0xaa8] sm:$0xff]
    %v559 = vld [vmem:[#allocation4 + $0xab0] sm:$0xff]
    %v560 = vld [vmem:[#allocation4 + $0xab8] sm:$0xff]
    %v561 = vld [vmem:[#allocation4 + $0xac0] sm:$0xff]
    %v562 = vld [vmem:[#allocation4 + $0xac8] sm:$0xff]
    %v563 = vld [vmem:[#allocation4 + $0xad0] sm:$0xff]
    %v564 = vld [vmem:[#allocation4 + $0xad8] sm:$0xff]
    %v565 = vld [vmem:[#allocation4 + $0xae0] sm:$0xff]
    %v566 = vld [vmem:[#allocation4 + $0xae8] sm:$0xff]
    %v567 = vld [vmem:[#allocation4 + $0xaf0] sm:$0xff]
    %v568 = vld [vmem:[#allocation4 + $0xaf8] sm:$0xff]
    %v569 = vld [vmem:[#allocation4 + $0xb00] sm:$0xff]
    %v570 = vld [vmem:[#allocation4 + $0xb08] sm:$0xff]
    %v571 = vld [vmem:[#allocation4 + $0xb10] sm:$0xff]
    %v572 = vld [vmem:[#allocation4 + $0xb18] sm:$0xff]
    %v573 = vld [vmem:[#allocation4 + $0xb20] sm:$0xff]
    %v574 = vld [vmem:[#allocation4 + $0xb28] sm:$0xff]
    %v575 = vld [vmem:[#allocation4 + $0xb30] sm:$0xff]
    %v576 = vld [vmem:[#allocation4 + $0xb38] sm:$0xff]
    %v577 = vld [vmem:[#allocation4 + $0xb40] sm:$0xff]
    %v578 = vld [vmem:[#allocation4 + $0xb48] sm:$0xff]
    %v579 = vld [vmem:[#allocation4 + $0xb50] sm:$0xff]
    %v580 = vld [vmem:[#allocation4 + $0xb58] sm:$0xff]
    %v581 = vld [vmem:[#allocation4 + $0xb60] sm:$0xff]
    %v582 = vld [vmem:[#allocation4 + $0xb68] sm:$0xff]
    %v583 = vld [vmem:[#allocation4 + $0xb70] sm:$0xff]
    %v584 = vld [vmem:[#allocation4 + $0xb78] sm:$0xff]
    %v585 = vld [vmem:[#allocation4 + $0xb80] sm:$0xff]
    %v586 = vld [vmem:[#allocation4 + $0xb88] sm:$0xff]
    %v587 = vld [vmem:[#allocation4 + $0xb90] sm:$0xff]
    %v588 = vld [vmem:[#allocation4 + $0xb98] sm:$0xff]
    %v589 = vld [vmem:[#allocation4 + $0xba0] sm:$0xff]
    %v590 = vld [vmem:[#allocation4 + $0xba8] sm:$0xff]
    %v591 = vld [vmem:[#allocation4 + $0xbb0] sm:$0xff]
    %v592 = vld [vmem:[#allocation4 + $0xbb8] sm:$0xff]
    %v593 = vld [vmem:[#allocation4 + $0xbc0] sm:$0xff]
    %v594 = vld [vmem:[#allocation4 + $0xbc8] sm:$0xff]
    %v595 = vld [vmem:[#allocation4 + $0xbd0] sm:$0xff]
    %v596 = vld [vmem:[#allocation4 + $0xbd8] sm:$0xff]
    %v597 = vld [vmem:[#allocation4 + $0xbe0] sm:$0xff]
    %v598 = vld [vmem:[#allocation4 + $0xbe8] sm:$0xff]
    %v599 = vld [vmem:[#allocation4 + $0xbf0] sm:$0xff]
    %v600 = vld [vmem:[#allocation4 + $0xbf8] sm:$0xff]
    %v601 = vunpack.c.l.s8.bf16 %v217
    %v602 = vunpack.c.l.s8.bf16 %v218
    %v603 = vunpack.c.l.s8.bf16 %v219
    %v604 = vunpack.c.l.s8.bf16 %v220
    %v605 = vunpack.c.h.s8.bf16 %v217
    %v606 = vunpack.c.h.s8.bf16 %v218
    %v607 = vunpack.c.h.s8.bf16 %v219
    %v608 = vunpack.c.h.s8.bf16 %v220
    %v609 = vunpack.c.l.s8.bf16 %v221
    %v610 = vunpack.c.l.s8.bf16 %v222
    %v611 = vunpack.c.l.s8.bf16 %v223
    %v612 = vunpack.c.l.s8.bf16 %v224
    %v613 = vunpack.c.h.s8.bf16 %v221
    %v614 = vunpack.c.h.s8.bf16 %v222
    %v615 = vunpack.c.h.s8.bf16 %v223
    %v616 = vunpack.c.h.s8.bf16 %v224
    %v617 = vunpack.c.l.s8.bf16 %v225
    %v618 = vunpack.c.l.s8.bf16 %v226
    %v619 = vunpack.c.l.s8.bf16 %v227
    %v620 = vunpack.c.l.s8.bf16 %v228
    %v621 = vunpack.c.h.s8.bf16 %v225
    %v622 = vunpack.c.h.s8.bf16 %v226
    %v623 = vunpack.c.h.s8.bf16 %v227
    %v624 = vunpack.c.h.s8.bf16 %v228
    %v625 = vunpack.c.l.s8.bf16 %v229
    %v626 = vunpack.c.l.s8.bf16 %v230
    %v627 = vunpack.c.l.s8.bf16 %v231
    %v628 = vunpack.c.l.s8.bf16 %v232
    %v629 = vunpack.c.h.s8.bf16 %v229
    %v630 = vunpack.c.h.s8.bf16 %v230
    %v631 = vunpack.c.h.s8.bf16 %v231
    %v632 = vunpack.c.h.s8.bf16 %v232
    %v633 = vunpack.c.l.s8.bf16 %v233
    %v634 = vunpack.c.l.s8.bf16 %v234
    %v635 = vunpack.c.l.s8.bf16 %v235
    %v636 = vunpack.c.l.s8.bf16 %v236
    %v637 = vunpack.c.h.s8.bf16 %v233
    %v638 = vunpack.c.h.s8.bf16 %v234
    %v639 = vunpack.c.h.s8.bf16 %v235
    %v640 = vunpack.c.h.s8.bf16 %v236
    %v641 = vunpack.c.l.s8.bf16 %v237
    %v642 = vunpack.c.l.s8.bf16 %v238
    %v643 = vunpack.c.l.s8.bf16 %v239
    %v644 = vunpack.c.l.s8.bf16 %v240
    %v645 = vunpack.c.h.s8.bf16 %v237
    %v646 = vunpack.c.h.s8.bf16 %v238
    %v647 = vunpack.c.h.s8.bf16 %v239
    %v648 = vunpack.c.h.s8.bf16 %v240
    %v649 = vunpack.c.l.s8.bf16 %v241
    %v650 = vunpack.c.l.s8.bf16 %v242
    %v651 = vunpack.c.l.s8.bf16 %v243
    %v652 = vunpack.c.l.s8.bf16 %v244
    %v653 = vunpack.c.h.s8.bf16 %v241
    %v654 = vunpack.c.h.s8.bf16 %v242
    %v655 = vunpack.c.h.s8.bf16 %v243
    %v656 = vunpack.c.h.s8.bf16 %v244
    %v657 = vunpack.c.l.s8.bf16 %v245
    %v658 = vunpack.c.l.s8.bf16 %v246
    %v659 = vunpack.c.l.s8.bf16 %v247
    %v660 = vunpack.c.l.s8.bf16 %v248
    %v661 = vunpack.c.h.s8.bf16 %v245
    %v662 = vunpack.c.h.s8.bf16 %v246
    %v663 = vunpack.c.h.s8.bf16 %v247
    %v664 = vunpack.c.h.s8.bf16 %v248
    %v665 = vunpack.c.l.s8.bf16 %v249
    %v666 = vunpack.c.l.s8.bf16 %v250
    %v667 = vunpack.c.l.s8.bf16 %v251
    %v668 = vunpack.c.l.s8.bf16 %v252
    %v669 = vunpack.c.h.s8.bf16 %v249
    %v670 = vunpack.c.h.s8.bf16 %v250
    %v671 = vunpack.c.h.s8.bf16 %v251
    %v672 = vunpack.c.h.s8.bf16 %v252
    %v673 = vunpack.c.l.s8.bf16 %v253
    %v674 = vunpack.c.l.s8.bf16 %v254
    %v675 = vunpack.c.l.s8.bf16 %v255
    %v676 = vunpack.c.l.s8.bf16 %v256
    %v677 = vunpack.c.h.s8.bf16 %v253
    %v678 = vunpack.c.h.s8.bf16 %v254
    %v679 = vunpack.c.h.s8.bf16 %v255
    %v680 = vunpack.c.h.s8.bf16 %v256
    %v681 = vunpack.c.l.s8.bf16 %v257
    %v682 = vunpack.c.l.s8.bf16 %v258
    %v683 = vunpack.c.l.s8.bf16 %v259
    %v684 = vunpack.c.l.s8.bf16 %v260
    %v685 = vunpack.c.h.s8.bf16 %v257
    %v686 = vunpack.c.h.s8.bf16 %v258
    %v687 = vunpack.c.h.s8.bf16 %v259
    %v688 = vunpack.c.h.s8.bf16 %v260
    %v689 = vunpack.c.l.s8.bf16 %v261
    %v690 = vunpack.c.l.s8.bf16 %v262
    %v691 = vunpack.c.l.s8.bf16 %v263
    %v692 = vunpack.c.l.s8.bf16 %v264
    %v693 = vunpack.c.h.s8.bf16 %v261
    %v694 = vunpack.c.h.s8.bf16 %v262
    %v695 = vunpack.c.h.s8.bf16 %v263
    %v696 = vunpack.c.h.s8.bf16 %v264
    %v697 = vunpack.c.l.s8.bf16 %v265
    %v698 = vunpack.c.l.s8.bf16 %v266
    %v699 = vunpack.c.l.s8.bf16 %v267
    %v700 = vunpack.c.l.s8.bf16 %v268
    %v701 = vunpack.c.h.s8.bf16 %v265
    %v702 = vunpack.c.h.s8.bf16 %v266
    %v703 = vunpack.c.h.s8.bf16 %v267
    %v704 = vunpack.c.h.s8.bf16 %v268
    %v705 = vunpack.c.l.s8.bf16 %v269
    %v706 = vunpack.c.l.s8.bf16 %v270
    %v707 = vunpack.c.l.s8.bf16 %v271
    %v708 = vunpack.c.l.s8.bf16 %v272
    %v709 = vunpack.c.h.s8.bf16 %v269
    %v710 = vunpack.c.h.s8.bf16 %v270
    %v711 = vunpack.c.h.s8.bf16 %v271
    %v712 = vunpack.c.h.s8.bf16 %v272
    %v713 = vunpack.c.l.s8.bf16 %v273
    %v714 = vunpack.c.l.s8.bf16 %v274
    %v715 = vunpack.c.l.s8.bf16 %v275
    %v716 = vunpack.c.l.s8.bf16 %v276
    %v717 = vunpack.c.h.s8.bf16 %v273
    %v718 = vunpack.c.h.s8.bf16 %v274
    %v719 = vunpack.c.h.s8.bf16 %v275
    %v720 = vunpack.c.h.s8.bf16 %v276
    %v721 = vunpack.c.l.s8.bf16 %v277
    %v722 = vunpack.c.l.s8.bf16 %v278
    %v723 = vunpack.c.l.s8.bf16 %v279
    %v724 = vunpack.c.l.s8.bf16 %v280
    %v725 = vunpack.c.h.s8.bf16 %v277
    %v726 = vunpack.c.h.s8.bf16 %v278
    %v727 = vunpack.c.h.s8.bf16 %v279
    %v728 = vunpack.c.h.s8.bf16 %v280
    %v729 = vunpack.c.l.s8.bf16 %v281
    %v730 = vunpack.c.l.s8.bf16 %v282
    %v731 = vunpack.c.l.s8.bf16 %v283
    %v732 = vunpack.c.l.s8.bf16 %v284
    %v733 = vunpack.c.h.s8.bf16 %v281
    %v734 = vunpack.c.h.s8.bf16 %v282
    %v735 = vunpack.c.h.s8.bf16 %v283
    %v736 = vunpack.c.h.s8.bf16 %v284
    %v737 = vunpack.c.l.s8.bf16 %v285
    %v738 = vunpack.c.l.s8.bf16 %v286
    %v739 = vunpack.c.l.s8.bf16 %v287
    %v740 = vunpack.c.l.s8.bf16 %v288
    %v741 = vunpack.c.h.s8.bf16 %v285
    %v742 = vunpack.c.h.s8.bf16 %v286
    %v743 = vunpack.c.h.s8.bf16 %v287
    %v744 = vunpack.c.h.s8.bf16 %v288
    %v745 = vunpack.c.l.s8.bf16 %v289
    %v746 = vunpack.c.l.s8.bf16 %v290
    %v747 = vunpack.c.l.s8.bf16 %v291
    %v748 = vunpack.c.l.s8.bf16 %v292
    %v749 = vunpack.c.h.s8.bf16 %v289
    %v750 = vunpack.c.h.s8.bf16 %v290
    %v751 = vunpack.c.h.s8.bf16 %v291
    %v752 = vunpack.c.h.s8.bf16 %v292
    %v753 = vunpack.c.l.s8.bf16 %v293
    %v754 = vunpack.c.l.s8.bf16 %v294
    %v755 = vunpack.c.l.s8.bf16 %v295
    %v756 = vunpack.c.l.s8.bf16 %v296
    %v757 = vunpack.c.h.s8.bf16 %v293
    %v758 = vunpack.c.h.s8.bf16 %v294
    %v759 = vunpack.c.h.s8.bf16 %v295
    %v760 = vunpack.c.h.s8.bf16 %v296
    %v761 = vunpack.c.l.s8.bf16 %v297
    %v762 = vunpack.c.l.s8.bf16 %v298
    %v763 = vunpack.c.l.s8.bf16 %v299
    %v764 = vunpack.c.l.s8.bf16 %v300
    %v765 = vunpack.c.h.s8.bf16 %v297
    %v766 = vunpack.c.h.s8.bf16 %v298
    %v767 = vunpack.c.h.s8.bf16 %v299
    %v768 = vunpack.c.h.s8.bf16 %v300
    %v769 = vunpack.c.l.s8.bf16 %v301
    %v770 = vunpack.c.l.s8.bf16 %v302
    %v771 = vunpack.c.l.s8.bf16 %v303
    %v772 = vunpack.c.l.s8.bf16 %v304
    %v773 = vunpack.c.h.s8.bf16 %v301
    %v774 = vunpack.c.h.s8.bf16 %v302
    %v775 = vunpack.c.h.s8.bf16 %v303
    %v776 = vunpack.c.h.s8.bf16 %v304
    %v777 = vunpack.c.l.s8.bf16 %v305
    %v778 = vunpack.c.l.s8.bf16 %v306
    %v779 = vunpack.c.l.s8.bf16 %v307
    %v780 = vunpack.c.l.s8.bf16 %v308
    %v781 = vunpack.c.h.s8.bf16 %v305
    %v782 = vunpack.c.h.s8.bf16 %v306
    %v783 = vunpack.c.h.s8.bf16 %v307
    %v784 = vunpack.c.h.s8.bf16 %v308
    %v785 = vunpack.c.l.s8.bf16 %v309
    %v786 = vunpack.c.l.s8.bf16 %v310
    %v787 = vunpack.c.l.s8.bf16 %v311
    %v788 = vunpack.c.l.s8.bf16 %v312
    %v789 = vunpack.c.h.s8.bf16 %v309
    %v790 = vunpack.c.h.s8.bf16 %v310
    %v791 = vunpack.c.h.s8.bf16 %v311
    %v792 = vunpack.c.h.s8.bf16 %v312
    %v793 = vunpack.c.l.s8.bf16 %v313
    %v794 = vunpack.c.l.s8.bf16 %v314
    %v795 = vunpack.c.l.s8.bf16 %v315
    %v796 = vunpack.c.l.s8.bf16 %v316
    %v797 = vunpack.c.h.s8.bf16 %v313
    %v798 = vunpack.c.h.s8.bf16 %v314
    %v799 = vunpack.c.h.s8.bf16 %v315
    %v800 = vunpack.c.h.s8.bf16 %v316
    %v801 = vunpack.c.l.s8.bf16 %v317
    %v802 = vunpack.c.l.s8.bf16 %v318
    %v803 = vunpack.c.l.s8.bf16 %v319
    %v804 = vunpack.c.l.s8.bf16 %v320
    %v805 = vunpack.c.h.s8.bf16 %v317
    %v806 = vunpack.c.h.s8.bf16 %v318
    %v807 = vunpack.c.h.s8.bf16 %v319
    %v808 = vunpack.c.h.s8.bf16 %v320
    %v809 = vunpack.c.l.s8.bf16 %v321
    %v810 = vunpack.c.l.s8.bf16 %v322
    %v811 = vunpack.c.l.s8.bf16 %v323
    %v812 = vunpack.c.l.s8.bf16 %v324
    %v813 = vunpack.c.h.s8.bf16 %v321
    %v814 = vunpack.c.h.s8.bf16 %v322
    %v815 = vunpack.c.h.s8.bf16 %v323
    %v816 = vunpack.c.h.s8.bf16 %v324
    %v817 = vunpack.c.l.s8.bf16 %v325
    %v818 = vunpack.c.l.s8.bf16 %v326
    %v819 = vunpack.c.l.s8.bf16 %v327
    %v820 = vunpack.c.l.s8.bf16 %v328
    %v821 = vunpack.c.h.s8.bf16 %v325
    %v822 = vunpack.c.h.s8.bf16 %v326
    %v823 = vunpack.c.h.s8.bf16 %v327
    %v824 = vunpack.c.h.s8.bf16 %v328
    %v825 = vunpack.c.l.s8.bf16 %v329
    %v826 = vunpack.c.l.s8.bf16 %v330
    %v827 = vunpack.c.l.s8.bf16 %v331
    %v828 = vunpack.c.l.s8.bf16 %v332
    %v829 = vunpack.c.h.s8.bf16 %v329
    %v830 = vunpack.c.h.s8.bf16 %v330
    %v831 = vunpack.c.h.s8.bf16 %v331
    %v832 = vunpack.c.h.s8.bf16 %v332
    %v833 = vunpack.c.l.s8.bf16 %v333
    %v834 = vunpack.c.l.s8.bf16 %v334
    %v835 = vunpack.c.l.s8.bf16 %v335
    %v836 = vunpack.c.l.s8.bf16 %v336
    %v837 = vunpack.c.h.s8.bf16 %v333
    %v838 = vunpack.c.h.s8.bf16 %v334
    %v839 = vunpack.c.h.s8.bf16 %v335
    %v840 = vunpack.c.h.s8.bf16 %v336
    %v841 = vunpack.c.l.s8.bf16 %v337
    %v842 = vunpack.c.l.s8.bf16 %v338
    %v843 = vunpack.c.l.s8.bf16 %v339
    %v844 = vunpack.c.l.s8.bf16 %v340
    %v845 = vunpack.c.h.s8.bf16 %v337
    %v846 = vunpack.c.h.s8.bf16 %v338
    %v847 = vunpack.c.h.s8.bf16 %v339
    %v848 = vunpack.c.h.s8.bf16 %v340
    %v849 = vunpack.c.l.s8.bf16 %v341
    %v850 = vunpack.c.l.s8.bf16 %v342
    %v851 = vunpack.c.l.s8.bf16 %v343
    %v852 = vunpack.c.l.s8.bf16 %v344
    %v853 = vunpack.c.h.s8.bf16 %v341
    %v854 = vunpack.c.h.s8.bf16 %v342
    %v855 = vunpack.c.h.s8.bf16 %v343
    %v856 = vunpack.c.h.s8.bf16 %v344
    %v857 = vunpack.c.l.s8.bf16 %v345
    %v858 = vunpack.c.l.s8.bf16 %v346
    %v859 = vunpack.c.l.s8.bf16 %v347
    %v860 = vunpack.c.l.s8.bf16 %v348
    %v861 = vunpack.c.h.s8.bf16 %v345
    %v862 = vunpack.c.h.s8.bf16 %v346
    %v863 = vunpack.c.h.s8.bf16 %v347
    %v864 = vunpack.c.h.s8.bf16 %v348
    %v865 = vunpack.c.l.s8.bf16 %v349
    %v866 = vunpack.c.l.s8.bf16 %v350
    %v867 = vunpack.c.l.s8.bf16 %v351
    %v868 = vunpack.c.l.s8.bf16 %v352
    %v869 = vunpack.c.h.s8.bf16 %v349
    %v870 = vunpack.c.h.s8.bf16 %v350
    %v871 = vunpack.c.h.s8.bf16 %v351
    %v872 = vunpack.c.h.s8.bf16 %v352
    %v873 = vunpack.c.l.s8.bf16 %v353
    %v874 = vunpack.c.l.s8.bf16 %v354
    %v875 = vunpack.c.l.s8.bf16 %v355
    %v876 = vunpack.c.l.s8.bf16 %v356
    %v877 = vunpack.c.h.s8.bf16 %v353
    %v878 = vunpack.c.h.s8.bf16 %v354
    %v879 = vunpack.c.h.s8.bf16 %v355
    %v880 = vunpack.c.h.s8.bf16 %v356
    %v881 = vunpack.c.l.s8.bf16 %v357
    %v882 = vunpack.c.l.s8.bf16 %v358
    %v883 = vunpack.c.l.s8.bf16 %v359
    %v884 = vunpack.c.l.s8.bf16 %v360
    %v885 = vunpack.c.h.s8.bf16 %v357
    %v886 = vunpack.c.h.s8.bf16 %v358
    %v887 = vunpack.c.h.s8.bf16 %v359
    %v888 = vunpack.c.h.s8.bf16 %v360
    %v889 = vunpack.c.l.s8.bf16 %v361
    %v890 = vunpack.c.l.s8.bf16 %v362
    %v891 = vunpack.c.l.s8.bf16 %v363
    %v892 = vunpack.c.l.s8.bf16 %v364
    %v893 = vunpack.c.h.s8.bf16 %v361
    %v894 = vunpack.c.h.s8.bf16 %v362
    %v895 = vunpack.c.h.s8.bf16 %v363
    %v896 = vunpack.c.h.s8.bf16 %v364
    %v897 = vunpack.c.l.s8.bf16 %v365
    %v898 = vunpack.c.l.s8.bf16 %v366
    %v899 = vunpack.c.l.s8.bf16 %v367
    %v900 = vunpack.c.l.s8.bf16 %v368
    %v901 = vunpack.c.h.s8.bf16 %v365
    %v902 = vunpack.c.h.s8.bf16 %v366
    %v903 = vunpack.c.h.s8.bf16 %v367
    %v904 = vunpack.c.h.s8.bf16 %v368
    %v905 = vunpack.c.l.s8.bf16 %v369
    %v906 = vunpack.c.l.s8.bf16 %v370
    %v907 = vunpack.c.l.s8.bf16 %v371
    %v908 = vunpack.c.l.s8.bf16 %v372
    %v909 = vunpack.c.h.s8.bf16 %v369
    %v910 = vunpack.c.h.s8.bf16 %v370
    %v911 = vunpack.c.h.s8.bf16 %v371
    %v912 = vunpack.c.h.s8.bf16 %v372
    %v913 = vunpack.c.l.s8.bf16 %v373
    %v914 = vunpack.c.l.s8.bf16 %v374
    %v915 = vunpack.c.l.s8.bf16 %v375
    %v916 = vunpack.c.l.s8.bf16 %v376
    %v917 = vunpack.c.h.s8.bf16 %v373
    %v918 = vunpack.c.h.s8.bf16 %v374
    %v919 = vunpack.c.h.s8.bf16 %v375
    %v920 = vunpack.c.h.s8.bf16 %v376
    %v921 = vunpack.c.l.s8.bf16 %v377
    %v922 = vunpack.c.l.s8.bf16 %v378
    %v923 = vunpack.c.l.s8.bf16 %v379
    %v924 = vunpack.c.l.s8.bf16 %v380
    %v925 = vunpack.c.h.s8.bf16 %v377
    %v926 = vunpack.c.h.s8.bf16 %v378
    %v927 = vunpack.c.h.s8.bf16 %v379
    %v928 = vunpack.c.h.s8.bf16 %v380
    %v929 = vunpack.c.l.s8.bf16 %v381
    %v930 = vunpack.c.l.s8.bf16 %v382
    %v931 = vunpack.c.l.s8.bf16 %v383
    %v932 = vunpack.c.l.s8.bf16 %v384
    %v933 = vunpack.c.h.s8.bf16 %v381
    %v934 = vunpack.c.h.s8.bf16 %v382
    %v935 = vunpack.c.h.s8.bf16 %v383
    %v936 = vunpack.c.h.s8.bf16 %v384
    %v937 = vunpack.c.l.s8.bf16 %v385
    %v938 = vunpack.c.l.s8.bf16 %v386
    %v939 = vunpack.c.l.s8.bf16 %v387
    %v940 = vunpack.c.l.s8.bf16 %v388
    %v941 = vunpack.c.h.s8.bf16 %v385
    %v942 = vunpack.c.h.s8.bf16 %v386
    %v943 = vunpack.c.h.s8.bf16 %v387
    %v944 = vunpack.c.h.s8.bf16 %v388
    %v945 = vunpack.c.l.s8.bf16 %v389
    %v946 = vunpack.c.l.s8.bf16 %v390
    %v947 = vunpack.c.l.s8.bf16 %v391
    %v948 = vunpack.c.l.s8.bf16 %v392
    %v949 = vunpack.c.h.s8.bf16 %v389
    %v950 = vunpack.c.h.s8.bf16 %v390
    %v951 = vunpack.c.h.s8.bf16 %v391
    %v952 = vunpack.c.h.s8.bf16 %v392
    %v953 = vunpack.c.l.s8.bf16 %v393
    %v954 = vunpack.c.l.s8.bf16 %v394
    %v955 = vunpack.c.l.s8.bf16 %v395
    %v956 = vunpack.c.l.s8.bf16 %v396
    %v957 = vunpack.c.h.s8.bf16 %v393
    %v958 = vunpack.c.h.s8.bf16 %v394
    %v959 = vunpack.c.h.s8.bf16 %v395
    %v960 = vunpack.c.h.s8.bf16 %v396
    %v961 = vunpack.c.l.s8.bf16 %v397
    %v962 = vunpack.c.l.s8.bf16 %v398
    %v963 = vunpack.c.l.s8.bf16 %v399
    %v964 = vunpack.c.l.s8.bf16 %v400
    %v965 = vunpack.c.h.s8.bf16 %v397
    %v966 = vunpack.c.h.s8.bf16 %v398
    %v967 = vunpack.c.h.s8.bf16 %v399
    %v968 = vunpack.c.h.s8.bf16 %v400
    %v969 = vunpack.c.l.s8.bf16 %v401
    %v970 = vunpack.c.l.s8.bf16 %v402
    %v971 = vunpack.c.l.s8.bf16 %v403
    %v972 = vunpack.c.l.s8.bf16 %v404
    %v973 = vunpack.c.h.s8.bf16 %v401
    %v974 = vunpack.c.h.s8.bf16 %v402
    %v975 = vunpack.c.h.s8.bf16 %v403
    %v976 = vunpack.c.h.s8.bf16 %v404
    %v977 = vunpack.c.l.s8.bf16 %v405
    %v978 = vunpack.c.l.s8.bf16 %v406
    %v979 = vunpack.c.l.s8.bf16 %v407
    %v980 = vunpack.c.l.s8.bf16 %v408
    %v981 = vunpack.c.h.s8.bf16 %v405
    %v982 = vunpack.c.h.s8.bf16 %v406
    %v983 = vunpack.c.h.s8.bf16 %v407
    %v984 = vunpack.c.h.s8.bf16 %v408
    %v985 = vunpack.c.l.s8.bf16 %v409
    %v986 = vunpack.c.l.s8.bf16 %v410
    %v987 = vunpack.c.l.s8.bf16 %v411
    %v988 = vunpack.c.l.s8.bf16 %v412
    %v989 = vunpack.c.h.s8.bf16 %v409
    %v990 = vunpack.c.h.s8.bf16 %v410
    %v991 = vunpack.c.h.s8.bf16 %v411
    %v992 = vunpack.c.h.s8.bf16 %v412
    %v993 = vunpack.c.l.s8.bf16 %v413
    %v994 = vunpack.c.l.s8.bf16 %v414
    %v995 = vunpack.c.l.s8.bf16 %v415
    %v996 = vunpack.c.l.s8.bf16 %v416
    %v997 = vunpack.c.h.s8.bf16 %v413
    %v998 = vunpack.c.h.s8.bf16 %v414
    %v999 = vunpack.c.h.s8.bf16 %v415
    %v1000 = vunpack.c.h.s8.bf16 %v416
    %v1001 = vunpack.c.l.s8.bf16 %v417
    %v1002 = vunpack.c.l.s8.bf16 %v418
    %v1003 = vunpack.c.l.s8.bf16 %v419
    %v1004 = vunpack.c.l.s8.bf16 %v420
    %v1005 = vunpack.c.h.s8.bf16 %v417
    %v1006 = vunpack.c.h.s8.bf16 %v418
    %v1007 = vunpack.c.h.s8.bf16 %v419
    %v1008 = vunpack.c.h.s8.bf16 %v420
    %v1009 = vunpack.c.l.s8.bf16 %v421
    %v1010 = vunpack.c.l.s8.bf16 %v422
    %v1011 = vunpack.c.l.s8.bf16 %v423
    %v1012 = vunpack.c.l.s8.bf16 %v424
    %v1013 = vunpack.c.h.s8.bf16 %v421
    %v1014 = vunpack.c.h.s8.bf16 %v422
    %v1015 = vunpack.c.h.s8.bf16 %v423
    %v1016 = vunpack.c.h.s8.bf16 %v424
    %v1017 = vunpack.c.l.s8.bf16 %v425
    %v1018 = vunpack.c.l.s8.bf16 %v426
    %v1019 = vunpack.c.l.s8.bf16 %v427
    %v1020 = vunpack.c.l.s8.bf16 %v428
    %v1021 = vunpack.c.h.s8.bf16 %v425
    %v1022 = vunpack.c.h.s8.bf16 %v426
    %v1023 = vunpack.c.h.s8.bf16 %v427
    %v1024 = vunpack.c.h.s8.bf16 %v428
    %v1025 = vunpack.c.l.s8.bf16 %v429
    %v1026 = vunpack.c.l.s8.bf16 %v430
    %v1027 = vunpack.c.l.s8.bf16 %v431
    %v1028 = vunpack.c.l.s8.bf16 %v432
    %v1029 = vunpack.c.h.s8.bf16 %v429
    %v1030 = vunpack.c.h.s8.bf16 %v430
    %v1031 = vunpack.c.h.s8.bf16 %v431
    %v1032 = vunpack.c.h.s8.bf16 %v432
    %v1033 = vunpack.c.l.s8.bf16 %v433
    %v1034 = vunpack.c.l.s8.bf16 %v434
    %v1035 = vunpack.c.l.s8.bf16 %v435
    %v1036 = vunpack.c.l.s8.bf16 %v436
    %v1037 = vunpack.c.h.s8.bf16 %v433
    %v1038 = vunpack.c.h.s8.bf16 %v434
    %v1039 = vunpack.c.h.s8.bf16 %v435
    %v1040 = vunpack.c.h.s8.bf16 %v436
    %v1041 = vunpack.c.l.s8.bf16 %v437
    %v1042 = vunpack.c.l.s8.bf16 %v438
    %v1043 = vunpack.c.l.s8.bf16 %v439
    %v1044 = vunpack.c.l.s8.bf16 %v440
    %v1045 = vunpack.c.h.s8.bf16 %v437
    %v1046 = vunpack.c.h.s8.bf16 %v438
    %v1047 = vunpack.c.h.s8.bf16 %v439
    %v1048 = vunpack.c.h.s8.bf16 %v440
    %v1049 = vunpack.c.l.s8.bf16 %v441
    %v1050 = vunpack.c.l.s8.bf16 %v442
    %v1051 = vunpack.c.l.s8.bf16 %v443
    %v1052 = vunpack.c.l.s8.bf16 %v444
    %v1053 = vunpack.c.h.s8.bf16 %v441
    %v1054 = vunpack.c.h.s8.bf16 %v442
    %v1055 = vunpack.c.h.s8.bf16 %v443
    %v1056 = vunpack.c.h.s8.bf16 %v444
    %v1057 = vunpack.c.l.s8.bf16 %v445
    %v1058 = vunpack.c.l.s8.bf16 %v446
    %v1059 = vunpack.c.l.s8.bf16 %v447
    %v1060 = vunpack.c.l.s8.bf16 %v448
    %v1061 = vunpack.c.h.s8.bf16 %v445
    %v1062 = vunpack.c.h.s8.bf16 %v446
    %v1063 = vunpack.c.h.s8.bf16 %v447
    %v1064 = vunpack.c.h.s8.bf16 %v448
    %v1065 = vunpack.c.l.s8.bf16 %v449
    %v1066 = vunpack.c.l.s8.bf16 %v450
    %v1067 = vunpack.c.l.s8.bf16 %v451
    %v1068 = vunpack.c.l.s8.bf16 %v452
    %v1069 = vunpack.c.h.s8.bf16 %v449
    %v1070 = vunpack.c.h.s8.bf16 %v450
    %v1071 = vunpack.c.h.s8.bf16 %v451
    %v1072 = vunpack.c.h.s8.bf16 %v452
    %v1073 = vunpack.c.l.s8.bf16 %v453
    %v1074 = vunpack.c.l.s8.bf16 %v454
    %v1075 = vunpack.c.l.s8.bf16 %v455
    %v1076 = vunpack.c.l.s8.bf16 %v456
    %v1077 = vunpack.c.h.s8.bf16 %v453
    %v1078 = vunpack.c.h.s8.bf16 %v454
    %v1079 = vunpack.c.h.s8.bf16 %v455
    %v1080 = vunpack.c.h.s8.bf16 %v456
    %v1081 = vunpack.c.l.s8.bf16 %v457
    %v1082 = vunpack.c.l.s8.bf16 %v458
    %v1083 = vunpack.c.l.s8.bf16 %v459
    %v1084 = vunpack.c.l.s8.bf16 %v460
    %v1085 = vunpack.c.h.s8.bf16 %v457
    %v1086 = vunpack.c.h.s8.bf16 %v458
    %v1087 = vunpack.c.h.s8.bf16 %v459
    %v1088 = vunpack.c.h.s8.bf16 %v460
    %v1089 = vunpack.c.l.s8.bf16 %v461
    %v1090 = vunpack.c.l.s8.bf16 %v462
    %v1091 = vunpack.c.l.s8.bf16 %v463
    %v1092 = vunpack.c.l.s8.bf16 %v464
    %v1093 = vunpack.c.h.s8.bf16 %v461
    %v1094 = vunpack.c.h.s8.bf16 %v462
    %v1095 = vunpack.c.h.s8.bf16 %v463
    %v1096 = vunpack.c.h.s8.bf16 %v464
    %v1097 = vunpack.c.l.s8.bf16 %v465
    %v1098 = vunpack.c.l.s8.bf16 %v466
    %v1099 = vunpack.c.l.s8.bf16 %v467
    %v1100 = vunpack.c.l.s8.bf16 %v468
    %v1101 = vunpack.c.h.s8.bf16 %v465
    %v1102 = vunpack.c.h.s8.bf16 %v466
    %v1103 = vunpack.c.h.s8.bf16 %v467
    %v1104 = vunpack.c.h.s8.bf16 %v468
    %v1105 = vunpack.c.l.s8.bf16 %v469
    %v1106 = vunpack.c.l.s8.bf16 %v470
    %v1107 = vunpack.c.l.s8.bf16 %v471
    %v1108 = vunpack.c.l.s8.bf16 %v472
    %v1109 = vunpack.c.h.s8.bf16 %v469
    %v1110 = vunpack.c.h.s8.bf16 %v470
    %v1111 = vunpack.c.h.s8.bf16 %v471
    %v1112 = vunpack.c.h.s8.bf16 %v472
    %v1113 = vunpack.c.l.s8.bf16 %v473
    %v1114 = vunpack.c.l.s8.bf16 %v474
    %v1115 = vunpack.c.l.s8.bf16 %v475
    %v1116 = vunpack.c.l.s8.bf16 %v476
    %v1117 = vunpack.c.h.s8.bf16 %v473
    %v1118 = vunpack.c.h.s8.bf16 %v474
    %v1119 = vunpack.c.h.s8.bf16 %v475
    %v1120 = vunpack.c.h.s8.bf16 %v476
    %v1121 = vunpack.c.l.s8.bf16 %v477
    %v1122 = vunpack.c.l.s8.bf16 %v478
    %v1123 = vunpack.c.l.s8.bf16 %v479
    %v1124 = vunpack.c.l.s8.bf16 %v480
    %v1125 = vunpack.c.h.s8.bf16 %v477
    %v1126 = vunpack.c.h.s8.bf16 %v478
    %v1127 = vunpack.c.h.s8.bf16 %v479
    %v1128 = vunpack.c.h.s8.bf16 %v480
    %v1129 = vunpack.c.l.s8.bf16 %v481
    %v1130 = vunpack.c.l.s8.bf16 %v482
    %v1131 = vunpack.c.l.s8.bf16 %v483
    %v1132 = vunpack.c.l.s8.bf16 %v484
    %v1133 = vunpack.c.h.s8.bf16 %v481
    %v1134 = vunpack.c.h.s8.bf16 %v482
    %v1135 = vunpack.c.h.s8.bf16 %v483
    %v1136 = vunpack.c.h.s8.bf16 %v484
    %v1137 = vunpack.c.l.s8.bf16 %v485
    %v1138 = vunpack.c.l.s8.bf16 %v486
    %v1139 = vunpack.c.l.s8.bf16 %v487
    %v1140 = vunpack.c.l.s8.bf16 %v488
    %v1141 = vunpack.c.h.s8.bf16 %v485
    %v1142 = vunpack.c.h.s8.bf16 %v486
    %v1143 = vunpack.c.h.s8.bf16 %v487
    %v1144 = vunpack.c.h.s8.bf16 %v488
    %v1145 = vunpack.c.l.s8.bf16 %v489
    %v1146 = vunpack.c.l.s8.bf16 %v490
    %v1147 = vunpack.c.l.s8.bf16 %v491
    %v1148 = vunpack.c.l.s8.bf16 %v492
    %v1149 = vunpack.c.h.s8.bf16 %v489
    %v1150 = vunpack.c.h.s8.bf16 %v490
    %v1151 = vunpack.c.h.s8.bf16 %v491
    %v1152 = vunpack.c.h.s8.bf16 %v492
    %v1153 = vunpack.c.l.s8.bf16 %v493
    %v1154 = vunpack.c.l.s8.bf16 %v494
    %v1155 = vunpack.c.l.s8.bf16 %v495
    %v1156 = vunpack.c.l.s8.bf16 %v496
    %v1157 = vunpack.c.h.s8.bf16 %v493
    %v1158 = vunpack.c.h.s8.bf16 %v494
    %v1159 = vunpack.c.h.s8.bf16 %v495
    %v1160 = vunpack.c.h.s8.bf16 %v496
    %v1161 = vunpack.c.l.s8.bf16 %v497
    %v1162 = vunpack.c.l.s8.bf16 %v498
    %v1163 = vunpack.c.l.s8.bf16 %v499
    %v1164 = vunpack.c.l.s8.bf16 %v500
    %v1165 = vunpack.c.h.s8.bf16 %v497
    %v1166 = vunpack.c.h.s8.bf16 %v498
    %v1167 = vunpack.c.h.s8.bf16 %v499
    %v1168 = vunpack.c.h.s8.bf16 %v500
    %v1169 = vunpack.c.l.s8.bf16 %v501
    %v1170 = vunpack.c.l.s8.bf16 %v502
    %v1171 = vunpack.c.l.s8.bf16 %v503
    %v1172 = vunpack.c.l.s8.bf16 %v504
    %v1173 = vunpack.c.h.s8.bf16 %v501
    %v1174 = vunpack.c.h.s8.bf16 %v502
    %v1175 = vunpack.c.h.s8.bf16 %v503
    %v1176 = vunpack.c.h.s8.bf16 %v504
    %v1177 = vunpack.c.l.s8.bf16 %v505
    %v1178 = vunpack.c.l.s8.bf16 %v506
    %v1179 = vunpack.c.l.s8.bf16 %v507
    %v1180 = vunpack.c.l.s8.bf16 %v508
    %v1181 = vunpack.c.h.s8.bf16 %v505
    %v1182 = vunpack.c.h.s8.bf16 %v506
    %v1183 = vunpack.c.h.s8.bf16 %v507
    %v1184 = vunpack.c.h.s8.bf16 %v508
    %v1185 = vunpack.c.l.s8.bf16 %v509
    %v1186 = vunpack.c.l.s8.bf16 %v510
    %v1187 = vunpack.c.l.s8.bf16 %v511
    %v1188 = vunpack.c.l.s8.bf16 %v512
    %v1189 = vunpack.c.h.s8.bf16 %v509
    %v1190 = vunpack.c.h.s8.bf16 %v510
    %v1191 = vunpack.c.h.s8.bf16 %v511
    %v1192 = vunpack.c.h.s8.bf16 %v512
    %v1193 = vunpack.c.l.s8.bf16 %v513
    %v1194 = vunpack.c.l.s8.bf16 %v514
    %v1195 = vunpack.c.l.s8.bf16 %v515
    %v1196 = vunpack.c.l.s8.bf16 %v516
    %v1197 = vunpack.c.h.s8.bf16 %v513
    %v1198 = vunpack.c.h.s8.bf16 %v514
    %v1199 = vunpack.c.h.s8.bf16 %v515
    %v1200 = vunpack.c.h.s8.bf16 %v516
    %v1201 = vunpack.c.l.s8.bf16 %v517
    %v1202 = vunpack.c.l.s8.bf16 %v518
    %v1203 = vunpack.c.l.s8.bf16 %v519
    %v1204 = vunpack.c.l.s8.bf16 %v520
    %v1205 = vunpack.c.h.s8.bf16 %v517
    %v1206 = vunpack.c.h.s8.bf16 %v518
    %v1207 = vunpack.c.h.s8.bf16 %v519
    %v1208 = vunpack.c.h.s8.bf16 %v520
    %v1209 = vunpack.c.l.s8.bf16 %v521
    %v1210 = vunpack.c.l.s8.bf16 %v522
    %v1211 = vunpack.c.l.s8.bf16 %v523
    %v1212 = vunpack.c.l.s8.bf16 %v524
    %v1213 = vunpack.c.h.s8.bf16 %v521
    %v1214 = vunpack.c.h.s8.bf16 %v522
    %v1215 = vunpack.c.h.s8.bf16 %v523
    %v1216 = vunpack.c.h.s8.bf16 %v524
    %v1217 = vunpack.c.l.s8.bf16 %v525
    %v1218 = vunpack.c.l.s8.bf16 %v526
    %v1219 = vunpack.c.l.s8.bf16 %v527
    %v1220 = vunpack.c.l.s8.bf16 %v528
    %v1221 = vunpack.c.h.s8.bf16 %v525
    %v1222 = vunpack.c.h.s8.bf16 %v526
    %v1223 = vunpack.c.h.s8.bf16 %v527
    %v1224 = vunpack.c.h.s8.bf16 %v528
    %v1225 = vunpack.c.l.s8.bf16 %v529
    %v1226 = vunpack.c.l.s8.bf16 %v530
    %v1227 = vunpack.c.l.s8.bf16 %v531
    %v1228 = vunpack.c.l.s8.bf16 %v532
    %v1229 = vunpack.c.h.s8.bf16 %v529
    %v1230 = vunpack.c.h.s8.bf16 %v530
    %v1231 = vunpack.c.h.s8.bf16 %v531
    %v1232 = vunpack.c.h.s8.bf16 %v532
    %v1233 = vunpack.c.l.s8.bf16 %v533
    %v1234 = vunpack.c.l.s8.bf16 %v534
    %v1235 = vunpack.c.l.s8.bf16 %v535
    %v1236 = vunpack.c.l.s8.bf16 %v536
    %v1237 = vunpack.c.h.s8.bf16 %v533
    %v1238 = vunpack.c.h.s8.bf16 %v534
    %v1239 = vunpack.c.h.s8.bf16 %v535
    %v1240 = vunpack.c.h.s8.bf16 %v536
    %v1241 = vunpack.c.l.s8.bf16 %v537
    %v1242 = vunpack.c.l.s8.bf16 %v538
    %v1243 = vunpack.c.l.s8.bf16 %v539
    %v1244 = vunpack.c.l.s8.bf16 %v540
    %v1245 = vunpack.c.h.s8.bf16 %v537
    %v1246 = vunpack.c.h.s8.bf16 %v538
    %v1247 = vunpack.c.h.s8.bf16 %v539
    %v1248 = vunpack.c.h.s8.bf16 %v540
    %v1249 = vunpack.c.l.s8.bf16 %v541
    %v1250 = vunpack.c.l.s8.bf16 %v542
    %v1251 = vunpack.c.l.s8.bf16 %v543
    %v1252 = vunpack.c.l.s8.bf16 %v544
    %v1253 = vunpack.c.h.s8.bf16 %v541
    %v1254 = vunpack.c.h.s8.bf16 %v542
    %v1255 = vunpack.c.h.s8.bf16 %v543
    %v1256 = vunpack.c.h.s8.bf16 %v544
    %v1257 = vunpack.c.l.s8.bf16 %v545
    %v1258 = vunpack.c.l.s8.bf16 %v546
    %v1259 = vunpack.c.l.s8.bf16 %v547
    %v1260 = vunpack.c.l.s8.bf16 %v548
    %v1261 = vunpack.c.h.s8.bf16 %v545
    %v1262 = vunpack.c.h.s8.bf16 %v546
    %v1263 = vunpack.c.h.s8.bf16 %v547
    %v1264 = vunpack.c.h.s8.bf16 %v548
    %v1265 = vunpack.c.l.s8.bf16 %v549
    %v1266 = vunpack.c.l.s8.bf16 %v550
    %v1267 = vunpack.c.l.s8.bf16 %v551
    %v1268 = vunpack.c.l.s8.bf16 %v552
    %v1269 = vunpack.c.h.s8.bf16 %v549
    %v1270 = vunpack.c.h.s8.bf16 %v550
    %v1271 = vunpack.c.h.s8.bf16 %v551
    %v1272 = vunpack.c.h.s8.bf16 %v552
    %v1273 = vunpack.c.l.s8.bf16 %v553
    %v1274 = vunpack.c.l.s8.bf16 %v554
    %v1275 = vunpack.c.l.s8.bf16 %v555
    %v1276 = vunpack.c.l.s8.bf16 %v556
    %v1277 = vunpack.c.h.s8.bf16 %v553
    %v1278 = vunpack.c.h.s8.bf16 %v554
    %v1279 = vunpack.c.h.s8.bf16 %v555
    %v1280 = vunpack.c.h.s8.bf16 %v556
    %v1281 = vunpack.c.l.s8.bf16 %v557
    %v1282 = vunpack.c.l.s8.bf16 %v558
    %v1283 = vunpack.c.l.s8.bf16 %v559
    %v1284 = vunpack.c.l.s8.bf16 %v560
    %v1285 = vunpack.c.h.s8.bf16 %v557
    %v1286 = vunpack.c.h.s8.bf16 %v558
    %v1287 = vunpack.c.h.s8.bf16 %v559
    %v1288 = vunpack.c.h.s8.bf16 %v560
    %v1289 = vunpack.c.l.s8.bf16 %v561
    %v1290 = vunpack.c.l.s8.bf16 %v562
    %v1291 = vunpack.c.l.s8.bf16 %v563
    %v1292 = vunpack.c.l.s8.bf16 %v564
    %v1293 = vunpack.c.h.s8.bf16 %v561
    %v1294 = vunpack.c.h.s8.bf16 %v562
    %v1295 = vunpack.c.h.s8.bf16 %v563
    %v1296 = vunpack.c.h.s8.bf16 %v564
    %v1297 = vunpack.c.l.s8.bf16 %v565
    %v1298 = vunpack.c.l.s8.bf16 %v566
    %v1299 = vunpack.c.l.s8.bf16 %v567
    %v1300 = vunpack.c.l.s8.bf16 %v568
    %v1301 = vunpack.c.h.s8.bf16 %v565
    %v1302 = vunpack.c.h.s8.bf16 %v566
    %v1303 = vunpack.c.h.s8.bf16 %v567
    %v1304 = vunpack.c.h.s8.bf16 %v568
    %v1305 = vunpack.c.l.s8.bf16 %v569
    %v1306 = vunpack.c.l.s8.bf16 %v570
    %v1307 = vunpack.c.l.s8.bf16 %v571
    %v1308 = vunpack.c.l.s8.bf16 %v572
    %v1309 = vunpack.c.h.s8.bf16 %v569
    %v1310 = vunpack.c.h.s8.bf16 %v570
    %v1311 = vunpack.c.h.s8.bf16 %v571
    %v1312 = vunpack.c.h.s8.bf16 %v572
    %v1313 = vunpack.c.l.s8.bf16 %v573
    %v1314 = vunpack.c.l.s8.bf16 %v574
    %v1315 = vunpack.c.l.s8.bf16 %v575
    %v1316 = vunpack.c.l.s8.bf16 %v576
    %v1317 = vunpack.c.h.s8.bf16 %v573
    %v1318 = vunpack.c.h.s8.bf16 %v574
    %v1319 = vunpack.c.h.s8.bf16 %v575
    %v1320 = vunpack.c.h.s8.bf16 %v576
    %v1321 = vunpack.c.l.s8.bf16 %v577
    %v1322 = vunpack.c.l.s8.bf16 %v578
    %v1323 = vunpack.c.l.s8.bf16 %v579
    %v1324 = vunpack.c.l.s8.bf16 %v580
    %v1325 = vunpack.c.h.s8.bf16 %v577
    %v1326 = vunpack.c.h.s8.bf16 %v578
    %v1327 = vunpack.c.h.s8.bf16 %v579
    %v1328 = vunpack.c.h.s8.bf16 %v580
    %v1329 = vunpack.c.l.s8.bf16 %v581
    %v1330 = vunpack.c.l.s8.bf16 %v582
    %v1331 = vunpack.c.l.s8.bf16 %v583
    %v1332 = vunpack.c.l.s8.bf16 %v584
    %v1333 = vunpack.c.h.s8.bf16 %v581
    %v1334 = vunpack.c.h.s8.bf16 %v582
    %v1335 = vunpack.c.h.s8.bf16 %v583
    %v1336 = vunpack.c.h.s8.bf16 %v584
    %v1337 = vunpack.c.l.s8.bf16 %v585
    %v1338 = vunpack.c.l.s8.bf16 %v586
    %v1339 = vunpack.c.l.s8.bf16 %v587
    %v1340 = vunpack.c.l.s8.bf16 %v588
    %v1341 = vunpack.c.h.s8.bf16 %v585
    %v1342 = vunpack.c.h.s8.bf16 %v586
    %v1343 = vunpack.c.h.s8.bf16 %v587
    %v1344 = vunpack.c.h.s8.bf16 %v588
    %v1345 = vunpack.c.l.s8.bf16 %v589
    %v1346 = vunpack.c.l.s8.bf16 %v590
    %v1347 = vunpack.c.l.s8.bf16 %v591
    %v1348 = vunpack.c.l.s8.bf16 %v592
    %v1349 = vunpack.c.h.s8.bf16 %v589
    %v1350 = vunpack.c.h.s8.bf16 %v590
    %v1351 = vunpack.c.h.s8.bf16 %v591
    %v1352 = vunpack.c.h.s8.bf16 %v592
    %v1353 = vunpack.c.l.s8.bf16 %v593
    %v1354 = vunpack.c.l.s8.bf16 %v594
    %v1355 = vunpack.c.l.s8.bf16 %v595
    %v1356 = vunpack.c.l.s8.bf16 %v596
    %v1357 = vunpack.c.h.s8.bf16 %v593
    %v1358 = vunpack.c.h.s8.bf16 %v594
    %v1359 = vunpack.c.h.s8.bf16 %v595
    %v1360 = vunpack.c.h.s8.bf16 %v596
    %v1361 = vunpack.c.l.s8.bf16 %v597
    %v1362 = vunpack.c.l.s8.bf16 %v598
    %v1363 = vunpack.c.l.s8.bf16 %v599
    %v1364 = vunpack.c.l.s8.bf16 %v600
    %v1365 = vunpack.c.h.s8.bf16 %v597
    %v1366 = vunpack.c.h.s8.bf16 %v598
    %v1367 = vunpack.c.h.s8.bf16 %v599
    %v1368 = vunpack.c.h.s8.bf16 %v600
    %v1369 = vpack.c.bf16 %v192, %v192
    %v1370 = vpack.c.bf16 %v193, %v193
    %v1371 = vpack.c.bf16 %v194, %v194
    %v1372 = vpack.c.bf16 %v195, %v195
    %v1373 = vpack.c.bf16 %v196, %v196
    %v1374 = vpack.c.bf16 %v197, %v197
    %v1375 = vpack.c.bf16 %v198, %v198
    %v1376 = vpack.c.bf16 %v199, %v199
    %v1377 = vpack.c.bf16 %v200, %v200
    %v1378 = vpack.c.bf16 %v201, %v201
    %v1379 = vpack.c.bf16 %v202, %v202
    %v1380 = vpack.c.bf16 %v203, %v203
    %v1381 = vpack.c.bf16 %v204, %v204
    %v1382 = vpack.c.bf16 %v205, %v205
    %v1383 = vpack.c.bf16 %v206, %v206
    %v1384 = vpack.c.bf16 %v207, %v207
    %v1385 = vpack.c.bf16 %v208, %v208
    %v1386 = vpack.c.bf16 %v209, %v209
    %v1387 = vpack.c.bf16 %v210, %v210
    %v1388 = vpack.c.bf16 %v211, %v211
    %v1389 = vpack.c.bf16 %v212, %v212
    %v1390 = vpack.c.bf16 %v213, %v213
    %v1391 = vpack.c.bf16 %v214, %v214
    %v1392 = vpack.c.bf16 %v215, %v215
    %1393 = vmatprep.subr.bf16.mxu0 %v602
    %1394 = vmatpush1.bf16.msra.mxu0 %v601
    %1395 = vmatprep.subr.bf16.mxu0 %v606
    %1396 = vmatpush1.bf16.msra.mxu0 %v605
    %1397 = vmatprep.subr.bf16.mxu0 %v610
    %1398 = vmatpush1.bf16.msra.mxu0 %v609
    %1399 = vmatprep.subr.bf16.mxu0 %v614
    %1400 = vmatpush1.bf16.msra.mxu0 %v613
    %1401 = vmatprep.subr.bf16.mxu0 %v618
    %1402 = vmatpush1.bf16.msra.mxu0 %v617
    %1403 = vmatprep.subr.bf16.mxu0 %v622
    %1404 = vmatpush1.bf16.msra.mxu0 %v621
    %1405 = vmatprep.subr.bf16.mxu0 %v626
    %1406 = vmatpush1.bf16.msra.mxu0 %v625
    %1407 = vmatprep.subr.bf16.mxu0 %v630
    %1408 = vmatpush1.bf16.msra.mxu0 %v629
    %1409 = vmatprep.subr.bf16.mxu0 %v634
    %1410 = vmatpush1.bf16.msra.mxu0 %v633
    %1411 = vmatprep.subr.bf16.mxu0 %v638
    %1412 = vmatpush1.bf16.msra.mxu0 %v637
    %1413 = vmatprep.subr.bf16.mxu0 %v642
    %1414 = vmatpush1.bf16.msra.mxu0 %v641
    %1415 = vmatprep.subr.bf16.mxu0 %v646
    %1416 = vmatpush1.bf16.msra.mxu0 %v645
    %1417 = vmatprep.subr.bf16.mxu0 %v650
    %1418 = vmatpush1.bf16.msra.mxu0 %v649
    %1419 = vmatprep.subr.bf16.mxu0 %v654
    %1420 = vmatpush1.bf16.msra.mxu0 %v653
    %1421 = vmatprep.subr.bf16.mxu0 %v658
    %1422 = vmatpush1.bf16.msra.mxu0 %v657
    %1423 = vmatprep.subr.bf16.mxu0 %v662
    %1424 = vmatpush1.bf16.msra.mxu0 %v661
    %1425 = vmatprep.mubr.bf16.mxu0 %v1370
    %1426 = vmatmul.mubr.bf16.gmra.mrb[0].mxu0 %v1369
    %v1427 = vpop.f32.mrb[0].mxu0
    %v1428 = vadd.f32 0.0, %v1427
    %v1429 = vpop.f32.mrb[0].mxu0
    %v1430 = vadd.f32 0.0, %v1429
    %v1431 = vpop.f32.mrb[0].mxu0
    %v1432 = vpop.f32.mrb[0].mxu0
    %1433 = vdwg.mxu0
    %1434 = vmatprep.subr.bf16.mxu0 %v666
    %1435 = vmatpush1.bf16.msra.mxu0 %v665
    %1436 = vmatprep.subr.bf16.mxu0 %v670
    %1437 = vmatpush1.bf16.msra.mxu0 %v669
    %1438 = vmatprep.subr.bf16.mxu0 %v674
    %1439 = vmatpush1.bf16.msra.mxu0 %v673
    %1440 = vmatprep.subr.bf16.mxu0 %v678
    %1441 = vmatpush1.bf16.msra.mxu0 %v677
    %1442 = vmatprep.subr.bf16.mxu0 %v682
    %1443 = vmatpush1.bf16.msra.mxu0 %v681
    %1444 = vmatprep.subr.bf16.mxu0 %v686
    %1445 = vmatpush1.bf16.msra.mxu0 %v685
    %1446 = vmatprep.subr.bf16.mxu0 %v690
    %1447 = vmatpush1.bf16.msra.mxu0 %v689
    %1448 = vmatprep.subr.bf16.mxu0 %v694
    %1449 = vmatpush1.bf16.msra.mxu0 %v693
    %1450 = vmatprep.subr.bf16.mxu0 %v698
    %1451 = vmatpush1.bf16.msra.mxu0 %v697
    %1452 = vmatprep.subr.bf16.mxu0 %v702
    %1453 = vmatpush1.bf16.msra.mxu0 %v701
    %1454 = vmatprep.subr.bf16.mxu0 %v706
    %1455 = vmatpush1.bf16.msra.mxu0 %v705
    %1456 = vmatprep.subr.bf16.mxu0 %v710
    %1457 = vmatpush1.bf16.msra.mxu0 %v709
    %1458 = vmatprep.subr.bf16.mxu0 %v714
    %1459 = vmatpush1.bf16.msra.mxu0 %v713
    %1460 = vmatprep.subr.bf16.mxu0 %v718
    %1461 = vmatpush1.bf16.msra.mxu0 %v717
    %1462 = vmatprep.subr.bf16.mxu0 %v722
    %1463 = vmatpush1.bf16.msra.mxu0 %v721
    %1464 = vmatprep.subr.bf16.mxu0 %v726
    %1465 = vmatpush1.bf16.msra.mxu0 %v725
    %1466 = vmatprep.mubr.bf16.mxu0 %v1372
    %1467 = vmatmul.mubr.bf16.gmra.mrb[0].mxu0 %v1371
    %v1468 = vpop.f32.mrb[0].mxu0
    %v1469 = vadd.f32 %v1428, %v1468
    %v1470 = vpop.f32.mrb[0].mxu0
    %v1471 = vadd.f32 %v1430, %v1470
    %v1472 = vpop.f32.mrb[0].mxu0
    %v1473 = vpop.f32.mrb[0].mxu0
    %1474 = vdwg.mxu0
    %1475 = vmatprep.subr.bf16.mxu0 %v730
    %1476 = vmatpush1.bf16.msra.mxu0 %v729
    %1477 = vmatprep.subr.bf16.mxu0 %v734
    %1478 = vmatpush1.bf16.msra.mxu0 %v733
    %1479 = vmatprep.subr.bf16.mxu0 %v738
    %1480 = vmatpush1.bf16.msra.mxu0 %v737
    %1481 = vmatprep.subr.bf16.mxu0 %v742
    %1482 = vmatpush1.bf16.msra.mxu0 %v741
    %1483 = vmatprep.subr.bf16.mxu0 %v746
    %1484 = vmatpush1.bf16.msra.mxu0 %v745
    %1485 = vmatprep.subr.bf16.mxu0 %v750
    %1486 = vmatpush1.bf16.msra.mxu0 %v749
    %1487 = vmatprep.subr.bf16.mxu0 %v754
    %1488 = vmatpush1.bf16.msra.mxu0 %v753
    %1489 = vmatprep.subr.bf16.mxu0 %v758
    %1490 = vmatpush1.bf16.msra.mxu0 %v757
    %1491 = vmatprep.subr.bf16.mxu0 %v762
    %1492 = vmatpush1.bf16.msra.mxu0 %v761
    %1493 = vmatprep.subr.bf16.mxu0 %v766
    %1494 = vmatpush1.bf16.msra.mxu0 %v765
    %1495 = vmatprep.subr.bf16.mxu0 %v770
    %1496 = vmatpush1.bf16.msra.mxu0 %v769
    %1497 = vmatprep.subr.bf16.mxu0 %v774
    %1498 = vmatpush1.bf16.msra.mxu0 %v773
    %1499 = vmatprep.subr.bf16.mxu0 %v778
    %1500 = vmatpush1.bf16.msra.mxu0 %v777
    %1501 = vmatprep.subr.bf16.mxu0 %v782
    %1502 = vmatpush1.bf16.msra.mxu0 %v781
    %1503 = vmatprep.subr.bf16.mxu0 %v786
    %1504 = vmatpush1.bf16.msra.mxu0 %v785
    %1505 = vmatprep.subr.bf16.mxu0 %v790
    %1506 = vmatpush1.bf16.msra.mxu0 %v789
    %1507 = vmatprep.mubr.bf16.mxu0 %v1374
    %1508 = vmatmul.mubr.bf16.gmra.mrb[0].mxu0 %v1373
    %v1509 = vpop.f32.mrb[0].mxu0
    %v1510 = vadd.f32 %v1469, %v1509
    %v1511 = vpop.f32.mrb[0].mxu0
    %v1512 = vadd.f32 %v1471, %v1511
    %v1513 = vpop.f32.mrb[0].mxu0
    %v1514 = vpop.f32.mrb[0].mxu0
    %1515 = vdwg.mxu0
    %1516 = vmatprep.subr.bf16.mxu0 %v794
    %1517 = vmatpush1.bf16.msra.mxu0 %v793
    %1518 = vmatprep.subr.bf16.mxu0 %v798
    %1519 = vmatpush1.bf16.msra.mxu0 %v797
    %1520 = vmatprep.subr.bf16.mxu0 %v802
    %1521 = vmatpush1.bf16.msra.mxu0 %v801
    %1522 = vmatprep.subr.bf16.mxu0 %v806
    %1523 = vmatpush1.bf16.msra.mxu0 %v805
    %1524 = vmatprep.subr.bf16.mxu0 %v810
    %1525 = vmatpush1.bf16.msra.mxu0 %v809
    %1526 = vmatprep.subr.bf16.mxu0 %v814
    %1527 = vmatpush1.bf16.msra.mxu0 %v813
    %1528 = vmatprep.subr.bf16.mxu0 %v818
    %1529 = vmatpush1.bf16.msra.mxu0 %v817
    %1530 = vmatprep.subr.bf16.mxu0 %v822
    %1531 = vmatpush1.bf16.msra.mxu0 %v821
    %1532 = vmatprep.subr.bf16.mxu0 %v826
    %1533 = vmatpush1.bf16.msra.mxu0 %v825
    %1534 = vmatprep.subr.bf16.mxu0 %v830
    %1535 = vmatpush1.bf16.msra.mxu0 %v829
    %1536 = vmatprep.subr.bf16.mxu0 %v834
    %1537 = vmatpush1.bf16.msra.mxu0 %v833
    %1538 = vmatprep.subr.bf16.mxu0 %v838
    %1539 = vmatpush1.bf16.msra.mxu0 %v837
    %1540 = vmatprep.subr.bf16.mxu0 %v842
    %1541 = vmatpush1.bf16.msra.mxu0 %v841
    %1542 = vmatprep.subr.bf16.mxu0 %v846
    %1543 = vmatpush1.bf16.msra.mxu0 %v845
    %1544 = vmatprep.subr.bf16.mxu0 %v850
    %1545 = vmatpush1.bf16.msra.mxu0 %v849
    %1546 = vmatprep.subr.bf16.mxu0 %v854
    %1547 = vmatpush1.bf16.msra.mxu0 %v853
    %1548 = vmatprep.mubr.bf16.mxu0 %v1376
    %1549 = vmatmul.mubr.bf16.gmra.mrb[0].mxu0 %v1375
    %v1550 = vpop.f32.mrb[0].mxu0
    %v1551 = vadd.f32 %v1510, %v1550
    %v1552 = vpop.f32.mrb[0].mxu0
    %v1553 = vadd.f32 %v1512, %v1552
    %v1554 = vpop.f32.mrb[0].mxu0
    %v1555 = vpop.f32.mrb[0].mxu0
    %1556 = vdwg.mxu0
    %1557 = vmatprep.subr.bf16.mxu0 %v858
    %1558 = vmatpush1.bf16.msra.mxu0 %v857
    %1559 = vmatprep.subr.bf16.mxu0 %v862
    %1560 = vmatpush1.bf16.msra.mxu0 %v861
    %1561 = vmatprep.subr.bf16.mxu0 %v866
    %1562 = vmatpush1.bf16.msra.mxu0 %v865
    %1563 = vmatprep.subr.bf16.mxu0 %v870
    %1564 = vmatpush1.bf16.msra.mxu0 %v869
    %1565 = vmatprep.subr.bf16.mxu0 %v874
    %1566 = vmatpush1.bf16.msra.mxu0 %v873
    %1567 = vmatprep.subr.bf16.mxu0 %v878
    %1568 = vmatpush1.bf16.msra.mxu0 %v877
    %1569 = vmatprep.subr.bf16.mxu0 %v882
    %1570 = vmatpush1.bf16.msra.mxu0 %v881
    %1571 = vmatprep.subr.bf16.mxu0 %v886
    %1572 = vmatpush1.bf16.msra.mxu0 %v885
    %1573 = vmatprep.subr.bf16.mxu0 %v890
    %1574 = vmatpush1.bf16.msra.mxu0 %v889
    %1575 = vmatprep.subr.bf16.mxu0 %v894
    %1576 = vmatpush1.bf16.msra.mxu0 %v893
    %1577 = vmatprep.subr.bf16.mxu0 %v898
    %1578 = vmatpush1.bf16.msra.mxu0 %v897
    %1579 = vmatprep.subr.bf16.mxu0 %v902
    %1580 = vmatpush1.bf16.msra.mxu0 %v901
    %1581 = vmatprep.subr.bf16.mxu0 %v906
    %1582 = vmatpush1.bf16.msra.mxu0 %v905
    %1583 = vmatprep.subr.bf16.mxu0 %v910
    %1584 = vmatpush1.bf16.msra.mxu0 %v909
    %1585 = vmatprep.subr.bf16.mxu0 %v914
    %1586 = vmatpush1.bf16.msra.mxu0 %v913
    %1587 = vmatprep.subr.bf16.mxu0 %v918
    %1588 = vmatpush1.bf16.msra.mxu0 %v917
    %1589 = vmatprep.mubr.bf16.mxu0 %v1378
    %1590 = vmatmul.mubr.bf16.gmra.mrb[0].mxu0 %v1377
    %v1591 = vpop.f32.mrb[0].mxu0
    %v1592 = vadd.f32 %v1551, %v1591
    %v1593 = vpop.f32.mrb[0].mxu0
    %v1594 = vadd.f32 %v1553, %v1593
    %v1595 = vpop.f32.mrb[0].mxu0
    %v1596 = vpop.f32.mrb[0].mxu0
    %1597 = vdwg.mxu0
    %1598 = vmatprep.subr.bf16.mxu0 %v922
    %1599 = vmatpush1.bf16.msra.mxu0 %v921
    %1600 = vmatprep.subr.bf16.mxu0 %v926
    %1601 = vmatpush1.bf16.msra.mxu0 %v925
    %1602 = vmatprep.subr.bf16.mxu0 %v930
    %1603 = vmatpush1.bf16.msra.mxu0 %v929
    %1604 = vmatprep.subr.bf16.mxu0 %v934
    %1605 = vmatpush1.bf16.msra.mxu0 %v933
    %1606 = vmatprep.subr.bf16.mxu0 %v938
    %1607 = vmatpush1.bf16.msra.mxu0 %v937
    %1608 = vmatprep.subr.bf16.mxu0 %v942
    %1609 = vmatpush1.bf16.msra.mxu0 %v941
    %1610 = vmatprep.subr.bf16.mxu0 %v946
    %1611 = vmatpush1.bf16.msra.mxu0 %v945
    %1612 = vmatprep.subr.bf16.mxu0 %v950
    %1613 = vmatpush1.bf16.msra.mxu0 %v949
    %1614 = vmatprep.subr.bf16.mxu0 %v954
    %1615 = vmatpush1.bf16.msra.mxu0 %v953
    %1616 = vmatprep.subr.bf16.mxu0 %v958
    %1617 = vmatpush1.bf16.msra.mxu0 %v957
    %1618 = vmatprep.subr.bf16.mxu0 %v962
    %1619 = vmatpush1.bf16.msra.mxu0 %v961
    %1620 = vmatprep.subr.bf16.mxu0 %v966
    %1621 = vmatpush1.bf16.msra.mxu0 %v965
    %1622 = vmatprep.subr.bf16.mxu0 %v970
    %1623 = vmatpush1.bf16.msra.mxu0 %v969
    %1624 = vmatprep.subr.bf16.mxu0 %v974
    %1625 = vmatpush1.bf16.msra.mxu0 %v973
    %1626 = vmatprep.subr.bf16.mxu0 %v978
    %1627 = vmatpush1.bf16.msra.mxu0 %v977
    %1628 = vmatprep.subr.bf16.mxu0 %v982
    %1629 = vmatpush1.bf16.msra.mxu0 %v981
    %1630 = vmatprep.mubr.bf16.mxu0 %v1380
    %1631 = vmatmul.mubr.bf16.gmra.mrb[0].mxu0 %v1379
    %v1632 = vpop.f32.mrb[0].mxu0
    %v1633 = vadd.f32 %v1592, %v1632
    %v1634 = vpop.f32.mrb[0].mxu0
    %v1635 = vadd.f32 %v1594, %v1634
    %v1636 = vpop.f32.mrb[0].mxu0
    %v1637 = vpop.f32.mrb[0].mxu0
    %1638 = vdwg.mxu0
    %1639 = vmatprep.subr.bf16.mxu0 %v986
    %1640 = vmatpush1.bf16.msra.mxu0 %v985
    %1641 = vmatprep.subr.bf16.mxu0 %v990
    %1642 = vmatpush1.bf16.msra.mxu0 %v989
    %1643 = vmatprep.subr.bf16.mxu0 %v994
    %1644 = vmatpush1.bf16.msra.mxu0 %v993
    %1645 = vmatprep.subr.bf16.mxu0 %v998
    %1646 = vmatpush1.bf16.msra.mxu0 %v997
    %1647 = vmatprep.subr.bf16.mxu0 %v1002
    %1648 = vmatpush1.bf16.msra.mxu0 %v1001
    %1649 = vmatprep.subr.bf16.mxu0 %v1006
    %1650 = vmatpush1.bf16.msra.mxu0 %v1005
    %1651 = vmatprep.subr.bf16.mxu0 %v1010
    %1652 = vmatpush1.bf16.msra.mxu0 %v1009
    %1653 = vmatprep.subr.bf16.mxu0 %v1014
    %1654 = vmatpush1.bf16.msra.mxu0 %v1013
    %1655 = vmatprep.subr.bf16.mxu0 %v1018
    %1656 = vmatpush1.bf16.msra.mxu0 %v1017
    %1657 = vmatprep.subr.bf16.mxu0 %v1022
    %1658 = vmatpush1.bf16.msra.mxu0 %v1021
    %1659 = vmatprep.subr.bf16.mxu0 %v1026
    %1660 = vmatpush1.bf16.msra.mxu0 %v1025
    %1661 = vmatprep.subr.bf16.mxu0 %v1030
    %1662 = vmatpush1.bf16.msra.mxu0 %v1029
    %1663 = vmatprep.subr.bf16.mxu0 %v1034
    %1664 = vmatpush1.bf16.msra.mxu0 %v1033
    %1665 = vmatprep.subr.bf16.mxu0 %v1038
    %1666 = vmatpush1.bf16.msra.mxu0 %v1037
    %1667 = vmatprep.subr.bf16.mxu0 %v1042
    %1668 = vmatpush1.bf16.msra.mxu0 %v1041
    %1669 = vmatprep.subr.bf16.mxu0 %v1046
    %1670 = vmatpush1.bf16.msra.mxu0 %v1045
    %1671 = vmatprep.mubr.bf16.mxu0 %v1382
    %1672 = vmatmul.mubr.bf16.gmra.mrb[0].mxu0 %v1381
    %v1673 = vpop.f32.mrb[0].mxu0
    %v1674 = vadd.f32 %v1633, %v1673
    %v1675 = vpop.f32.mrb[0].mxu0
    %v1676 = vadd.f32 %v1635, %v1675
    %v1677 = vpop.f32.mrb[0].mxu0
    %v1678 = vpop.f32.mrb[0].mxu0
    %1679 = vdwg.mxu0
    %1680 = vmatprep.subr.bf16.mxu0 %v1050
    %1681 = vmatpush1.bf16.msra.mxu0 %v1049
    %1682 = vmatprep.subr.bf16.mxu0 %v1054
    %1683 = vmatpush1.bf16.msra.mxu0 %v1053
    %1684 = vmatprep.subr.bf16.mxu0 %v1058
    %1685 = vmatpush1.bf16.msra.mxu0 %v1057
    %1686 = vmatprep.subr.bf16.mxu0 %v1062
    %1687 = vmatpush1.bf16.msra.mxu0 %v1061
    %1688 = vmatprep.subr.bf16.mxu0 %v1066
    %1689 = vmatpush1.bf16.msra.mxu0 %v1065
    %1690 = vmatprep.subr.bf16.mxu0 %v1070
    %1691 = vmatpush1.bf16.msra.mxu0 %v1069
    %1692 = vmatprep.subr.bf16.mxu0 %v1074
    %1693 = vmatpush1.bf16.msra.mxu0 %v1073
    %1694 = vmatprep.subr.bf16.mxu0 %v1078
    %1695 = vmatpush1.bf16.msra.mxu0 %v1077
    %1696 = vmatprep.subr.bf16.mxu0 %v1082
    %1697 = vmatpush1.bf16.msra.mxu0 %v1081
    %1698 = vmatprep.subr.bf16.mxu0 %v1086
    %1699 = vmatpush1.bf16.msra.mxu0 %v1085
    %1700 = vmatprep.subr.bf16.mxu0 %v1090
    %1701 = vmatpush1.bf16.msra.mxu0 %v1089
    %1702 = vmatprep.subr.bf16.mxu0 %v1094
    %1703 = vmatpush1.bf16.msra.mxu0 %v1093
    %1704 = vmatprep.subr.bf16.mxu0 %v1098
    %1705 = vmatpush1.bf16.msra.mxu0 %v1097
    %1706 = vmatprep.subr.bf16.mxu0 %v1102
    %1707 = vmatpush1.bf16.msra.mxu0 %v1101
    %1708 = vmatprep.subr.bf16.mxu0 %v1106
    %1709 = vmatpush1.bf16.msra.mxu0 %v1105
    %1710 = vmatprep.subr.bf16.mxu0 %v1110
    %1711 = vmatpush1.bf16.msra.mxu0 %v1109
    %1712 = vmatprep.mubr.bf16.mxu0 %v1384
    %1713 = vmatmul.mubr.bf16.gmra.mrb[0].mxu0 %v1383
    %v1714 = vpop.f32.mrb[0].mxu0
    %v1715 = vadd.f32 %v1674, %v1714
    %v1716 = vpop.f32.mrb[0].mxu0
    %v1717 = vadd.f32 %v1676, %v1716
    %v1718 = vpop.f32.mrb[0].mxu0
    %v1719 = vpop.f32.mrb[0].mxu0
    %1720 = vdwg.mxu0
    %1721 = vmatprep.subr.bf16.mxu0 %v1114
    %1722 = vmatpush1.bf16.msra.mxu0 %v1113
    %1723 = vmatprep.subr.bf16.mxu0 %v1118
    %1724 = vmatpush1.bf16.msra.mxu0 %v1117
    %1725 = vmatprep.subr.bf16.mxu0 %v1122
    %1726 = vmatpush1.bf16.msra.mxu0 %v1121
    %1727 = vmatprep.subr.bf16.mxu0 %v1126
    %1728 = vmatpush1.bf16.msra.mxu0 %v1125
    %1729 = vmatprep.subr.bf16.mxu0 %v1130
    %1730 = vmatpush1.bf16.msra.mxu0 %v1129
    %1731 = vmatprep.subr.bf16.mxu0 %v1134
    %1732 = vmatpush1.bf16.msra.mxu0 %v1133
    %1733 = vmatprep.subr.bf16.mxu0 %v1138
    %1734 = vmatpush1.bf16.msra.mxu0 %v1137
    %1735 = vmatprep.subr.bf16.mxu0 %v1142
    %1736 = vmatpush1.bf16.msra.mxu0 %v1141
    %1737 = vmatprep.subr.bf16.mxu0 %v1146
    %1738 = vmatpush1.bf16.msra.mxu0 %v1145
    %1739 = vmatprep.subr.bf16.mxu0 %v1150
    %1740 = vmatpush1.bf16.msra.mxu0 %v1149
    %1741 = vmatprep.subr.bf16.mxu0 %v1154
    %1742 = vmatpush1.bf16.msra.mxu0 %v1153
    %1743 = vmatprep.subr.bf16.mxu0 %v1158
    %1744 = vmatpush1.bf16.msra.mxu0 %v1157
    %1745 = vmatprep.subr.bf16.mxu0 %v1162
    %1746 = vmatpush1.bf16.msra.mxu0 %v1161
    %1747 = vmatprep.subr.bf16.mxu0 %v1166
    %1748 = vmatpush1.bf16.msra.mxu0 %v1165
    %1749 = vmatprep.subr.bf16.mxu0 %v1170
    %1750 = vmatpush1.bf16.msra.mxu0 %v1169
    %1751 = vmatprep.subr.bf16.mxu0 %v1174
    %1752 = vmatpush1.bf16.msra.mxu0 %v1173
    %1753 = vmatprep.mubr.bf16.mxu0 %v1386
    %1754 = vmatmul.mubr.bf16.gmra.mrb[0].mxu0 %v1385
    %v1755 = vpop.f32.mrb[0].mxu0
    %v1756 = vadd.f32 %v1715, %v1755
    %v1757 = vpop.f32.mrb[0].mxu0
    %v1758 = vadd.f32 %v1717, %v1757
    %v1759 = vpop.f32.mrb[0].mxu0
    %v1760 = vpop.f32.mrb[0].mxu0
    %1761 = vdwg.mxu0
    %1762 = vmatprep.subr.bf16.mxu0 %v1178
    %1763 = vmatpush1.bf16.msra.mxu0 %v1177
    %1764 = vmatprep.subr.bf16.mxu0 %v1182
    %1765 = vmatpush1.bf16.msra.mxu0 %v1181
    %1766 = vmatprep.subr.bf16.mxu0 %v1186
    %1767 = vmatpush1.bf16.msra.mxu0 %v1185
    %1768 = vmatprep.subr.bf16.mxu0 %v1190
    %1769 = vmatpush1.bf16.msra.mxu0 %v1189
    %1770 = vmatprep.subr.bf16.mxu0 %v1194
    %1771 = vmatpush1.bf16.msra.mxu0 %v1193
    %1772 = vmatprep.subr.bf16.mxu0 %v1198
    %1773 = vmatpush1.bf16.msra.mxu0 %v1197
    %1774 = vmatprep.subr.bf16.mxu0 %v1202
    %1775 = vmatpush1.bf16.msra.mxu0 %v1201
    %1776 = vmatprep.subr.bf16.mxu0 %v1206
    %1777 = vmatpush1.bf16.msra.mxu0 %v1205
    %1778 = vmatprep.subr.bf16.mxu0 %v1210
    %1779 = vmatpush1.bf16.msra.mxu0 %v1209
    %1780 = vmatprep.subr.bf16.mxu0 %v1214
    %1781 = vmatpush1.bf16.msra.mxu0 %v1213
    %1782 = vmatprep.subr.bf16.mxu0 %v1218
    %1783 = vmatpush1.bf16.msra.mxu0 %v1217
    %1784 = vmatprep.subr.bf16.mxu0 %v1222
    %1785 = vmatpush1.bf16.msra.mxu0 %v1221
    %1786 = vmatprep.subr.bf16.mxu0 %v1226
    %1787 = vmatpush1.bf16.msra.mxu0 %v1225
    %1788 = vmatprep.subr.bf16.mxu0 %v1230
    %1789 = vmatpush1.bf16.msra.mxu0 %v1229
    %1790 = vmatprep.subr.bf16.mxu0 %v1234
    %1791 = vmatpush1.bf16.msra.mxu0 %v1233
    %1792 = vmatprep.subr.bf16.mxu0 %v1238
    %1793 = vmatpush1.bf16.msra.mxu0 %v1237
    %1794 = vmatprep.mubr.bf16.mxu0 %v1388
    %1795 = vmatmul.mubr.bf16.gmra.mrb[0].mxu0 %v1387
    %v1796 = vpop.f32.mrb[0].mxu0
    %v1797 = vadd.f32 %v1756, %v1796
    %v1798 = vpop.f32.mrb[0].mxu0
    %v1799 = vadd.f32 %v1758, %v1798
    %v1800 = vpop.f32.mrb[0].mxu0
    %v1801 = vpop.f32.mrb[0].mxu0
    %1802 = vdwg.mxu0
    %1803 = vmatprep.subr.bf16.mxu0 %v1242
    %1804 = vmatpush1.bf16.msra.mxu0 %v1241
    %1805 = vmatprep.subr.bf16.mxu0 %v1246
    %1806 = vmatpush1.bf16.msra.mxu0 %v1245
    %1807 = vmatprep.subr.bf16.mxu0 %v1250
    %1808 = vmatpush1.bf16.msra.mxu0 %v1249
    %1809 = vmatprep.subr.bf16.mxu0 %v1254
    %1810 = vmatpush1.bf16.msra.mxu0 %v1253
    %1811 = vmatprep.subr.bf16.mxu0 %v1258
    %1812 = vmatpush1.bf16.msra.mxu0 %v1257
    %1813 = vmatprep.subr.bf16.mxu0 %v1262
    %1814 = vmatpush1.bf16.msra.mxu0 %v1261
    %1815 = vmatprep.subr.bf16.mxu0 %v1266
    %1816 = vmatpush1.bf16.msra.mxu0 %v1265
    %1817 = vmatprep.subr.bf16.mxu0 %v1270
    %1818 = vmatpush1.bf16.msra.mxu0 %v1269
    %1819 = vmatprep.subr.bf16.mxu0 %v1274
    %1820 = vmatpush1.bf16.msra.mxu0 %v1273
    %1821 = vmatprep.subr.bf16.mxu0 %v1278
    %1822 = vmatpush1.bf16.msra.mxu0 %v1277
    %1823 = vmatprep.subr.bf16.mxu0 %v1282
    %1824 = vmatpush1.bf16.msra.mxu0 %v1281
    %1825 = vmatprep.subr.bf16.mxu0 %v1286
    %1826 = vmatpush1.bf16.msra.mxu0 %v1285
    %1827 = vmatprep.subr.bf16.mxu0 %v1290
    %1828 = vmatpush1.bf16.msra.mxu0 %v1289
    %1829 = vmatprep.subr.bf16.mxu0 %v1294
    %1830 = vmatpush1.bf16.msra.mxu0 %v1293
    %1831 = vmatprep.subr.bf16.mxu0 %v1298
    %1832 = vmatpush1.bf16.msra.mxu0 %v1297
    %1833 = vmatprep.subr.bf16.mxu0 %v1302
    %1834 = vmatpush1.bf16.msra.mxu0 %v1301
    %1835 = vmatprep.mubr.bf16.mxu0 %v1390
    %1836 = vmatmul.mubr.bf16.gmra.mrb[0].mxu0 %v1389
    %v1837 = vpop.f32.mrb[0].mxu0
    %v1838 = vadd.f32 %v1797, %v1837
    %v1839 = vpop.f32.mrb[0].mxu0
    %v1840 = vadd.f32 %v1799, %v1839
    %v1841 = vpop.f32.mrb[0].mxu0
    %v1842 = vpop.f32.mrb[0].mxu0
    %1843 = vdwg.mxu0
    %1844 = vmatprep.subr.bf16.mxu0 %v1306
    %1845 = vmatpush1.bf16.msra.mxu0 %v1305
    %1846 = vmatprep.subr.bf16.mxu0 %v1310
    %1847 = vmatpush1.bf16.msra.mxu0 %v1309
    %1848 = vmatprep.subr.bf16.mxu0 %v1314
    %1849 = vmatpush1.bf16.msra.mxu0 %v1313
    %1850 = vmatprep.subr.bf16.mxu0 %v1318
    %1851 = vmatpush1.bf16.msra.mxu0 %v1317
    %1852 = vmatprep.subr.bf16.mxu0 %v1322
    %1853 = vmatpush1.bf16.msra.mxu0 %v1321
    %1854 = vmatprep.subr.bf16.mxu0 %v1326
    %1855 = vmatpush1.bf16.msra.mxu0 %v1325
    %1856 = vmatprep.subr.bf16.mxu0 %v1330
    %1857 = vmatpush1.bf16.msra.mxu0 %v1329
    %1858 = vmatprep.subr.bf16.mxu0 %v1334
    %1859 = vmatpush1.bf16.msra.mxu0 %v1333
    %1860 = vmatprep.subr.bf16.mxu0 %v1338
    %1861 = vmatpush1.bf16.msra.mxu0 %v1337
    %1862 = vmatprep.subr.bf16.mxu0 %v1342
    %1863 = vmatpush1.bf16.msra.mxu0 %v1341
    %1864 = vmatprep.subr.bf16.mxu0 %v1346
    %1865 = vmatpush1.bf16.msra.mxu0 %v1345
    %1866 = vmatprep.subr.bf16.mxu0 %v1350
    %1867 = vmatpush1.bf16.msra.mxu0 %v1349
    %1868 = vmatprep.subr.bf16.mxu0 %v1354
    %1869 = vmatpush1.bf16.msra.mxu0 %v1353
    %1870 = vmatprep.subr.bf16.mxu0 %v1358
    %1871 = vmatpush1.bf16.msra.mxu0 %v1357
    %1872 = vmatprep.subr.bf16.mxu0 %v1362
    %1873 = vmatpush1.bf16.msra.mxu0 %v1361
    %1874 = vmatprep.subr.bf16.mxu0 %v1366
    %1875 = vmatpush1.bf16.msra.mxu0 %v1365
    %1876 = vmatprep.mubr.bf16.mxu0 %v1392
    %1877 = vmatmul.mubr.bf16.gmra.mrb[0].mxu0 %v1391
    %v1878 = vpop.f32.mrb[0].mxu0
    %v1879 = vadd.f32 %v1838, %v1878
    %v1880 = vpop.f32.mrb[0].mxu0
    %v1881 = vadd.f32 %v1840, %v1880
    %v1882 = vpop.f32.mrb[0].mxu0
    %v1883 = vpop.f32.mrb[0].mxu0
    %1884 = vdwg.mxu0
    %1885 = vmatprep.subr.bf16.mxu0 %v604
    %1886 = vmatpush1.bf16.msra.mxu0 %v603
    %1887 = vmatprep.subr.bf16.mxu0 %v608
    %1888 = vmatpush1.bf16.msra.mxu0 %v607
    %1889 = vmatprep.subr.bf16.mxu0 %v612
    %1890 = vmatpush1.bf16.msra.mxu0 %v611
    %1891 = vmatprep.subr.bf16.mxu0 %v616
    %1892 = vmatpush1.bf16.msra.mxu0 %v615
    %1893 = vmatprep.subr.bf16.mxu0 %v620
    %1894 = vmatpush1.bf16.msra.mxu0 %v619
    %1895 = vmatprep.subr.bf16.mxu0 %v624
    %1896 = vmatpush1.bf16.msra.mxu0 %v623
    %1897 = vmatprep.subr.bf16.mxu0 %v628
    %1898 = vmatpush1.bf16.msra.mxu0 %v627
    %1899 = vmatprep.subr.bf16.mxu0 %v632
    %1900 = vmatpush1.bf16.msra.mxu0 %v631
    %1901 = vmatprep.subr.bf16.mxu0 %v636
    %1902 = vmatpush1.bf16.msra.mxu0 %v635
    %1903 = vmatprep.subr.bf16.mxu0 %v640
    %1904 = vmatpush1.bf16.msra.mxu0 %v639
    %1905 = vmatprep.subr.bf16.mxu0 %v644
    %1906 = vmatpush1.bf16.msra.mxu0 %v643
    %1907 = vmatprep.subr.bf16.mxu0 %v648
    %1908 = vmatpush1.bf16.msra.mxu0 %v647
    %1909 = vmatprep.subr.bf16.mxu0 %v652
    %1910 = vmatpush1.bf16.msra.mxu0 %v651
    %1911 = vmatprep.subr.bf16.mxu0 %v656
    %1912 = vmatpush1.bf16.msra.mxu0 %v655
    %1913 = vmatprep.subr.bf16.mxu0 %v660
    %1914 = vmatpush1.bf16.msra.mxu0 %v659
    %1915 = vmatprep.subr.bf16.mxu0 %v664
    %1916 = vmatpush1.bf16.msra.mxu0 %v663
    %1917 = vmatprep.mubr.bf16.mxu0 %v1370
    %1918 = vmatmul.mubr.bf16.gmra.mrb[0].mxu0 %v1369
    %v1919 = vpop.f32.mrb[0].mxu0
    %v1920 = vadd.f32 0.0, %v1919
    %v1921 = vpop.f32.mrb[0].mxu0
    %v1922 = vadd.f32 0.0, %v1921
    %v1923 = vpop.f32.mrb[0].mxu0
    %v1924 = vpop.f32.mrb[0].mxu0
    %1925 = vdwg.mxu0
    %1926 = vmatprep.subr.bf16.mxu0 %v668
    %1927 = vmatpush1.bf16.msra.mxu0 %v667
    %1928 = vmatprep.subr.bf16.mxu0 %v672
    %1929 = vmatpush1.bf16.msra.mxu0 %v671
    %1930 = vmatprep.subr.bf16.mxu0 %v676
    %1931 = vmatpush1.bf16.msra.mxu0 %v675
    %1932 = vmatprep.subr.bf16.mxu0 %v680
    %1933 = vmatpush1.bf16.msra.mxu0 %v679
    %1934 = vmatprep.subr.bf16.mxu0 %v684
    %1935 = vmatpush1.bf16.msra.mxu0 %v683
    %1936 = vmatprep.subr.bf16.mxu0 %v688
    %1937 = vmatpush1.bf16.msra.mxu0 %v687
    %1938 = vmatprep.subr.bf16.mxu0 %v692
    %1939 = vmatpush1.bf16.msra.mxu0 %v691
    %1940 = vmatprep.subr.bf16.mxu0 %v696
    %1941 = vmatpush1.bf16.msra.mxu0 %v695
    %1942 = vmatprep.subr.bf16.mxu0 %v700
    %1943 = vmatpush1.bf16.msra.mxu0 %v699
    %1944 = vmatprep.subr.bf16.mxu0 %v704
    %1945 = vmatpush1.bf16.msra.mxu0 %v703
    %1946 = vmatprep.subr.bf16.mxu0 %v708
    %1947 = vmatpush1.bf16.msra.mxu0 %v707
    %1948 = vmatprep.subr.bf16.mxu0 %v712
    %1949 = vmatpush1.bf16.msra.mxu0 %v711
    %1950 = vmatprep.subr.bf16.mxu0 %v716
    %1951 = vmatpush1.bf16.msra.mxu0 %v715
    %1952 = vmatprep.subr.bf16.mxu0 %v720
    %1953 = vmatpush1.bf16.msra.mxu0 %v719
    %1954 = vmatprep.subr.bf16.mxu0 %v724
    %1955 = vmatpush1.bf16.msra.mxu0 %v723
    %1956 = vmatprep.subr.bf16.mxu0 %v728
    %1957 = vmatpush1.bf16.msra.mxu0 %v727
    %1958 = vmatprep.mubr.bf16.mxu0 %v1372
    %1959 = vmatmul.mubr.bf16.gmra.mrb[0].mxu0 %v1371
    %v1960 = vpop.f32.mrb[0].mxu0
    %v1961 = vadd.f32 %v1920, %v1960
    %v1962 = vpop.f32.mrb[0].mxu0
    %v1963 = vadd.f32 %v1922, %v1962
    %v1964 = vpop.f32.mrb[0].mxu0
    %v1965 = vpop.f32.mrb[0].mxu0
    %1966 = vdwg.mxu0
    %1967 = vmatprep.subr.bf16.mxu0 %v732
    %1968 = vmatpush1.bf16.msra.mxu0 %v731
    %1969 = vmatprep.subr.bf16.mxu0 %v736
    %1970 = vmatpush1.bf16.msra.mxu0 %v735
    %1971 = vmatprep.subr.bf16.mxu0 %v740
    %1972 = vmatpush1.bf16.msra.mxu0 %v739
    %1973 = vmatprep.subr.bf16.mxu0 %v744
    %1974 = vmatpush1.bf16.msra.mxu0 %v743
    %1975 = vmatprep.subr.bf16.mxu0 %v748
    %1976 = vmatpush1.bf16.msra.mxu0 %v747
    %1977 = vmatprep.subr.bf16.mxu0 %v752
    %1978 = vmatpush1.bf16.msra.mxu0 %v751
    %1979 = vmatprep.subr.bf16.mxu0 %v756
    %1980 = vmatpush1.bf16.msra.mxu0 %v755
    %1981 = vmatprep.subr.bf16.mxu0 %v760
    %1982 = vmatpush1.bf16.msra.mxu0 %v759
    %1983 = vmatprep.subr.bf16.mxu0 %v764
    %1984 = vmatpush1.bf16.msra.mxu0 %v763
    %1985 = vmatprep.subr.bf16.mxu0 %v768
    %1986 = vmatpush1.bf16.msra.mxu0 %v767
    %1987 = vmatprep.subr.bf16.mxu0 %v772
    %1988 = vmatpush1.bf16.msra.mxu0 %v771
    %1989 = vmatprep.subr.bf16.mxu0 %v776
    %1990 = vmatpush1.bf16.msra.mxu0 %v775
    %1991 = vmatprep.subr.bf16.mxu0 %v780
    %1992 = vmatpush1.bf16.msra.mxu0 %v779
    %1993 = vmatprep.subr.bf16.mxu0 %v784
    %1994 = vmatpush1.bf16.msra.mxu0 %v783
    %1995 = vmatprep.subr.bf16.mxu0 %v788
    %1996 = vmatpush1.bf16.msra.mxu0 %v787
    %1997 = vmatprep.subr.bf16.mxu0 %v792
    %1998 = vmatpush1.bf16.msra.mxu0 %v791
    %1999 = vmatprep.mubr.bf16.mxu0 %v1374
    %2000 = vmatmul.mubr.bf16.gmra.mrb[0].mxu0 %v1373
    %v2001 = vpop.f32.mrb[0].mxu0
    %v2002 = vadd.f32 %v1961, %v2001
    %v2003 = vpop.f32.mrb[0].mxu0
    %v2004 = vadd.f32 %v1963, %v2003
    %v2005 = vpop.f32.mrb[0].mxu0
    %v2006 = vpop.f32.mrb[0].mxu0
    %2007 = vdwg.mxu0
    %2008 = vmatprep.subr.bf16.mxu0 %v796
    %2009 = vmatpush1.bf16.msra.mxu0 %v795
    %2010 = vmatprep.subr.bf16.mxu0 %v800
    %2011 = vmatpush1.bf16.msra.mxu0 %v799
    %2012 = vmatprep.subr.bf16.mxu0 %v804
    %2013 = vmatpush1.bf16.msra.mxu0 %v803
    %2014 = vmatprep.subr.bf16.mxu0 %v808
    %2015 = vmatpush1.bf16.msra.mxu0 %v807
    %2016 = vmatprep.subr.bf16.mxu0 %v812
    %2017 = vmatpush1.bf16.msra.mxu0 %v811
    %2018 = vmatprep.subr.bf16.mxu0 %v816
    %2019 = vmatpush1.bf16.msra.mxu0 %v815
    %2020 = vmatprep.subr.bf16.mxu0 %v820
    %2021 = vmatpush1.bf16.msra.mxu0 %v819
    %2022 = vmatprep.subr.bf16.mxu0 %v824
    %2023 = vmatpush1.bf16.msra.mxu0 %v823
    %2024 = vmatprep.subr.bf16.mxu0 %v828
    %2025 = vmatpush1.bf16.msra.mxu0 %v827
    %2026 = vmatprep.subr.bf16.mxu0 %v832
    %2027 = vmatpush1.bf16.msra.mxu0 %v831
    %2028 = vmatprep.subr.bf16.mxu0 %v836
    %2029 = vmatpush1.bf16.msra.mxu0 %v835
    %2030 = vmatprep.subr.bf16.mxu0 %v840
    %2031 = vmatpush1.bf16.msra.mxu0 %v839
    %2032 = vmatprep.subr.bf16.mxu0 %v844
    %2033 = vmatpush1.bf16.msra.mxu0 %v843
    %2034 = vmatprep.subr.bf16.mxu0 %v848
    %2035 = vmatpush1.bf16.msra.mxu0 %v847
    %2036 = vmatprep.subr.bf16.mxu0 %v852
    %2037 = vmatpush1.bf16.msra.mxu0 %v851
    %2038 = vmatprep.subr.bf16.mxu0 %v856
    %2039 = vmatpush1.bf16.msra.mxu0 %v855
    %2040 = vmatprep.mubr.bf16.mxu0 %v1376
    %2041 = vmatmul.mubr.bf16.gmra.mrb[0].mxu0 %v1375
    %v2042 = vpop.f32.mrb[0].mxu0
    %v2043 = vadd.f32 %v2002, %v2042
    %v2044 = vpop.f32.mrb[0].mxu0
    %v2045 = vadd.f32 %v2004, %v2044
    %v2046 = vpop.f32.mrb[0].mxu0
    %v2047 = vpop.f32.mrb[0].mxu0
    %2048 = vdwg.mxu0
    %2049 = vmatprep.subr.bf16.mxu0 %v860
    %2050 = vmatpush1.bf16.msra.mxu0 %v859
    %2051 = vmatprep.subr.bf16.mxu0 %v864
    %2052 = vmatpush1.bf16.msra.mxu0 %v863
    %2053 = vmatprep.subr.bf16.mxu0 %v868
    %2054 = vmatpush1.bf16.msra.mxu0 %v867
    %2055 = vmatprep.subr.bf16.mxu0 %v872
    %2056 = vmatpush1.bf16.msra.mxu0 %v871
    %2057 = vmatprep.subr.bf16.mxu0 %v876
    %2058 = vmatpush1.bf16.msra.mxu0 %v875
    %2059 = vmatprep.subr.bf16.mxu0 %v880
    %2060 = vmatpush1.bf16.msra.mxu0 %v879
    %2061 = vmatprep.subr.bf16.mxu0 %v884
    %2062 = vmatpush1.bf16.msra.mxu0 %v883
    %2063 = vmatprep.subr.bf16.mxu0 %v888
    %2064 = vmatpush1.bf16.msra.mxu0 %v887
    %2065 = vmatprep.subr.bf16.mxu0 %v892
    %2066 = vmatpush1.bf16.msra.mxu0 %v891
    %2067 = vmatprep.subr.bf16.mxu0 %v896
    %2068 = vmatpush1.bf16.msra.mxu0 %v895
    %2069 = vmatprep.subr.bf16.mxu0 %v900
    %2070 = vmatpush1.bf16.msra.mxu0 %v899
    %2071 = vmatprep.subr.bf16.mxu0 %v904
    %2072 = vmatpush1.bf16.msra.mxu0 %v903
    %2073 = vmatprep.subr.bf16.mxu0 %v908
    %2074 = vmatpush1.bf16.msra.mxu0 %v907
    %2075 = vmatprep.subr.bf16.mxu0 %v912
    %2076 = vmatpush1.bf16.msra.mxu0 %v911
    %2077 = vmatprep.subr.bf16.mxu0 %v916
    %2078 = vmatpush1.bf16.msra.mxu0 %v915
    %2079 = vmatprep.subr.bf16.mxu0 %v920
    %2080 = vmatpush1.bf16.msra.mxu0 %v919
    %2081 = vmatprep.mubr.bf16.mxu0 %v1378
    %2082 = vmatmul.mubr.bf16.gmra.mrb[0].mxu0 %v1377
    %v2083 = vpop.f32.mrb[0].mxu0
    %v2084 = vadd.f32 %v2043, %v2083
    %v2085 = vpop.f32.mrb[0].mxu0
    %v2086 = vadd.f32 %v2045, %v2085
    %v2087 = vpop.f32.mrb[0].mxu0
    %v2088 = vpop.f32.mrb[0].mxu0
    %2089 = vdwg.mxu0
    %2090 = vmatprep.subr.bf16.mxu0 %v924
    %2091 = vmatpush1.bf16.msra.mxu0 %v923
    %2092 = vmatprep.subr.bf16.mxu0 %v928
    %2093 = vmatpush1.bf16.msra.mxu0 %v927
    %2094 = vmatprep.subr.bf16.mxu0 %v932
    %2095 = vmatpush1.bf16.msra.mxu0 %v931
    %2096 = vmatprep.subr.bf16.mxu0 %v936
    %2097 = vmatpush1.bf16.msra.mxu0 %v935
    %2098 = vmatprep.subr.bf16.mxu0 %v940
    %2099 = vmatpush1.bf16.msra.mxu0 %v939
    %2100 = vmatprep.subr.bf16.mxu0 %v944
    %2101 = vmatpush1.bf16.msra.mxu0 %v943
    %2102 = vmatprep.subr.bf16.mxu0 %v948
    %2103 = vmatpush1.bf16.msra.mxu0 %v947
    %2104 = vmatprep.subr.bf16.mxu0 %v952
    %2105 = vmatpush1.bf16.msra.mxu0 %v951
    %2106 = vmatprep.subr.bf16.mxu0 %v956
    %2107 = vmatpush1.bf16.msra.mxu0 %v955
    %2108 = vmatprep.subr.bf16.mxu0 %v960
    %2109 = vmatpush1.bf16.msra.mxu0 %v959
    %2110 = vmatprep.subr.bf16.mxu0 %v964
    %2111 = vmatpush1.bf16.msra.mxu0 %v963
    %2112 = vmatprep.subr.bf16.mxu0 %v968
    %2113 = vmatpush1.bf16.msra.mxu0 %v967
    %2114 = vmatprep.subr.bf16.mxu0 %v972
    %2115 = vmatpush1.bf16.msra.mxu0 %v971
    %2116 = vmatprep.subr.bf16.mxu0 %v976
    %2117 = vmatpush1.bf16.msra.mxu0 %v975
    %2118 = vmatprep.subr.bf16.mxu0 %v980
    %2119 = vmatpush1.bf16.msra.mxu0 %v979
    %2120 = vmatprep.subr.bf16.mxu0 %v984
    %2121 = vmatpush1.bf16.msra.mxu0 %v983
    %2122 = vmatprep.mubr.bf16.mxu0 %v1380
    %2123 = vmatmul.mubr.bf16.gmra.mrb[0].mxu0 %v1379
    %v2124 = vpop.f32.mrb[0].mxu0
    %v2125 = vadd.f32 %v2084, %v2124
    %v2126 = vpop.f32.mrb[0].mxu0
    %v2127 = vadd.f32 %v2086, %v2126
    %v2128 = vpop.f32.mrb[0].mxu0
    %v2129 = vpop.f32.mrb[0].mxu0
    %2130 = vdwg.mxu0
    %2131 = vmatprep.subr.bf16.mxu0 %v988
    %2132 = vmatpush1.bf16.msra.mxu0 %v987
    %2133 = vmatprep.subr.bf16.mxu0 %v992
    %2134 = vmatpush1.bf16.msra.mxu0 %v991
    %2135 = vmatprep.subr.bf16.mxu0 %v996
    %2136 = vmatpush1.bf16.msra.mxu0 %v995
    %2137 = vmatprep.subr.bf16.mxu0 %v1000
    %2138 = vmatpush1.bf16.msra.mxu0 %v999
    %2139 = vmatprep.subr.bf16.mxu0 %v1004
    %2140 = vmatpush1.bf16.msra.mxu0 %v1003
    %2141 = vmatprep.subr.bf16.mxu0 %v1008
    %2142 = vmatpush1.bf16.msra.mxu0 %v1007
    %2143 = vmatprep.subr.bf16.mxu0 %v1012
    %2144 = vmatpush1.bf16.msra.mxu0 %v1011
    %2145 = vmatprep.subr.bf16.mxu0 %v1016
    %2146 = vmatpush1.bf16.msra.mxu0 %v1015
    %2147 = vmatprep.subr.bf16.mxu0 %v1020
    %2148 = vmatpush1.bf16.msra.mxu0 %v1019
    %2149 = vmatprep.subr.bf16.mxu0 %v1024
    %2150 = vmatpush1.bf16.msra.mxu0 %v1023
    %2151 = vmatprep.subr.bf16.mxu0 %v1028
    %2152 = vmatpush1.bf16.msra.mxu0 %v1027
    %2153 = vmatprep.subr.bf16.mxu0 %v1032
    %2154 = vmatpush1.bf16.msra.mxu0 %v1031
    %2155 = vmatprep.subr.bf16.mxu0 %v1036
    %2156 = vmatpush1.bf16.msra.mxu0 %v1035
    %2157 = vmatprep.subr.bf16.mxu0 %v1040
    %2158 = vmatpush1.bf16.msra.mxu0 %v1039
    %2159 = vmatprep.subr.bf16.mxu0 %v1044
    %2160 = vmatpush1.bf16.msra.mxu0 %v1043
    %2161 = vmatprep.subr.bf16.mxu0 %v1048
    %2162 = vmatpush1.bf16.msra.mxu0 %v1047
    %2163 = vmatprep.mubr.bf16.mxu0 %v1382
    %2164 = vmatmul.mubr.bf16.gmra.mrb[0].mxu0 %v1381
    %v2165 = vpop.f32.mrb[0].mxu0
    %v2166 = vadd.f32 %v2125, %v2165
    %v2167 = vpop.f32.mrb[0].mxu0
    %v2168 = vadd.f32 %v2127, %v2167
    %v2169 = vpop.f32.mrb[0].mxu0
    %v2170 = vpop.f32.mrb[0].mxu0
    %2171 = vdwg.mxu0
    %2172 = vmatprep.subr.bf16.mxu0 %v1052
    %2173 = vmatpush1.bf16.msra.mxu0 %v1051
    %2174 = vmatprep.subr.bf16.mxu0 %v1056
    %2175 = vmatpush1.bf16.msra.mxu0 %v1055
    %2176 = vmatprep.subr.bf16.mxu0 %v1060
    %2177 = vmatpush1.bf16.msra.mxu0 %v1059
    %2178 = vmatprep.subr.bf16.mxu0 %v1064
    %2179 = vmatpush1.bf16.msra.mxu0 %v1063
    %2180 = vmatprep.subr.bf16.mxu0 %v1068
    %2181 = vmatpush1.bf16.msra.mxu0 %v1067
    %2182 = vmatprep.subr.bf16.mxu0 %v1072
    %2183 = vmatpush1.bf16.msra.mxu0 %v1071
    %2184 = vmatprep.subr.bf16.mxu0 %v1076
    %2185 = vmatpush1.bf16.msra.mxu0 %v1075
    %2186 = vmatprep.subr.bf16.mxu0 %v1080
    %2187 = vmatpush1.bf16.msra.mxu0 %v1079
    %2188 = vmatprep.subr.bf16.mxu0 %v1084
    %2189 = vmatpush1.bf16.msra.mxu0 %v1083
    %2190 = vmatprep.subr.bf16.mxu0 %v1088
    %2191 = vmatpush1.bf16.msra.mxu0 %v1087
    %2192 = vmatprep.subr.bf16.mxu0 %v1092
    %2193 = vmatpush1.bf16.msra.mxu0 %v1091
    %2194 = vmatprep.subr.bf16.mxu0 %v1096
    %2195 = vmatpush1.bf16.msra.mxu0 %v1095
    %2196 = vmatprep.subr.bf16.mxu0 %v1100
    %2197 = vmatpush1.bf16.msra.mxu0 %v1099
    %2198 = vmatprep.subr.bf16.mxu0 %v1104
    %2199 = vmatpush1.bf16.msra.mxu0 %v1103
    %2200 = vmatprep.subr.bf16.mxu0 %v1108
    %2201 = vmatpush1.bf16.msra.mxu0 %v1107
    %2202 = vmatprep.subr.bf16.mxu0 %v1112
    %2203 = vmatpush1.bf16.msra.mxu0 %v1111
    %2204 = vmatprep.mubr.bf16.mxu0 %v1384
    %2205 = vmatmul.mubr.bf16.gmra.mrb[0].mxu0 %v1383
    %v2206 = vpop.f32.mrb[0].mxu0
    %v2207 = vadd.f32 %v2166, %v2206
    %v2208 = vpop.f32.mrb[0].mxu0
    %v2209 = vadd.f32 %v2168, %v2208
    %v2210 = vpop.f32.mrb[0].mxu0
    %v2211 = vpop.f32.mrb[0].mxu0
    %2212 = vdwg.mxu0
    %2213 = vmatprep.subr.bf16.mxu0 %v1116
    %2214 = vmatpush1.bf16.msra.mxu0 %v1115
    %2215 = vmatprep.subr.bf16.mxu0 %v1120
    %2216 = vmatpush1.bf16.msra.mxu0 %v1119
    %2217 = vmatprep.subr.bf16.mxu0 %v1124
    %2218 = vmatpush1.bf16.msra.mxu0 %v1123
    %2219 = vmatprep.subr.bf16.mxu0 %v1128
    %2220 = vmatpush1.bf16.msra.mxu0 %v1127
    %2221 = vmatprep.subr.bf16.mxu0 %v1132
    %2222 = vmatpush1.bf16.msra.mxu0 %v1131
    %2223 = vmatprep.subr.bf16.mxu0 %v1136
    %2224 = vmatpush1.bf16.msra.mxu0 %v1135
    %2225 = vmatprep.subr.bf16.mxu0 %v1140
    %2226 = vmatpush1.bf16.msra.mxu0 %v1139
    %2227 = vmatprep.subr.bf16.mxu0 %v1144
    %2228 = vmatpush1.bf16.msra.mxu0 %v1143
    %2229 = vmatprep.subr.bf16.mxu0 %v1148
    %2230 = vmatpush1.bf16.msra.mxu0 %v1147
    %2231 = vmatprep.subr.bf16.mxu0 %v1152
    %2232 = vmatpush1.bf16.msra.mxu0 %v1151
    %2233 = vmatprep.subr.bf16.mxu0 %v1156
    %2234 = vmatpush1.bf16.msra.mxu0 %v1155
    %2235 = vmatprep.subr.bf16.mxu0 %v1160
    %2236 = vmatpush1.bf16.msra.mxu0 %v1159
    %2237 = vmatprep.subr.bf16.mxu0 %v1164
    %2238 = vmatpush1.bf16.msra.mxu0 %v1163
    %2239 = vmatprep.subr.bf16.mxu0 %v1168
    %2240 = vmatpush1.bf16.msra.mxu0 %v1167
    %2241 = vmatprep.subr.bf16.mxu0 %v1172
    %2242 = vmatpush1.bf16.msra.mxu0 %v1171
    %2243 = vmatprep.subr.bf16.mxu0 %v1176
    %2244 = vmatpush1.bf16.msra.mxu0 %v1175
    %2245 = vmatprep.mubr.bf16.mxu0 %v1386
    %2246 = vmatmul.mubr.bf16.gmra.mrb[0].mxu0 %v1385
    %v2247 = vpop.f32.mrb[0].mxu0
    %v2248 = vadd.f32 %v2207, %v2247
    %v2249 = vpop.f32.mrb[0].mxu0
    %v2250 = vadd.f32 %v2209, %v2249
    %v2251 = vpop.f32.mrb[0].mxu0
    %v2252 = vpop.f32.mrb[0].mxu0
    %2253 = vdwg.mxu0
    %2254 = vmatprep.subr.bf16.mxu0 %v1180
    %2255 = vmatpush1.bf16.msra.mxu0 %v1179
    %2256 = vmatprep.subr.bf16.mxu0 %v1184
    %2257 = vmatpush1.bf16.msra.mxu0 %v1183
    %2258 = vmatprep.subr.bf16.mxu0 %v1188
    %2259 = vmatpush1.bf16.msra.mxu0 %v1187
    %2260 = vmatprep.subr.bf16.mxu0 %v1192
    %2261 = vmatpush1.bf16.msra.mxu0 %v1191
    %2262 = vmatprep.subr.bf16.mxu0 %v1196
    %2263 = vmatpush1.bf16.msra.mxu0 %v1195
    %2264 = vmatprep.subr.bf16.mxu0 %v1200
    %2265 = vmatpush1.bf16.msra.mxu0 %v1199
    %2266 = vmatprep.subr.bf16.mxu0 %v1204
    %2267 = vmatpush1.bf16.msra.mxu0 %v1203
    %2268 = vmatprep.subr.bf16.mxu0 %v1208
    %2269 = vmatpush1.bf16.msra.mxu0 %v1207
    %2270 = vmatprep.subr.bf16.mxu0 %v1212
    %2271 = vmatpush1.bf16.msra.mxu0 %v1211
    %2272 = vmatprep.subr.bf16.mxu0 %v1216
    %2273 = vmatpush1.bf16.msra.mxu0 %v1215
    %2274 = vmatprep.subr.bf16.mxu0 %v1220
    %2275 = vmatpush1.bf16.msra.mxu0 %v1219
    %2276 = vmatprep.subr.bf16.mxu0 %v1224
    %2277 = vmatpush1.bf16.msra.mxu0 %v1223
    %2278 = vmatprep.subr.bf16.mxu0 %v1228
    %2279 = vmatpush1.bf16.msra.mxu0 %v1227
    %2280 = vmatprep.subr.bf16.mxu0 %v1232
    %2281 = vmatpush1.bf16.msra.mxu0 %v1231
    %2282 = vmatprep.subr.bf16.mxu0 %v1236
    %2283 = vmatpush1.bf16.msra.mxu0 %v1235
    %2284 = vmatprep.subr.bf16.mxu0 %v1240
    %2285 = vmatpush1.bf16.msra.mxu0 %v1239
    %2286 = vmatprep.mubr.bf16.mxu0 %v1388
    %2287 = vmatmul.mubr.bf16.gmra.mrb[0].mxu0 %v1387
    %v2288 = vpop.f32.mrb[0].mxu0
    %v2289 = vadd.f32 %v2248, %v2288
    %v2290 = vpop.f32.mrb[0].mxu0
    %v2291 = vadd.f32 %v2250, %v2290
    %v2292 = vpop.f32.mrb[0].mxu0
    %v2293 = vpop.f32.mrb[0].mxu0
    %2294 = vdwg.mxu0
    %2295 = vmatprep.subr.bf16.mxu0 %v1244
    %2296 = vmatpush1.bf16.msra.mxu0 %v1243
    %2297 = vmatprep.subr.bf16.mxu0 %v1248
    %2298 = vmatpush1.bf16.msra.mxu0 %v1247
    %2299 = vmatprep.subr.bf16.mxu0 %v1252
    %2300 = vmatpush1.bf16.msra.mxu0 %v1251
    %2301 = vmatprep.subr.bf16.mxu0 %v1256
    %2302 = vmatpush1.bf16.msra.mxu0 %v1255
    %2303 = vmatprep.subr.bf16.mxu0 %v1260
    %2304 = vmatpush1.bf16.msra.mxu0 %v1259
    %2305 = vmatprep.subr.bf16.mxu0 %v1264
    %2306 = vmatpush1.bf16.msra.mxu0 %v1263
    %2307 = vmatprep.subr.bf16.mxu0 %v1268
    %2308 = vmatpush1.bf16.msra.mxu0 %v1267
    %2309 = vmatprep.subr.bf16.mxu0 %v1272
    %2310 = vmatpush1.bf16.msra.mxu0 %v1271
    %2311 = vmatprep.subr.bf16.mxu0 %v1276
    %2312 = vmatpush1.bf16.msra.mxu0 %v1275
    %2313 = vmatprep.subr.bf16.mxu0 %v1280
    %2314 = vmatpush1.bf16.msra.mxu0 %v1279
    %2315 = vmatprep.subr.bf16.mxu0 %v1284
    %2316 = vmatpush1.bf16.msra.mxu0 %v1283
    %2317 = vmatprep.subr.bf16.mxu0 %v1288
    %2318 = vmatpush1.bf16.msra.mxu0 %v1287
    %2319 = vmatprep.subr.bf16.mxu0 %v1292
    %2320 = vmatpush1.bf16.msra.mxu0 %v1291
    %2321 = vmatprep.subr.bf16.mxu0 %v1296
    %2322 = vmatpush1.bf16.msra.mxu0 %v1295
    %2323 = vmatprep.subr.bf16.mxu0 %v1300
    %2324 = vmatpush1.bf16.msra.mxu0 %v1299
    %2325 = vmatprep.subr.bf16.mxu0 %v1304
    %2326 = vmatpush1.bf16.msra.mxu0 %v1303
    %2327 = vmatprep.mubr.bf16.mxu0 %v1390
    %2328 = vmatmul.mubr.bf16.gmra.mrb[0].mxu0 %v1389
    %v2329 = vpop.f32.mrb[0].mxu0
    %v2330 = vadd.f32 %v2289, %v2329
    %v2331 = vpop.f32.mrb[0].mxu0
    %v2332 = vadd.f32 %v2291, %v2331
    %v2333 = vpop.f32.mrb[0].mxu0
    %v2334 = vpop.f32.mrb[0].mxu0
    %2335 = vdwg.mxu0
    %2336 = vmatprep.subr.bf16.mxu0 %v1308
    %2337 = vmatpush1.bf16.msra.mxu0 %v1307
    %2338 = vmatprep.subr.bf16.mxu0 %v1312
    %2339 = vmatpush1.bf16.msra.mxu0 %v1311
    %2340 = vmatprep.subr.bf16.mxu0 %v1316
    %2341 = vmatpush1.bf16.msra.mxu0 %v1315
    %2342 = vmatprep.subr.bf16.mxu0 %v1320
    %2343 = vmatpush1.bf16.msra.mxu0 %v1319
    %2344 = vmatprep.subr.bf16.mxu0 %v1324
    %2345 = vmatpush1.bf16.msra.mxu0 %v1323
    %2346 = vmatprep.subr.bf16.mxu0 %v1328
    %2347 = vmatpush1.bf16.msra.mxu0 %v1327
    %2348 = vmatprep.subr.bf16.mxu0 %v1332
    %2349 = vmatpush1.bf16.msra.mxu0 %v1331
    %2350 = vmatprep.subr.bf16.mxu0 %v1336
    %2351 = vmatpush1.bf16.msra.mxu0 %v1335
    %2352 = vmatprep.subr.bf16.mxu0 %v1340
    %2353 = vmatpush1.bf16.msra.mxu0 %v1339
    %2354 = vmatprep.subr.bf16.mxu0 %v1344
    %2355 = vmatpush1.bf16.msra.mxu0 %v1343
    %2356 = vmatprep.subr.bf16.mxu0 %v1348
    %2357 = vmatpush1.bf16.msra.mxu0 %v1347
    %2358 = vmatprep.subr.bf16.mxu0 %v1352
    %2359 = vmatpush1.bf16.msra.mxu0 %v1351
    %2360 = vmatprep.subr.bf16.mxu0 %v1356
    %2361 = vmatpush1.bf16.msra.mxu0 %v1355
    %2362 = vmatprep.subr.bf16.mxu0 %v1360
    %2363 = vmatpush1.bf16.msra.mxu0 %v1359
    %2364 = vmatprep.subr.bf16.mxu0 %v1364
    %2365 = vmatpush1.bf16.msra.mxu0 %v1363
    %2366 = vmatprep.subr.bf16.mxu0 %v1368
    %2367 = vmatpush1.bf16.msra.mxu0 %v1367
    %2368 = vmatprep.mubr.bf16.mxu0 %v1392
    %2369 = vmatmul.mubr.bf16.gmra.mrb[0].mxu0 %v1391
    %v2370 = vpop.f32.mrb[0].mxu0
    %v2371 = vadd.f32 %v2330, %v2370
    %v2372 = vpop.f32.mrb[0].mxu0
    %v2373 = vadd.f32 %v2332, %v2372
    %v2374 = vpop.f32.mrb[0].mxu0
    %v2375 = vpop.f32.mrb[0].mxu0
    %2376 = vdwg.mxu0
    %v2378 = vlaneseq
    %v2379 = vshrl.u32 %v2378, 7
    %v2380 = vsub.s32 0, %v2379
    %v2381 = vrot.slane %v216, %v2380
    %v2382 = vlaneseq
    %v2383 = vshrl.u32 %v2382, 7
    %v2384 = vsub.s32 1, %v2383
    %v2385 = vrot.slane %v216, %v2384
    %v2386 = vlaneseq
    %v2387 = vshrl.u32 %v2386, 7
    %v2388 = vsub.s32 2, %v2387
    %v2389 = vrot.slane %v216, %v2388
    %v2390 = vlaneseq
    %v2391 = vshrl.u32 %v2390, 7
    %v2392 = vsub.s32 3, %v2391
    %v2393 = vrot.slane %v216, %v2392
    %v2398 = vmul.f32 %v1879, %v2381
    %v2399 = vmul.f32 %v1881, %v2385
    %v2400 = vmul.f32 %v2371, %v2389
    %v2401 = vmul.f32 %v2373, %v2393
    %v2402 = vmul.f32 %v2398, %v2398
    %v2403 = vmul.f32 %v2399, %v2399
    %v2404 = vmul.f32 %v2400, %v2400
    %v2405 = vmul.f32 %v2401, %v2401
    %v2406 = vadd.f32 %v2402, %v2403
    %v2407 = vadd.f32 %v2406, %v2404
    %v2408 = vadd.f32 %v2407, %v2405
    %2409 = vadd.xlane.f32.xlu0 %v2408
    %v2410 = vpop.xlane.xlu0 %2409
    %v2411 = vadd.f32 %v2410, 1e-12
    %v2412 = vrsqrt.pop %v2411
    %v2413 = vmul.f32 %v2398, %v2412
    %v2414 = vmul.f32 %v2399, %v2412
    %v2415 = vmul.f32 %v2400, %v2412
    %v2416 = vmul.f32 %v2401, %v2412
    %v2417 = vld [vmem:[%s1] sm:$0xff]
    %v2418 = vld [vmem:[#allocation2 + $0x66] sm:$0xf]
    %v2419 = vld [vmem:[#allocation6] sm:$0xff]
    %v2420 = vld [vmem:[#allocation6 + $0x8] sm:$0xff]
    %v2421 = vld [vmem:[#allocation6 + $0x10] sm:$0xff]
    %v2422 = vld [vmem:[#allocation6 + $0x18] sm:$0xff]
    %v2423 = vld [vmem:[#allocation6 + $0x20] sm:$0xff]
    %v2424 = vld [vmem:[#allocation6 + $0x28] sm:$0xff]
    %v2425 = vld [vmem:[#allocation6 + $0x30] sm:$0xff]
    %v2426 = vld [vmem:[#allocation6 + $0x38] sm:$0xff]
    %v2427 = vunpack.c.l.s8.bf16 %v2419
    %v2428 = vunpack.c.l.s8.bf16 %v2420
    %v2429 = vunpack.c.l.s8.bf16 %v2421
    %v2430 = vunpack.c.l.s8.bf16 %v2422
    %v2431 = vunpack.c.h.s8.bf16 %v2419
    %v2432 = vunpack.c.h.s8.bf16 %v2420
    %v2433 = vunpack.c.h.s8.bf16 %v2421
    %v2434 = vunpack.c.h.s8.bf16 %v2422
    %v2435 = vunpack.c.l.s8.bf16 %v2423
    %v2436 = vunpack.c.l.s8.bf16 %v2424
    %v2437 = vunpack.c.l.s8.bf16 %v2425
    %v2438 = vunpack.c.l.s8.bf16 %v2426
    %v2439 = vunpack.c.h.s8.bf16 %v2423
    %v2440 = vunpack.c.h.s8.bf16 %v2424
    %v2441 = vunpack.c.h.s8.bf16 %v2425
    %v2442 = vunpack.c.h.s8.bf16 %v2426
    %v2443 = vpack.c.bf16 %v2417, %v2417
    %vm2444 = vcmask 523264
    %v2446 = vsel %vm2444, %v2443, 0
    %2448 = vmatprep.subr.bf16.mxu0 %v2428
    %2449 = vmatpush1.bf16.msra.mxu0 %v2427
    %2450 = vmatprep.subr.bf16.mxu0 %v2432
    %2451 = vmatpush1.bf16.msra.mxu0 %v2431
    %2452 = vmatprep.subr.bf16.mxu0 %v2436
    %2453 = vmatpush1.bf16.msra.mxu0 %v2435
    %2454 = vmatprep.subr.bf16.mxu0 %v2440
    %2455 = vmatpush1.bf16.msra.mxu0 %v2439
    %2456 = vmatprep.subr.bf16.mxu0 0
    %2457 = vmatpush1.bf16.msra.mxu0 0
    %2458 = vmatprep.subr.bf16.mxu0 0
    %2459 = vmatpush1.bf16.msra.mxu0 0
    %2460 = vmatprep.subr.bf16.mxu0 0
    %2461 = vmatpush1.bf16.msra.mxu0 0
    %2462 = vmatprep.subr.bf16.mxu0 0
    %2463 = vmatpush1.bf16.msra.mxu0 0
    %2464 = vmatprep.subr.bf16.mxu0 0
    %2465 = vmatpush1.bf16.msra.mxu0 0
    %2466 = vmatprep.subr.bf16.mxu0 0
    %2467 = vmatpush1.bf16.msra.mxu0 0
    %2468 = vmatprep.subr.bf16.mxu0 0
    %2469 = vmatpush1.bf16.msra.mxu0 0
    %2470 = vmatprep.subr.bf16.mxu0 0
    %2471 = vmatpush1.bf16.msra.mxu0 0
    %2472 = vmatprep.subr.bf16.mxu0 0
    %2473 = vmatpush1.bf16.msra.mxu0 0
    %2474 = vmatprep.subr.bf16.mxu0 0
    %2475 = vmatpush1.bf16.msra.mxu0 0
    %2476 = vmatprep.subr.bf16.mxu0 0
    %2477 = vmatpush1.bf16.msra.mxu0 0
    %2478 = vmatprep.subr.bf16.mxu0 0
    %2479 = vmatpush1.bf16.msra.mxu0 0
    %2480 = vmatprep.mubr.bf16.mxu0 0
    %2481 = vmatmul.mubr.bf16.gmra.mrb[0].mxu0 %v2446
    %v2482 = vpop.f32.mrb[0].mxu0
    %v2483 = vadd.f32 0.0, %v2482
    %v2484 = vpop.f32.mrb[0].mxu0
    %v2485 = vadd.f32 0.0, %v2484
    %v2486 = vpop.f32.mrb[0].mxu0
    %v2487 = vpop.f32.mrb[0].mxu0
    %2488 = vdwg.mxu0
    %2489 = vmatprep.subr.bf16.mxu0 %v2430
    %2490 = vmatpush1.bf16.msra.mxu0 %v2429
    %2491 = vmatprep.subr.bf16.mxu0 %v2434
    %2492 = vmatpush1.bf16.msra.mxu0 %v2433
    %2493 = vmatprep.subr.bf16.mxu0 %v2438
    %2494 = vmatpush1.bf16.msra.mxu0 %v2437
    %2495 = vmatprep.subr.bf16.mxu0 %v2442
    %2496 = vmatpush1.bf16.msra.mxu0 %v2441
    %2497 = vmatprep.subr.bf16.mxu0 0
    %2498 = vmatpush1.bf16.msra.mxu0 0
    %2499 = vmatprep.subr.bf16.mxu0 0
    %2500 = vmatpush1.bf16.msra.mxu0 0
    %2501 = vmatprep.subr.bf16.mxu0 0
    %2502 = vmatpush1.bf16.msra.mxu0 0
    %2503 = vmatprep.subr.bf16.mxu0 0
    %2504 = vmatpush1.bf16.msra.mxu0 0
    %2505 = vmatprep.subr.bf16.mxu0 0
    %2506 = vmatpush1.bf16.msra.mxu0 0
    %2507 = vmatprep.subr.bf16.mxu0 0
    %2508 = vmatpush1.bf16.msra.mxu0 0
    %2509 = vmatprep.subr.bf16.mxu0 0
    %2510 = vmatpush1.bf16.msra.mxu0 0
    %2511 = vmatprep.subr.bf16.mxu0 0
    %2512 = vmatpush1.bf16.msra.mxu0 0
    %2513 = vmatprep.subr.bf16.mxu0 0
    %2514 = vmatpush1.bf16.msra.mxu0 0
    %2515 = vmatprep.subr.bf16.mxu0 0
    %2516 = vmatpush1.bf16.msra.mxu0 0
    %2517 = vmatprep.subr.bf16.mxu0 0
    %2518 = vmatpush1.bf16.msra.mxu0 0
    %2519 = vmatprep.subr.bf16.mxu0 0
    %2520 = vmatpush1.bf16.msra.mxu0 0
    %2521 = vmatprep.mubr.bf16.mxu0 0
    %2522 = vmatmul.mubr.bf16.gmra.mrb[0].mxu0 %v2446
    %v2523 = vpop.f32.mrb[0].mxu0
    %v2524 = vadd.f32 0.0, %v2523
    %v2525 = vpop.f32.mrb[0].mxu0
    %v2526 = vadd.f32 0.0, %v2525
    %v2527 = vpop.f32.mrb[0].mxu0
    %v2528 = vpop.f32.mrb[0].mxu0
    %2529 = vdwg.mxu0
    %v2531 = vlaneseq
    %v2532 = vshrl.u32 %v2531, 7
    %v2533 = vsub.s32 0, %v2532
    %v2534 = vrot.slane %v2418, %v2533
    %v2535 = vlaneseq
    %v2536 = vshrl.u32 %v2535, 7
    %v2537 = vsub.s32 1, %v2536
    %v2538 = vrot.slane %v2418, %v2537
    %v2539 = vlaneseq
    %v2540 = vshrl.u32 %v2539, 7
    %v2541 = vsub.s32 2, %v2540
    %v2542 = vrot.slane %v2418, %v2541
    %v2543 = vlaneseq
    %v2544 = vshrl.u32 %v2543, 7
    %v2545 = vsub.s32 3, %v2544
    %v2546 = vrot.slane %v2418, %v2545
    %v2551 = vmul.f32 %v2483, %v2534
    %v2552 = vmul.f32 %v2485, %v2538
    %v2553 = vmul.f32 %v2524, %v2542
    %v2554 = vmul.f32 %v2526, %v2546
    %v2555 = vmul.f32 %v2551, %v2551
    %v2556 = vmul.f32 %v2552, %v2552
    %v2557 = vmul.f32 %v2553, %v2553
    %v2558 = vmul.f32 %v2554, %v2554
    %v2559 = vadd.f32 %v2555, %v2556
    %v2560 = vadd.f32 %v2559, %v2557
    %v2561 = vadd.f32 %v2560, %v2558
    %2562 = vadd.xlane.f32.xlu0 %v2561
    %v2563 = vpop.xlane.xlu0 %2562
    %v2564 = vadd.f32 %v2563, 1e-12
    %v2565 = vrsqrt.pop %v2564
    %v2566 = vmul.f32 %v2551, %v2565
    %v2567 = vmul.f32 %v2552, %v2565
    %v2568 = vmul.f32 %v2553, %v2565
    %v2569 = vmul.f32 %v2554, %v2565
    %v2570 = vld [vmem:[#allocation2 + $0x6a] sm:$0xff]
    %v2571 = vld [vmem:[#allocation7] sm:$0xff]
    %v2572 = vld [vmem:[#allocation7 + $0x8] sm:$0xff]
    %v2573 = vld [vmem:[#allocation7 + $0x10] sm:$0xff]
    %v2574 = vld [vmem:[#allocation7 + $0x18] sm:$0xff]
    %v2575 = vld [vmem:[#allocation7 + $0x20] sm:$0xff]
    %v2576 = vld [vmem:[#allocation7 + $0x28] sm:$0xff]
    %v2577 = vld [vmem:[#allocation7 + $0x30] sm:$0xff]
    %v2578 = vld [vmem:[#allocation7 + $0x38] sm:$0xff]
    %v2579 = vld [vmem:[#allocation7 + $0x40] sm:$0xff]
    %v2580 = vld [vmem:[#allocation7 + $0x48] sm:$0xff]
    %v2581 = vld [vmem:[#allocation7 + $0x50] sm:$0xff]
    %v2582 = vld [vmem:[#allocation7 + $0x58] sm:$0xff]
    %v2583 = vld [vmem:[#allocation7 + $0x60] sm:$0xff]
    %v2584 = vld [vmem:[#allocation7 + $0x68] sm:$0xff]
    %v2585 = vld [vmem:[#allocation7 + $0x70] sm:$0xff]
    %v2586 = vld [vmem:[#allocation7 + $0x78] sm:$0xff]
    %v2587 = vld [vmem:[#allocation7 + $0x80] sm:$0xff]
    %v2588 = vld [vmem:[#allocation7 + $0x88] sm:$0xff]
    %v2589 = vld [vmem:[#allocation7 + $0x90] sm:$0xff]
    %v2590 = vld [vmem:[#allocation7 + $0x98] sm:$0xff]
    %v2591 = vld [vmem:[#allocation7 + $0xa0] sm:$0xff]
    %v2592 = vld [vmem:[#allocation7 + $0xa8] sm:$0xff]
    %v2593 = vld [vmem:[#allocation7 + $0xb0] sm:$0xff]
    %v2594 = vld [vmem:[#allocation7 + $0xb8] sm:$0xff]
    %v2595 = vld [vmem:[#allocation7 + $0xc0] sm:$0xff]
    %v2596 = vld [vmem:[#allocation7 + $0xc8] sm:$0xff]
    %v2597 = vld [vmem:[#allocation7 + $0xd0] sm:$0xff]
    %v2598 = vld [vmem:[#allocation7 + $0xd8] sm:$0xff]
    %v2599 = vld [vmem:[#allocation7 + $0xe0] sm:$0xff]
    %v2600 = vld [vmem:[#allocation7 + $0xe8] sm:$0xff]
    %v2601 = vld [vmem:[#allocation7 + $0xf0] sm:$0xff]
    %v2602 = vld [vmem:[#allocation7 + $0xf8] sm:$0xff]
    %v2603 = vld [vmem:[#allocation7 + $0x100] sm:$0xff]
    %v2604 = vld [vmem:[#allocation7 + $0x108] sm:$0xff]
    %v2605 = vld [vmem:[#allocation7 + $0x110] sm:$0xff]
    %v2606 = vld [vmem:[#allocation7 + $0x118] sm:$0xff]
    %v2607 = vld [vmem:[#allocation7 + $0x120] sm:$0xff]
    %v2608 = vld [vmem:[#allocation7 + $0x128] sm:$0xff]
    %v2609 = vld [vmem:[#allocation7 + $0x130] sm:$0xff]
    %v2610 = vld [vmem:[#allocation7 + $0x138] sm:$0xff]
    %v2611 = vld [vmem:[#allocation7 + $0x140] sm:$0xff]
    %v2612 = vld [vmem:[#allocation7 + $0x148] sm:$0xff]
    %v2613 = vld [vmem:[#allocation7 + $0x150] sm:$0xff]
    %v2614 = vld [vmem:[#allocation7 + $0x158] sm:$0xff]
    %v2615 = vld [vmem:[#allocation7 + $0x160] sm:$0xff]
    %v2616 = vld [vmem:[#allocation7 + $0x168] sm:$0xff]
    %v2617 = vld [vmem:[#allocation7 + $0x170] sm:$0xff]
    %v2618 = vld [vmem:[#allocation7 + $0x178] sm:$0xff]
    %v2619 = vld [vmem:[#allocation7 + $0x180] sm:$0xff]
    %v2620 = vld [vmem:[#allocation7 + $0x188] sm:$0xff]
    %v2621 = vld [vmem:[#allocation7 + $0x190] sm:$0xff]
    %v2622 = vld [vmem:[#allocation7 + $0x198] sm:$0xff]
    %v2623 = vld [vmem:[#allocation7 + $0x1a0] sm:$0xff]
    %v2624 = vld [vmem:[#allocation7 + $0x1a8] sm:$0xff]
    %v2625 = vld [vmem:[#allocation7 + $0x1b0] sm:$0xff]
    %v2626 = vld [vmem:[#allocation7 + $0x1b8] sm:$0xff]
    %v2627 = vld [vmem:[#allocation7 + $0x1c0] sm:$0xff]
    %v2628 = vld [vmem:[#allocation7 + $0x1c8] sm:$0xff]
    %v2629 = vld [vmem:[#allocation7 + $0x1d0] sm:$0xff]
    %v2630 = vld [vmem:[#allocation7 + $0x1d8] sm:$0xff]
    %v2631 = vld [vmem:[#allocation7 + $0x1e0] sm:$0xff]
    %v2632 = vld [vmem:[#allocation7 + $0x1e8] sm:$0xff]
    %v2633 = vld [vmem:[#allocation7 + $0x1f0] sm:$0xff]
    %v2634 = vld [vmem:[#allocation7 + $0x1f8] sm:$0xff]
    %v2635 = vld [vmem:[#allocation7 + $0x200] sm:$0xff]
    %v2636 = vld [vmem:[#allocation7 + $0x208] sm:$0xff]
    %v2637 = vld [vmem:[#allocation7 + $0x210] sm:$0xff]
    %v2638 = vld [vmem:[#allocation7 + $0x218] sm:$0xff]
    %v2639 = vld [vmem:[#allocation7 + $0x220] sm:$0xff]
    %v2640 = vld [vmem:[#allocation7 + $0x228] sm:$0xff]
    %v2641 = vld [vmem:[#allocation7 + $0x230] sm:$0xff]
    %v2642 = vld [vmem:[#allocation7 + $0x238] sm:$0xff]
    %v2643 = vld [vmem:[#allocation7 + $0x240] sm:$0xff]
    %v2644 = vld [vmem:[#allocation7 + $0x248] sm:$0xff]
    %v2645 = vld [vmem:[#allocation7 + $0x250] sm:$0xff]
    %v2646 = vld [vmem:[#allocation7 + $0x258] sm:$0xff]
    %v2647 = vld [vmem:[#allocation7 + $0x260] sm:$0xff]
    %v2648 = vld [vmem:[#allocation7 + $0x268] sm:$0xff]
    %v2649 = vld [vmem:[#allocation7 + $0x270] sm:$0xff]
    %v2650 = vld [vmem:[#allocation7 + $0x278] sm:$0xff]
    %v2651 = vld [vmem:[#allocation7 + $0x280] sm:$0xff]
    %v2652 = vld [vmem:[#allocation7 + $0x288] sm:$0xff]
    %v2653 = vld [vmem:[#allocation7 + $0x290] sm:$0xff]
    %v2654 = vld [vmem:[#allocation7 + $0x298] sm:$0xff]
    %v2655 = vld [vmem:[#allocation7 + $0x2a0] sm:$0xff]
    %v2656 = vld [vmem:[#allocation7 + $0x2a8] sm:$0xff]
    %v2657 = vld [vmem:[#allocation7 + $0x2b0] sm:$0xff]
    %v2658 = vld [vmem:[#allocation7 + $0x2b8] sm:$0xff]
    %v2659 = vld [vmem:[#allocation7 + $0x2c0] sm:$0xff]
    %v2660 = vld [vmem:[#allocation7 + $0x2c8] sm:$0xff]
    %v2661 = vld [vmem:[#allocation7 + $0x2d0] sm:$0xff]
    %v2662 = vld [vmem:[#allocation7 + $0x2d8] sm:$0xff]
    %v2663 = vld [vmem:[#allocation7 + $0x2e0] sm:$0xff]
    %v2664 = vld [vmem:[#allocation7 + $0x2e8] sm:$0xff]
    %v2665 = vld [vmem:[#allocation7 + $0x2f0] sm:$0xff]
    %v2666 = vld [vmem:[#allocation7 + $0x2f8] sm:$0xff]
    %v2667 = vld [vmem:[#allocation7 + $0x300] sm:$0xff]
    %v2668 = vld [vmem:[#allocation7 + $0x308] sm:$0xff]
    %v2669 = vld [vmem:[#allocation7 + $0x310] sm:$0xff]
    %v2670 = vld [vmem:[#allocation7 + $0x318] sm:$0xff]
    %v2671 = vld [vmem:[#allocation7 + $0x320] sm:$0xff]
    %v2672 = vld [vmem:[#allocation7 + $0x328] sm:$0xff]
    %v2673 = vld [vmem:[#allocation7 + $0x330] sm:$0xff]
    %v2674 = vld [vmem:[#allocation7 + $0x338] sm:$0xff]
    %v2675 = vld [vmem:[#allocation7 + $0x340] sm:$0xff]
    %v2676 = vld [vmem:[#allocation7 + $0x348] sm:$0xff]
    %v2677 = vld [vmem:[#allocation7 + $0x350] sm:$0xff]
    %v2678 = vld [vmem:[#allocation7 + $0x358] sm:$0xff]
    %v2679 = vld [vmem:[#allocation7 + $0x360] sm:$0xff]
    %v2680 = vld [vmem:[#allocation7 + $0x368] sm:$0xff]
    %v2681 = vld [vmem:[#allocation7 + $0x370] sm:$0xff]
    %v2682 = vld [vmem:[#allocation7 + $0x378] sm:$0xff]
    %v2683 = vld [vmem:[#allocation7 + $0x380] sm:$0xff]
    %v2684 = vld [vmem:[#allocation7 + $0x388] sm:$0xff]
    %v2685 = vld [vmem:[#allocation7 + $0x390] sm:$0xff]
    %v2686 = vld [vmem:[#allocation7 + $0x398] sm:$0xff]
    %v2687 = vld [vmem:[#allocation7 + $0x3a0] sm:$0xff]
    %v2688 = vld [vmem:[#allocation7 + $0x3a8] sm:$0xff]
    %v2689 = vld [vmem:[#allocation7 + $0x3b0] sm:$0xff]
    %v2690 = vld [vmem:[#allocation7 + $0x3b8] sm:$0xff]
    %v2691 = vld [vmem:[#allocation7 + $0x3c0] sm:$0xff]
    %v2692 = vld [vmem:[#allocation7 + $0x3c8] sm:$0xff]
    %v2693 = vld [vmem:[#allocation7 + $0x3d0] sm:$0xff]
    %v2694 = vld [vmem:[#allocation7 + $0x3d8] sm:$0xff]
    %v2695 = vld [vmem:[#allocation7 + $0x3e0] sm:$0xff]
    %v2696 = vld [vmem:[#allocation7 + $0x3e8] sm:$0xff]
    %v2697 = vld [vmem:[#allocation7 + $0x3f0] sm:$0xff]
    %v2698 = vld [vmem:[#allocation7 + $0x3f8] sm:$0xff]
    %v2699 = vunpack.c.l.s8.bf16 %v2571
    %v2700 = vunpack.c.l.s8.bf16 %v2572
    %v2701 = vunpack.c.l.s8.bf16 %v2573
    %v2702 = vunpack.c.l.s8.bf16 %v2574
    %v2703 = vunpack.c.l.s8.bf16 %v2575
    %v2704 = vunpack.c.l.s8.bf16 %v2576
    %v2705 = vunpack.c.l.s8.bf16 %v2577
    %v2706 = vunpack.c.l.s8.bf16 %v2578
    %v2707 = vunpack.c.h.s8.bf16 %v2571
    %v2708 = vunpack.c.h.s8.bf16 %v2572
    %v2709 = vunpack.c.h.s8.bf16 %v2573
    %v2710 = vunpack.c.h.s8.bf16 %v2574
    %v2711 = vunpack.c.h.s8.bf16 %v2575
    %v2712 = vunpack.c.h.s8.bf16 %v2576
    %v2713 = vunpack.c.h.s8.bf16 %v2577
    %v2714 = vunpack.c.h.s8.bf16 %v2578
    %v2715 = vunpack.c.l.s8.bf16 %v2579
    %v2716 = vunpack.c.l.s8.bf16 %v2580
    %v2717 = vunpack.c.l.s8.bf16 %v2581
    %v2718 = vunpack.c.l.s8.bf16 %v2582
    %v2719 = vunpack.c.l.s8.bf16 %v2583
    %v2720 = vunpack.c.l.s8.bf16 %v2584
    %v2721 = vunpack.c.l.s8.bf16 %v2585
    %v2722 = vunpack.c.l.s8.bf16 %v2586
    %v2723 = vunpack.c.h.s8.bf16 %v2579
    %v2724 = vunpack.c.h.s8.bf16 %v2580
    %v2725 = vunpack.c.h.s8.bf16 %v2581
    %v2726 = vunpack.c.h.s8.bf16 %v2582
    %v2727 = vunpack.c.h.s8.bf16 %v2583
    %v2728 = vunpack.c.h.s8.bf16 %v2584
    %v2729 = vunpack.c.h.s8.bf16 %v2585
    %v2730 = vunpack.c.h.s8.bf16 %v2586
    %v2731 = vunpack.c.l.s8.bf16 %v2587
    %v2732 = vunpack.c.l.s8.bf16 %v2588
    %v2733 = vunpack.c.l.s8.bf16 %v2589
    %v2734 = vunpack.c.l.s8.bf16 %v2590
    %v2735 = vunpack.c.l.s8.bf16 %v2591
    %v2736 = vunpack.c.l.s8.bf16 %v2592
    %v2737 = vunpack.c.l.s8.bf16 %v2593
    %v2738 = vunpack.c.l.s8.bf16 %v2594
    %v2739 = vunpack.c.h.s8.bf16 %v2587
    %v2740 = vunpack.c.h.s8.bf16 %v2588
    %v2741 = vunpack.c.h.s8.bf16 %v2589
    %v2742 = vunpack.c.h.s8.bf16 %v2590
    %v2743 = vunpack.c.h.s8.bf16 %v2591
    %v2744 = vunpack.c.h.s8.bf16 %v2592
    %v2745 = vunpack.c.h.s8.bf16 %v2593
    %v2746 = vunpack.c.h.s8.bf16 %v2594
    %v2747 = vunpack.c.l.s8.bf16 %v2595
    %v2748 = vunpack.c.l.s8.bf16 %v2596
    %v2749 = vunpack.c.l.s8.bf16 %v2597
    %v2750 = vunpack.c.l.s8.bf16 %v2598
    %v2751 = vunpack.c.l.s8.bf16 %v2599
    %v2752 = vunpack.c.l.s8.bf16 %v2600
    %v2753 = vunpack.c.l.s8.bf16 %v2601
    %v2754 = vunpack.c.l.s8.bf16 %v2602
    %v2755 = vunpack.c.h.s8.bf16 %v2595
    %v2756 = vunpack.c.h.s8.bf16 %v2596
    %v2757 = vunpack.c.h.s8.bf16 %v2597
    %v2758 = vunpack.c.h.s8.bf16 %v2598
    %v2759 = vunpack.c.h.s8.bf16 %v2599
    %v2760 = vunpack.c.h.s8.bf16 %v2600
    %v2761 = vunpack.c.h.s8.bf16 %v2601
    %v2762 = vunpack.c.h.s8.bf16 %v2602
    %v2763 = vunpack.c.l.s8.bf16 %v2603
    %v2764 = vunpack.c.l.s8.bf16 %v2604
    %v2765 = vunpack.c.l.s8.bf16 %v2605
    %v2766 = vunpack.c.l.s8.bf16 %v2606
    %v2767 = vunpack.c.l.s8.bf16 %v2607
    %v2768 = vunpack.c.l.s8.bf16 %v2608
    %v2769 = vunpack.c.l.s8.bf16 %v2609
    %v2770 = vunpack.c.l.s8.bf16 %v2610
    %v2771 = vunpack.c.h.s8.bf16 %v2603
    %v2772 = vunpack.c.h.s8.bf16 %v2604
    %v2773 = vunpack.c.h.s8.bf16 %v2605
    %v2774 = vunpack.c.h.s8.bf16 %v2606
    %v2775 = vunpack.c.h.s8.bf16 %v2607
    %v2776 = vunpack.c.h.s8.bf16 %v2608
    %v2777 = vunpack.c.h.s8.bf16 %v2609
    %v2778 = vunpack.c.h.s8.bf16 %v2610
    %v2779 = vunpack.c.l.s8.bf16 %v2611
    %v2780 = vunpack.c.l.s8.bf16 %v2612
    %v2781 = vunpack.c.l.s8.bf16 %v2613
    %v2782 = vunpack.c.l.s8.bf16 %v2614
    %v2783 = vunpack.c.l.s8.bf16 %v2615
    %v2784 = vunpack.c.l.s8.bf16 %v2616
    %v2785 = vunpack.c.l.s8.bf16 %v2617
    %v2786 = vunpack.c.l.s8.bf16 %v2618
    %v2787 = vunpack.c.h.s8.bf16 %v2611
    %v2788 = vunpack.c.h.s8.bf16 %v2612
    %v2789 = vunpack.c.h.s8.bf16 %v2613
    %v2790 = vunpack.c.h.s8.bf16 %v2614
    %v2791 = vunpack.c.h.s8.bf16 %v2615
    %v2792 = vunpack.c.h.s8.bf16 %v2616
    %v2793 = vunpack.c.h.s8.bf16 %v2617
    %v2794 = vunpack.c.h.s8.bf16 %v2618
    %v2795 = vunpack.c.l.s8.bf16 %v2619
    %v2796 = vunpack.c.l.s8.bf16 %v2620
    %v2797 = vunpack.c.l.s8.bf16 %v2621
    %v2798 = vunpack.c.l.s8.bf16 %v2622
    %v2799 = vunpack.c.l.s8.bf16 %v2623
    %v2800 = vunpack.c.l.s8.bf16 %v2624
    %v2801 = vunpack.c.l.s8.bf16 %v2625
    %v2802 = vunpack.c.l.s8.bf16 %v2626
    %v2803 = vunpack.c.h.s8.bf16 %v2619
    %v2804 = vunpack.c.h.s8.bf16 %v2620
    %v2805 = vunpack.c.h.s8.bf16 %v2621
    %v2806 = vunpack.c.h.s8.bf16 %v2622
    %v2807 = vunpack.c.h.s8.bf16 %v2623
    %v2808 = vunpack.c.h.s8.bf16 %v2624
    %v2809 = vunpack.c.h.s8.bf16 %v2625
    %v2810 = vunpack.c.h.s8.bf16 %v2626
    %v2811 = vunpack.c.l.s8.bf16 %v2627
    %v2812 = vunpack.c.l.s8.bf16 %v2628
    %v2813 = vunpack.c.l.s8.bf16 %v2629
    %v2814 = vunpack.c.l.s8.bf16 %v2630
    %v2815 = vunpack.c.l.s8.bf16 %v2631
    %v2816 = vunpack.c.l.s8.bf16 %v2632
    %v2817 = vunpack.c.l.s8.bf16 %v2633
    %v2818 = vunpack.c.l.s8.bf16 %v2634
    %v2819 = vunpack.c.h.s8.bf16 %v2627
    %v2820 = vunpack.c.h.s8.bf16 %v2628
    %v2821 = vunpack.c.h.s8.bf16 %v2629
    %v2822 = vunpack.c.h.s8.bf16 %v2630
    %v2823 = vunpack.c.h.s8.bf16 %v2631
    %v2824 = vunpack.c.h.s8.bf16 %v2632
    %v2825 = vunpack.c.h.s8.bf16 %v2633
    %v2826 = vunpack.c.h.s8.bf16 %v2634
    %v2827 = vunpack.c.l.s8.bf16 %v2635
    %v2828 = vunpack.c.l.s8.bf16 %v2636
    %v2829 = vunpack.c.l.s8.bf16 %v2637
    %v2830 = vunpack.c.l.s8.bf16 %v2638
    %v2831 = vunpack.c.l.s8.bf16 %v2639
    %v2832 = vunpack.c.l.s8.bf16 %v2640
    %v2833 = vunpack.c.l.s8.bf16 %v2641
    %v2834 = vunpack.c.l.s8.bf16 %v2642
    %v2835 = vunpack.c.h.s8.bf16 %v2635
    %v2836 = vunpack.c.h.s8.bf16 %v2636
    %v2837 = vunpack.c.h.s8.bf16 %v2637
    %v2838 = vunpack.c.h.s8.bf16 %v2638
    %v2839 = vunpack.c.h.s8.bf16 %v2639
    %v2840 = vunpack.c.h.s8.bf16 %v2640
    %v2841 = vunpack.c.h.s8.bf16 %v2641
    %v2842 = vunpack.c.h.s8.bf16 %v2642
    %v2843 = vunpack.c.l.s8.bf16 %v2643
    %v2844 = vunpack.c.l.s8.bf16 %v2644
    %v2845 = vunpack.c.l.s8.bf16 %v2645
    %v2846 = vunpack.c.l.s8.bf16 %v2646
    %v2847 = vunpack.c.l.s8.bf16 %v2647
    %v2848 = vunpack.c.l.s8.bf16 %v2648
    %v2849 = vunpack.c.l.s8.bf16 %v2649
    %v2850 = vunpack.c.l.s8.bf16 %v2650
    %v2851 = vunpack.c.h.s8.bf16 %v2643
    %v2852 = vunpack.c.h.s8.bf16 %v2644
    %v2853 = vunpack.c.h.s8.bf16 %v2645
    %v2854 = vunpack.c.h.s8.bf16 %v2646
    %v2855 = vunpack.c.h.s8.bf16 %v2647
    %v2856 = vunpack.c.h.s8.bf16 %v2648
    %v2857 = vunpack.c.h.s8.bf16 %v2649
    %v2858 = vunpack.c.h.s8.bf16 %v2650
    %v2859 = vunpack.c.l.s8.bf16 %v2651
    %v2860 = vunpack.c.l.s8.bf16 %v2652
    %v2861 = vunpack.c.l.s8.bf16 %v2653
    %v2862 = vunpack.c.l.s8.bf16 %v2654
    %v2863 = vunpack.c.l.s8.bf16 %v2655
    %v2864 = vunpack.c.l.s8.bf16 %v2656
    %v2865 = vunpack.c.l.s8.bf16 %v2657
    %v2866 = vunpack.c.l.s8.bf16 %v2658
    %v2867 = vunpack.c.h.s8.bf16 %v2651
    %v2868 = vunpack.c.h.s8.bf16 %v2652
    %v2869 = vunpack.c.h.s8.bf16 %v2653
    %v2870 = vunpack.c.h.s8.bf16 %v2654
    %v2871 = vunpack.c.h.s8.bf16 %v2655
    %v2872 = vunpack.c.h.s8.bf16 %v2656
    %v2873 = vunpack.c.h.s8.bf16 %v2657
    %v2874 = vunpack.c.h.s8.bf16 %v2658
    %v2875 = vunpack.c.l.s8.bf16 %v2659
    %v2876 = vunpack.c.l.s8.bf16 %v2660
    %v2877 = vunpack.c.l.s8.bf16 %v2661
    %v2878 = vunpack.c.l.s8.bf16 %v2662
    %v2879 = vunpack.c.l.s8.bf16 %v2663
    %v2880 = vunpack.c.l.s8.bf16 %v2664
    %v2881 = vunpack.c.l.s8.bf16 %v2665
    %v2882 = vunpack.c.l.s8.bf16 %v2666
    %v2883 = vunpack.c.h.s8.bf16 %v2659
    %v2884 = vunpack.c.h.s8.bf16 %v2660
    %v2885 = vunpack.c.h.s8.bf16 %v2661
    %v2886 = vunpack.c.h.s8.bf16 %v2662
    %v2887 = vunpack.c.h.s8.bf16 %v2663
    %v2888 = vunpack.c.h.s8.bf16 %v2664
    %v2889 = vunpack.c.h.s8.bf16 %v2665
    %v2890 = vunpack.c.h.s8.bf16 %v2666
    %v2891 = vunpack.c.l.s8.bf16 %v2667
    %v2892 = vunpack.c.l.s8.bf16 %v2668
    %v2893 = vunpack.c.l.s8.bf16 %v2669
    %v2894 = vunpack.c.l.s8.bf16 %v2670
    %v2895 = vunpack.c.l.s8.bf16 %v2671
    %v2896 = vunpack.c.l.s8.bf16 %v2672
    %v2897 = vunpack.c.l.s8.bf16 %v2673
    %v2898 = vunpack.c.l.s8.bf16 %v2674
    %v2899 = vunpack.c.h.s8.bf16 %v2667
    %v2900 = vunpack.c.h.s8.bf16 %v2668
    %v2901 = vunpack.c.h.s8.bf16 %v2669
    %v2902 = vunpack.c.h.s8.bf16 %v2670
    %v2903 = vunpack.c.h.s8.bf16 %v2671
    %v2904 = vunpack.c.h.s8.bf16 %v2672
    %v2905 = vunpack.c.h.s8.bf16 %v2673
    %v2906 = vunpack.c.h.s8.bf16 %v2674
    %v2907 = vunpack.c.l.s8.bf16 %v2675
    %v2908 = vunpack.c.l.s8.bf16 %v2676
    %v2909 = vunpack.c.l.s8.bf16 %v2677
    %v2910 = vunpack.c.l.s8.bf16 %v2678
    %v2911 = vunpack.c.l.s8.bf16 %v2679
    %v2912 = vunpack.c.l.s8.bf16 %v2680
    %v2913 = vunpack.c.l.s8.bf16 %v2681
    %v2914 = vunpack.c.l.s8.bf16 %v2682
    %v2915 = vunpack.c.h.s8.bf16 %v2675
    %v2916 = vunpack.c.h.s8.bf16 %v2676
    %v2917 = vunpack.c.h.s8.bf16 %v2677
    %v2918 = vunpack.c.h.s8.bf16 %v2678
    %v2919 = vunpack.c.h.s8.bf16 %v2679
    %v2920 = vunpack.c.h.s8.bf16 %v2680
    %v2921 = vunpack.c.h.s8.bf16 %v2681
    %v2922 = vunpack.c.h.s8.bf16 %v2682
    %v2923 = vunpack.c.l.s8.bf16 %v2683
    %v2924 = vunpack.c.l.s8.bf16 %v2684
    %v2925 = vunpack.c.l.s8.bf16 %v2685
    %v2926 = vunpack.c.l.s8.bf16 %v2686
    %v2927 = vunpack.c.l.s8.bf16 %v2687
    %v2928 = vunpack.c.l.s8.bf16 %v2688
    %v2929 = vunpack.c.l.s8.bf16 %v2689
    %v2930 = vunpack.c.l.s8.bf16 %v2690
    %v2931 = vunpack.c.h.s8.bf16 %v2683
    %v2932 = vunpack.c.h.s8.bf16 %v2684
    %v2933 = vunpack.c.h.s8.bf16 %v2685
    %v2934 = vunpack.c.h.s8.bf16 %v2686
    %v2935 = vunpack.c.h.s8.bf16 %v2687
    %v2936 = vunpack.c.h.s8.bf16 %v2688
    %v2937 = vunpack.c.h.s8.bf16 %v2689
    %v2938 = vunpack.c.h.s8.bf16 %v2690
    %v2939 = vunpack.c.l.s8.bf16 %v2691
    %v2940 = vunpack.c.l.s8.bf16 %v2692
    %v2941 = vunpack.c.l.s8.bf16 %v2693
    %v2942 = vunpack.c.l.s8.bf16 %v2694
    %v2943 = vunpack.c.l.s8.bf16 %v2695
    %v2944 = vunpack.c.l.s8.bf16 %v2696
    %v2945 = vunpack.c.l.s8.bf16 %v2697
    %v2946 = vunpack.c.l.s8.bf16 %v2698
    %v2947 = vunpack.c.h.s8.bf16 %v2691
    %v2948 = vunpack.c.h.s8.bf16 %v2692
    %v2949 = vunpack.c.h.s8.bf16 %v2693
    %v2950 = vunpack.c.h.s8.bf16 %v2694
    %v2951 = vunpack.c.h.s8.bf16 %v2695
    %v2952 = vunpack.c.h.s8.bf16 %v2696
    %v2953 = vunpack.c.h.s8.bf16 %v2697
    %v2954 = vunpack.c.h.s8.bf16 %v2698
    %v2955 = vpack.c.bf16 %v2413, %v2413
    %v2956 = vpack.c.bf16 %v2414, %v2414
    %v2957 = vpack.c.bf16 %v2415, %v2415
    %v2958 = vpack.c.bf16 %v2416, %v2416
    %2959 = vmatprep.subr.bf16.mxu0 %v2700
    %2960 = vmatpush1.bf16.msra.mxu0 %v2699
    %2961 = vmatprep.subr.bf16.mxu0 %v2708
    %2962 = vmatpush1.bf16.msra.mxu0 %v2707
    %2963 = vmatprep.subr.bf16.mxu0 %v2716
    %2964 = vmatpush1.bf16.msra.mxu0 %v2715
    %2965 = vmatprep.subr.bf16.mxu0 %v2724
    %2966 = vmatpush1.bf16.msra.mxu0 %v2723
    %2967 = vmatprep.subr.bf16.mxu0 %v2732
    %2968 = vmatpush1.bf16.msra.mxu0 %v2731
    %2969 = vmatprep.subr.bf16.mxu0 %v2740
    %2970 = vmatpush1.bf16.msra.mxu0 %v2739
    %2971 = vmatprep.subr.bf16.mxu0 %v2748
    %2972 = vmatpush1.bf16.msra.mxu0 %v2747
    %2973 = vmatprep.subr.bf16.mxu0 %v2756
    %2974 = vmatpush1.bf16.msra.mxu0 %v2755
    %2975 = vmatprep.subr.bf16.mxu0 %v2764
    %2976 = vmatpush1.bf16.msra.mxu0 %v2763
    %2977 = vmatprep.subr.bf16.mxu0 %v2772
    %2978 = vmatpush1.bf16.msra.mxu0 %v2771
    %2979 = vmatprep.subr.bf16.mxu0 %v2780
    %2980 = vmatpush1.bf16.msra.mxu0 %v2779
    %2981 = vmatprep.subr.bf16.mxu0 %v2788
    %2982 = vmatpush1.bf16.msra.mxu0 %v2787
    %2983 = vmatprep.subr.bf16.mxu0 %v2796
    %2984 = vmatpush1.bf16.msra.mxu0 %v2795
    %2985 = vmatprep.subr.bf16.mxu0 %v2804
    %2986 = vmatpush1.bf16.msra.mxu0 %v2803
    %2987 = vmatprep.subr.bf16.mxu0 %v2812
    %2988 = vmatpush1.bf16.msra.mxu0 %v2811
    %2989 = vmatprep.subr.bf16.mxu0 %v2820
    %2990 = vmatpush1.bf16.msra.mxu0 %v2819
    %2991 = vmatprep.mubr.bf16.mxu0 %v2956
    %2992 = vmatmul.mubr.bf16.gmra.mrb[0].mxu0 %v2955
    %v2993 = vpop.f32.mrb[0].mxu0
    %v2994 = vadd.f32 0.0, %v2993
    %v2995 = vpop.f32.mrb[0].mxu0
    %v2996 = vadd.f32 0.0, %v2995
    %v2997 = vpop.f32.mrb[0].mxu0
    %v2998 = vpop.f32.mrb[0].mxu0
    %2999 = vdwg.mxu0
    %3000 = vmatprep.subr.bf16.mxu0 %v2828
    %3001 = vmatpush1.bf16.msra.mxu0 %v2827
    %3002 = vmatprep.subr.bf16.mxu0 %v2836
    %3003 = vmatpush1.bf16.msra.mxu0 %v2835
    %3004 = vmatprep.subr.bf16.mxu0 %v2844
    %3005 = vmatpush1.bf16.msra.mxu0 %v2843
    %3006 = vmatprep.subr.bf16.mxu0 %v2852
    %3007 = vmatpush1.bf16.msra.mxu0 %v2851
    %3008 = vmatprep.subr.bf16.mxu0 %v2860
    %3009 = vmatpush1.bf16.msra.mxu0 %v2859
    %3010 = vmatprep.subr.bf16.mxu0 %v2868
    %3011 = vmatpush1.bf16.msra.mxu0 %v2867
    %3012 = vmatprep.subr.bf16.mxu0 %v2876
    %3013 = vmatpush1.bf16.msra.mxu0 %v2875
    %3014 = vmatprep.subr.bf16.mxu0 %v2884
    %3015 = vmatpush1.bf16.msra.mxu0 %v2883
    %3016 = vmatprep.subr.bf16.mxu0 %v2892
    %3017 = vmatpush1.bf16.msra.mxu0 %v2891
    %3018 = vmatprep.subr.bf16.mxu0 %v2900
    %3019 = vmatpush1.bf16.msra.mxu0 %v2899
    %3020 = vmatprep.subr.bf16.mxu0 %v2908
    %3021 = vmatpush1.bf16.msra.mxu0 %v2907
    %3022 = vmatprep.subr.bf16.mxu0 %v2916
    %3023 = vmatpush1.bf16.msra.mxu0 %v2915
    %3024 = vmatprep.subr.bf16.mxu0 %v2924
    %3025 = vmatpush1.bf16.msra.mxu0 %v2923
    %3026 = vmatprep.subr.bf16.mxu0 %v2932
    %3027 = vmatpush1.bf16.msra.mxu0 %v2931
    %3028 = vmatprep.subr.bf16.mxu0 %v2940
    %3029 = vmatpush1.bf16.msra.mxu0 %v2939
    %3030 = vmatprep.subr.bf16.mxu0 %v2948
    %3031 = vmatpush1.bf16.msra.mxu0 %v2947
    %3032 = vmatprep.mubr.bf16.mxu0 %v2958
    %3033 = vmatmul.mubr.bf16.gmra.mrb[0].mxu0 %v2957
    %v3034 = vpop.f32.mrb[0].mxu0
    %v3035 = vadd.f32 %v2994, %v3034
    %v3036 = vpop.f32.mrb[0].mxu0
    %v3037 = vadd.f32 %v2996, %v3036
    %v3038 = vpop.f32.mrb[0].mxu0
    %v3039 = vpop.f32.mrb[0].mxu0
    %3040 = vdwg.mxu0
    %3041 = vmatprep.subr.bf16.mxu0 %v2702
    %3042 = vmatpush1.bf16.msra.mxu0 %v2701
    %3043 = vmatprep.subr.bf16.mxu0 %v2710
    %3044 = vmatpush1.bf16.msra.mxu0 %v2709
    %3045 = vmatprep.subr.bf16.mxu0 %v2718
    %3046 = vmatpush1.bf16.msra.mxu0 %v2717
    %3047 = vmatprep.subr.bf16.mxu0 %v2726
    %3048 = vmatpush1.bf16.msra.mxu0 %v2725
    %3049 = vmatprep.subr.bf16.mxu0 %v2734
    %3050 = vmatpush1.bf16.msra.mxu0 %v2733
    %3051 = vmatprep.subr.bf16.mxu0 %v2742
    %3052 = vmatpush1.bf16.msra.mxu0 %v2741
    %3053 = vmatprep.subr.bf16.mxu0 %v2750
    %3054 = vmatpush1.bf16.msra.mxu0 %v2749
    %3055 = vmatprep.subr.bf16.mxu0 %v2758
    %3056 = vmatpush1.bf16.msra.mxu0 %v2757
    %3057 = vmatprep.subr.bf16.mxu0 %v2766
    %3058 = vmatpush1.bf16.msra.mxu0 %v2765
    %3059 = vmatprep.subr.bf16.mxu0 %v2774
    %3060 = vmatpush1.bf16.msra.mxu0 %v2773
    %3061 = vmatprep.subr.bf16.mxu0 %v2782
    %3062 = vmatpush1.bf16.msra.mxu0 %v2781
    %3063 = vmatprep.subr.bf16.mxu0 %v2790
    %3064 = vmatpush1.bf16.msra.mxu0 %v2789
    %3065 = vmatprep.subr.bf16.mxu0 %v2798
    %3066 = vmatpush1.bf16.msra.mxu0 %v2797
    %3067 = vmatprep.subr.bf16.mxu0 %v2806
    %3068 = vmatpush1.bf16.msra.mxu0 %v2805
    %3069 = vmatprep.subr.bf16.mxu0 %v2814
    %3070 = vmatpush1.bf16.msra.mxu0 %v2813
    %3071 = vmatprep.subr.bf16.mxu0 %v2822
    %3072 = vmatpush1.bf16.msra.mxu0 %v2821
    %3073 = vmatprep.mubr.bf16.mxu0 %v2956
    %3074 = vmatmul.mubr.bf16.gmra.mrb[0].mxu0 %v2955
    %v3075 = vpop.f32.mrb[0].mxu0
    %v3076 = vadd.f32 0.0, %v3075
    %v3077 = vpop.f32.mrb[0].mxu0
    %v3078 = vadd.f32 0.0, %v3077
    %v3079 = vpop.f32.mrb[0].mxu0
    %v3080 = vpop.f32.mrb[0].mxu0
    %3081 = vdwg.mxu0
    %3082 = vmatprep.subr.bf16.mxu0 %v2830
    %3083 = vmatpush1.bf16.msra.mxu0 %v2829
    %3084 = vmatprep.subr.bf16.mxu0 %v2838
    %3085 = vmatpush1.bf16.msra.mxu0 %v2837
    %3086 = vmatprep.subr.bf16.mxu0 %v2846
    %3087 = vmatpush1.bf16.msra.mxu0 %v2845
    %3088 = vmatprep.subr.bf16.mxu0 %v2854
    %3089 = vmatpush1.bf16.msra.mxu0 %v2853
    %3090 = vmatprep.subr.bf16.mxu0 %v2862
    %3091 = vmatpush1.bf16.msra.mxu0 %v2861
    %3092 = vmatprep.subr.bf16.mxu0 %v2870
    %3093 = vmatpush1.bf16.msra.mxu0 %v2869
    %3094 = vmatprep.subr.bf16.mxu0 %v2878
    %3095 = vmatpush1.bf16.msra.mxu0 %v2877
    %3096 = vmatprep.subr.bf16.mxu0 %v2886
    %3097 = vmatpush1.bf16.msra.mxu0 %v2885
    %3098 = vmatprep.subr.bf16.mxu0 %v2894
    %3099 = vmatpush1.bf16.msra.mxu0 %v2893
    %3100 = vmatprep.subr.bf16.mxu0 %v2902
    %3101 = vmatpush1.bf16.msra.mxu0 %v2901
    %3102 = vmatprep.subr.bf16.mxu0 %v2910
    %3103 = vmatpush1.bf16.msra.mxu0 %v2909
    %3104 = vmatprep.subr.bf16.mxu0 %v2918
    %3105 = vmatpush1.bf16.msra.mxu0 %v2917
    %3106 = vmatprep.subr.bf16.mxu0 %v2926
    %3107 = vmatpush1.bf16.msra.mxu0 %v2925
    %3108 = vmatprep.subr.bf16.mxu0 %v2934
    %3109 = vmatpush1.bf16.msra.mxu0 %v2933
    %3110 = vmatprep.subr.bf16.mxu0 %v2942
    %3111 = vmatpush1.bf16.msra.mxu0 %v2941
    %3112 = vmatprep.subr.bf16.mxu0 %v2950
    %3113 = vmatpush1.bf16.msra.mxu0 %v2949
    %3114 = vmatprep.mubr.bf16.mxu0 %v2958
    %3115 = vmatmul.mubr.bf16.gmra.mrb[0].mxu0 %v2957
    %v3116 = vpop.f32.mrb[0].mxu0
    %v3117 = vadd.f32 %v3076, %v3116
    %v3118 = vpop.f32.mrb[0].mxu0
    %v3119 = vadd.f32 %v3078, %v3118
    %v3120 = vpop.f32.mrb[0].mxu0
    %v3121 = vpop.f32.mrb[0].mxu0
    %3122 = vdwg.mxu0
    %3123 = vmatprep.subr.bf16.mxu0 %v2704
    %3124 = vmatpush1.bf16.msra.mxu0 %v2703
    %3125 = vmatprep.subr.bf16.mxu0 %v2712
    %3126 = vmatpush1.bf16.msra.mxu0 %v2711
    %3127 = vmatprep.subr.bf16.mxu0 %v2720
    %3128 = vmatpush1.bf16.msra.mxu0 %v2719
    %3129 = vmatprep.subr.bf16.mxu0 %v2728
    %3130 = vmatpush1.bf16.msra.mxu0 %v2727
    %3131 = vmatprep.subr.bf16.mxu0 %v2736
    %3132 = vmatpush1.bf16.msra.mxu0 %v2735
    %3133 = vmatprep.subr.bf16.mxu0 %v2744
    %3134 = vmatpush1.bf16.msra.mxu0 %v2743
    %3135 = vmatprep.subr.bf16.mxu0 %v2752
    %3136 = vmatpush1.bf16.msra.mxu0 %v2751
    %3137 = vmatprep.subr.bf16.mxu0 %v2760
    %3138 = vmatpush1.bf16.msra.mxu0 %v2759
    %3139 = vmatprep.subr.bf16.mxu0 %v2768
    %3140 = vmatpush1.bf16.msra.mxu0 %v2767
    %3141 = vmatprep.subr.bf16.mxu0 %v2776
    %3142 = vmatpush1.bf16.msra.mxu0 %v2775
    %3143 = vmatprep.subr.bf16.mxu0 %v2784
    %3144 = vmatpush1.bf16.msra.mxu0 %v2783
    %3145 = vmatprep.subr.bf16.mxu0 %v2792
    %3146 = vmatpush1.bf16.msra.mxu0 %v2791
    %3147 = vmatprep.subr.bf16.mxu0 %v2800
    %3148 = vmatpush1.bf16.msra.mxu0 %v2799
    %3149 = vmatprep.subr.bf16.mxu0 %v2808
    %3150 = vmatpush1.bf16.msra.mxu0 %v2807
    %3151 = vmatprep.subr.bf16.mxu0 %v2816
    %3152 = vmatpush1.bf16.msra.mxu0 %v2815
    %3153 = vmatprep.subr.bf16.mxu0 %v2824
    %3154 = vmatpush1.bf16.msra.mxu0 %v2823
    %3155 = vmatprep.mubr.bf16.mxu0 %v2956
    %3156 = vmatmul.mubr.bf16.gmra.mrb[0].mxu0 %v2955
    %v3157 = vpop.f32.mrb[0].mxu0
    %v3158 = vadd.f32 0.0, %v3157
    %v3159 = vpop.f32.mrb[0].mxu0
    %v3160 = vadd.f32 0.0, %v3159
    %v3161 = vpop.f32.mrb[0].mxu0
    %v3162 = vpop.f32.mrb[0].mxu0
    %3163 = vdwg.mxu0
    %3164 = vmatprep.subr.bf16.mxu0 %v2832
    %3165 = vmatpush1.bf16.msra.mxu0 %v2831
    %3166 = vmatprep.subr.bf16.mxu0 %v2840
    %3167 = vmatpush1.bf16.msra.mxu0 %v2839
    %3168 = vmatprep.subr.bf16.mxu0 %v2848
    %3169 = vmatpush1.bf16.msra.mxu0 %v2847
    %3170 = vmatprep.subr.bf16.mxu0 %v2856
    %3171 = vmatpush1.bf16.msra.mxu0 %v2855
    %3172 = vmatprep.subr.bf16.mxu0 %v2864
    %3173 = vmatpush1.bf16.msra.mxu0 %v2863
    %3174 = vmatprep.subr.bf16.mxu0 %v2872
    %3175 = vmatpush1.bf16.msra.mxu0 %v2871
    %3176 = vmatprep.subr.bf16.mxu0 %v2880
    %3177 = vmatpush1.bf16.msra.mxu0 %v2879
    %3178 = vmatprep.subr.bf16.mxu0 %v2888
    %3179 = vmatpush1.bf16.msra.mxu0 %v2887
    %3180 = vmatprep.subr.bf16.mxu0 %v2896
    %3181 = vmatpush1.bf16.msra.mxu0 %v2895
    %3182 = vmatprep.subr.bf16.mxu0 %v2904
    %3183 = vmatpush1.bf16.msra.mxu0 %v2903
    %3184 = vmatprep.subr.bf16.mxu0 %v2912
    %3185 = vmatpush1.bf16.msra.mxu0 %v2911
    %3186 = vmatprep.subr.bf16.mxu0 %v2920
    %3187 = vmatpush1.bf16.msra.mxu0 %v2919
    %3188 = vmatprep.subr.bf16.mxu0 %v2928
    %3189 = vmatpush1.bf16.msra.mxu0 %v2927
    %3190 = vmatprep.subr.bf16.mxu0 %v2936
    %3191 = vmatpush1.bf16.msra.mxu0 %v2935
    %3192 = vmatprep.subr.bf16.mxu0 %v2944
    %3193 = vmatpush1.bf16.msra.mxu0 %v2943
    %3194 = vmatprep.subr.bf16.mxu0 %v2952
    %3195 = vmatpush1.bf16.msra.mxu0 %v2951
    %3196 = vmatprep.mubr.bf16.mxu0 %v2958
    %3197 = vmatmul.mubr.bf16.gmra.mrb[0].mxu0 %v2957
    %v3198 = vpop.f32.mrb[0].mxu0
    %v3199 = vadd.f32 %v3158, %v3198
    %v3200 = vpop.f32.mrb[0].mxu0
    %v3201 = vadd.f32 %v3160, %v3200
    %v3202 = vpop.f32.mrb[0].mxu0
    %v3203 = vpop.f32.mrb[0].mxu0
    %3204 = vdwg.mxu0
    %3205 = vmatprep.subr.bf16.mxu0 %v2706
    %3206 = vmatpush1.bf16.msra.mxu0 %v2705
    %3207 = vmatprep.subr.bf16.mxu0 %v2714
    %3208 = vmatpush1.bf16.msra.mxu0 %v2713
    %3209 = vmatprep.subr.bf16.mxu0 %v2722
    %3210 = vmatpush1.bf16.msra.mxu0 %v2721
    %3211 = vmatprep.subr.bf16.mxu0 %v2730
    %3212 = vmatpush1.bf16.msra.mxu0 %v2729
    %3213 = vmatprep.subr.bf16.mxu0 %v2738
    %3214 = vmatpush1.bf16.msra.mxu0 %v2737
    %3215 = vmatprep.subr.bf16.mxu0 %v2746
    %3216 = vmatpush1.bf16.msra.mxu0 %v2745
    %3217 = vmatprep.subr.bf16.mxu0 %v2754
    %3218 = vmatpush1.bf16.msra.mxu0 %v2753
    %3219 = vmatprep.subr.bf16.mxu0 %v2762
    %3220 = vmatpush1.bf16.msra.mxu0 %v2761
    %3221 = vmatprep.subr.bf16.mxu0 %v2770
    %3222 = vmatpush1.bf16.msra.mxu0 %v2769
    %3223 = vmatprep.subr.bf16.mxu0 %v2778
    %3224 = vmatpush1.bf16.msra.mxu0 %v2777
    %3225 = vmatprep.subr.bf16.mxu0 %v2786
    %3226 = vmatpush1.bf16.msra.mxu0 %v2785
    %3227 = vmatprep.subr.bf16.mxu0 %v2794
    %3228 = vmatpush1.bf16.msra.mxu0 %v2793
    %3229 = vmatprep.subr.bf16.mxu0 %v2802
    %3230 = vmatpush1.bf16.msra.mxu0 %v2801
    %3231 = vmatprep.subr.bf16.mxu0 %v2810
    %3232 = vmatpush1.bf16.msra.mxu0 %v2809
    %3233 = vmatprep.subr.bf16.mxu0 %v2818
    %3234 = vmatpush1.bf16.msra.mxu0 %v2817
    %3235 = vmatprep.subr.bf16.mxu0 %v2826
    %3236 = vmatpush1.bf16.msra.mxu0 %v2825
    %3237 = vmatprep.mubr.bf16.mxu0 %v2956
    %3238 = vmatmul.mubr.bf16.gmra.mrb[0].mxu0 %v2955
    %v3239 = vpop.f32.mrb[0].mxu0
    %v3240 = vadd.f32 0.0, %v3239
    %v3241 = vpop.f32.mrb[0].mxu0
    %v3242 = vadd.f32 0.0, %v3241
    %v3243 = vpop.f32.mrb[0].mxu0
    %v3244 = vpop.f32.mrb[0].mxu0
    %3245 = vdwg.mxu0
    %3246 = vmatprep.subr.bf16.mxu0 %v2834
    %3247 = vmatpush1.bf16.msra.mxu0 %v2833
    %3248 = vmatprep.subr.bf16.mxu0 %v2842
    %3249 = vmatpush1.bf16.msra.mxu0 %v2841
    %3250 = vmatprep.subr.bf16.mxu0 %v2850
    %3251 = vmatpush1.bf16.msra.mxu0 %v2849
    %3252 = vmatprep.subr.bf16.mxu0 %v2858
    %3253 = vmatpush1.bf16.msra.mxu0 %v2857
    %3254 = vmatprep.subr.bf16.mxu0 %v2866
    %3255 = vmatpush1.bf16.msra.mxu0 %v2865
    %3256 = vmatprep.subr.bf16.mxu0 %v2874
    %3257 = vmatpush1.bf16.msra.mxu0 %v2873
    %3258 = vmatprep.subr.bf16.mxu0 %v2882
    %3259 = vmatpush1.bf16.msra.mxu0 %v2881
    %3260 = vmatprep.subr.bf16.mxu0 %v2890
    %3261 = vmatpush1.bf16.msra.mxu0 %v2889
    %3262 = vmatprep.subr.bf16.mxu0 %v2898
    %3263 = vmatpush1.bf16.msra.mxu0 %v2897
    %3264 = vmatprep.subr.bf16.mxu0 %v2906
    %3265 = vmatpush1.bf16.msra.mxu0 %v2905
    %3266 = vmatprep.subr.bf16.mxu0 %v2914
    %3267 = vmatpush1.bf16.msra.mxu0 %v2913
    %3268 = vmatprep.subr.bf16.mxu0 %v2922
    %3269 = vmatpush1.bf16.msra.mxu0 %v2921
    %3270 = vmatprep.subr.bf16.mxu0 %v2930
    %3271 = vmatpush1.bf16.msra.mxu0 %v2929
    %3272 = vmatprep.subr.bf16.mxu0 %v2938
    %3273 = vmatpush1.bf16.msra.mxu0 %v2937
    %3274 = vmatprep.subr.bf16.mxu0 %v2946
    %3275 = vmatpush1.bf16.msra.mxu0 %v2945
    %3276 = vmatprep.subr.bf16.mxu0 %v2954
    %3277 = vmatpush1.bf16.msra.mxu0 %v2953
    %3278 = vmatprep.mubr.bf16.mxu0 %v2958
    %3279 = vmatmul.mubr.bf16.gmra.mrb[0].mxu0 %v2957
    %v3280 = vpop.f32.mrb[0].mxu0
    %v3281 = vadd.f32 %v3240, %v3280
    %v3282 = vpop.f32.mrb[0].mxu0
    %v3283 = vadd.f32 %v3242, %v3282
    %v3284 = vpop.f32.mrb[0].mxu0
    %v3285 = vpop.f32.mrb[0].mxu0
    %3286 = vdwg.mxu0
    %v3288 = vlaneseq
    %v3289 = vshrl.u32 %v3288, 7
    %v3290 = vsub.s32 0, %v3289
    %v3291 = vrot.slane %v2570, %v3290
    %v3292 = vlaneseq
    %v3293 = vshrl.u32 %v3292, 7
    %v3294 = vsub.s32 1, %v3293
    %v3295 = vrot.slane %v2570, %v3294
    %v3296 = vlaneseq
    %v3297 = vshrl.u32 %v3296, 7
    %v3298 = vsub.s32 2, %v3297
    %v3299 = vrot.slane %v2570, %v3298
    %v3300 = vlaneseq
    %v3301 = vshrl.u32 %v3300, 7
    %v3302 = vsub.s32 3, %v3301
    %v3303 = vrot.slane %v2570, %v3302
    %v3304 = vlaneseq
    %v3305 = vshrl.u32 %v3304, 7
    %v3306 = vsub.s32 4, %v3305
    %v3307 = vrot.slane %v2570, %v3306
    %v3308 = vlaneseq
    %v3309 = vshrl.u32 %v3308, 7
    %v3310 = vsub.s32 5, %v3309
    %v3311 = vrot.slane %v2570, %v3310
    %v3312 = vlaneseq
    %v3313 = vshrl.u32 %v3312, 7
    %v3314 = vsub.s32 6, %v3313
    %v3315 = vrot.slane %v2570, %v3314
    %v3316 = vlaneseq
    %v3317 = vshrl.u32 %v3316, 7
    %v3318 = vsub.s32 7, %v3317
    %v3319 = vrot.slane %v2570, %v3318
    %v3328 = vmul.f32 %v3035, %v3291
    %v3329 = vmul.f32 %v3037, %v3295
    %v3330 = vmul.f32 %v3117, %v3299
    %v3331 = vmul.f32 %v3119, %v3303
    %v3332 = vmul.f32 %v3199, %v3307
    %v3333 = vmul.f32 %v3201, %v3311
    %v3334 = vmul.f32 %v3281, %v3315
    %v3335 = vmul.f32 %v3283, %v3319
    %v3336 = vld [vmem:[#allocation2 + $0x72] sm:$0xff]
    %v3337 = vld [vmem:[#allocation9] sm:$0xff]
    %v3338 = vld [vmem:[#allocation9 + $0x8] sm:$0xff]
    %v3339 = vld [vmem:[#allocation9 + $0x10] sm:$0xff]
    %v3340 = vld [vmem:[#allocation9 + $0x18] sm:$0xff]
    %v3341 = vld [vmem:[#allocation9 + $0x20] sm:$0xff]
    %v3342 = vld [vmem:[#allocation9 + $0x28] sm:$0xff]
    %v3343 = vld [vmem:[#allocation9 + $0x30] sm:$0xff]
    %v3344 = vld [vmem:[#allocation9 + $0x38] sm:$0xff]
    %v3345 = vld [vmem:[#allocation9 + $0x40] sm:$0xff]
    %v3346 = vld [vmem:[#allocation9 + $0x48] sm:$0xff]
    %v3347 = vld [vmem:[#allocation9 + $0x50] sm:$0xff]
    %v3348 = vld [vmem:[#allocation9 + $0x58] sm:$0xff]
    %v3349 = vld [vmem:[#allocation9 + $0x60] sm:$0xff]
    %v3350 = vld [vmem:[#allocation9 + $0x68] sm:$0xff]
    %v3351 = vld [vmem:[#allocation9 + $0x70] sm:$0xff]
    %v3352 = vld [vmem:[#allocation9 + $0x78] sm:$0xff]
    %v3353 = vld [vmem:[#allocation9 + $0x80] sm:$0xff]
    %v3354 = vld [vmem:[#allocation9 + $0x88] sm:$0xff]
    %v3355 = vld [vmem:[#allocation9 + $0x90] sm:$0xff]
    %v3356 = vld [vmem:[#allocation9 + $0x98] sm:$0xff]
    %v3357 = vld [vmem:[#allocation9 + $0xa0] sm:$0xff]
    %v3358 = vld [vmem:[#allocation9 + $0xa8] sm:$0xff]
    %v3359 = vld [vmem:[#allocation9 + $0xb0] sm:$0xff]
    %v3360 = vld [vmem:[#allocation9 + $0xb8] sm:$0xff]
    %v3361 = vld [vmem:[#allocation9 + $0xc0] sm:$0xff]
    %v3362 = vld [vmem:[#allocation9 + $0xc8] sm:$0xff]
    %v3363 = vld [vmem:[#allocation9 + $0xd0] sm:$0xff]
    %v3364 = vld [vmem:[#allocation9 + $0xd8] sm:$0xff]
    %v3365 = vld [vmem:[#allocation9 + $0xe0] sm:$0xff]
    %v3366 = vld [vmem:[#allocation9 + $0xe8] sm:$0xff]
    %v3367 = vld [vmem:[#allocation9 + $0xf0] sm:$0xff]
    %v3368 = vld [vmem:[#allocation9 + $0xf8] sm:$0xff]
    %v3369 = vld [vmem:[#allocation9 + $0x100] sm:$0xff]
    %v3370 = vld [vmem:[#allocation9 + $0x108] sm:$0xff]
    %v3371 = vld [vmem:[#allocation9 + $0x110] sm:$0xff]
    %v3372 = vld [vmem:[#allocation9 + $0x118] sm:$0xff]
    %v3373 = vld [vmem:[#allocation9 + $0x120] sm:$0xff]
    %v3374 = vld [vmem:[#allocation9 + $0x128] sm:$0xff]
    %v3375 = vld [vmem:[#allocation9 + $0x130] sm:$0xff]
    %v3376 = vld [vmem:[#allocation9 + $0x138] sm:$0xff]
    %v3377 = vld [vmem:[#allocation9 + $0x140] sm:$0xff]
    %v3378 = vld [vmem:[#allocation9 + $0x148] sm:$0xff]
    %v3379 = vld [vmem:[#allocation9 + $0x150] sm:$0xff]
    %v3380 = vld [vmem:[#allocation9 + $0x158] sm:$0xff]
    %v3381 = vld [vmem:[#allocation9 + $0x160] sm:$0xff]
    %v3382 = vld [vmem:[#allocation9 + $0x168] sm:$0xff]
    %v3383 = vld [vmem:[#allocation9 + $0x170] sm:$0xff]
    %v3384 = vld [vmem:[#allocation9 + $0x178] sm:$0xff]
    %v3385 = vld [vmem:[#allocation9 + $0x180] sm:$0xff]
    %v3386 = vld [vmem:[#allocation9 + $0x188] sm:$0xff]
    %v3387 = vld [vmem:[#allocation9 + $0x190] sm:$0xff]
    %v3388 = vld [vmem:[#allocation9 + $0x198] sm:$0xff]
    %v3389 = vld [vmem:[#allocation9 + $0x1a0] sm:$0xff]
    %v3390 = vld [vmem:[#allocation9 + $0x1a8] sm:$0xff]
    %v3391 = vld [vmem:[#allocation9 + $0x1b0] sm:$0xff]
    %v3392 = vld [vmem:[#allocation9 + $0x1b8] sm:$0xff]
    %v3393 = vld [vmem:[#allocation9 + $0x1c0] sm:$0xff]
    %v3394 = vld [vmem:[#allocation9 + $0x1c8] sm:$0xff]
    %v3395 = vld [vmem:[#allocation9 + $0x1d0] sm:$0xff]
    %v3396 = vld [vmem:[#allocation9 + $0x1d8] sm:$0xff]
    %v3397 = vld [vmem:[#allocation9 + $0x1e0] sm:$0xff]
    %v3398 = vld [vmem:[#allocation9 + $0x1e8] sm:$0xff]
    %v3399 = vld [vmem:[#allocation9 + $0x1f0] sm:$0xff]
    %v3400 = vld [vmem:[#allocation9 + $0x1f8] sm:$0xff]
    %v3401 = vld [vmem:[#allocation9 + $0x200] sm:$0xff]
    %v3402 = vld [vmem:[#allocation9 + $0x208] sm:$0xff]
    %v3403 = vld [vmem:[#allocation9 + $0x210] sm:$0xff]
    %v3404 = vld [vmem:[#allocation9 + $0x218] sm:$0xff]
    %v3405 = vld [vmem:[#allocation9 + $0x220] sm:$0xff]
    %v3406 = vld [vmem:[#allocation9 + $0x228] sm:$0xff]
    %v3407 = vld [vmem:[#allocation9 + $0x230] sm:$0xff]
    %v3408 = vld [vmem:[#allocation9 + $0x238] sm:$0xff]
    %v3409 = vld [vmem:[#allocation9 + $0x240] sm:$0xff]
    %v3410 = vld [vmem:[#allocation9 + $0x248] sm:$0xff]
    %v3411 = vld [vmem:[#allocation9 + $0x250] sm:$0xff]
    %v3412 = vld [vmem:[#allocation9 + $0x258] sm:$0xff]
    %v3413 = vld [vmem:[#allocation9 + $0x260] sm:$0xff]
    %v3414 = vld [vmem:[#allocation9 + $0x268] sm:$0xff]
    %v3415 = vld [vmem:[#allocation9 + $0x270] sm:$0xff]
    %v3416 = vld [vmem:[#allocation9 + $0x278] sm:$0xff]
    %v3417 = vld [vmem:[#allocation9 + $0x280] sm:$0xff]
    %v3418 = vld [vmem:[#allocation9 + $0x288] sm:$0xff]
    %v3419 = vld [vmem:[#allocation9 + $0x290] sm:$0xff]
    %v3420 = vld [vmem:[#allocation9 + $0x298] sm:$0xff]
    %v3421 = vld [vmem:[#allocation9 + $0x2a0] sm:$0xff]
    %v3422 = vld [vmem:[#allocation9 + $0x2a8] sm:$0xff]
    %v3423 = vld [vmem:[#allocation9 + $0x2b0] sm:$0xff]
    %v3424 = vld [vmem:[#allocation9 + $0x2b8] sm:$0xff]
    %v3425 = vld [vmem:[#allocation9 + $0x2c0] sm:$0xff]
    %v3426 = vld [vmem:[#allocation9 + $0x2c8] sm:$0xff]
    %v3427 = vld [vmem:[#allocation9 + $0x2d0] sm:$0xff]
    %v3428 = vld [vmem:[#allocation9 + $0x2d8] sm:$0xff]
    %v3429 = vld [vmem:[#allocation9 + $0x2e0] sm:$0xff]
    %v3430 = vld [vmem:[#allocation9 + $0x2e8] sm:$0xff]
    %v3431 = vld [vmem:[#allocation9 + $0x2f0] sm:$0xff]
    %v3432 = vld [vmem:[#allocation9 + $0x2f8] sm:$0xff]
    %v3433 = vld [vmem:[#allocation9 + $0x300] sm:$0xff]
    %v3434 = vld [vmem:[#allocation9 + $0x308] sm:$0xff]
    %v3435 = vld [vmem:[#allocation9 + $0x310] sm:$0xff]
    %v3436 = vld [vmem:[#allocation9 + $0x318] sm:$0xff]
    %v3437 = vld [vmem:[#allocation9 + $0x320] sm:$0xff]
    %v3438 = vld [vmem:[#allocation9 + $0x328] sm:$0xff]
    %v3439 = vld [vmem:[#allocation9 + $0x330] sm:$0xff]
    %v3440 = vld [vmem:[#allocation9 + $0x338] sm:$0xff]
    %v3441 = vld [vmem:[#allocation9 + $0x340] sm:$0xff]
    %v3442 = vld [vmem:[#allocation9 + $0x348] sm:$0xff]
    %v3443 = vld [vmem:[#allocation9 + $0x350] sm:$0xff]
    %v3444 = vld [vmem:[#allocation9 + $0x358] sm:$0xff]
    %v3445 = vld [vmem:[#allocation9 + $0x360] sm:$0xff]
    %v3446 = vld [vmem:[#allocation9 + $0x368] sm:$0xff]
    %v3447 = vld [vmem:[#allocation9 + $0x370] sm:$0xff]
    %v3448 = vld [vmem:[#allocation9 + $0x378] sm:$0xff]
    %v3449 = vld [vmem:[#allocation9 + $0x380] sm:$0xff]
    %v3450 = vld [vmem:[#allocation9 + $0x388] sm:$0xff]
    %v3451 = vld [vmem:[#allocation9 + $0x390] sm:$0xff]
    %v3452 = vld [vmem:[#allocation9 + $0x398] sm:$0xff]
    %v3453 = vld [vmem:[#allocation9 + $0x3a0] sm:$0xff]
    %v3454 = vld [vmem:[#allocation9 + $0x3a8] sm:$0xff]
    %v3455 = vld [vmem:[#allocation9 + $0x3b0] sm:$0xff]
    %v3456 = vld [vmem:[#allocation9 + $0x3b8] sm:$0xff]
    %v3457 = vld [vmem:[#allocation9 + $0x3c0] sm:$0xff]
    %v3458 = vld [vmem:[#allocation9 + $0x3c8] sm:$0xff]
    %v3459 = vld [vmem:[#allocation9 + $0x3d0] sm:$0xff]
    %v3460 = vld [vmem:[#allocation9 + $0x3d8] sm:$0xff]
    %v3461 = vld [vmem:[#allocation9 + $0x3e0] sm:$0xff]
    %v3462 = vld [vmem:[#allocation9 + $0x3e8] sm:$0xff]
    %v3463 = vld [vmem:[#allocation9 + $0x3f0] sm:$0xff]
    %v3464 = vld [vmem:[#allocation9 + $0x3f8] sm:$0xff]
    %v3465 = vunpack.c.l.s8.bf16 %v3337
    %v3466 = vunpack.c.l.s8.bf16 %v3338
    %v3467 = vunpack.c.l.s8.bf16 %v3339
    %v3468 = vunpack.c.l.s8.bf16 %v3340
    %v3469 = vunpack.c.l.s8.bf16 %v3341
    %v3470 = vunpack.c.l.s8.bf16 %v3342
    %v3471 = vunpack.c.l.s8.bf16 %v3343
    %v3472 = vunpack.c.l.s8.bf16 %v3344
    %v3473 = vunpack.c.h.s8.bf16 %v3337
    %v3474 = vunpack.c.h.s8.bf16 %v3338
    %v3475 = vunpack.c.h.s8.bf16 %v3339
    %v3476 = vunpack.c.h.s8.bf16 %v3340
    %v3477 = vunpack.c.h.s8.bf16 %v3341
    %v3478 = vunpack.c.h.s8.bf16 %v3342
    %v3479 = vunpack.c.h.s8.bf16 %v3343
    %v3480 = vunpack.c.h.s8.bf16 %v3344
    %v3481 = vunpack.c.l.s8.bf16 %v3345
    %v3482 = vunpack.c.l.s8.bf16 %v3346
    %v3483 = vunpack.c.l.s8.bf16 %v3347
    %v3484 = vunpack.c.l.s8.bf16 %v3348
    %v3485 = vunpack.c.l.s8.bf16 %v3349
    %v3486 = vunpack.c.l.s8.bf16 %v3350
    %v3487 = vunpack.c.l.s8.bf16 %v3351
    %v3488 = vunpack.c.l.s8.bf16 %v3352
    %v3489 = vunpack.c.h.s8.bf16 %v3345
    %v3490 = vunpack.c.h.s8.bf16 %v3346
    %v3491 = vunpack.c.h.s8.bf16 %v3347
    %v3492 = vunpack.c.h.s8.bf16 %v3348
    %v3493 = vunpack.c.h.s8.bf16 %v3349
    %v3494 = vunpack.c.h.s8.bf16 %v3350
    %v3495 = vunpack.c.h.s8.bf16 %v3351
    %v3496 = vunpack.c.h.s8.bf16 %v3352
    %v3497 = vunpack.c.l.s8.bf16 %v3353
    %v3498 = vunpack.c.l.s8.bf16 %v3354
    %v3499 = vunpack.c.l.s8.bf16 %v3355
    %v3500 = vunpack.c.l.s8.bf16 %v3356
    %v3501 = vunpack.c.l.s8.bf16 %v3357
    %v3502 = vunpack.c.l.s8.bf16 %v3358
    %v3503 = vunpack.c.l.s8.bf16 %v3359
    %v3504 = vunpack.c.l.s8.bf16 %v3360
    %v3505 = vunpack.c.h.s8.bf16 %v3353
    %v3506 = vunpack.c.h.s8.bf16 %v3354
    %v3507 = vunpack.c.h.s8.bf16 %v3355
    %v3508 = vunpack.c.h.s8.bf16 %v3356
    %v3509 = vunpack.c.h.s8.bf16 %v3357
    %v3510 = vunpack.c.h.s8.bf16 %v3358
    %v3511 = vunpack.c.h.s8.bf16 %v3359
    %v3512 = vunpack.c.h.s8.bf16 %v3360
    %v3513 = vunpack.c.l.s8.bf16 %v3361
    %v3514 = vunpack.c.l.s8.bf16 %v3362
    %v3515 = vunpack.c.l.s8.bf16 %v3363
    %v3516 = vunpack.c.l.s8.bf16 %v3364
    %v3517 = vunpack.c.l.s8.bf16 %v3365
    %v3518 = vunpack.c.l.s8.bf16 %v3366
    %v3519 = vunpack.c.l.s8.bf16 %v3367
    %v3520 = vunpack.c.l.s8.bf16 %v3368
    %v3521 = vunpack.c.h.s8.bf16 %v3361
    %v3522 = vunpack.c.h.s8.bf16 %v3362
    %v3523 = vunpack.c.h.s8.bf16 %v3363
    %v3524 = vunpack.c.h.s8.bf16 %v3364
    %v3525 = vunpack.c.h.s8.bf16 %v3365
    %v3526 = vunpack.c.h.s8.bf16 %v3366
    %v3527 = vunpack.c.h.s8.bf16 %v3367
    %v3528 = vunpack.c.h.s8.bf16 %v3368
    %v3529 = vunpack.c.l.s8.bf16 %v3369
    %v3530 = vunpack.c.l.s8.bf16 %v3370
    %v3531 = vunpack.c.l.s8.bf16 %v3371
    %v3532 = vunpack.c.l.s8.bf16 %v3372
    %v3533 = vunpack.c.l.s8.bf16 %v3373
    %v3534 = vunpack.c.l.s8.bf16 %v3374
    %v3535 = vunpack.c.l.s8.bf16 %v3375
    %v3536 = vunpack.c.l.s8.bf16 %v3376
    %v3537 = vunpack.c.h.s8.bf16 %v3369
    %v3538 = vunpack.c.h.s8.bf16 %v3370
    %v3539 = vunpack.c.h.s8.bf16 %v3371
    %v3540 = vunpack.c.h.s8.bf16 %v3372
    %v3541 = vunpack.c.h.s8.bf16 %v3373
    %v3542 = vunpack.c.h.s8.bf16 %v3374
    %v3543 = vunpack.c.h.s8.bf16 %v3375
    %v3544 = vunpack.c.h.s8.bf16 %v3376
    %v3545 = vunpack.c.l.s8.bf16 %v3377
    %v3546 = vunpack.c.l.s8.bf16 %v3378
    %v3547 = vunpack.c.l.s8.bf16 %v3379
    %v3548 = vunpack.c.l.s8.bf16 %v3380
    %v3549 = vunpack.c.l.s8.bf16 %v3381
    %v3550 = vunpack.c.l.s8.bf16 %v3382
    %v3551 = vunpack.c.l.s8.bf16 %v3383
    %v3552 = vunpack.c.l.s8.bf16 %v3384
    %v3553 = vunpack.c.h.s8.bf16 %v3377
    %v3554 = vunpack.c.h.s8.bf16 %v3378
    %v3555 = vunpack.c.h.s8.bf16 %v3379
    %v3556 = vunpack.c.h.s8.bf16 %v3380
    %v3557 = vunpack.c.h.s8.bf16 %v3381
    %v3558 = vunpack.c.h.s8.bf16 %v3382
    %v3559 = vunpack.c.h.s8.bf16 %v3383
    %v3560 = vunpack.c.h.s8.bf16 %v3384
    %v3561 = vunpack.c.l.s8.bf16 %v3385
    %v3562 = vunpack.c.l.s8.bf16 %v3386
    %v3563 = vunpack.c.l.s8.bf16 %v3387
    %v3564 = vunpack.c.l.s8.bf16 %v3388
    %v3565 = vunpack.c.l.s8.bf16 %v3389
    %v3566 = vunpack.c.l.s8.bf16 %v3390
    %v3567 = vunpack.c.l.s8.bf16 %v3391
    %v3568 = vunpack.c.l.s8.bf16 %v3392
    %v3569 = vunpack.c.h.s8.bf16 %v3385
    %v3570 = vunpack.c.h.s8.bf16 %v3386
    %v3571 = vunpack.c.h.s8.bf16 %v3387
    %v3572 = vunpack.c.h.s8.bf16 %v3388
    %v3573 = vunpack.c.h.s8.bf16 %v3389
    %v3574 = vunpack.c.h.s8.bf16 %v3390
    %v3575 = vunpack.c.h.s8.bf16 %v3391
    %v3576 = vunpack.c.h.s8.bf16 %v3392
    %v3577 = vunpack.c.l.s8.bf16 %v3393
    %v3578 = vunpack.c.l.s8.bf16 %v3394
    %v3579 = vunpack.c.l.s8.bf16 %v3395
    %v3580 = vunpack.c.l.s8.bf16 %v3396
    %v3581 = vunpack.c.l.s8.bf16 %v3397
    %v3582 = vunpack.c.l.s8.bf16 %v3398
    %v3583 = vunpack.c.l.s8.bf16 %v3399
    %v3584 = vunpack.c.l.s8.bf16 %v3400
    %v3585 = vunpack.c.h.s8.bf16 %v3393
    %v3586 = vunpack.c.h.s8.bf16 %v3394
    %v3587 = vunpack.c.h.s8.bf16 %v3395
    %v3588 = vunpack.c.h.s8.bf16 %v3396
    %v3589 = vunpack.c.h.s8.bf16 %v3397
    %v3590 = vunpack.c.h.s8.bf16 %v3398
    %v3591 = vunpack.c.h.s8.bf16 %v3399
    %v3592 = vunpack.c.h.s8.bf16 %v3400
    %v3593 = vunpack.c.l.s8.bf16 %v3401
    %v3594 = vunpack.c.l.s8.bf16 %v3402
    %v3595 = vunpack.c.l.s8.bf16 %v3403
    %v3596 = vunpack.c.l.s8.bf16 %v3404
    %v3597 = vunpack.c.l.s8.bf16 %v3405
    %v3598 = vunpack.c.l.s8.bf16 %v3406
    %v3599 = vunpack.c.l.s8.bf16 %v3407
    %v3600 = vunpack.c.l.s8.bf16 %v3408
    %v3601 = vunpack.c.h.s8.bf16 %v3401
    %v3602 = vunpack.c.h.s8.bf16 %v3402
    %v3603 = vunpack.c.h.s8.bf16 %v3403
    %v3604 = vunpack.c.h.s8.bf16 %v3404
    %v3605 = vunpack.c.h.s8.bf16 %v3405
    %v3606 = vunpack.c.h.s8.bf16 %v3406
    %v3607 = vunpack.c.h.s8.bf16 %v3407
    %v3608 = vunpack.c.h.s8.bf16 %v3408
    %v3609 = vunpack.c.l.s8.bf16 %v3409
    %v3610 = vunpack.c.l.s8.bf16 %v3410
    %v3611 = vunpack.c.l.s8.bf16 %v3411
    %v3612 = vunpack.c.l.s8.bf16 %v3412
    %v3613 = vunpack.c.l.s8.bf16 %v3413
    %v3614 = vunpack.c.l.s8.bf16 %v3414
    %v3615 = vunpack.c.l.s8.bf16 %v3415
    %v3616 = vunpack.c.l.s8.bf16 %v3416
    %v3617 = vunpack.c.h.s8.bf16 %v3409
    %v3618 = vunpack.c.h.s8.bf16 %v3410
    %v3619 = vunpack.c.h.s8.bf16 %v3411
    %v3620 = vunpack.c.h.s8.bf16 %v3412
    %v3621 = vunpack.c.h.s8.bf16 %v3413
    %v3622 = vunpack.c.h.s8.bf16 %v3414
    %v3623 = vunpack.c.h.s8.bf16 %v3415
    %v3624 = vunpack.c.h.s8.bf16 %v3416
    %v3625 = vunpack.c.l.s8.bf16 %v3417
    %v3626 = vunpack.c.l.s8.bf16 %v3418
    %v3627 = vunpack.c.l.s8.bf16 %v3419
    %v3628 = vunpack.c.l.s8.bf16 %v3420
    %v3629 = vunpack.c.l.s8.bf16 %v3421
    %v3630 = vunpack.c.l.s8.bf16 %v3422
    %v3631 = vunpack.c.l.s8.bf16 %v3423
    %v3632 = vunpack.c.l.s8.bf16 %v3424
    %v3633 = vunpack.c.h.s8.bf16 %v3417
    %v3634 = vunpack.c.h.s8.bf16 %v3418
    %v3635 = vunpack.c.h.s8.bf16 %v3419
    %v3636 = vunpack.c.h.s8.bf16 %v3420
    %v3637 = vunpack.c.h.s8.bf16 %v3421
    %v3638 = vunpack.c.h.s8.bf16 %v3422
    %v3639 = vunpack.c.h.s8.bf16 %v3423
    %v3640 = vunpack.c.h.s8.bf16 %v3424
    %v3641 = vunpack.c.l.s8.bf16 %v3425
    %v3642 = vunpack.c.l.s8.bf16 %v3426
    %v3643 = vunpack.c.l.s8.bf16 %v3427
    %v3644 = vunpack.c.l.s8.bf16 %v3428
    %v3645 = vunpack.c.l.s8.bf16 %v3429
    %v3646 = vunpack.c.l.s8.bf16 %v3430
    %v3647 = vunpack.c.l.s8.bf16 %v3431
    %v3648 = vunpack.c.l.s8.bf16 %v3432
    %v3649 = vunpack.c.h.s8.bf16 %v3425
    %v3650 = vunpack.c.h.s8.bf16 %v3426
    %v3651 = vunpack.c.h.s8.bf16 %v3427
    %v3652 = vunpack.c.h.s8.bf16 %v3428
    %v3653 = vunpack.c.h.s8.bf16 %v3429
    %v3654 = vunpack.c.h.s8.bf16 %v3430
    %v3655 = vunpack.c.h.s8.bf16 %v3431
    %v3656 = vunpack.c.h.s8.bf16 %v3432
    %v3657 = vunpack.c.l.s8.bf16 %v3433
    %v3658 = vunpack.c.l.s8.bf16 %v3434
    %v3659 = vunpack.c.l.s8.bf16 %v3435
    %v3660 = vunpack.c.l.s8.bf16 %v3436
    %v3661 = vunpack.c.l.s8.bf16 %v3437
    %v3662 = vunpack.c.l.s8.bf16 %v3438
    %v3663 = vunpack.c.l.s8.bf16 %v3439
    %v3664 = vunpack.c.l.s8.bf16 %v3440
    %v3665 = vunpack.c.h.s8.bf16 %v3433
    %v3666 = vunpack.c.h.s8.bf16 %v3434
    %v3667 = vunpack.c.h.s8.bf16 %v3435
    %v3668 = vunpack.c.h.s8.bf16 %v3436
    %v3669 = vunpack.c.h.s8.bf16 %v3437
    %v3670 = vunpack.c.h.s8.bf16 %v3438
    %v3671 = vunpack.c.h.s8.bf16 %v3439
    %v3672 = vunpack.c.h.s8.bf16 %v3440
    %v3673 = vunpack.c.l.s8.bf16 %v3441
    %v3674 = vunpack.c.l.s8.bf16 %v3442
    %v3675 = vunpack.c.l.s8.bf16 %v3443
    %v3676 = vunpack.c.l.s8.bf16 %v3444
    %v3677 = vunpack.c.l.s8.bf16 %v3445
    %v3678 = vunpack.c.l.s8.bf16 %v3446
    %v3679 = vunpack.c.l.s8.bf16 %v3447
    %v3680 = vunpack.c.l.s8.bf16 %v3448
    %v3681 = vunpack.c.h.s8.bf16 %v3441
    %v3682 = vunpack.c.h.s8.bf16 %v3442
    %v3683 = vunpack.c.h.s8.bf16 %v3443
    %v3684 = vunpack.c.h.s8.bf16 %v3444
    %v3685 = vunpack.c.h.s8.bf16 %v3445
    %v3686 = vunpack.c.h.s8.bf16 %v3446
    %v3687 = vunpack.c.h.s8.bf16 %v3447
    %v3688 = vunpack.c.h.s8.bf16 %v3448
    %v3689 = vunpack.c.l.s8.bf16 %v3449
    %v3690 = vunpack.c.l.s8.bf16 %v3450
    %v3691 = vunpack.c.l.s8.bf16 %v3451
    %v3692 = vunpack.c.l.s8.bf16 %v3452
    %v3693 = vunpack.c.l.s8.bf16 %v3453
    %v3694 = vunpack.c.l.s8.bf16 %v3454
    %v3695 = vunpack.c.l.s8.bf16 %v3455
    %v3696 = vunpack.c.l.s8.bf16 %v3456
    %v3697 = vunpack.c.h.s8.bf16 %v3449
    %v3698 = vunpack.c.h.s8.bf16 %v3450
    %v3699 = vunpack.c.h.s8.bf16 %v3451
    %v3700 = vunpack.c.h.s8.bf16 %v3452
    %v3701 = vunpack.c.h.s8.bf16 %v3453
    %v3702 = vunpack.c.h.s8.bf16 %v3454
    %v3703 = vunpack.c.h.s8.bf16 %v3455
    %v3704 = vunpack.c.h.s8.bf16 %v3456
    %v3705 = vunpack.c.l.s8.bf16 %v3457
    %v3706 = vunpack.c.l.s8.bf16 %v3458
    %v3707 = vunpack.c.l.s8.bf16 %v3459
    %v3708 = vunpack.c.l.s8.bf16 %v3460
    %v3709 = vunpack.c.l.s8.bf16 %v3461
    %v3710 = vunpack.c.l.s8.bf16 %v3462
    %v3711 = vunpack.c.l.s8.bf16 %v3463
    %v3712 = vunpack.c.l.s8.bf16 %v3464
    %v3713 = vunpack.c.h.s8.bf16 %v3457
    %v3714 = vunpack.c.h.s8.bf16 %v3458
    %v3715 = vunpack.c.h.s8.bf16 %v3459
    %v3716 = vunpack.c.h.s8.bf16 %v3460
    %v3717 = vunpack.c.h.s8.bf16 %v3461
    %v3718 = vunpack.c.h.s8.bf16 %v3462
    %v3719 = vunpack.c.h.s8.bf16 %v3463
    %v3720 = vunpack.c.h.s8.bf16 %v3464
    %v3721 = vpack.c.bf16 %v2566, %v2566
    %v3722 = vpack.c.bf16 %v2567, %v2567
    %v3723 = vpack.c.bf16 %v2568, %v2568
    %v3724 = vpack.c.bf16 %v2569, %v2569
    %3725 = vmatprep.subr.bf16.mxu0 %v3466
    %3726 = vmatpush1.bf16.msra.mxu0 %v3465
    %3727 = vmatprep.subr.bf16.mxu0 %v3474
    %3728 = vmatpush1.bf16.msra.mxu0 %v3473
    %3729 = vmatprep.subr.bf16.mxu0 %v3482
    %3730 = vmatpush1.bf16.msra.mxu0 %v3481
    %3731 = vmatprep.subr.bf16.mxu0 %v3490
    %3732 = vmatpush1.bf16.msra.mxu0 %v3489
    %3733 = vmatprep.subr.bf16.mxu0 %v3498
    %3734 = vmatpush1.bf16.msra.mxu0 %v3497
    %3735 = vmatprep.subr.bf16.mxu0 %v3506
    %3736 = vmatpush1.bf16.msra.mxu0 %v3505
    %3737 = vmatprep.subr.bf16.mxu0 %v3514
    %3738 = vmatpush1.bf16.msra.mxu0 %v3513
    %3739 = vmatprep.subr.bf16.mxu0 %v3522
    %3740 = vmatpush1.bf16.msra.mxu0 %v3521
    %3741 = vmatprep.subr.bf16.mxu0 %v3530
    %3742 = vmatpush1.bf16.msra.mxu0 %v3529
    %3743 = vmatprep.subr.bf16.mxu0 %v3538
    %3744 = vmatpush1.bf16.msra.mxu0 %v3537
    %3745 = vmatprep.subr.bf16.mxu0 %v3546
    %3746 = vmatpush1.bf16.msra.mxu0 %v3545
    %3747 = vmatprep.subr.bf16.mxu0 %v3554
    %3748 = vmatpush1.bf16.msra.mxu0 %v3553
    %3749 = vmatprep.subr.bf16.mxu0 %v3562
    %3750 = vmatpush1.bf16.msra.mxu0 %v3561
    %3751 = vmatprep.subr.bf16.mxu0 %v3570
    %3752 = vmatpush1.bf16.msra.mxu0 %v3569
    %3753 = vmatprep.subr.bf16.mxu0 %v3578
    %3754 = vmatpush1.bf16.msra.mxu0 %v3577
    %3755 = vmatprep.subr.bf16.mxu0 %v3586
    %3756 = vmatpush1.bf16.msra.mxu0 %v3585
    %3757 = vmatprep.mubr.bf16.mxu0 %v3722
    %3758 = vmatmul.mubr.bf16.gmra.mrb[0].mxu0 %v3721
    %v3759 = vpop.f32.mrb[0].mxu0
    %v3760 = vadd.f32 0.0, %v3759
    %v3761 = vpop.f32.mrb[0].mxu0
    %v3762 = vadd.f32 0.0, %v3761
    %v3763 = vpop.f32.mrb[0].mxu0
    %v3764 = vpop.f32.mrb[0].mxu0
    %3765 = vdwg.mxu0
    %3766 = vmatprep.subr.bf16.mxu0 %v3594
    %3767 = vmatpush1.bf16.msra.mxu0 %v3593
    %3768 = vmatprep.subr.bf16.mxu0 %v3602
    %3769 = vmatpush1.bf16.msra.mxu0 %v3601
    %3770 = vmatprep.subr.bf16.mxu0 %v3610
    %3771 = vmatpush1.bf16.msra.mxu0 %v3609
    %3772 = vmatprep.subr.bf16.mxu0 %v3618
    %3773 = vmatpush1.bf16.msra.mxu0 %v3617
    %3774 = vmatprep.subr.bf16.mxu0 %v3626
    %3775 = vmatpush1.bf16.msra.mxu0 %v3625
    %3776 = vmatprep.subr.bf16.mxu0 %v3634
    %3777 = vmatpush1.bf16.msra.mxu0 %v3633
    %3778 = vmatprep.subr.bf16.mxu0 %v3642
    %3779 = vmatpush1.bf16.msra.mxu0 %v3641
    %3780 = vmatprep.subr.bf16.mxu0 %v3650
    %3781 = vmatpush1.bf16.msra.mxu0 %v3649
    %3782 = vmatprep.subr.bf16.mxu0 %v3658
    %3783 = vmatpush1.bf16.msra.mxu0 %v3657
    %3784 = vmatprep.subr.bf16.mxu0 %v3666
    %3785 = vmatpush1.bf16.msra.mxu0 %v3665
    %3786 = vmatprep.subr.bf16.mxu0 %v3674
    %3787 = vmatpush1.bf16.msra.mxu0 %v3673
    %3788 = vmatprep.subr.bf16.mxu0 %v3682
    %3789 = vmatpush1.bf16.msra.mxu0 %v3681
    %3790 = vmatprep.subr.bf16.mxu0 %v3690
    %3791 = vmatpush1.bf16.msra.mxu0 %v3689
    %3792 = vmatprep.subr.bf16.mxu0 %v3698
    %3793 = vmatpush1.bf16.msra.mxu0 %v3697
    %3794 = vmatprep.subr.bf16.mxu0 %v3706
    %3795 = vmatpush1.bf16.msra.mxu0 %v3705
    %3796 = vmatprep.subr.bf16.mxu0 %v3714
    %3797 = vmatpush1.bf16.msra.mxu0 %v3713
    %3798 = vmatprep.mubr.bf16.mxu0 %v3724
    %3799 = vmatmul.mubr.bf16.gmra.mrb[0].mxu0 %v3723
    %v3800 = vpop.f32.mrb[0].mxu0
    %v3801 = vadd.f32 %v3760, %v3800
    %v3802 = vpop.f32.mrb[0].mxu0
    %v3803 = vadd.f32 %v3762, %v3802
    %v3804 = vpop.f32.mrb[0].mxu0
    %v3805 = vpop.f32.mrb[0].mxu0
    %3806 = vdwg.mxu0
    %3807 = vmatprep.subr.bf16.mxu0 %v3468
    %3808 = vmatpush1.bf16.msra.mxu0 %v3467
    %3809 = vmatprep.subr.bf16.mxu0 %v3476
    %3810 = vmatpush1.bf16.msra.mxu0 %v3475
    %3811 = vmatprep.subr.bf16.mxu0 %v3484
    %3812 = vmatpush1.bf16.msra.mxu0 %v3483
    %3813 = vmatprep.subr.bf16.mxu0 %v3492
    %3814 = vmatpush1.bf16.msra.mxu0 %v3491
    %3815 = vmatprep.subr.bf16.mxu0 %v3500
    %3816 = vmatpush1.bf16.msra.mxu0 %v3499
    %3817 = vmatprep.subr.bf16.mxu0 %v3508
    %3818 = vmatpush1.bf16.msra.mxu0 %v3507
    %3819 = vmatprep.subr.bf16.mxu0 %v3516
    %3820 = vmatpush1.bf16.msra.mxu0 %v3515
    %3821 = vmatprep.subr.bf16.mxu0 %v3524
    %3822 = vmatpush1.bf16.msra.mxu0 %v3523
    %3823 = vmatprep.subr.bf16.mxu0 %v3532
    %3824 = vmatpush1.bf16.msra.mxu0 %v3531
    %3825 = vmatprep.subr.bf16.mxu0 %v3540
    %3826 = vmatpush1.bf16.msra.mxu0 %v3539
    %3827 = vmatprep.subr.bf16.mxu0 %v3548
    %3828 = vmatpush1.bf16.msra.mxu0 %v3547
    %3829 = vmatprep.subr.bf16.mxu0 %v3556
    %3830 = vmatpush1.bf16.msra.mxu0 %v3555
    %3831 = vmatprep.subr.bf16.mxu0 %v3564
    %3832 = vmatpush1.bf16.msra.mxu0 %v3563
    %3833 = vmatprep.subr.bf16.mxu0 %v3572
    %3834 = vmatpush1.bf16.msra.mxu0 %v3571
    %3835 = vmatprep.subr.bf16.mxu0 %v3580
    %3836 = vmatpush1.bf16.msra.mxu0 %v3579
    %3837 = vmatprep.subr.bf16.mxu0 %v3588
    %3838 = vmatpush1.bf16.msra.mxu0 %v3587
    %3839 = vmatprep.mubr.bf16.mxu0 %v3722
    %3840 = vmatmul.mubr.bf16.gmra.mrb[0].mxu0 %v3721
    %v3841 = vpop.f32.mrb[0].mxu0
    %v3842 = vadd.f32 0.0, %v3841
    %v3843 = vpop.f32.mrb[0].mxu0
    %v3844 = vadd.f32 0.0, %v3843
    %v3845 = vpop.f32.mrb[0].mxu0
    %v3846 = vpop.f32.mrb[0].mxu0
    %3847 = vdwg.mxu0
    %3848 = vmatprep.subr.bf16.mxu0 %v3596
    %3849 = vmatpush1.bf16.msra.mxu0 %v3595
    %3850 = vmatprep.subr.bf16.mxu0 %v3604
    %3851 = vmatpush1.bf16.msra.mxu0 %v3603
    %3852 = vmatprep.subr.bf16.mxu0 %v3612
    %3853 = vmatpush1.bf16.msra.mxu0 %v3611
    %3854 = vmatprep.subr.bf16.mxu0 %v3620
    %3855 = vmatpush1.bf16.msra.mxu0 %v3619
    %3856 = vmatprep.subr.bf16.mxu0 %v3628
    %3857 = vmatpush1.bf16.msra.mxu0 %v3627
    %3858 = vmatprep.subr.bf16.mxu0 %v3636
    %3859 = vmatpush1.bf16.msra.mxu0 %v3635
    %3860 = vmatprep.subr.bf16.mxu0 %v3644
    %3861 = vmatpush1.bf16.msra.mxu0 %v3643
    %3862 = vmatprep.subr.bf16.mxu0 %v3652
    %3863 = vmatpush1.bf16.msra.mxu0 %v3651
    %3864 = vmatprep.subr.bf16.mxu0 %v3660
    %3865 = vmatpush1.bf16.msra.mxu0 %v3659
    %3866 = vmatprep.subr.bf16.mxu0 %v3668
    %3867 = vmatpush1.bf16.msra.mxu0 %v3667
    %3868 = vmatprep.subr.bf16.mxu0 %v3676
    %3869 = vmatpush1.bf16.msra.mxu0 %v3675
    %3870 = vmatprep.subr.bf16.mxu0 %v3684
    %3871 = vmatpush1.bf16.msra.mxu0 %v3683
    %3872 = vmatprep.subr.bf16.mxu0 %v3692
    %3873 = vmatpush1.bf16.msra.mxu0 %v3691
    %3874 = vmatprep.subr.bf16.mxu0 %v3700
    %3875 = vmatpush1.bf16.msra.mxu0 %v3699
    %3876 = vmatprep.subr.bf16.mxu0 %v3708
    %3877 = vmatpush1.bf16.msra.mxu0 %v3707
    %3878 = vmatprep.subr.bf16.mxu0 %v3716
    %3879 = vmatpush1.bf16.msra.mxu0 %v3715
    %3880 = vmatprep.mubr.bf16.mxu0 %v3724
    %3881 = vmatmul.mubr.bf16.gmra.mrb[0].mxu0 %v3723
    %v3882 = vpop.f32.mrb[0].mxu0
    %v3883 = vadd.f32 %v3842, %v3882
    %v3884 = vpop.f32.mrb[0].mxu0
    %v3885 = vadd.f32 %v3844, %v3884
    %v3886 = vpop.f32.mrb[0].mxu0
    %v3887 = vpop.f32.mrb[0].mxu0
    %3888 = vdwg.mxu0
    %3889 = vmatprep.subr.bf16.mxu0 %v3470
    %3890 = vmatpush1.bf16.msra.mxu0 %v3469
    %3891 = vmatprep.subr.bf16.mxu0 %v3478
    %3892 = vmatpush1.bf16.msra.mxu0 %v3477
    %3893 = vmatprep.subr.bf16.mxu0 %v3486
    %3894 = vmatpush1.bf16.msra.mxu0 %v3485
    %3895 = vmatprep.subr.bf16.mxu0 %v3494
    %3896 = vmatpush1.bf16.msra.mxu0 %v3493
    %3897 = vmatprep.subr.bf16.mxu0 %v3502
    %3898 = vmatpush1.bf16.msra.mxu0 %v3501
    %3899 = vmatprep.subr.bf16.mxu0 %v3510
    %3900 = vmatpush1.bf16.msra.mxu0 %v3509
    %3901 = vmatprep.subr.bf16.mxu0 %v3518
    %3902 = vmatpush1.bf16.msra.mxu0 %v3517
    %3903 = vmatprep.subr.bf16.mxu0 %v3526
    %3904 = vmatpush1.bf16.msra.mxu0 %v3525
    %3905 = vmatprep.subr.bf16.mxu0 %v3534
    %3906 = vmatpush1.bf16.msra.mxu0 %v3533
    %3907 = vmatprep.subr.bf16.mxu0 %v3542
    %3908 = vmatpush1.bf16.msra.mxu0 %v3541
    %3909 = vmatprep.subr.bf16.mxu0 %v3550
    %3910 = vmatpush1.bf16.msra.mxu0 %v3549
    %3911 = vmatprep.subr.bf16.mxu0 %v3558
    %3912 = vmatpush1.bf16.msra.mxu0 %v3557
    %3913 = vmatprep.subr.bf16.mxu0 %v3566
    %3914 = vmatpush1.bf16.msra.mxu0 %v3565
    %3915 = vmatprep.subr.bf16.mxu0 %v3574
    %3916 = vmatpush1.bf16.msra.mxu0 %v3573
    %3917 = vmatprep.subr.bf16.mxu0 %v3582
    %3918 = vmatpush1.bf16.msra.mxu0 %v3581
    %3919 = vmatprep.subr.bf16.mxu0 %v3590
    %3920 = vmatpush1.bf16.msra.mxu0 %v3589
    %3921 = vmatprep.mubr.bf16.mxu0 %v3722
    %3922 = vmatmul.mubr.bf16.gmra.mrb[0].mxu0 %v3721
    %v3923 = vpop.f32.mrb[0].mxu0
    %v3924 = vadd.f32 0.0, %v3923
    %v3925 = vpop.f32.mrb[0].mxu0
    %v3926 = vadd.f32 0.0, %v3925
    %v3927 = vpop.f32.mrb[0].mxu0
    %v3928 = vpop.f32.mrb[0].mxu0
    %3929 = vdwg.mxu0
    %3930 = vmatprep.subr.bf16.mxu0 %v3598
    %3931 = vmatpush1.bf16.msra.mxu0 %v3597
    %3932 = vmatprep.subr.bf16.mxu0 %v3606
    %3933 = vmatpush1.bf16.msra.mxu0 %v3605
    %3934 = vmatprep.subr.bf16.mxu0 %v3614
    %3935 = vmatpush1.bf16.msra.mxu0 %v3613
    %3936 = vmatprep.subr.bf16.mxu0 %v3622
    %3937 = vmatpush1.bf16.msra.mxu0 %v3621
    %3938 = vmatprep.subr.bf16.mxu0 %v3630
    %3939 = vmatpush1.bf16.msra.mxu0 %v3629
    %3940 = vmatprep.subr.bf16.mxu0 %v3638
    %3941 = vmatpush1.bf16.msra.mxu0 %v3637
    %3942 = vmatprep.subr.bf16.mxu0 %v3646
    %3943 = vmatpush1.bf16.msra.mxu0 %v3645
    %3944 = vmatprep.subr.bf16.mxu0 %v3654
    %3945 = vmatpush1.bf16.msra.mxu0 %v3653
    %3946 = vmatprep.subr.bf16.mxu0 %v3662
    %3947 = vmatpush1.bf16.msra.mxu0 %v3661
    %3948 = vmatprep.subr.bf16.mxu0 %v3670
    %3949 = vmatpush1.bf16.msra.mxu0 %v3669
    %3950 = vmatprep.subr.bf16.mxu0 %v3678
    %3951 = vmatpush1.bf16.msra.mxu0 %v3677
    %3952 = vmatprep.subr.bf16.mxu0 %v3686
    %3953 = vmatpush1.bf16.msra.mxu0 %v3685
    %3954 = vmatprep.subr.bf16.mxu0 %v3694
    %3955 = vmatpush1.bf16.msra.mxu0 %v3693
    %3956 = vmatprep.subr.bf16.mxu0 %v3702
    %3957 = vmatpush1.bf16.msra.mxu0 %v3701
    %3958 = vmatprep.subr.bf16.mxu0 %v3710
    %3959 = vmatpush1.bf16.msra.mxu0 %v3709
    %3960 = vmatprep.subr.bf16.mxu0 %v3718
    %3961 = vmatpush1.bf16.msra.mxu0 %v3717
    %3962 = vmatprep.mubr.bf16.mxu0 %v3724
    %3963 = vmatmul.mubr.bf16.gmra.mrb[0].mxu0 %v3723
    %v3964 = vpop.f32.mrb[0].mxu0
    %v3965 = vadd.f32 %v3924, %v3964
    %v3966 = vpop.f32.mrb[0].mxu0
    %v3967 = vadd.f32 %v3926, %v3966
    %v3968 = vpop.f32.mrb[0].mxu0
    %v3969 = vpop.f32.mrb[0].mxu0
    %3970 = vdwg.mxu0
    %3971 = vmatprep.subr.bf16.mxu0 %v3472
    %3972 = vmatpush1.bf16.msra.mxu0 %v3471
    %3973 = vmatprep.subr.bf16.mxu0 %v3480
    %3974 = vmatpush1.bf16.msra.mxu0 %v3479
    %3975 = vmatprep.subr.bf16.mxu0 %v3488
    %3976 = vmatpush1.bf16.msra.mxu0 %v3487
    %3977 = vmatprep.subr.bf16.mxu0 %v3496
    %3978 = vmatpush1.bf16.msra.mxu0 %v3495
    %3979 = vmatprep.subr.bf16.mxu0 %v3504
    %3980 = vmatpush1.bf16.msra.mxu0 %v3503
    %3981 = vmatprep.subr.bf16.mxu0 %v3512
    %3982 = vmatpush1.bf16.msra.mxu0 %v3511
    %3983 = vmatprep.subr.bf16.mxu0 %v3520
    %3984 = vmatpush1.bf16.msra.mxu0 %v3519
    %3985 = vmatprep.subr.bf16.mxu0 %v3528
    %3986 = vmatpush1.bf16.msra.mxu0 %v3527
    %3987 = vmatprep.subr.bf16.mxu0 %v3536
    %3988 = vmatpush1.bf16.msra.mxu0 %v3535
    %3989 = vmatprep.subr.bf16.mxu0 %v3544
    %3990 = vmatpush1.bf16.msra.mxu0 %v3543
    %3991 = vmatprep.subr.bf16.mxu0 %v3552
    %3992 = vmatpush1.bf16.msra.mxu0 %v3551
    %3993 = vmatprep.subr.bf16.mxu0 %v3560
    %3994 = vmatpush1.bf16.msra.mxu0 %v3559
    %3995 = vmatprep.subr.bf16.mxu0 %v3568
    %3996 = vmatpush1.bf16.msra.mxu0 %v3567
    %3997 = vmatprep.subr.bf16.mxu0 %v3576
    %3998 = vmatpush1.bf16.msra.mxu0 %v3575
    %3999 = vmatprep.subr.bf16.mxu0 %v3584
    %4000 = vmatpush1.bf16.msra.mxu0 %v3583
    %4001 = vmatprep.subr.bf16.mxu0 %v3592
    %4002 = vmatpush1.bf16.msra.mxu0 %v3591
    %4003 = vmatprep.mubr.bf16.mxu0 %v3722
    %4004 = vmatmul.mubr.bf16.gmra.mrb[0].mxu0 %v3721
    %v4005 = vpop.f32.mrb[0].mxu0
    %v4006 = vadd.f32 0.0, %v4005
    %v4007 = vpop.f32.mrb[0].mxu0
    %v4008 = vadd.f32 0.0, %v4007
    %v4009 = vpop.f32.mrb[0].mxu0
    %v4010 = vpop.f32.mrb[0].mxu0
    %4011 = vdwg.mxu0
    %4012 = vmatprep.subr.bf16.mxu0 %v3600
    %4013 = vmatpush1.bf16.msra.mxu0 %v3599
    %4014 = vmatprep.subr.bf16.mxu0 %v3608
    %4015 = vmatpush1.bf16.msra.mxu0 %v3607
    %4016 = vmatprep.subr.bf16.mxu0 %v3616
    %4017 = vmatpush1.bf16.msra.mxu0 %v3615
    %4018 = vmatprep.subr.bf16.mxu0 %v3624
    %4019 = vmatpush1.bf16.msra.mxu0 %v3623
    %4020 = vmatprep.subr.bf16.mxu0 %v3632
    %4021 = vmatpush1.bf16.msra.mxu0 %v3631
    %4022 = vmatprep.subr.bf16.mxu0 %v3640
    %4023 = vmatpush1.bf16.msra.mxu0 %v3639
    %4024 = vmatprep.subr.bf16.mxu0 %v3648
    %4025 = vmatpush1.bf16.msra.mxu0 %v3647
    %4026 = vmatprep.subr.bf16.mxu0 %v3656
    %4027 = vmatpush1.bf16.msra.mxu0 %v3655
    %4028 = vmatprep.subr.bf16.mxu0 %v3664
    %4029 = vmatpush1.bf16.msra.mxu0 %v3663
    %4030 = vmatprep.subr.bf16.mxu0 %v3672
    %4031 = vmatpush1.bf16.msra.mxu0 %v3671
    %4032 = vmatprep.subr.bf16.mxu0 %v3680
    %4033 = vmatpush1.bf16.msra.mxu0 %v3679
    %4034 = vmatprep.subr.bf16.mxu0 %v3688
    %4035 = vmatpush1.bf16.msra.mxu0 %v3687
    %4036 = vmatprep.subr.bf16.mxu0 %v3696
    %4037 = vmatpush1.bf16.msra.mxu0 %v3695
    %4038 = vmatprep.subr.bf16.mxu0 %v3704
    %4039 = vmatpush1.bf16.msra.mxu0 %v3703
    %4040 = vmatprep.subr.bf16.mxu0 %v3712
    %4041 = vmatpush1.bf16.msra.mxu0 %v3711
    %4042 = vmatprep.subr.bf16.mxu0 %v3720
    %4043 = vmatpush1.bf16.msra.mxu0 %v3719
    %4044 = vmatprep.mubr.bf16.mxu0 %v3724
    %4045 = vmatmul.mubr.bf16.gmra.mrb[0].mxu0 %v3723
    %v4046 = vpop.f32.mrb[0].mxu0
    %v4047 = vadd.f32 %v4006, %v4046
    %v4048 = vpop.f32.mrb[0].mxu0
    %v4049 = vadd.f32 %v4008, %v4048
    %v4050 = vpop.f32.mrb[0].mxu0
    %v4051 = vpop.f32.mrb[0].mxu0
    %4052 = vdwg.mxu0
    %v4054 = vlaneseq
    %v4055 = vshrl.u32 %v4054, 7
    %v4056 = vsub.s32 0, %v4055
    %v4057 = vrot.slane %v3336, %v4056
    %v4058 = vlaneseq
    %v4059 = vshrl.u32 %v4058, 7
    %v4060 = vsub.s32 1, %v4059
    %v4061 = vrot.slane %v3336, %v4060
    %v4062 = vlaneseq
    %v4063 = vshrl.u32 %v4062, 7
    %v4064 = vsub.s32 2, %v4063
    %v4065 = vrot.slane %v3336, %v4064
    %v4066 = vlaneseq
    %v4067 = vshrl.u32 %v4066, 7
    %v4068 = vsub.s32 3, %v4067
    %v4069 = vrot.slane %v3336, %v4068
    %v4070 = vlaneseq
    %v4071 = vshrl.u32 %v4070, 7
    %v4072 = vsub.s32 4, %v4071
    %v4073 = vrot.slane %v3336, %v4072
    %v4074 = vlaneseq
    %v4075 = vshrl.u32 %v4074, 7
    %v4076 = vsub.s32 5, %v4075
    %v4077 = vrot.slane %v3336, %v4076
    %v4078 = vlaneseq
    %v4079 = vshrl.u32 %v4078, 7
    %v4080 = vsub.s32 6, %v4079
    %v4081 = vrot.slane %v3336, %v4080
    %v4082 = vlaneseq
    %v4083 = vshrl.u32 %v4082, 7
    %v4084 = vsub.s32 7, %v4083
    %v4085 = vrot.slane %v3336, %v4084
    %v4094 = vmul.f32 %v3801, %v4057
    %v4095 = vmul.f32 %v3803, %v4061
    %v4096 = vmul.f32 %v3883, %v4065
    %v4097 = vmul.f32 %v3885, %v4069
    %v4098 = vmul.f32 %v3965, %v4073
    %v4099 = vmul.f32 %v3967, %v4077
    %v4100 = vmul.f32 %v4047, %v4081
    %v4101 = vmul.f32 %v4049, %v4085
    %v4102 = vadd.f32 %v3328, %v4094
    %v4103 = vadd.f32 %v3329, %v4095
    %v4104 = vadd.f32 %v3330, %v4096
    %v4105 = vadd.f32 %v3331, %v4097
    %v4106 = vadd.f32 %v3332, %v4098
    %v4107 = vadd.f32 %v3333, %v4099
    %v4108 = vadd.f32 %v3334, %v4100
    %v4109 = vadd.f32 %v3335, %v4101
    %v4110 = vld [vmem:[#allocation2] sm:$0xff]
    %v4112 = vlaneseq
    %v4113 = vshrl.u32 %v4112, 7
    %v4114 = vsub.s32 0, %v4113
    %v4115 = vrot.slane %v4110, %v4114
    %v4116 = vlaneseq
    %v4117 = vshrl.u32 %v4116, 7
    %v4118 = vsub.s32 1, %v4117
    %v4119 = vrot.slane %v4110, %v4118
    %v4120 = vlaneseq
    %v4121 = vshrl.u32 %v4120, 7
    %v4122 = vsub.s32 2, %v4121
    %v4123 = vrot.slane %v4110, %v4122
    %v4124 = vlaneseq
    %v4125 = vshrl.u32 %v4124, 7
    %v4126 = vsub.s32 3, %v4125
    %v4127 = vrot.slane %v4110, %v4126
    %v4128 = vlaneseq
    %v4129 = vshrl.u32 %v4128, 7
    %v4130 = vsub.s32 4, %v4129
    %v4131 = vrot.slane %v4110, %v4130
    %v4132 = vlaneseq
    %v4133 = vshrl.u32 %v4132, 7
    %v4134 = vsub.s32 5, %v4133
    %v4135 = vrot.slane %v4110, %v4134
    %v4136 = vlaneseq
    %v4137 = vshrl.u32 %v4136, 7
    %v4138 = vsub.s32 6, %v4137
    %v4139 = vrot.slane %v4110, %v4138
    %v4140 = vlaneseq
    %v4141 = vshrl.u32 %v4140, 7
    %v4142 = vsub.s32 7, %v4141
    %v4143 = vrot.slane %v4110, %v4142
    %v4152 = vadd.f32 %v4102, %v4115
    %v4153 = vadd.f32 %v4103, %v4119
    %v4154 = vadd.f32 %v4104, %v4123
    %v4155 = vadd.f32 %v4105, %v4127
    %v4156 = vadd.f32 %v4106, %v4131
    %v4157 = vadd.f32 %v4107, %v4135
    %v4158 = vadd.f32 %v4108, %v4139
    %v4159 = vadd.f32 %v4109, %v4143
    %v4160 = vmul.f32 %v4152, 0.5
    %v4161 = vmul.f32 %v4153, 0.5
    %v4162 = vmul.f32 %v4154, 0.5
    %v4163 = vmul.f32 %v4155, 0.5
    %v4164 = vmul.f32 %v4156, 0.5
    %v4165 = vmul.f32 %v4157, 0.5
    %v4166 = vmul.f32 %v4158, 0.5
    %v4167 = vmul.f32 %v4159, 0.5
    %v4168 = vmul.f32 %v4152, 0.70710677
    %v4169 = vmul.f32 %v4153, 0.70710677
    %v4170 = vmul.f32 %v4154, 0.70710677
    %v4171 = vmul.f32 %v4155, 0.70710677
    %v4172 = vmul.f32 %v4156, 0.70710677
    %v4173 = vmul.f32 %v4157, 0.70710677
    %v4174 = vmul.f32 %v4158, 0.70710677
    %v4175 = vmul.f32 %v4159, 0.70710677
    %v4176 = verf.f32.pop %v4168
    %v4177 = verf.f32.pop %v4169
    %v4178 = verf.f32.pop %v4170
    %v4179 = verf.f32.pop %v4171
    %v4180 = verf.f32.pop %v4172
    %v4181 = verf.f32.pop %v4173
    %v4182 = verf.f32.pop %v4174
    %v4183 = verf.f32.pop %v4175
    %v4184 = vadd.f32 %v4176, 1.0
    %v4185 = vadd.f32 %v4177, 1.0
    %v4186 = vadd.f32 %v4178, 1.0
    %v4187 = vadd.f32 %v4179, 1.0
    %v4188 = vadd.f32 %v4180, 1.0
    %v4189 = vadd.f32 %v4181, 1.0
    %v4190 = vadd.f32 %v4182, 1.0
    %v4191 = vadd.f32 %v4183, 1.0
    %v4192 = vmul.f32 %v4160, %v4184
    %v4193 = vmul.f32 %v4161, %v4185
    %v4194 = vmul.f32 %v4162, %v4186
    %v4195 = vmul.f32 %v4163, %v4187
    %v4196 = vmul.f32 %v4164, %v4188
    %v4197 = vmul.f32 %v4165, %v4189
    %v4198 = vmul.f32 %v4166, %v4190
    %v4199 = vmul.f32 %v4167, %v4191
    %v4200 = vld [vmem:[#allocation2 + $0x8] sm:$0xff]
    %v4201 = vld [vmem:[#allocation2 + $0x10] sm:$0xff]
    %v4202 = vadd.f32 %v4192, %v4193
    %v4203 = vadd.f32 %v4202, %v4194
    %v4204 = vadd.f32 %v4203, %v4195
    %v4205 = vadd.f32 %v4204, %v4196
    %v4206 = vadd.f32 %v4205, %v4197
    %v4207 = vadd.f32 %v4206, %v4198
    %v4208 = vadd.f32 %v4207, %v4199
    %4209 = vadd.xlane.f32.xlu0 %v4208
    %v4210 = vpop.xlane.xlu0 %4209
    %v4211 = vrcp.pop 1024.0
    %v4212 = vmul.f32 %v4210, %v4211
    %v4213 = vsub.f32 %v4192, %v4212
    %v4214 = vsub.f32 %v4193, %v4212
    %v4215 = vsub.f32 %v4194, %v4212
    %v4216 = vsub.f32 %v4195, %v4212
    %v4217 = vsub.f32 %v4196, %v4212
    %v4218 = vsub.f32 %v4197, %v4212
    %v4219 = vsub.f32 %v4198, %v4212
    %v4220 = vsub.f32 %v4199, %v4212
    %v4221 = vmul.f32 %v4213, %v4213
    %v4222 = vmul.f32 %v4214, %v4214
    %v4223 = vmul.f32 %v4215, %v4215
    %v4224 = vmul.f32 %v4216, %v4216
    %v4225 = vmul.f32 %v4217, %v4217
    %v4226 = vmul.f32 %v4218, %v4218
    %v4227 = vmul.f32 %v4219, %v4219
    %v4228 = vmul.f32 %v4220, %v4220
    %v4229 = vadd.f32 %v4221, %v4222
    %v4230 = vadd.f32 %v4229, %v4223
    %v4231 = vadd.f32 %v4230, %v4224
    %v4232 = vadd.f32 %v4231, %v4225
    %v4233 = vadd.f32 %v4232, %v4226
    %v4234 = vadd.f32 %v4233, %v4227
    %v4235 = vadd.f32 %v4234, %v4228
    %4236 = vadd.xlane.f32.xlu0 %v4235
    %v4237 = vpop.xlane.xlu0 %4236
    %v4238 = vmul.f32 %v4237, %v4211
    %v4239 = vadd.f32 %v4238, 1e-05
    %v4240 = vrsqrt.pop %v4239
    %v4241 = vmul.f32 %v4213, %v4240
    %v4242 = vmul.f32 %v4214, %v4240
    %v4243 = vmul.f32 %v4215, %v4240
    %v4244 = vmul.f32 %v4216, %v4240
    %v4245 = vmul.f32 %v4217, %v4240
    %v4246 = vmul.f32 %v4218, %v4240
    %v4247 = vmul.f32 %v4219, %v4240
    %v4248 = vmul.f32 %v4220, %v4240
    %v4250 = vlaneseq
    %v4251 = vshrl.u32 %v4250, 7
    %v4252 = vsub.s32 0, %v4251
    %v4253 = vrot.slane %v4200, %v4252
    %v4254 = vlaneseq
    %v4255 = vshrl.u32 %v4254, 7
    %v4256 = vsub.s32 1, %v4255
    %v4257 = vrot.slane %v4200, %v4256
    %v4258 = vlaneseq
    %v4259 = vshrl.u32 %v4258, 7
    %v4260 = vsub.s32 2, %v4259
    %v4261 = vrot.slane %v4200, %v4260
    %v4262 = vlaneseq
    %v4263 = vshrl.u32 %v4262, 7
    %v4264 = vsub.s32 3, %v4263
    %v4265 = vrot.slane %v4200, %v4264
    %v4266 = vlaneseq
    %v4267 = vshrl.u32 %v4266, 7
    %v4268 = vsub.s32 4, %v4267
    %v4269 = vrot.slane %v4200, %v4268
    %v4270 = vlaneseq
    %v4271 = vshrl.u32 %v4270, 7
    %v4272 = vsub.s32 5, %v4271
    %v4273 = vrot.slane %v4200, %v4272
    %v4274 = vlaneseq
    %v4275 = vshrl.u32 %v4274, 7
    %v4276 = vsub.s32 6, %v4275
    %v4277 = vrot.slane %v4200, %v4276
    %v4278 = vlaneseq
    %v4279 = vshrl.u32 %v4278, 7
    %v4280 = vsub.s32 7, %v4279
    %v4281 = vrot.slane %v4200, %v4280
    %v4290 = vmul.f32 %v4241, %v4253
    %v4291 = vmul.f32 %v4242, %v4257
    %v4292 = vmul.f32 %v4243, %v4261
    %v4293 = vmul.f32 %v4244, %v4265
    %v4294 = vmul.f32 %v4245, %v4269
    %v4295 = vmul.f32 %v4246, %v4273
    %v4296 = vmul.f32 %v4247, %v4277
    %v4297 = vmul.f32 %v4248, %v4281
    %v4299 = vlaneseq
    %v4300 = vshrl.u32 %v4299, 7
    %v4301 = vsub.s32 0, %v4300
    %v4302 = vrot.slane %v4201, %v4301
    %v4303 = vlaneseq
    %v4304 = vshrl.u32 %v4303, 7
    %v4305 = vsub.s32 1, %v4304
    %v4306 = vrot.slane %v4201, %v4305
    %v4307 = vlaneseq
    %v4308 = vshrl.u32 %v4307, 7
    %v4309 = vsub.s32 2, %v4308
    %v4310 = vrot.slane %v4201, %v4309
    %v4311 = vlaneseq
    %v4312 = vshrl.u32 %v4311, 7
    %v4313 = vsub.s32 3, %v4312
    %v4314 = vrot.slane %v4201, %v4313
    %v4315 = vlaneseq
    %v4316 = vshrl.u32 %v4315, 7
    %v4317 = vsub.s32 4, %v4316
    %v4318 = vrot.slane %v4201, %v4317
    %v4319 = vlaneseq
    %v4320 = vshrl.u32 %v4319, 7
    %v4321 = vsub.s32 5, %v4320
    %v4322 = vrot.slane %v4201, %v4321
    %v4323 = vlaneseq
    %v4324 = vshrl.u32 %v4323, 7
    %v4325 = vsub.s32 6, %v4324
    %v4326 = vrot.slane %v4201, %v4325
    %v4327 = vlaneseq
    %v4328 = vshrl.u32 %v4327, 7
    %v4329 = vsub.s32 7, %v4328
    %v4330 = vrot.slane %v4201, %v4329
    %v4339 = vadd.f32 %v4290, %v4302
    %v4340 = vadd.f32 %v4291, %v4306
    %v4341 = vadd.f32 %v4292, %v4310
    %v4342 = vadd.f32 %v4293, %v4314
    %v4343 = vadd.f32 %v4294, %v4318
    %v4344 = vadd.f32 %v4295, %v4322
    %v4345 = vadd.f32 %v4296, %v4326
    %v4346 = vadd.f32 %v4297, %v4330
    %v4347 = vld [vmem:[#allocation2 + $0x7a] sm:$0x3f]
    %v4348 = vld [vmem:[#allocation10] sm:$0xff]
    %v4349 = vld [vmem:[#allocation10 + $0x8] sm:$0xff]
    %v4350 = vld [vmem:[#allocation10 + $0x10] sm:$0xff]
    %v4351 = vld [vmem:[#allocation10 + $0x18] sm:$0xff]
    %v4352 = vld [vmem:[#allocation10 + $0x20] sm:$0xff]
    %v4353 = vld [vmem:[#allocation10 + $0x28] sm:$0xff]
    %v4354 = vld [vmem:[#allocation10 + $0x30] sm:$0xff]
    %v4355 = vld [vmem:[#allocation10 + $0x38] sm:$0xff]
    %v4356 = vld [vmem:[#allocation10 + $0x40] sm:$0xff]
    %v4357 = vld [vmem:[#allocation10 + $0x48] sm:$0xff]
    %v4358 = vld [vmem:[#allocation10 + $0x50] sm:$0xff]
    %v4359 = vld [vmem:[#allocation10 + $0x58] sm:$0xff]
    %v4360 = vld [vmem:[#allocation10 + $0x60] sm:$0xff]
    %v4361 = vld [vmem:[#allocation10 + $0x68] sm:$0xff]
    %v4362 = vld [vmem:[#allocation10 + $0x70] sm:$0xff]
    %v4363 = vld [vmem:[#allocation10 + $0x78] sm:$0xff]
    %v4364 = vld [vmem:[#allocation10 + $0x80] sm:$0xff]
    %v4365 = vld [vmem:[#allocation10 + $0x88] sm:$0xff]
    %v4366 = vld [vmem:[#allocation10 + $0x90] sm:$0xff]
    %v4367 = vld [vmem:[#allocation10 + $0x98] sm:$0xff]
    %v4368 = vld [vmem:[#allocation10 + $0xa0] sm:$0xff]
    %v4369 = vld [vmem:[#allocation10 + $0xa8] sm:$0xff]
    %v4370 = vld [vmem:[#allocation10 + $0xb0] sm:$0xff]
    %v4371 = vld [vmem:[#allocation10 + $0xb8] sm:$0xff]
    %v4372 = vld [vmem:[#allocation10 + $0xc0] sm:$0xff]
    %v4373 = vld [vmem:[#allocation10 + $0xc8] sm:$0xff]
    %v4374 = vld [vmem:[#allocation10 + $0xd0] sm:$0xff]
    %v4375 = vld [vmem:[#allocation10 + $0xd8] sm:$0xff]
    %v4376 = vld [vmem:[#allocation10 + $0xe0] sm:$0xff]
    %v4377 = vld [vmem:[#allocation10 + $0xe8] sm:$0xff]
    %v4378 = vld [vmem:[#allocation10 + $0xf0] sm:$0xff]
    %v4379 = vld [vmem:[#allocation10 + $0xf8] sm:$0xff]
    %v4380 = vld [vmem:[#allocation10 + $0x100] sm:$0xff]
    %v4381 = vld [vmem:[#allocation10 + $0x108] sm:$0xff]
    %v4382 = vld [vmem:[#allocation10 + $0x110] sm:$0xff]
    %v4383 = vld [vmem:[#allocation10 + $0x118] sm:$0xff]
    %v4384 = vld [vmem:[#allocation10 + $0x120] sm:$0xff]
    %v4385 = vld [vmem:[#allocation10 + $0x128] sm:$0xff]
    %v4386 = vld [vmem:[#allocation10 + $0x130] sm:$0xff]
    %v4387 = vld [vmem:[#allocation10 + $0x138] sm:$0xff]
    %v4388 = vld [vmem:[#allocation10 + $0x140] sm:$0xff]
    %v4389 = vld [vmem:[#allocation10 + $0x148] sm:$0xff]
    %v4390 = vld [vmem:[#allocation10 + $0x150] sm:$0xff]
    %v4391 = vld [vmem:[#allocation10 + $0x158] sm:$0xff]
    %v4392 = vld [vmem:[#allocation10 + $0x160] sm:$0xff]
    %v4393 = vld [vmem:[#allocation10 + $0x168] sm:$0xff]
    %v4394 = vld [vmem:[#allocation10 + $0x170] sm:$0xff]
    %v4395 = vld [vmem:[#allocation10 + $0x178] sm:$0xff]
    %v4396 = vld [vmem:[#allocation10 + $0x180] sm:$0xff]
    %v4397 = vld [vmem:[#allocation10 + $0x188] sm:$0xff]
    %v4398 = vld [vmem:[#allocation10 + $0x190] sm:$0xff]
    %v4399 = vld [vmem:[#allocation10 + $0x198] sm:$0xff]
    %v4400 = vld [vmem:[#allocation10 + $0x1a0] sm:$0xff]
    %v4401 = vld [vmem:[#allocation10 + $0x1a8] sm:$0xff]
    %v4402 = vld [vmem:[#allocation10 + $0x1b0] sm:$0xff]
    %v4403 = vld [vmem:[#allocation10 + $0x1b8] sm:$0xff]
    %v4404 = vld [vmem:[#allocation10 + $0x1c0] sm:$0xff]
    %v4405 = vld [vmem:[#allocation10 + $0x1c8] sm:$0xff]
    %v4406 = vld [vmem:[#allocation10 + $0x1d0] sm:$0xff]
    %v4407 = vld [vmem:[#allocation10 + $0x1d8] sm:$0xff]
    %v4408 = vld [vmem:[#allocation10 + $0x1e0] sm:$0xff]
    %v4409 = vld [vmem:[#allocation10 + $0x1e8] sm:$0xff]
    %v4410 = vld [vmem:[#allocation10 + $0x1f0] sm:$0xff]
    %v4411 = vld [vmem:[#allocation10 + $0x1f8] sm:$0xff]
    %v4412 = vld [vmem:[#allocation10 + $0x200] sm:$0xff]
    %v4413 = vld [vmem:[#allocation10 + $0x208] sm:$0xff]
    %v4414 = vld [vmem:[#allocation10 + $0x210] sm:$0xff]
    %v4415 = vld [vmem:[#allocation10 + $0x218] sm:$0xff]
    %v4416 = vld [vmem:[#allocation10 + $0x220] sm:$0xff]
    %v4417 = vld [vmem:[#allocation10 + $0x228] sm:$0xff]
    %v4418 = vld [vmem:[#allocation10 + $0x230] sm:$0xff]
    %v4419 = vld [vmem:[#allocation10 + $0x238] sm:$0xff]
    %v4420 = vld [vmem:[#allocation10 + $0x240] sm:$0xff]
    %v4421 = vld [vmem:[#allocation10 + $0x248] sm:$0xff]
    %v4422 = vld [vmem:[#allocation10 + $0x250] sm:$0xff]
    %v4423 = vld [vmem:[#allocation10 + $0x258] sm:$0xff]
    %v4424 = vld [vmem:[#allocation10 + $0x260] sm:$0xff]
    %v4425 = vld [vmem:[#allocation10 + $0x268] sm:$0xff]
    %v4426 = vld [vmem:[#allocation10 + $0x270] sm:$0xff]
    %v4427 = vld [vmem:[#allocation10 + $0x278] sm:$0xff]
    %v4428 = vld [vmem:[#allocation10 + $0x280] sm:$0xff]
    %v4429 = vld [vmem:[#allocation10 + $0x288] sm:$0xff]
    %v4430 = vld [vmem:[#allocation10 + $0x290] sm:$0xff]
    %v4431 = vld [vmem:[#allocation10 + $0x298] sm:$0xff]
    %v4432 = vld [vmem:[#allocation10 + $0x2a0] sm:$0xff]
    %v4433 = vld [vmem:[#allocation10 + $0x2a8] sm:$0xff]
    %v4434 = vld [vmem:[#allocation10 + $0x2b0] sm:$0xff]
    %v4435 = vld [vmem:[#allocation10 + $0x2b8] sm:$0xff]
    %v4436 = vld [vmem:[#allocation10 + $0x2c0] sm:$0xff]
    %v4437 = vld [vmem:[#allocation10 + $0x2c8] sm:$0xff]
    %v4438 = vld [vmem:[#allocation10 + $0x2d0] sm:$0xff]
    %v4439 = vld [vmem:[#allocation10 + $0x2d8] sm:$0xff]
    %v4440 = vld [vmem:[#allocation10 + $0x2e0] sm:$0xff]
    %v4441 = vld [vmem:[#allocation10 + $0x2e8] sm:$0xff]
    %v4442 = vld [vmem:[#allocation10 + $0x2f0] sm:$0xff]
    %v4443 = vld [vmem:[#allocation10 + $0x2f8] sm:$0xff]
    %v4444 = vld [vmem:[#allocation10 + $0x300] sm:$0xff]
    %v4445 = vld [vmem:[#allocation10 + $0x308] sm:$0xff]
    %v4446 = vld [vmem:[#allocation10 + $0x310] sm:$0xff]
    %v4447 = vld [vmem:[#allocation10 + $0x318] sm:$0xff]
    %v4448 = vld [vmem:[#allocation10 + $0x320] sm:$0xff]
    %v4449 = vld [vmem:[#allocation10 + $0x328] sm:$0xff]
    %v4450 = vld [vmem:[#allocation10 + $0x330] sm:$0xff]
    %v4451 = vld [vmem:[#allocation10 + $0x338] sm:$0xff]
    %v4452 = vld [vmem:[#allocation10 + $0x340] sm:$0xff]
    %v4453 = vld [vmem:[#allocation10 + $0x348] sm:$0xff]
    %v4454 = vld [vmem:[#allocation10 + $0x350] sm:$0xff]
    %v4455 = vld [vmem:[#allocation10 + $0x358] sm:$0xff]
    %v4456 = vld [vmem:[#allocation10 + $0x360] sm:$0xff]
    %v4457 = vld [vmem:[#allocation10 + $0x368] sm:$0xff]
    %v4458 = vld [vmem:[#allocation10 + $0x370] sm:$0xff]
    %v4459 = vld [vmem:[#allocation10 + $0x378] sm:$0xff]
    %v4460 = vld [vmem:[#allocation10 + $0x380] sm:$0xff]
    %v4461 = vld [vmem:[#allocation10 + $0x388] sm:$0xff]
    %v4462 = vld [vmem:[#allocation10 + $0x390] sm:$0xff]
    %v4463 = vld [vmem:[#allocation10 + $0x398] sm:$0xff]
    %v4464 = vld [vmem:[#allocation10 + $0x3a0] sm:$0xff]
    %v4465 = vld [vmem:[#allocation10 + $0x3a8] sm:$0xff]
    %v4466 = vld [vmem:[#allocation10 + $0x3b0] sm:$0xff]
    %v4467 = vld [vmem:[#allocation10 + $0x3b8] sm:$0xff]
    %v4468 = vld [vmem:[#allocation10 + $0x3c0] sm:$0xff]
    %v4469 = vld [vmem:[#allocation10 + $0x3c8] sm:$0xff]
    %v4470 = vld [vmem:[#allocation10 + $0x3d0] sm:$0xff]
    %v4471 = vld [vmem:[#allocation10 + $0x3d8] sm:$0xff]
    %v4472 = vld [vmem:[#allocation10 + $0x3e0] sm:$0xff]
    %v4473 = vld [vmem:[#allocation10 + $0x3e8] sm:$0xff]
    %v4474 = vld [vmem:[#allocation10 + $0x3f0] sm:$0xff]
    %v4475 = vld [vmem:[#allocation10 + $0x3f8] sm:$0xff]
    %v4476 = vld [vmem:[#allocation10 + $0x400] sm:$0xff]
    %v4477 = vld [vmem:[#allocation10 + $0x408] sm:$0xff]
    %v4478 = vld [vmem:[#allocation10 + $0x410] sm:$0xff]
    %v4479 = vld [vmem:[#allocation10 + $0x418] sm:$0xff]
    %v4480 = vld [vmem:[#allocation10 + $0x420] sm:$0xff]
    %v4481 = vld [vmem:[#allocation10 + $0x428] sm:$0xff]
    %v4482 = vld [vmem:[#allocation10 + $0x430] sm:$0xff]
    %v4483 = vld [vmem:[#allocation10 + $0x438] sm:$0xff]
    %v4484 = vld [vmem:[#allocation10 + $0x440] sm:$0xff]
    %v4485 = vld [vmem:[#allocation10 + $0x448] sm:$0xff]
    %v4486 = vld [vmem:[#allocation10 + $0x450] sm:$0xff]
    %v4487 = vld [vmem:[#allocation10 + $0x458] sm:$0xff]
    %v4488 = vld [vmem:[#allocation10 + $0x460] sm:$0xff]
    %v4489 = vld [vmem:[#allocation10 + $0x468] sm:$0xff]
    %v4490 = vld [vmem:[#allocation10 + $0x470] sm:$0xff]
    %v4491 = vld [vmem:[#allocation10 + $0x478] sm:$0xff]
    %v4492 = vld [vmem:[#allocation10 + $0x480] sm:$0xff]
    %v4493 = vld [vmem:[#allocation10 + $0x488] sm:$0xff]
    %v4494 = vld [vmem:[#allocation10 + $0x490] sm:$0xff]
    %v4495 = vld [vmem:[#allocation10 + $0x498] sm:$0xff]
    %v4496 = vld [vmem:[#allocation10 + $0x4a0] sm:$0xff]
    %v4497 = vld [vmem:[#allocation10 + $0x4a8] sm:$0xff]
    %v4498 = vld [vmem:[#allocation10 + $0x4b0] sm:$0xff]
    %v4499 = vld [vmem:[#allocation10 + $0x4b8] sm:$0xff]
    %v4500 = vld [vmem:[#allocation10 + $0x4c0] sm:$0xff]
    %v4501 = vld [vmem:[#allocation10 + $0x4c8] sm:$0xff]
    %v4502 = vld [vmem:[#allocation10 + $0x4d0] sm:$0xff]
    %v4503 = vld [vmem:[#allocation10 + $0x4d8] sm:$0xff]
    %v4504 = vld [vmem:[#allocation10 + $0x4e0] sm:$0xff]
    %v4505 = vld [vmem:[#allocation10 + $0x4e8] sm:$0xff]
    %v4506 = vld [vmem:[#allocation10 + $0x4f0] sm:$0xff]
    %v4507 = vld [vmem:[#allocation10 + $0x4f8] sm:$0xff]
    %v4508 = vld [vmem:[#allocation10 + $0x500] sm:$0xff]
    %v4509 = vld [vmem:[#allocation10 + $0x508] sm:$0xff]
    %v4510 = vld [vmem:[#allocation10 + $0x510] sm:$0xff]
    %v4511 = vld [vmem:[#allocation10 + $0x518] sm:$0xff]
    %v4512 = vld [vmem:[#allocation10 + $0x520] sm:$0xff]
    %v4513 = vld [vmem:[#allocation10 + $0x528] sm:$0xff]
    %v4514 = vld [vmem:[#allocation10 + $0x530] sm:$0xff]
    %v4515 = vld [vmem:[#allocation10 + $0x538] sm:$0xff]
    %v4516 = vld [vmem:[#allocation10 + $0x540] sm:$0xff]
    %v4517 = vld [vmem:[#allocation10 + $0x548] sm:$0xff]
    %v4518 = vld [vmem:[#allocation10 + $0x550] sm:$0xff]
    %v4519 = vld [vmem:[#allocation10 + $0x558] sm:$0xff]
    %v4520 = vld [vmem:[#allocation10 + $0x560] sm:$0xff]
    %v4521 = vld [vmem:[#allocation10 + $0x568] sm:$0xff]
    %v4522 = vld [vmem:[#allocation10 + $0x570] sm:$0xff]
    %v4523 = vld [vmem:[#allocation10 + $0x578] sm:$0xff]
    %v4524 = vld [vmem:[#allocation10 + $0x580] sm:$0xff]
    %v4525 = vld [vmem:[#allocation10 + $0x588] sm:$0xff]
    %v4526 = vld [vmem:[#allocation10 + $0x590] sm:$0xff]
    %v4527 = vld [vmem:[#allocation10 + $0x598] sm:$0xff]
    %v4528 = vld [vmem:[#allocation10 + $0x5a0] sm:$0xff]
    %v4529 = vld [vmem:[#allocation10 + $0x5a8] sm:$0xff]
    %v4530 = vld [vmem:[#allocation10 + $0x5b0] sm:$0xff]
    %v4531 = vld [vmem:[#allocation10 + $0x5b8] sm:$0xff]
    %v4532 = vld [vmem:[#allocation10 + $0x5c0] sm:$0xff]
    %v4533 = vld [vmem:[#allocation10 + $0x5c8] sm:$0xff]
    %v4534 = vld [vmem:[#allocation10 + $0x5d0] sm:$0xff]
    %v4535 = vld [vmem:[#allocation10 + $0x5d8] sm:$0xff]
    %v4536 = vld [vmem:[#allocation10 + $0x5e0] sm:$0xff]
    %v4537 = vld [vmem:[#allocation10 + $0x5e8] sm:$0xff]
    %v4538 = vld [vmem:[#allocation10 + $0x5f0] sm:$0xff]
    %v4539 = vld [vmem:[#allocation10 + $0x5f8] sm:$0xff]
    %v4540 = vunpack.c.l.s8.bf16 %v4348
    %v4541 = vunpack.c.l.s8.bf16 %v4349
    %v4542 = vunpack.c.l.s8.bf16 %v4350
    %v4543 = vunpack.c.l.s8.bf16 %v4351
    %v4544 = vunpack.c.l.s8.bf16 %v4352
    %v4545 = vunpack.c.l.s8.bf16 %v4353
    %v4546 = vunpack.c.h.s8.bf16 %v4348
    %v4547 = vunpack.c.h.s8.bf16 %v4349
    %v4548 = vunpack.c.h.s8.bf16 %v4350
    %v4549 = vunpack.c.h.s8.bf16 %v4351
    %v4550 = vunpack.c.h.s8.bf16 %v4352
    %v4551 = vunpack.c.h.s8.bf16 %v4353
    %v4552 = vunpack.c.l.s8.bf16 %v4354
    %v4553 = vunpack.c.l.s8.bf16 %v4355
    %v4554 = vunpack.c.l.s8.bf16 %v4356
    %v4555 = vunpack.c.l.s8.bf16 %v4357
    %v4556 = vunpack.c.l.s8.bf16 %v4358
    %v4557 = vunpack.c.l.s8.bf16 %v4359
    %v4558 = vunpack.c.h.s8.bf16 %v4354
    %v4559 = vunpack.c.h.s8.bf16 %v4355
    %v4560 = vunpack.c.h.s8.bf16 %v4356
    %v4561 = vunpack.c.h.s8.bf16 %v4357
    %v4562 = vunpack.c.h.s8.bf16 %v4358
    %v4563 = vunpack.c.h.s8.bf16 %v4359
    %v4564 = vunpack.c.l.s8.bf16 %v4360
    %v4565 = vunpack.c.l.s8.bf16 %v4361
    %v4566 = vunpack.c.l.s8.bf16 %v4362
    %v4567 = vunpack.c.l.s8.bf16 %v4363
    %v4568 = vunpack.c.l.s8.bf16 %v4364
    %v4569 = vunpack.c.l.s8.bf16 %v4365
    %v4570 = vunpack.c.h.s8.bf16 %v4360
    %v4571 = vunpack.c.h.s8.bf16 %v4361
    %v4572 = vunpack.c.h.s8.bf16 %v4362
    %v4573 = vunpack.c.h.s8.bf16 %v4363
    %v4574 = vunpack.c.h.s8.bf16 %v4364
    %v4575 = vunpack.c.h.s8.bf16 %v4365
    %v4576 = vunpack.c.l.s8.bf16 %v4366
    %v4577 = vunpack.c.l.s8.bf16 %v4367
    %v4578 = vunpack.c.l.s8.bf16 %v4368
    %v4579 = vunpack.c.l.s8.bf16 %v4369
    %v4580 = vunpack.c.l.s8.bf16 %v4370
    %v4581 = vunpack.c.l.s8.bf16 %v4371
    %v4582 = vunpack.c.h.s8.bf16 %v4366
    %v4583 = vunpack.c.h.s8.bf16 %v4367
    %v4584 = vunpack.c.h.s8.bf16 %v4368
    %v4585 = vunpack.c.h.s8.bf16 %v4369
    %v4586 = vunpack.c.h.s8.bf16 %v4370
    %v4587 = vunpack.c.h.s8.bf16 %v4371
    %v4588 = vunpack.c.l.s8.bf16 %v4372
    %v4589 = vunpack.c.l.s8.bf16 %v4373
    %v4590 = vunpack.c.l.s8.bf16 %v4374
    %v4591 = vunpack.c.l.s8.bf16 %v4375
    %v4592 = vunpack.c.l.s8.bf16 %v4376
    %v4593 = vunpack.c.l.s8.bf16 %v4377
    %v4594 = vunpack.c.h.s8.bf16 %v4372
    %v4595 = vunpack.c.h.s8.bf16 %v4373
    %v4596 = vunpack.c.h.s8.bf16 %v4374
    %v4597 = vunpack.c.h.s8.bf16 %v4375
    %v4598 = vunpack.c.h.s8.bf16 %v4376
    %v4599 = vunpack.c.h.s8.bf16 %v4377
    %v4600 = vunpack.c.l.s8.bf16 %v4378
    %v4601 = vunpack.c.l.s8.bf16 %v4379
    %v4602 = vunpack.c.l.s8.bf16 %v4380
    %v4603 = vunpack.c.l.s8.bf16 %v4381
    %v4604 = vunpack.c.l.s8.bf16 %v4382
    %v4605 = vunpack.c.l.s8.bf16 %v4383
    %v4606 = vunpack.c.h.s8.bf16 %v4378
    %v4607 = vunpack.c.h.s8.bf16 %v4379
    %v4608 = vunpack.c.h.s8.bf16 %v4380
    %v4609 = vunpack.c.h.s8.bf16 %v4381
    %v4610 = vunpack.c.h.s8.bf16 %v4382
    %v4611 = vunpack.c.h.s8.bf16 %v4383
    %v4612 = vunpack.c.l.s8.bf16 %v4384
    %v4613 = vunpack.c.l.s8.bf16 %v4385
    %v4614 = vunpack.c.l.s8.bf16 %v4386
    %v4615 = vunpack.c.l.s8.bf16 %v4387
    %v4616 = vunpack.c.l.s8.bf16 %v4388
    %v4617 = vunpack.c.l.s8.bf16 %v4389
    %v4618 = vunpack.c.h.s8.bf16 %v4384
    %v4619 = vunpack.c.h.s8.bf16 %v4385
    %v4620 = vunpack.c.h.s8.bf16 %v4386
    %v4621 = vunpack.c.h.s8.bf16 %v4387
    %v4622 = vunpack.c.h.s8.bf16 %v4388
    %v4623 = vunpack.c.h.s8.bf16 %v4389
    %v4624 = vunpack.c.l.s8.bf16 %v4390
    %v4625 = vunpack.c.l.s8.bf16 %v4391
    %v4626 = vunpack.c.l.s8.bf16 %v4392
    %v4627 = vunpack.c.l.s8.bf16 %v4393
    %v4628 = vunpack.c.l.s8.bf16 %v4394
    %v4629 = vunpack.c.l.s8.bf16 %v4395
    %v4630 = vunpack.c.h.s8.bf16 %v4390
    %v4631 = vunpack.c.h.s8.bf16 %v4391
    %v4632 = vunpack.c.h.s8.bf16 %v4392
    %v4633 = vunpack.c.h.s8.bf16 %v4393
    %v4634 = vunpack.c.h.s8.bf16 %v4394
    %v4635 = vunpack.c.h.s8.bf16 %v4395
    %v4636 = vunpack.c.l.s8.bf16 %v4396
    %v4637 = vunpack.c.l.s8.bf16 %v4397
    %v4638 = vunpack.c.l.s8.bf16 %v4398
    %v4639 = vunpack.c.l.s8.bf16 %v4399
    %v4640 = vunpack.c.l.s8.bf16 %v4400
    %v4641 = vunpack.c.l.s8.bf16 %v4401
    %v4642 = vunpack.c.h.s8.bf16 %v4396
    %v4643 = vunpack.c.h.s8.bf16 %v4397
    %v4644 = vunpack.c.h.s8.bf16 %v4398
    %v4645 = vunpack.c.h.s8.bf16 %v4399
    %v4646 = vunpack.c.h.s8.bf16 %v4400
    %v4647 = vunpack.c.h.s8.bf16 %v4401
    %v4648 = vunpack.c.l.s8.bf16 %v4402
    %v4649 = vunpack.c.l.s8.bf16 %v4403
    %v4650 = vunpack.c.l.s8.bf16 %v4404
    %v4651 = vunpack.c.l.s8.bf16 %v4405
    %v4652 = vunpack.c.l.s8.bf16 %v4406
    %v4653 = vunpack.c.l.s8.bf16 %v4407
    %v4654 = vunpack.c.h.s8.bf16 %v4402
    %v4655 = vunpack.c.h.s8.bf16 %v4403
    %v4656 = vunpack.c.h.s8.bf16 %v4404
    %v4657 = vunpack.c.h.s8.bf16 %v4405
    %v4658 = vunpack.c.h.s8.bf16 %v4406
    %v4659 = vunpack.c.h.s8.bf16 %v4407
    %v4660 = vunpack.c.l.s8.bf16 %v4408
    %v4661 = vunpack.c.l.s8.bf16 %v4409
    %v4662 = vunpack.c.l.s8.bf16 %v4410
    %v4663 = vunpack.c.l.s8.bf16 %v4411
    %v4664 = vunpack.c.l.s8.bf16 %v4412
    %v4665 = vunpack.c.l.s8.bf16 %v4413
    %v4666 = vunpack.c.h.s8.bf16 %v4408
    %v4667 = vunpack.c.h.s8.bf16 %v4409
    %v4668 = vunpack.c.h.s8.bf16 %v4410
    %v4669 = vunpack.c.h.s8.bf16 %v4411
    %v4670 = vunpack.c.h.s8.bf16 %v4412
    %v4671 = vunpack.c.h.s8.bf16 %v4413
    %v4672 = vunpack.c.l.s8.bf16 %v4414
    %v4673 = vunpack.c.l.s8.bf16 %v4415
    %v4674 = vunpack.c.l.s8.bf16 %v4416
    %v4675 = vunpack.c.l.s8.bf16 %v4417
    %v4676 = vunpack.c.l.s8.bf16 %v4418
    %v4677 = vunpack.c.l.s8.bf16 %v4419
    %v4678 = vunpack.c.h.s8.bf16 %v4414
    %v4679 = vunpack.c.h.s8.bf16 %v4415
    %v4680 = vunpack.c.h.s8.bf16 %v4416
    %v4681 = vunpack.c.h.s8.bf16 %v4417
    %v4682 = vunpack.c.h.s8.bf16 %v4418
    %v4683 = vunpack.c.h.s8.bf16 %v4419
    %v4684 = vunpack.c.l.s8.bf16 %v4420
    %v4685 = vunpack.c.l.s8.bf16 %v4421
    %v4686 = vunpack.c.l.s8.bf16 %v4422
    %v4687 = vunpack.c.l.s8.bf16 %v4423
    %v4688 = vunpack.c.l.s8.bf16 %v4424
    %v4689 = vunpack.c.l.s8.bf16 %v4425
    %v4690 = vunpack.c.h.s8.bf16 %v4420
    %v4691 = vunpack.c.h.s8.bf16 %v4421
    %v4692 = vunpack.c.h.s8.bf16 %v4422
    %v4693 = vunpack.c.h.s8.bf16 %v4423
    %v4694 = vunpack.c.h.s8.bf16 %v4424
    %v4695 = vunpack.c.h.s8.bf16 %v4425
    %v4696 = vunpack.c.l.s8.bf16 %v4426
    %v4697 = vunpack.c.l.s8.bf16 %v4427
    %v4698 = vunpack.c.l.s8.bf16 %v4428
    %v4699 = vunpack.c.l.s8.bf16 %v4429
    %v4700 = vunpack.c.l.s8.bf16 %v4430
    %v4701 = vunpack.c.l.s8.bf16 %v4431
    %v4702 = vunpack.c.h.s8.bf16 %v4426
    %v4703 = vunpack.c.h.s8.bf16 %v4427
    %v4704 = vunpack.c.h.s8.bf16 %v4428
    %v4705 = vunpack.c.h.s8.bf16 %v4429
    %v4706 = vunpack.c.h.s8.bf16 %v4430
    %v4707 = vunpack.c.h.s8.bf16 %v4431
    %v4708 = vunpack.c.l.s8.bf16 %v4432
    %v4709 = vunpack.c.l.s8.bf16 %v4433
    %v4710 = vunpack.c.l.s8.bf16 %v4434
    %v4711 = vunpack.c.l.s8.bf16 %v4435
    %v4712 = vunpack.c.l.s8.bf16 %v4436
    %v4713 = vunpack.c.l.s8.bf16 %v4437
    %v4714 = vunpack.c.h.s8.bf16 %v4432
    %v4715 = vunpack.c.h.s8.bf16 %v4433
    %v4716 = vunpack.c.h.s8.bf16 %v4434
    %v4717 = vunpack.c.h.s8.bf16 %v4435
    %v4718 = vunpack.c.h.s8.bf16 %v4436
    %v4719 = vunpack.c.h.s8.bf16 %v4437
    %v4720 = vunpack.c.l.s8.bf16 %v4438
    %v4721 = vunpack.c.l.s8.bf16 %v4439
    %v4722 = vunpack.c.l.s8.bf16 %v4440
    %v4723 = vunpack.c.l.s8.bf16 %v4441
    %v4724 = vunpack.c.l.s8.bf16 %v4442
    %v4725 = vunpack.c.l.s8.bf16 %v4443
    %v4726 = vunpack.c.h.s8.bf16 %v4438
    %v4727 = vunpack.c.h.s8.bf16 %v4439
    %v4728 = vunpack.c.h.s8.bf16 %v4440
    %v4729 = vunpack.c.h.s8.bf16 %v4441
    %v4730 = vunpack.c.h.s8.bf16 %v4442
    %v4731 = vunpack.c.h.s8.bf16 %v4443
    %v4732 = vunpack.c.l.s8.bf16 %v4444
    %v4733 = vunpack.c.l.s8.bf16 %v4445
    %v4734 = vunpack.c.l.s8.bf16 %v4446
    %v4735 = vunpack.c.l.s8.bf16 %v4447
    %v4736 = vunpack.c.l.s8.bf16 %v4448
    %v4737 = vunpack.c.l.s8.bf16 %v4449
    %v4738 = vunpack.c.h.s8.bf16 %v4444
    %v4739 = vunpack.c.h.s8.bf16 %v4445
    %v4740 = vunpack.c.h.s8.bf16 %v4446
    %v4741 = vunpack.c.h.s8.bf16 %v4447
    %v4742 = vunpack.c.h.s8.bf16 %v4448
    %v4743 = vunpack.c.h.s8.bf16 %v4449
    %v4744 = vunpack.c.l.s8.bf16 %v4450
    %v4745 = vunpack.c.l.s8.bf16 %v4451
    %v4746 = vunpack.c.l.s8.bf16 %v4452
    %v4747 = vunpack.c.l.s8.bf16 %v4453
    %v4748 = vunpack.c.l.s8.bf16 %v4454
    %v4749 = vunpack.c.l.s8.bf16 %v4455
    %v4750 = vunpack.c.h.s8.bf16 %v4450
    %v4751 = vunpack.c.h.s8.bf16 %v4451
    %v4752 = vunpack.c.h.s8.bf16 %v4452
    %v4753 = vunpack.c.h.s8.bf16 %v4453
    %v4754 = vunpack.c.h.s8.bf16 %v4454
    %v4755 = vunpack.c.h.s8.bf16 %v4455
    %v4756 = vunpack.c.l.s8.bf16 %v4456
    %v4757 = vunpack.c.l.s8.bf16 %v4457
    %v4758 = vunpack.c.l.s8.bf16 %v4458
    %v4759 = vunpack.c.l.s8.bf16 %v4459
    %v4760 = vunpack.c.l.s8.bf16 %v4460
    %v4761 = vunpack.c.l.s8.bf16 %v4461
    %v4762 = vunpack.c.h.s8.bf16 %v4456
    %v4763 = vunpack.c.h.s8.bf16 %v4457
    %v4764 = vunpack.c.h.s8.bf16 %v4458
    %v4765 = vunpack.c.h.s8.bf16 %v4459
    %v4766 = vunpack.c.h.s8.bf16 %v4460
    %v4767 = vunpack.c.h.s8.bf16 %v4461
    %v4768 = vunpack.c.l.s8.bf16 %v4462
    %v4769 = vunpack.c.l.s8.bf16 %v4463
    %v4770 = vunpack.c.l.s8.bf16 %v4464
    %v4771 = vunpack.c.l.s8.bf16 %v4465
    %v4772 = vunpack.c.l.s8.bf16 %v4466
    %v4773 = vunpack.c.l.s8.bf16 %v4467
    %v4774 = vunpack.c.h.s8.bf16 %v4462
    %v4775 = vunpack.c.h.s8.bf16 %v4463
    %v4776 = vunpack.c.h.s8.bf16 %v4464
    %v4777 = vunpack.c.h.s8.bf16 %v4465
    %v4778 = vunpack.c.h.s8.bf16 %v4466
    %v4779 = vunpack.c.h.s8.bf16 %v4467
    %v4780 = vunpack.c.l.s8.bf16 %v4468
    %v4781 = vunpack.c.l.s8.bf16 %v4469
    %v4782 = vunpack.c.l.s8.bf16 %v4470
    %v4783 = vunpack.c.l.s8.bf16 %v4471
    %v4784 = vunpack.c.l.s8.bf16 %v4472
    %v4785 = vunpack.c.l.s8.bf16 %v4473
    %v4786 = vunpack.c.h.s8.bf16 %v4468
    %v4787 = vunpack.c.h.s8.bf16 %v4469
    %v4788 = vunpack.c.h.s8.bf16 %v4470
    %v4789 = vunpack.c.h.s8.bf16 %v4471
    %v4790 = vunpack.c.h.s8.bf16 %v4472
    %v4791 = vunpack.c.h.s8.bf16 %v4473
    %v4792 = vunpack.c.l.s8.bf16 %v4474
    %v4793 = vunpack.c.l.s8.bf16 %v4475
    %v4794 = vunpack.c.l.s8.bf16 %v4476
    %v4795 = vunpack.c.l.s8.bf16 %v4477
    %v4796 = vunpack.c.l.s8.bf16 %v4478
    %v4797 = vunpack.c.l.s8.bf16 %v4479
    %v4798 = vunpack.c.h.s8.bf16 %v4474
    %v4799 = vunpack.c.h.s8.bf16 %v4475
    %v4800 = vunpack.c.h.s8.bf16 %v4476
    %v4801 = vunpack.c.h.s8.bf16 %v4477
    %v4802 = vunpack.c.h.s8.bf16 %v4478
    %v4803 = vunpack.c.h.s8.bf16 %v4479
    %v4804 = vunpack.c.l.s8.bf16 %v4480
    %v4805 = vunpack.c.l.s8.bf16 %v4481
    %v4806 = vunpack.c.l.s8.bf16 %v4482
    %v4807 = vunpack.c.l.s8.bf16 %v4483
    %v4808 = vunpack.c.l.s8.bf16 %v4484
    %v4809 = vunpack.c.l.s8.bf16 %v4485
    %v4810 = vunpack.c.h.s8.bf16 %v4480
    %v4811 = vunpack.c.h.s8.bf16 %v4481
    %v4812 = vunpack.c.h.s8.bf16 %v4482
    %v4813 = vunpack.c.h.s8.bf16 %v4483
    %v4814 = vunpack.c.h.s8.bf16 %v4484
    %v4815 = vunpack.c.h.s8.bf16 %v4485
    %v4816 = vunpack.c.l.s8.bf16 %v4486
    %v4817 = vunpack.c.l.s8.bf16 %v4487
    %v4818 = vunpack.c.l.s8.bf16 %v4488
    %v4819 = vunpack.c.l.s8.bf16 %v4489
    %v4820 = vunpack.c.l.s8.bf16 %v4490
    %v4821 = vunpack.c.l.s8.bf16 %v4491
    %v4822 = vunpack.c.h.s8.bf16 %v4486
    %v4823 = vunpack.c.h.s8.bf16 %v4487
    %v4824 = vunpack.c.h.s8.bf16 %v4488
    %v4825 = vunpack.c.h.s8.bf16 %v4489
    %v4826 = vunpack.c.h.s8.bf16 %v4490
    %v4827 = vunpack.c.h.s8.bf16 %v4491
    %v4828 = vunpack.c.l.s8.bf16 %v4492
    %v4829 = vunpack.c.l.s8.bf16 %v4493
    %v4830 = vunpack.c.l.s8.bf16 %v4494
    %v4831 = vunpack.c.l.s8.bf16 %v4495
    %v4832 = vunpack.c.l.s8.bf16 %v4496
    %v4833 = vunpack.c.l.s8.bf16 %v4497
    %v4834 = vunpack.c.h.s8.bf16 %v4492
    %v4835 = vunpack.c.h.s8.bf16 %v4493
    %v4836 = vunpack.c.h.s8.bf16 %v4494
    %v4837 = vunpack.c.h.s8.bf16 %v4495
    %v4838 = vunpack.c.h.s8.bf16 %v4496
    %v4839 = vunpack.c.h.s8.bf16 %v4497
    %v4840 = vunpack.c.l.s8.bf16 %v4498
    %v4841 = vunpack.c.l.s8.bf16 %v4499
    %v4842 = vunpack.c.l.s8.bf16 %v4500
    %v4843 = vunpack.c.l.s8.bf16 %v4501
    %v4844 = vunpack.c.l.s8.bf16 %v4502
    %v4845 = vunpack.c.l.s8.bf16 %v4503
    %v4846 = vunpack.c.h.s8.bf16 %v4498
    %v4847 = vunpack.c.h.s8.bf16 %v4499
    %v4848 = vunpack.c.h.s8.bf16 %v4500
    %v4849 = vunpack.c.h.s8.bf16 %v4501
    %v4850 = vunpack.c.h.s8.bf16 %v4502
    %v4851 = vunpack.c.h.s8.bf16 %v4503
    %v4852 = vunpack.c.l.s8.bf16 %v4504
    %v4853 = vunpack.c.l.s8.bf16 %v4505
    %v4854 = vunpack.c.l.s8.bf16 %v4506
    %v4855 = vunpack.c.l.s8.bf16 %v4507
    %v4856 = vunpack.c.l.s8.bf16 %v4508
    %v4857 = vunpack.c.l.s8.bf16 %v4509
    %v4858 = vunpack.c.h.s8.bf16 %v4504
    %v4859 = vunpack.c.h.s8.bf16 %v4505
    %v4860 = vunpack.c.h.s8.bf16 %v4506
    %v4861 = vunpack.c.h.s8.bf16 %v4507
    %v4862 = vunpack.c.h.s8.bf16 %v4508
    %v4863 = vunpack.c.h.s8.bf16 %v4509
    %v4864 = vunpack.c.l.s8.bf16 %v4510
    %v4865 = vunpack.c.l.s8.bf16 %v4511
    %v4866 = vunpack.c.l.s8.bf16 %v4512
    %v4867 = vunpack.c.l.s8.bf16 %v4513
    %v4868 = vunpack.c.l.s8.bf16 %v4514
    %v4869 = vunpack.c.l.s8.bf16 %v4515
    %v4870 = vunpack.c.h.s8.bf16 %v4510
    %v4871 = vunpack.c.h.s8.bf16 %v4511
    %v4872 = vunpack.c.h.s8.bf16 %v4512
    %v4873 = vunpack.c.h.s8.bf16 %v4513
    %v4874 = vunpack.c.h.s8.bf16 %v4514
    %v4875 = vunpack.c.h.s8.bf16 %v4515
    %v4876 = vunpack.c.l.s8.bf16 %v4516
    %v4877 = vunpack.c.l.s8.bf16 %v4517
    %v4878 = vunpack.c.l.s8.bf16 %v4518
    %v4879 = vunpack.c.l.s8.bf16 %v4519
    %v4880 = vunpack.c.l.s8.bf16 %v4520
    %v4881 = vunpack.c.l.s8.bf16 %v4521
    %v4882 = vunpack.c.h.s8.bf16 %v4516
    %v4883 = vunpack.c.h.s8.bf16 %v4517
    %v4884 = vunpack.c.h.s8.bf16 %v4518
    %v4885 = vunpack.c.h.s8.bf16 %v4519
    %v4886 = vunpack.c.h.s8.bf16 %v4520
    %v4887 = vunpack.c.h.s8.bf16 %v4521
    %v4888 = vunpack.c.l.s8.bf16 %v4522
    %v4889 = vunpack.c.l.s8.bf16 %v4523
    %v4890 = vunpack.c.l.s8.bf16 %v4524
    %v4891 = vunpack.c.l.s8.bf16 %v4525
    %v4892 = vunpack.c.l.s8.bf16 %v4526
    %v4893 = vunpack.c.l.s8.bf16 %v4527
    %v4894 = vunpack.c.h.s8.bf16 %v4522
    %v4895 = vunpack.c.h.s8.bf16 %v4523
    %v4896 = vunpack.c.h.s8.bf16 %v4524
    %v4897 = vunpack.c.h.s8.bf16 %v4525
    %v4898 = vunpack.c.h.s8.bf16 %v4526
    %v4899 = vunpack.c.h.s8.bf16 %v4527
    %v4900 = vunpack.c.l.s8.bf16 %v4528
    %v4901 = vunpack.c.l.s8.bf16 %v4529
    %v4902 = vunpack.c.l.s8.bf16 %v4530
    %v4903 = vunpack.c.l.s8.bf16 %v4531
    %v4904 = vunpack.c.l.s8.bf16 %v4532
    %v4905 = vunpack.c.l.s8.bf16 %v4533
    %v4906 = vunpack.c.h.s8.bf16 %v4528
    %v4907 = vunpack.c.h.s8.bf16 %v4529
    %v4908 = vunpack.c.h.s8.bf16 %v4530
    %v4909 = vunpack.c.h.s8.bf16 %v4531
    %v4910 = vunpack.c.h.s8.bf16 %v4532
    %v4911 = vunpack.c.h.s8.bf16 %v4533
    %v4912 = vunpack.c.l.s8.bf16 %v4534
    %v4913 = vunpack.c.l.s8.bf16 %v4535
    %v4914 = vunpack.c.l.s8.bf16 %v4536
    %v4915 = vunpack.c.l.s8.bf16 %v4537
    %v4916 = vunpack.c.l.s8.bf16 %v4538
    %v4917 = vunpack.c.l.s8.bf16 %v4539
    %v4918 = vunpack.c.h.s8.bf16 %v4534
    %v4919 = vunpack.c.h.s8.bf16 %v4535
    %v4920 = vunpack.c.h.s8.bf16 %v4536
    %v4921 = vunpack.c.h.s8.bf16 %v4537
    %v4922 = vunpack.c.h.s8.bf16 %v4538
    %v4923 = vunpack.c.h.s8.bf16 %v4539
    %v4924 = vpack.c.bf16 %v4339, %v4339
    %v4925 = vpack.c.bf16 %v4340, %v4340
    %v4926 = vpack.c.bf16 %v4341, %v4341
    %v4927 = vpack.c.bf16 %v4342, %v4342
    %v4928 = vpack.c.bf16 %v4343, %v4343
    %v4929 = vpack.c.bf16 %v4344, %v4344
    %v4930 = vpack.c.bf16 %v4345, %v4345
    %v4931 = vpack.c.bf16 %v4346, %v4346
    %4932 = vmatprep.subr.bf16.mxu0 %v4541
    %4933 = vmatpush1.bf16.msra.mxu0 %v4540
    %4934 = vmatprep.subr.bf16.mxu0 %v4547
    %4935 = vmatpush1.bf16.msra.mxu0 %v4546
    %4936 = vmatprep.subr.bf16.mxu0 %v4553
    %4937 = vmatpush1.bf16.msra.mxu0 %v4552
    %4938 = vmatprep.subr.bf16.mxu0 %v4559
    %4939 = vmatpush1.bf16.msra.mxu0 %v4558
    %4940 = vmatprep.subr.bf16.mxu0 %v4565
    %4941 = vmatpush1.bf16.msra.mxu0 %v4564
    %4942 = vmatprep.subr.bf16.mxu0 %v4571
    %4943 = vmatpush1.bf16.msra.mxu0 %v4570
    %4944 = vmatprep.subr.bf16.mxu0 %v4577
    %4945 = vmatpush1.bf16.msra.mxu0 %v4576
    %4946 = vmatprep.subr.bf16.mxu0 %v4583
    %4947 = vmatpush1.bf16.msra.mxu0 %v4582
    %4948 = vmatprep.subr.bf16.mxu0 %v4589
    %4949 = vmatpush1.bf16.msra.mxu0 %v4588
    %4950 = vmatprep.subr.bf16.mxu0 %v4595
    %4951 = vmatpush1.bf16.msra.mxu0 %v4594
    %4952 = vmatprep.subr.bf16.mxu0 %v4601
    %4953 = vmatpush1.bf16.msra.mxu0 %v4600
    %4954 = vmatprep.subr.bf16.mxu0 %v4607
    %4955 = vmatpush1.bf16.msra.mxu0 %v4606
    %4956 = vmatprep.subr.bf16.mxu0 %v4613
    %4957 = vmatpush1.bf16.msra.mxu0 %v4612
    %4958 = vmatprep.subr.bf16.mxu0 %v4619
    %4959 = vmatpush1.bf16.msra.mxu0 %v4618
    %4960 = vmatprep.subr.bf16.mxu0 %v4625
    %4961 = vmatpush1.bf16.msra.mxu0 %v4624
    %4962 = vmatprep.subr.bf16.mxu0 %v4631
    %4963 = vmatpush1.bf16.msra.mxu0 %v4630
    %4964 = vmatprep.mubr.bf16.mxu0 %v4925
    %4965 = vmatmul.mubr.bf16.gmra.mrb[0].mxu0 %v4924
    %v4966 = vpop.f32.mrb[0].mxu0
    %v4967 = vadd.f32 0.0, %v4966
    %v4968 = vpop.f32.mrb[0].mxu0
    %v4969 = vadd.f32 0.0, %v4968
    %v4970 = vpop.f32.mrb[0].mxu0
    %v4971 = vpop.f32.mrb[0].mxu0
    %4972 = vdwg.mxu0
    %4973 = vmatprep.subr.bf16.mxu0 %v4637
    %4974 = vmatpush1.bf16.msra.mxu0 %v4636
    %4975 = vmatprep.subr.bf16.mxu0 %v4643
    %4976 = vmatpush1.bf16.msra.mxu0 %v4642
    %4977 = vmatprep.subr.bf16.mxu0 %v4649
    %4978 = vmatpush1.bf16.msra.mxu0 %v4648
    %4979 = vmatprep.subr.bf16.mxu0 %v4655
    %4980 = vmatpush1.bf16.msra.mxu0 %v4654
    %4981 = vmatprep.subr.bf16.mxu0 %v4661
    %4982 = vmatpush1.bf16.msra.mxu0 %v4660
    %4983 = vmatprep.subr.bf16.mxu0 %v4667
    %4984 = vmatpush1.bf16.msra.mxu0 %v4666
    %4985 = vmatprep.subr.bf16.mxu0 %v4673
    %4986 = vmatpush1.bf16.msra.mxu0 %v4672
    %4987 = vmatprep.subr.bf16.mxu0 %v4679
    %4988 = vmatpush1.bf16.msra.mxu0 %v4678
    %4989 = vmatprep.subr.bf16.mxu0 %v4685
    %4990 = vmatpush1.bf16.msra.mxu0 %v4684
    %4991 = vmatprep.subr.bf16.mxu0 %v4691
    %4992 = vmatpush1.bf16.msra.mxu0 %v4690
    %4993 = vmatprep.subr.bf16.mxu0 %v4697
    %4994 = vmatpush1.bf16.msra.mxu0 %v4696
    %4995 = vmatprep.subr.bf16.mxu0 %v4703
    %4996 = vmatpush1.bf16.msra.mxu0 %v4702
    %4997 = vmatprep.subr.bf16.mxu0 %v4709
    %4998 = vmatpush1.bf16.msra.mxu0 %v4708
    %4999 = vmatprep.subr.bf16.mxu0 %v4715
    %5000 = vmatpush1.bf16.msra.mxu0 %v4714
    %5001 = vmatprep.subr.bf16.mxu0 %v4721
    %5002 = vmatpush1.bf16.msra.mxu0 %v4720
    %5003 = vmatprep.subr.bf16.mxu0 %v4727
    %5004 = vmatpush1.bf16.msra.mxu0 %v4726
    %5005 = vmatprep.mubr.bf16.mxu0 %v4927
    %5006 = vmatmul.mubr.bf16.gmra.mrb[0].mxu0 %v4926
    %v5007 = vpop.f32.mrb[0].mxu0
    %v5008 = vadd.f32 %v4967, %v5007
    %v5009 = vpop.f32.mrb[0].mxu0
    %v5010 = vadd.f32 %v4969, %v5009
    %v5011 = vpop.f32.mrb[0].mxu0
    %v5012 = vpop.f32.mrb[0].mxu0
    %5013 = vdwg.mxu0
    %5014 = vmatprep.subr.bf16.mxu0 %v4733
    %5015 = vmatpush1.bf16.msra.mxu0 %v4732
    %5016 = vmatprep.subr.bf16.mxu0 %v4739
    %5017 = vmatpush1.bf16.msra.mxu0 %v4738
    %5018 = vmatprep.subr.bf16.mxu0 %v4745
    %5019 = vmatpush1.bf16.msra.mxu0 %v4744
    %5020 = vmatprep.subr.bf16.mxu0 %v4751
    %5021 = vmatpush1.bf16.msra.mxu0 %v4750
    %5022 = vmatprep.subr.bf16.mxu0 %v4757
    %5023 = vmatpush1.bf16.msra.mxu0 %v4756
    %5024 = vmatprep.subr.bf16.mxu0 %v4763
    %5025 = vmatpush1.bf16.msra.mxu0 %v4762
    %5026 = vmatprep.subr.bf16.mxu0 %v4769
    %5027 = vmatpush1.bf16.msra.mxu0 %v4768
    %5028 = vmatprep.subr.bf16.mxu0 %v4775
    %5029 = vmatpush1.bf16.msra.mxu0 %v4774
    %5030 = vmatprep.subr.bf16.mxu0 %v4781
    %5031 = vmatpush1.bf16.msra.mxu0 %v4780
    %5032 = vmatprep.subr.bf16.mxu0 %v4787
    %5033 = vmatpush1.bf16.msra.mxu0 %v4786
    %5034 = vmatprep.subr.bf16.mxu0 %v4793
    %5035 = vmatpush1.bf16.msra.mxu0 %v4792
    %5036 = vmatprep.subr.bf16.mxu0 %v4799
    %5037 = vmatpush1.bf16.msra.mxu0 %v4798
    %5038 = vmatprep.subr.bf16.mxu0 %v4805
    %5039 = vmatpush1.bf16.msra.mxu0 %v4804
    %5040 = vmatprep.subr.bf16.mxu0 %v4811
    %5041 = vmatpush1.bf16.msra.mxu0 %v4810
    %5042 = vmatprep.subr.bf16.mxu0 %v4817
    %5043 = vmatpush1.bf16.msra.mxu0 %v4816
    %5044 = vmatprep.subr.bf16.mxu0 %v4823
    %5045 = vmatpush1.bf16.msra.mxu0 %v4822
    %5046 = vmatprep.mubr.bf16.mxu0 %v4929
    %5047 = vmatmul.mubr.bf16.gmra.mrb[0].mxu0 %v4928
    %v5048 = vpop.f32.mrb[0].mxu0
    %v5049 = vadd.f32 %v5008, %v5048
    %v5050 = vpop.f32.mrb[0].mxu0
    %v5051 = vadd.f32 %v5010, %v5050
    %v5052 = vpop.f32.mrb[0].mxu0
    %v5053 = vpop.f32.mrb[0].mxu0
    %5054 = vdwg.mxu0
    %5055 = vmatprep.subr.bf16.mxu0 %v4829
    %5056 = vmatpush1.bf16.msra.mxu0 %v4828
    %5057 = vmatprep.subr.bf16.mxu0 %v4835
    %5058 = vmatpush1.bf16.msra.mxu0 %v4834
    %5059 = vmatprep.subr.bf16.mxu0 %v4841
    %5060 = vmatpush1.bf16.msra.mxu0 %v4840
    %5061 = vmatprep.subr.bf16.mxu0 %v4847
    %5062 = vmatpush1.bf16.msra.mxu0 %v4846
    %5063 = vmatprep.subr.bf16.mxu0 %v4853
    %5064 = vmatpush1.bf16.msra.mxu0 %v4852
    %5065 = vmatprep.subr.bf16.mxu0 %v4859
    %5066 = vmatpush1.bf16.msra.mxu0 %v4858
    %5067 = vmatprep.subr.bf16.mxu0 %v4865
    %5068 = vmatpush1.bf16.msra.mxu0 %v4864
    %5069 = vmatprep.subr.bf16.mxu0 %v4871
    %5070 = vmatpush1.bf16.msra.mxu0 %v4870
    %5071 = vmatprep.subr.bf16.mxu0 %v4877
    %5072 = vmatpush1.bf16.msra.mxu0 %v4876
    %5073 = vmatprep.subr.bf16.mxu0 %v4883
    %5074 = vmatpush1.bf16.msra.mxu0 %v4882
    %5075 = vmatprep.subr.bf16.mxu0 %v4889
    %5076 = vmatpush1.bf16.msra.mxu0 %v4888
    %5077 = vmatprep.subr.bf16.mxu0 %v4895
    %5078 = vmatpush1.bf16.msra.mxu0 %v4894
    %5079 = vmatprep.subr.bf16.mxu0 %v4901
    %5080 = vmatpush1.bf16.msra.mxu0 %v4900
    %5081 = vmatprep.subr.bf16.mxu0 %v4907
    %5082 = vmatpush1.bf16.msra.mxu0 %v4906
    %5083 = vmatprep.subr.bf16.mxu0 %v4913
    %5084 = vmatpush1.bf16.msra.mxu0 %v4912
    %5085 = vmatprep.subr.bf16.mxu0 %v4919
    %5086 = vmatpush1.bf16.msra.mxu0 %v4918
    %5087 = vmatprep.mubr.bf16.mxu0 %v4931
    %5088 = vmatmul.mubr.bf16.gmra.mrb[0].mxu0 %v4930
    %v5089 = vpop.f32.mrb[0].mxu0
    %v5090 = vadd.f32 %v5049, %v5089
    %v5091 = vpop.f32.mrb[0].mxu0
    %v5092 = vadd.f32 %v5051, %v5091
    %v5093 = vpop.f32.mrb[0].mxu0
    %v5094 = vpop.f32.mrb[0].mxu0
    %5095 = vdwg.mxu0
    %5096 = vmatprep.subr.bf16.mxu0 %v4543
    %5097 = vmatpush1.bf16.msra.mxu0 %v4542
    %5098 = vmatprep.subr.bf16.mxu0 %v4549
    %5099 = vmatpush1.bf16.msra.mxu0 %v4548
    %5100 = vmatprep.subr.bf16.mxu0 %v4555
    %5101 = vmatpush1.bf16.msra.mxu0 %v4554
    %5102 = vmatprep.subr.bf16.mxu0 %v4561
    %5103 = vmatpush1.bf16.msra.mxu0 %v4560
    %5104 = vmatprep.subr.bf16.mxu0 %v4567
    %5105 = vmatpush1.bf16.msra.mxu0 %v4566
    %5106 = vmatprep.subr.bf16.mxu0 %v4573
    %5107 = vmatpush1.bf16.msra.mxu0 %v4572
    %5108 = vmatprep.subr.bf16.mxu0 %v4579
    %5109 = vmatpush1.bf16.msra.mxu0 %v4578
    %5110 = vmatprep.subr.bf16.mxu0 %v4585
    %5111 = vmatpush1.bf16.msra.mxu0 %v4584
    %5112 = vmatprep.subr.bf16.mxu0 %v4591
    %5113 = vmatpush1.bf16.msra.mxu0 %v4590
    %5114 = vmatprep.subr.bf16.mxu0 %v4597
    %5115 = vmatpush1.bf16.msra.mxu0 %v4596
    %5116 = vmatprep.subr.bf16.mxu0 %v4603
    %5117 = vmatpush1.bf16.msra.mxu0 %v4602
    %5118 = vmatprep.subr.bf16.mxu0 %v4609
    %5119 = vmatpush1.bf16.msra.mxu0 %v4608
    %5120 = vmatprep.subr.bf16.mxu0 %v4615
    %5121 = vmatpush1.bf16.msra.mxu0 %v4614
    %5122 = vmatprep.subr.bf16.mxu0 %v4621
    %5123 = vmatpush1.bf16.msra.mxu0 %v4620
    %5124 = vmatprep.subr.bf16.mxu0 %v4627
    %5125 = vmatpush1.bf16.msra.mxu0 %v4626
    %5126 = vmatprep.subr.bf16.mxu0 %v4633
    %5127 = vmatpush1.bf16.msra.mxu0 %v4632
    %5128 = vmatprep.mubr.bf16.mxu0 %v4925
    %5129 = vmatmul.mubr.bf16.gmra.mrb[0].mxu0 %v4924
    %v5130 = vpop.f32.mrb[0].mxu0
    %v5131 = vadd.f32 0.0, %v5130
    %v5132 = vpop.f32.mrb[0].mxu0
    %v5133 = vadd.f32 0.0, %v5132
    %v5134 = vpop.f32.mrb[0].mxu0
    %v5135 = vpop.f32.mrb[0].mxu0
    %5136 = vdwg.mxu0
    %5137 = vmatprep.subr.bf16.mxu0 %v4639
    %5138 = vmatpush1.bf16.msra.mxu0 %v4638
    %5139 = vmatprep.subr.bf16.mxu0 %v4645
    %5140 = vmatpush1.bf16.msra.mxu0 %v4644
    %5141 = vmatprep.subr.bf16.mxu0 %v4651
    %5142 = vmatpush1.bf16.msra.mxu0 %v4650
    %5143 = vmatprep.subr.bf16.mxu0 %v4657
    %5144 = vmatpush1.bf16.msra.mxu0 %v4656
    %5145 = vmatprep.subr.bf16.mxu0 %v4663
    %5146 = vmatpush1.bf16.msra.mxu0 %v4662
    %5147 = vmatprep.subr.bf16.mxu0 %v4669
    %5148 = vmatpush1.bf16.msra.mxu0 %v4668
    %5149 = vmatprep.subr.bf16.mxu0 %v4675
    %5150 = vmatpush1.bf16.msra.mxu0 %v4674
    %5151 = vmatprep.subr.bf16.mxu0 %v4681
    %5152 = vmatpush1.bf16.msra.mxu0 %v4680
    %5153 = vmatprep.subr.bf16.mxu0 %v4687
    %5154 = vmatpush1.bf16.msra.mxu0 %v4686
    %5155 = vmatprep.subr.bf16.mxu0 %v4693
    %5156 = vmatpush1.bf16.msra.mxu0 %v4692
    %5157 = vmatprep.subr.bf16.mxu0 %v4699
    %5158 = vmatpush1.bf16.msra.mxu0 %v4698
    %5159 = vmatprep.subr.bf16.mxu0 %v4705
    %5160 = vmatpush1.bf16.msra.mxu0 %v4704
    %5161 = vmatprep.subr.bf16.mxu0 %v4711
    %5162 = vmatpush1.bf16.msra.mxu0 %v4710
    %5163 = vmatprep.subr.bf16.mxu0 %v4717
    %5164 = vmatpush1.bf16.msra.mxu0 %v4716
    %5165 = vmatprep.subr.bf16.mxu0 %v4723
    %5166 = vmatpush1.bf16.msra.mxu0 %v4722
    %5167 = vmatprep.subr.bf16.mxu0 %v4729
    %5168 = vmatpush1.bf16.msra.mxu0 %v4728
    %5169 = vmatprep.mubr.bf16.mxu0 %v4927
    %5170 = vmatmul.mubr.bf16.gmra.mrb[0].mxu0 %v4926
    %v5171 = vpop.f32.mrb[0].mxu0
    %v5172 = vadd.f32 %v5131, %v5171
    %v5173 = vpop.f32.mrb[0].mxu0
    %v5174 = vadd.f32 %v5133, %v5173
    %v5175 = vpop.f32.mrb[0].mxu0
    %v5176 = vpop.f32.mrb[0].mxu0
    %5177 = vdwg.mxu0
    %5178 = vmatprep.subr.bf16.mxu0 %v4735
    %5179 = vmatpush1.bf16.msra.mxu0 %v4734
    %5180 = vmatprep.subr.bf16.mxu0 %v4741
    %5181 = vmatpush1.bf16.msra.mxu0 %v4740
    %5182 = vmatprep.subr.bf16.mxu0 %v4747
    %5183 = vmatpush1.bf16.msra.mxu0 %v4746
    %5184 = vmatprep.subr.bf16.mxu0 %v4753
    %5185 = vmatpush1.bf16.msra.mxu0 %v4752
    %5186 = vmatprep.subr.bf16.mxu0 %v4759
    %5187 = vmatpush1.bf16.msra.mxu0 %v4758
    %5188 = vmatprep.subr.bf16.mxu0 %v4765
    %5189 = vmatpush1.bf16.msra.mxu0 %v4764
    %5190 = vmatprep.subr.bf16.mxu0 %v4771
    %5191 = vmatpush1.bf16.msra.mxu0 %v4770
    %5192 = vmatprep.subr.bf16.mxu0 %v4777
    %5193 = vmatpush1.bf16.msra.mxu0 %v4776
    %5194 = vmatprep.subr.bf16.mxu0 %v4783
    %5195 = vmatpush1.bf16.msra.mxu0 %v4782
    %5196 = vmatprep.subr.bf16.mxu0 %v4789
    %5197 = vmatpush1.bf16.msra.mxu0 %v4788
    %5198 = vmatprep.subr.bf16.mxu0 %v4795
    %5199 = vmatpush1.bf16.msra.mxu0 %v4794
    %5200 = vmatprep.subr.bf16.mxu0 %v4801
    %5201 = vmatpush1.bf16.msra.mxu0 %v4800
    %5202 = vmatprep.subr.bf16.mxu0 %v4807
    %5203 = vmatpush1.bf16.msra.mxu0 %v4806
    %5204 = vmatprep.subr.bf16.mxu0 %v4813
    %5205 = vmatpush1.bf16.msra.mxu0 %v4812
    %5206 = vmatprep.subr.bf16.mxu0 %v4819
    %5207 = vmatpush1.bf16.msra.mxu0 %v4818
    %5208 = vmatprep.subr.bf16.mxu0 %v4825
    %5209 = vmatpush1.bf16.msra.mxu0 %v4824
    %5210 = vmatprep.mubr.bf16.mxu0 %v4929
    %5211 = vmatmul.mubr.bf16.gmra.mrb[0].mxu0 %v4928
    %v5212 = vpop.f32.mrb[0].mxu0
    %v5213 = vadd.f32 %v5172, %v5212
    %v5214 = vpop.f32.mrb[0].mxu0
    %v5215 = vadd.f32 %v5174, %v5214
    %v5216 = vpop.f32.mrb[0].mxu0
    %v5217 = vpop.f32.mrb[0].mxu0
    %5218 = vdwg.mxu0
    %5219 = vmatprep.subr.bf16.mxu0 %v4831
    %5220 = vmatpush1.bf16.msra.mxu0 %v4830
    %5221 = vmatprep.subr.bf16.mxu0 %v4837
    %5222 = vmatpush1.bf16.msra.mxu0 %v4836
    %5223 = vmatprep.subr.bf16.mxu0 %v4843
    %5224 = vmatpush1.bf16.msra.mxu0 %v4842
    %5225 = vmatprep.subr.bf16.mxu0 %v4849
    %5226 = vmatpush1.bf16.msra.mxu0 %v4848
    %5227 = vmatprep.subr.bf16.mxu0 %v4855
    %5228 = vmatpush1.bf16.msra.mxu0 %v4854
    %5229 = vmatprep.subr.bf16.mxu0 %v4861
    %5230 = vmatpush1.bf16.msra.mxu0 %v4860
    %5231 = vmatprep.subr.bf16.mxu0 %v4867
    %5232 = vmatpush1.bf16.msra.mxu0 %v4866
    %5233 = vmatprep.subr.bf16.mxu0 %v4873
    %5234 = vmatpush1.bf16.msra.mxu0 %v4872
    %5235 = vmatprep.subr.bf16.mxu0 %v4879
    %5236 = vmatpush1.bf16.msra.mxu0 %v4878
    %5237 = vmatprep.subr.bf16.mxu0 %v4885
    %5238 = vmatpush1.bf16.msra.mxu0 %v4884
    %5239 = vmatprep.subr.bf16.mxu0 %v4891
    %5240 = vmatpush1.bf16.msra.mxu0 %v4890
    %5241 = vmatprep.subr.bf16.mxu0 %v4897
    %5242 = vmatpush1.bf16.msra.mxu0 %v4896
    %5243 = vmatprep.subr.bf16.mxu0 %v4903
    %5244 = vmatpush1.bf16.msra.mxu0 %v4902
    %5245 = vmatprep.subr.bf16.mxu0 %v4909
    %5246 = vmatpush1.bf16.msra.mxu0 %v4908
    %5247 = vmatprep.subr.bf16.mxu0 %v4915
    %5248 = vmatpush1.bf16.msra.mxu0 %v4914
    %5249 = vmatprep.subr.bf16.mxu0 %v4921
    %5250 = vmatpush1.bf16.msra.mxu0 %v4920
    %5251 = vmatprep.mubr.bf16.mxu0 %v4931
    %5252 = vmatmul.mubr.bf16.gmra.mrb[0].mxu0 %v4930
    %v5253 = vpop.f32.mrb[0].mxu0
    %v5254 = vadd.f32 %v5213, %v5253
    %v5255 = vpop.f32.mrb[0].mxu0
    %v5256 = vadd.f32 %v5215, %v5255
    %v5257 = vpop.f32.mrb[0].mxu0
    %v5258 = vpop.f32.mrb[0].mxu0
    %5259 = vdwg.mxu0
    %5260 = vmatprep.subr.bf16.mxu0 %v4545
    %5261 = vmatpush1.bf16.msra.mxu0 %v4544
    %5262 = vmatprep.subr.bf16.mxu0 %v4551
    %5263 = vmatpush1.bf16.msra.mxu0 %v4550
    %5264 = vmatprep.subr.bf16.mxu0 %v4557
    %5265 = vmatpush1.bf16.msra.mxu0 %v4556
    %5266 = vmatprep.subr.bf16.mxu0 %v4563
    %5267 = vmatpush1.bf16.msra.mxu0 %v4562
    %5268 = vmatprep.subr.bf16.mxu0 %v4569
    %5269 = vmatpush1.bf16.msra.mxu0 %v4568
    %5270 = vmatprep.subr.bf16.mxu0 %v4575
    %5271 = vmatpush1.bf16.msra.mxu0 %v4574
    %5272 = vmatprep.subr.bf16.mxu0 %v4581
    %5273 = vmatpush1.bf16.msra.mxu0 %v4580
    %5274 = vmatprep.subr.bf16.mxu0 %v4587
    %5275 = vmatpush1.bf16.msra.mxu0 %v4586
    %5276 = vmatprep.subr.bf16.mxu0 %v4593
    %5277 = vmatpush1.bf16.msra.mxu0 %v4592
    %5278 = vmatprep.subr.bf16.mxu0 %v4599
    %5279 = vmatpush1.bf16.msra.mxu0 %v4598
    %5280 = vmatprep.subr.bf16.mxu0 %v4605
    %5281 = vmatpush1.bf16.msra.mxu0 %v4604
    %5282 = vmatprep.subr.bf16.mxu0 %v4611
    %5283 = vmatpush1.bf16.msra.mxu0 %v4610
    %5284 = vmatprep.subr.bf16.mxu0 %v4617
    %5285 = vmatpush1.bf16.msra.mxu0 %v4616
    %5286 = vmatprep.subr.bf16.mxu0 %v4623
    %5287 = vmatpush1.bf16.msra.mxu0 %v4622
    %5288 = vmatprep.subr.bf16.mxu0 %v4629
    %5289 = vmatpush1.bf16.msra.mxu0 %v4628
    %5290 = vmatprep.subr.bf16.mxu0 %v4635
    %5291 = vmatpush1.bf16.msra.mxu0 %v4634
    %5292 = vmatprep.mubr.bf16.mxu0 %v4925
    %5293 = vmatmul.mubr.bf16.gmra.mrb[0].mxu0 %v4924
    %v5294 = vpop.f32.mrb[0].mxu0
    %v5295 = vadd.f32 0.0, %v5294
    %v5296 = vpop.f32.mrb[0].mxu0
    %v5297 = vadd.f32 0.0, %v5296
    %v5298 = vpop.f32.mrb[0].mxu0
    %v5299 = vpop.f32.mrb[0].mxu0
    %5300 = vdwg.mxu0
    %5301 = vmatprep.subr.bf16.mxu0 %v4641
    %5302 = vmatpush1.bf16.msra.mxu0 %v4640
    %5303 = vmatprep.subr.bf16.mxu0 %v4647
    %5304 = vmatpush1.bf16.msra.mxu0 %v4646
    %5305 = vmatprep.subr.bf16.mxu0 %v4653
    %5306 = vmatpush1.bf16.msra.mxu0 %v4652
    %5307 = vmatprep.subr.bf16.mxu0 %v4659
    %5308 = vmatpush1.bf16.msra.mxu0 %v4658
    %5309 = vmatprep.subr.bf16.mxu0 %v4665
    %5310 = vmatpush1.bf16.msra.mxu0 %v4664
    %5311 = vmatprep.subr.bf16.mxu0 %v4671
    %5312 = vmatpush1.bf16.msra.mxu0 %v4670
    %5313 = vmatprep.subr.bf16.mxu0 %v4677
    %5314 = vmatpush1.bf16.msra.mxu0 %v4676
    %5315 = vmatprep.subr.bf16.mxu0 %v4683
    %5316 = vmatpush1.bf16.msra.mxu0 %v4682
    %5317 = vmatprep.subr.bf16.mxu0 %v4689
    %5318 = vmatpush1.bf16.msra.mxu0 %v4688
    %5319 = vmatprep.subr.bf16.mxu0 %v4695
    %5320 = vmatpush1.bf16.msra.mxu0 %v4694
    %5321 = vmatprep.subr.bf16.mxu0 %v4701
    %5322 = vmatpush1.bf16.msra.mxu0 %v4700
    %5323 = vmatprep.subr.bf16.mxu0 %v4707
    %5324 = vmatpush1.bf16.msra.mxu0 %v4706
    %5325 = vmatprep.subr.bf16.mxu0 %v4713
    %5326 = vmatpush1.bf16.msra.mxu0 %v4712
    %5327 = vmatprep.subr.bf16.mxu0 %v4719
    %5328 = vmatpush1.bf16.msra.mxu0 %v4718
    %5329 = vmatprep.subr.bf16.mxu0 %v4725
    %5330 = vmatpush1.bf16.msra.mxu0 %v4724
    %5331 = vmatprep.subr.bf16.mxu0 %v4731
    %5332 = vmatpush1.bf16.msra.mxu0 %v4730
    %5333 = vmatprep.mubr.bf16.mxu0 %v4927
    %5334 = vmatmul.mubr.bf16.gmra.mrb[0].mxu0 %v4926
    %v5335 = vpop.f32.mrb[0].mxu0
    %v5336 = vadd.f32 %v5295, %v5335
    %v5337 = vpop.f32.mrb[0].mxu0
    %v5338 = vadd.f32 %v5297, %v5337
    %v5339 = vpop.f32.mrb[0].mxu0
    %v5340 = vpop.f32.mrb[0].mxu0
    %5341 = vdwg.mxu0
    %5342 = vmatprep.subr.bf16.mxu0 %v4737
    %5343 = vmatpush1.bf16.msra.mxu0 %v4736
    %5344 = vmatprep.subr.bf16.mxu0 %v4743
    %5345 = vmatpush1.bf16.msra.mxu0 %v4742
    %5346 = vmatprep.subr.bf16.mxu0 %v4749
    %5347 = vmatpush1.bf16.msra.mxu0 %v4748
    %5348 = vmatprep.subr.bf16.mxu0 %v4755
    %5349 = vmatpush1.bf16.msra.mxu0 %v4754
    %5350 = vmatprep.subr.bf16.mxu0 %v4761
    %5351 = vmatpush1.bf16.msra.mxu0 %v4760
    %5352 = vmatprep.subr.bf16.mxu0 %v4767
    %5353 = vmatpush1.bf16.msra.mxu0 %v4766
    %5354 = vmatprep.subr.bf16.mxu0 %v4773
    %5355 = vmatpush1.bf16.msra.mxu0 %v4772
    %5356 = vmatprep.subr.bf16.mxu0 %v4779
    %5357 = vmatpush1.bf16.msra.mxu0 %v4778
    %5358 = vmatprep.subr.bf16.mxu0 %v4785
    %5359 = vmatpush1.bf16.msra.mxu0 %v4784
    %5360 = vmatprep.subr.bf16.mxu0 %v4791
    %5361 = vmatpush1.bf16.msra.mxu0 %v4790
    %5362 = vmatprep.subr.bf16.mxu0 %v4797
    %5363 = vmatpush1.bf16.msra.mxu0 %v4796
    %5364 = vmatprep.subr.bf16.mxu0 %v4803
    %5365 = vmatpush1.bf16.msra.mxu0 %v4802
    %5366 = vmatprep.subr.bf16.mxu0 %v4809
    %5367 = vmatpush1.bf16.msra.mxu0 %v4808
    %5368 = vmatprep.subr.bf16.mxu0 %v4815
    %5369 = vmatpush1.bf16.msra.mxu0 %v4814
    %5370 = vmatprep.subr.bf16.mxu0 %v4821
    %5371 = vmatpush1.bf16.msra.mxu0 %v4820
    %5372 = vmatprep.subr.bf16.mxu0 %v4827
    %5373 = vmatpush1.bf16.msra.mxu0 %v4826
    %5374 = vmatprep.mubr.bf16.mxu0 %v4929
    %5375 = vmatmul.mubr.bf16.gmra.mrb[0].mxu0 %v4928
    %v5376 = vpop.f32.mrb[0].mxu0
    %v5377 = vadd.f32 %v5336, %v5376
    %v5378 = vpop.f32.mrb[0].mxu0
    %v5379 = vadd.f32 %v5338, %v5378
    %v5380 = vpop.f32.mrb[0].mxu0
    %v5381 = vpop.f32.mrb[0].mxu0
    %5382 = vdwg.mxu0
    %5383 = vmatprep.subr.bf16.mxu0 %v4833
    %5384 = vmatpush1.bf16.msra.mxu0 %v4832
    %5385 = vmatprep.subr.bf16.mxu0 %v4839
    %5386 = vmatpush1.bf16.msra.mxu0 %v4838
    %5387 = vmatprep.subr.bf16.mxu0 %v4845
    %5388 = vmatpush1.bf16.msra.mxu0 %v4844
    %5389 = vmatprep.subr.bf16.mxu0 %v4851
    %5390 = vmatpush1.bf16.msra.mxu0 %v4850
    %5391 = vmatprep.subr.bf16.mxu0 %v4857
    %5392 = vmatpush1.bf16.msra.mxu0 %v4856
    %5393 = vmatprep.subr.bf16.mxu0 %v4863
    %5394 = vmatpush1.bf16.msra.mxu0 %v4862
    %5395 = vmatprep.subr.bf16.mxu0 %v4869
    %5396 = vmatpush1.bf16.msra.mxu0 %v4868
    %5397 = vmatprep.subr.bf16.mxu0 %v4875
    %5398 = vmatpush1.bf16.msra.mxu0 %v4874
    %5399 = vmatprep.subr.bf16.mxu0 %v4881
    %5400 = vmatpush1.bf16.msra.mxu0 %v4880
    %5401 = vmatprep.subr.bf16.mxu0 %v4887
    %5402 = vmatpush1.bf16.msra.mxu0 %v4886
    %5403 = vmatprep.subr.bf16.mxu0 %v4893
    %5404 = vmatpush1.bf16.msra.mxu0 %v4892
    %5405 = vmatprep.subr.bf16.mxu0 %v4899
    %5406 = vmatpush1.bf16.msra.mxu0 %v4898
    %5407 = vmatprep.subr.bf16.mxu0 %v4905
    %5408 = vmatpush1.bf16.msra.mxu0 %v4904
    %5409 = vmatprep.subr.bf16.mxu0 %v4911
    %5410 = vmatpush1.bf16.msra.mxu0 %v4910
    %5411 = vmatprep.subr.bf16.mxu0 %v4917
    %5412 = vmatpush1.bf16.msra.mxu0 %v4916
    %5413 = vmatprep.subr.bf16.mxu0 %v4923
    %5414 = vmatpush1.bf16.msra.mxu0 %v4922
    %5415 = vmatprep.mubr.bf16.mxu0 %v4931
    %5416 = vmatmul.mubr.bf16.gmra.mrb[0].mxu0 %v4930
    %v5417 = vpop.f32.mrb[0].mxu0
    %v5418 = vadd.f32 %v5377, %v5417
    %v5419 = vpop.f32.mrb[0].mxu0
    %v5420 = vadd.f32 %v5379, %v5419
    %v5421 = vpop.f32.mrb[0].mxu0
    %v5422 = vpop.f32.mrb[0].mxu0
    %5423 = vdwg.mxu0
    %v5425 = vlaneseq
    %v5426 = vshrl.u32 %v5425, 7
    %v5427 = vsub.s32 0, %v5426
    %v5428 = vrot.slane %v4347, %v5427
    %v5429 = vlaneseq
    %v5430 = vshrl.u32 %v5429, 7
    %v5431 = vsub.s32 1, %v5430
    %v5432 = vrot.slane %v4347, %v5431
    %v5433 = vlaneseq
    %v5434 = vshrl.u32 %v5433, 7
    %v5435 = vsub.s32 2, %v5434
    %v5436 = vrot.slane %v4347, %v5435
    %v5437 = vlaneseq
    %v5438 = vshrl.u32 %v5437, 7
    %v5439 = vsub.s32 3, %v5438
    %v5440 = vrot.slane %v4347, %v5439
    %v5441 = vlaneseq
    %v5442 = vshrl.u32 %v5441, 7
    %v5443 = vsub.s32 4, %v5442
    %v5444 = vrot.slane %v4347, %v5443
    %v5445 = vlaneseq
    %v5446 = vshrl.u32 %v5445, 7
    %v5447 = vsub.s32 5, %v5446
    %v5448 = vrot.slane %v4347, %v5447
    %v5455 = vmul.f32 %v5090, %v5428
    %v5456 = vmul.f32 %v5092, %v5432
    %v5457 = vmul.f32 %v5254, %v5436
    %v5458 = vmul.f32 %v5256, %v5440
    %v5459 = vmul.f32 %v5418, %v5444
    %v5460 = vmul.f32 %v5420, %v5448
    %v5461 = vld [vmem:[#allocation2 + $0x18] sm:$0x3f]
    %v5463 = vlaneseq
    %v5464 = vshrl.u32 %v5463, 7
    %v5465 = vsub.s32 0, %v5464
    %v5466 = vrot.slane %v5461, %v5465
    %v5467 = vlaneseq
    %v5468 = vshrl.u32 %v5467, 7
    %v5469 = vsub.s32 1, %v5468
    %v5470 = vrot.slane %v5461, %v5469
    %v5471 = vlaneseq
    %v5472 = vshrl.u32 %v5471, 7
    %v5473 = vsub.s32 2, %v5472
    %v5474 = vrot.slane %v5461, %v5473
    %v5475 = vlaneseq
    %v5476 = vshrl.u32 %v5475, 7
    %v5477 = vsub.s32 3, %v5476
    %v5478 = vrot.slane %v5461, %v5477
    %v5479 = vlaneseq
    %v5480 = vshrl.u32 %v5479, 7
    %v5481 = vsub.s32 4, %v5480
    %v5482 = vrot.slane %v5461, %v5481
    %v5483 = vlaneseq
    %v5484 = vshrl.u32 %v5483, 7
    %v5485 = vsub.s32 5, %v5484
    %v5486 = vrot.slane %v5461, %v5485
    %v5493 = vadd.f32 %v5455, %v5466
    %v5494 = vadd.f32 %v5456, %v5470
    %v5495 = vadd.f32 %v5457, %v5474
    %v5496 = vadd.f32 %v5458, %v5478
    %v5497 = vadd.f32 %v5459, %v5482
    %v5498 = vadd.f32 %v5460, %v5486
    %v5499 = vld [vmem:[#allocation2 + $0x1e] sm:$0x3f]
    %v5501 = vlaneseq
    %v5502 = vshrl.u32 %v5501, 7
    %v5503 = vsub.s32 0, %v5502
    %v5504 = vrot.slane %v5499, %v5503
    %v5505 = vlaneseq
    %v5506 = vshrl.u32 %v5505, 7
    %v5507 = vsub.s32 1, %v5506
    %v5508 = vrot.slane %v5499, %v5507
    %v5509 = vlaneseq
    %v5510 = vshrl.u32 %v5509, 7
    %v5511 = vsub.s32 2, %v5510
    %v5512 = vrot.slane %v5499, %v5511
    %v5513 = vlaneseq
    %v5514 = vshrl.u32 %v5513, 7
    %v5515 = vsub.s32 3, %v5514
    %v5516 = vrot.slane %v5499, %v5515
    %v5517 = vlaneseq
    %v5518 = vshrl.u32 %v5517, 7
    %v5519 = vsub.s32 4, %v5518
    %v5520 = vrot.slane %v5499, %v5519
    %v5521 = vlaneseq
    %v5522 = vshrl.u32 %v5521, 7
    %v5523 = vsub.s32 5, %v5522
    %v5524 = vrot.slane %v5499, %v5523
    %v5531 = vadd.f32 %v5493, %v5504
    %v5532 = vadd.f32 %v5494, %v5508
    %v5533 = vadd.f32 %v5495, %v5512
    %v5534 = vadd.f32 %v5496, %v5516
    %v5535 = vadd.f32 %v5497, %v5520
    %v5536 = vadd.f32 %v5498, %v5524
    %v5537 = vld [vmem:[#allocation2 + $0x24] sm:$0x3f]
    %v5538 = vld [vmem:[#allocation2 + $0x2a] sm:$0x3f]
    %v5539 = vadd.f32 %v5531, %v5532
    %v5540 = vadd.f32 %v5539, %v5533
    %v5541 = vadd.f32 %v5540, %v5534
    %v5542 = vadd.f32 %v5541, %v5535
    %v5543 = vadd.f32 %v5542, %v5536
    %5544 = vadd.xlane.f32.xlu0 %v5543
    %v5545 = vpop.xlane.xlu0 %5544
    %v5546 = vrcp.pop 768.0
    %v5547 = vmul.f32 %v5545, %v5546
    %v5548 = vsub.f32 %v5531, %v5547
    %v5549 = vsub.f32 %v5532, %v5547
    %v5550 = vsub.f32 %v5533, %v5547
    %v5551 = vsub.f32 %v5534, %v5547
    %v5552 = vsub.f32 %v5535, %v5547
    %v5553 = vsub.f32 %v5536, %v5547
    %v5554 = vmul.f32 %v5548, %v5548
    %v5555 = vmul.f32 %v5549, %v5549
    %v5556 = vmul.f32 %v5550, %v5550
    %v5557 = vmul.f32 %v5551, %v5551
    %v5558 = vmul.f32 %v5552, %v5552
    %v5559 = vmul.f32 %v5553, %v5553
    %v5560 = vadd.f32 %v5554, %v5555
    %v5561 = vadd.f32 %v5560, %v5556
    %v5562 = vadd.f32 %v5561, %v5557
    %v5563 = vadd.f32 %v5562, %v5558
    %v5564 = vadd.f32 %v5563, %v5559
    %5565 = vadd.xlane.f32.xlu0 %v5564
    %v5566 = vpop.xlane.xlu0 %5565
    %v5567 = vmul.f32 %v5566, %v5546
    %v5568 = vadd.f32 %v5567, 1e-05
    %v5569 = vrsqrt.pop %v5568
    %v5570 = vmul.f32 %v5548, %v5569
    %v5571 = vmul.f32 %v5549, %v5569
    %v5572 = vmul.f32 %v5550, %v5569
    %v5573 = vmul.f32 %v5551, %v5569
    %v5574 = vmul.f32 %v5552, %v5569
    %v5575 = vmul.f32 %v5553, %v5569
    %v5577 = vlaneseq
    %v5578 = vshrl.u32 %v5577, 7
    %v5579 = vsub.s32 0, %v5578
    %v5580 = vrot.slane %v5537, %v5579
    %v5581 = vlaneseq
    %v5582 = vshrl.u32 %v5581, 7
    %v5583 = vsub.s32 1, %v5582
    %v5584 = vrot.slane %v5537, %v5583
    %v5585 = vlaneseq
    %v5586 = vshrl.u32 %v5585, 7
    %v5587 = vsub.s32 2, %v5586
    %v5588 = vrot.slane %v5537, %v5587
    %v5589 = vlaneseq
    %v5590 = vshrl.u32 %v5589, 7
    %v5591 = vsub.s32 3, %v5590
    %v5592 = vrot.slane %v5537, %v5591
    %v5593 = vlaneseq
    %v5594 = vshrl.u32 %v5593, 7
    %v5595 = vsub.s32 4, %v5594
    %v5596 = vrot.slane %v5537, %v5595
    %v5597 = vlaneseq
    %v5598 = vshrl.u32 %v5597, 7
    %v5599 = vsub.s32 5, %v5598
    %v5600 = vrot.slane %v5537, %v5599
    %v5607 = vmul.f32 %v5570, %v5580
    %v5608 = vmul.f32 %v5571, %v5584
    %v5609 = vmul.f32 %v5572, %v5588
    %v5610 = vmul.f32 %v5573, %v5592
    %v5611 = vmul.f32 %v5574, %v5596
    %v5612 = vmul.f32 %v5575, %v5600
    %v5614 = vlaneseq
    %v5615 = vshrl.u32 %v5614, 7
    %v5616 = vsub.s32 0, %v5615
    %v5617 = vrot.slane %v5538, %v5616
    %v5618 = vlaneseq
    %v5619 = vshrl.u32 %v5618, 7
    %v5620 = vsub.s32 1, %v5619
    %v5621 = vrot.slane %v5538, %v5620
    %v5622 = vlaneseq
    %v5623 = vshrl.u32 %v5622, 7
    %v5624 = vsub.s32 2, %v5623
    %v5625 = vrot.slane %v5538, %v5624
    %v5626 = vlaneseq
    %v5627 = vshrl.u32 %v5626, 7
    %v5628 = vsub.s32 3, %v5627
    %v5629 = vrot.slane %v5538, %v5628
    %v5630 = vlaneseq
    %v5631 = vshrl.u32 %v5630, 7
    %v5632 = vsub.s32 4, %v5631
    %v5633 = vrot.slane %v5538, %v5632
    %v5634 = vlaneseq
    %v5635 = vshrl.u32 %v5634, 7
    %v5636 = vsub.s32 5, %v5635
    %v5637 = vrot.slane %v5538, %v5636
    %v5644 = vadd.f32 %v5607, %v5617
    %v5645 = vadd.f32 %v5608, %v5621
    %v5646 = vadd.f32 %v5609, %v5625
    %v5647 = vadd.f32 %v5610, %v5629
    %v5648 = vadd.f32 %v5611, %v5633
    %v5649 = vadd.f32 %v5612, %v5637
    %v5650 = vld [vmem:[#allocation2 + $0x80] sm:$0x3f]
    %v5651 = vld [vmem:[#allocation12] sm:$0xff]
    %v5652 = vld [vmem:[#allocation12 + $0x8] sm:$0xff]
    %v5653 = vld [vmem:[#allocation12 + $0x10] sm:$0xff]
    %v5654 = vld [vmem:[#allocation12 + $0x18] sm:$0xff]
    %v5655 = vld [vmem:[#allocation12 + $0x20] sm:$0xff]
    %v5656 = vld [vmem:[#allocation12 + $0x28] sm:$0xff]
    %v5657 = vld [vmem:[#allocation12 + $0x30] sm:$0xff]
    %v5658 = vld [vmem:[#allocation12 + $0x38] sm:$0xff]
    %v5659 = vld [vmem:[#allocation12 + $0x40] sm:$0xff]
    %v5660 = vld [vmem:[#allocation12 + $0x48] sm:$0xff]
    %v5661 = vld [vmem:[#allocation12 + $0x50] sm:$0xff]
    %v5662 = vld [vmem:[#allocation12 + $0x58] sm:$0xff]
    %v5663 = vld [vmem:[#allocation12 + $0x60] sm:$0xff]
    %v5664 = vld [vmem:[#allocation12 + $0x68] sm:$0xff]
    %v5665 = vld [vmem:[#allocation12 + $0x70] sm:$0xff]
    %v5666 = vld [vmem:[#allocation12 + $0x78] sm:$0xff]
    %v5667 = vld [vmem:[#allocation12 + $0x80] sm:$0xff]
    %v5668 = vld [vmem:[#allocation12 + $0x88] sm:$0xff]
    %v5669 = vld [vmem:[#allocation12 + $0x90] sm:$0xff]
    %v5670 = vld [vmem:[#allocation12 + $0x98] sm:$0xff]
    %v5671 = vld [vmem:[#allocation12 + $0xa0] sm:$0xff]
    %v5672 = vld [vmem:[#allocation12 + $0xa8] sm:$0xff]
    %v5673 = vld [vmem:[#allocation12 + $0xb0] sm:$0xff]
    %v5674 = vld [vmem:[#allocation12 + $0xb8] sm:$0xff]
    %v5675 = vld [vmem:[#allocation12 + $0xc0] sm:$0xff]
    %v5676 = vld [vmem:[#allocation12 + $0xc8] sm:$0xff]
    %v5677 = vld [vmem:[#allocation12 + $0xd0] sm:$0xff]
    %v5678 = vld [vmem:[#allocation12 + $0xd8] sm:$0xff]
    %v5679 = vld [vmem:[#allocation12 + $0xe0] sm:$0xff]
    %v5680 = vld [vmem:[#allocation12 + $0xe8] sm:$0xff]
    %v5681 = vld [vmem:[#allocation12 + $0xf0] sm:$0xff]
    %v5682 = vld [vmem:[#allocation12 + $0xf8] sm:$0xff]
    %v5683 = vld [vmem:[#allocation12 + $0x100] sm:$0xff]
    %v5684 = vld [vmem:[#allocation12 + $0x108] sm:$0xff]
    %v5685 = vld [vmem:[#allocation12 + $0x110] sm:$0xff]
    %v5686 = vld [vmem:[#allocation12 + $0x118] sm:$0xff]
    %v5687 = vld [vmem:[#allocation12 + $0x120] sm:$0xff]
    %v5688 = vld [vmem:[#allocation12 + $0x128] sm:$0xff]
    %v5689 = vld [vmem:[#allocation12 + $0x130] sm:$0xff]
    %v5690 = vld [vmem:[#allocation12 + $0x138] sm:$0xff]
    %v5691 = vld [vmem:[#allocation12 + $0x140] sm:$0xff]
    %v5692 = vld [vmem:[#allocation12 + $0x148] sm:$0xff]
    %v5693 = vld [vmem:[#allocation12 + $0x150] sm:$0xff]
    %v5694 = vld [vmem:[#allocation12 + $0x158] sm:$0xff]
    %v5695 = vld [vmem:[#allocation12 + $0x160] sm:$0xff]
    %v5696 = vld [vmem:[#allocation12 + $0x168] sm:$0xff]
    %v5697 = vld [vmem:[#allocation12 + $0x170] sm:$0xff]
    %v5698 = vld [vmem:[#allocation12 + $0x178] sm:$0xff]
    %v5699 = vld [vmem:[#allocation12 + $0x180] sm:$0xff]
    %v5700 = vld [vmem:[#allocation12 + $0x188] sm:$0xff]
    %v5701 = vld [vmem:[#allocation12 + $0x190] sm:$0xff]
    %v5702 = vld [vmem:[#allocation12 + $0x198] sm:$0xff]
    %v5703 = vld [vmem:[#allocation12 + $0x1a0] sm:$0xff]
    %v5704 = vld [vmem:[#allocation12 + $0x1a8] sm:$0xff]
    %v5705 = vld [vmem:[#allocation12 + $0x1b0] sm:$0xff]
    %v5706 = vld [vmem:[#allocation12 + $0x1b8] sm:$0xff]
    %v5707 = vld [vmem:[#allocation12 + $0x1c0] sm:$0xff]
    %v5708 = vld [vmem:[#allocation12 + $0x1c8] sm:$0xff]
    %v5709 = vld [vmem:[#allocation12 + $0x1d0] sm:$0xff]
    %v5710 = vld [vmem:[#allocation12 + $0x1d8] sm:$0xff]
    %v5711 = vld [vmem:[#allocation12 + $0x1e0] sm:$0xff]
    %v5712 = vld [vmem:[#allocation12 + $0x1e8] sm:$0xff]
    %v5713 = vld [vmem:[#allocation12 + $0x1f0] sm:$0xff]
    %v5714 = vld [vmem:[#allocation12 + $0x1f8] sm:$0xff]
    %v5715 = vld [vmem:[#allocation12 + $0x200] sm:$0xff]
    %v5716 = vld [vmem:[#allocation12 + $0x208] sm:$0xff]
    %v5717 = vld [vmem:[#allocation12 + $0x210] sm:$0xff]
    %v5718 = vld [vmem:[#allocation12 + $0x218] sm:$0xff]
    %v5719 = vld [vmem:[#allocation12 + $0x220] sm:$0xff]
    %v5720 = vld [vmem:[#allocation12 + $0x228] sm:$0xff]
    %v5721 = vld [vmem:[#allocation12 + $0x230] sm:$0xff]
    %v5722 = vld [vmem:[#allocation12 + $0x238] sm:$0xff]
    %v5723 = vld [vmem:[#allocation12 + $0x240] sm:$0xff]
    %v5724 = vld [vmem:[#allocation12 + $0x248] sm:$0xff]
    %v5725 = vld [vmem:[#allocation12 + $0x250] sm:$0xff]
    %v5726 = vld [vmem:[#allocation12 + $0x258] sm:$0xff]
    %v5727 = vld [vmem:[#allocation12 + $0x260] sm:$0xff]
    %v5728 = vld [vmem:[#allocation12 + $0x268] sm:$0xff]
    %v5729 = vld [vmem:[#allocation12 + $0x270] sm:$0xff]
    %v5730 = vld [vmem:[#allocation12 + $0x278] sm:$0xff]
    %v5731 = vld [vmem:[#allocation12 + $0x280] sm:$0xff]
    %v5732 = vld [vmem:[#allocation12 + $0x288] sm:$0xff]
    %v5733 = vld [vmem:[#allocation12 + $0x290] sm:$0xff]
    %v5734 = vld [vmem:[#allocation12 + $0x298] sm:$0xff]
    %v5735 = vld [vmem:[#allocation12 + $0x2a0] sm:$0xff]
    %v5736 = vld [vmem:[#allocation12 + $0x2a8] sm:$0xff]
    %v5737 = vld [vmem:[#allocation12 + $0x2b0] sm:$0xff]
    %v5738 = vld [vmem:[#allocation12 + $0x2b8] sm:$0xff]
    %v5739 = vld [vmem:[#allocation12 + $0x2c0] sm:$0xff]
    %v5740 = vld [vmem:[#allocation12 + $0x2c8] sm:$0xff]
    %v5741 = vld [vmem:[#allocation12 + $0x2d0] sm:$0xff]
    %v5742 = vld [vmem:[#allocation12 + $0x2d8] sm:$0xff]
    %v5743 = vld [vmem:[#allocation12 + $0x2e0] sm:$0xff]
    %v5744 = vld [vmem:[#allocation12 + $0x2e8] sm:$0xff]
    %v5745 = vld [vmem:[#allocation12 + $0x2f0] sm:$0xff]
    %v5746 = vld [vmem:[#allocation12 + $0x2f8] sm:$0xff]
    %v5747 = vld [vmem:[#allocation12 + $0x300] sm:$0xff]
    %v5748 = vld [vmem:[#allocation12 + $0x308] sm:$0xff]
    %v5749 = vld [vmem:[#allocation12 + $0x310] sm:$0xff]
    %v5750 = vld [vmem:[#allocation12 + $0x318] sm:$0xff]
    %v5751 = vld [vmem:[#allocation12 + $0x320] sm:$0xff]
    %v5752 = vld [vmem:[#allocation12 + $0x328] sm:$0xff]
    %v5753 = vld [vmem:[#allocation12 + $0x330] sm:$0xff]
    %v5754 = vld [vmem:[#allocation12 + $0x338] sm:$0xff]
    %v5755 = vld [vmem:[#allocation12 + $0x340] sm:$0xff]
    %v5756 = vld [vmem:[#allocation12 + $0x348] sm:$0xff]
    %v5757 = vld [vmem:[#allocation12 + $0x350] sm:$0xff]
    %v5758 = vld [vmem:[#allocation12 + $0x358] sm:$0xff]
    %v5759 = vld [vmem:[#allocation12 + $0x360] sm:$0xff]
    %v5760 = vld [vmem:[#allocation12 + $0x368] sm:$0xff]
    %v5761 = vld [vmem:[#allocation12 + $0x370] sm:$0xff]
    %v5762 = vld [vmem:[#allocation12 + $0x378] sm:$0xff]
    %v5763 = vld [vmem:[#allocation12 + $0x380] sm:$0xff]
    %v5764 = vld [vmem:[#allocation12 + $0x388] sm:$0xff]
    %v5765 = vld [vmem:[#allocation12 + $0x390] sm:$0xff]
    %v5766 = vld [vmem:[#allocation12 + $0x398] sm:$0xff]
    %v5767 = vld [vmem:[#allocation12 + $0x3a0] sm:$0xff]
    %v5768 = vld [vmem:[#allocation12 + $0x3a8] sm:$0xff]
    %v5769 = vld [vmem:[#allocation12 + $0x3b0] sm:$0xff]
    %v5770 = vld [vmem:[#allocation12 + $0x3b8] sm:$0xff]
    %v5771 = vld [vmem:[#allocation12 + $0x3c0] sm:$0xff]
    %v5772 = vld [vmem:[#allocation12 + $0x3c8] sm:$0xff]
    %v5773 = vld [vmem:[#allocation12 + $0x3d0] sm:$0xff]
    %v5774 = vld [vmem:[#allocation12 + $0x3d8] sm:$0xff]
    %v5775 = vld [vmem:[#allocation12 + $0x3e0] sm:$0xff]
    %v5776 = vld [vmem:[#allocation12 + $0x3e8] sm:$0xff]
    %v5777 = vld [vmem:[#allocation12 + $0x3f0] sm:$0xff]
    %v5778 = vld [vmem:[#allocation12 + $0x3f8] sm:$0xff]
    %v5779 = vld [vmem:[#allocation12 + $0x400] sm:$0xff]
    %v5780 = vld [vmem:[#allocation12 + $0x408] sm:$0xff]
    %v5781 = vld [vmem:[#allocation12 + $0x410] sm:$0xff]
    %v5782 = vld [vmem:[#allocation12 + $0x418] sm:$0xff]
    %v5783 = vld [vmem:[#allocation12 + $0x420] sm:$0xff]
    %v5784 = vld [vmem:[#allocation12 + $0x428] sm:$0xff]
    %v5785 = vld [vmem:[#allocation12 + $0x430] sm:$0xff]
    %v5786 = vld [vmem:[#allocation12 + $0x438] sm:$0xff]
    %v5787 = vld [vmem:[#allocation12 + $0x440] sm:$0xff]
    %v5788 = vld [vmem:[#allocation12 + $0x448] sm:$0xff]
    %v5789 = vld [vmem:[#allocation12 + $0x450] sm:$0xff]
    %v5790 = vld [vmem:[#allocation12 + $0x458] sm:$0xff]
    %v5791 = vld [vmem:[#allocation12 + $0x460] sm:$0xff]
    %v5792 = vld [vmem:[#allocation12 + $0x468] sm:$0xff]
    %v5793 = vld [vmem:[#allocation12 + $0x470] sm:$0xff]
    %v5794 = vld [vmem:[#allocation12 + $0x478] sm:$0xff]
    %v5795 = vunpack.c.l.s8.bf16 %v5651
    %v5796 = vunpack.c.l.s8.bf16 %v5652
    %v5797 = vunpack.c.l.s8.bf16 %v5653
    %v5798 = vunpack.c.l.s8.bf16 %v5654
    %v5799 = vunpack.c.l.s8.bf16 %v5655
    %v5800 = vunpack.c.l.s8.bf16 %v5656
    %v5801 = vunpack.c.h.s8.bf16 %v5651
    %v5802 = vunpack.c.h.s8.bf16 %v5652
    %v5803 = vunpack.c.h.s8.bf16 %v5653
    %v5804 = vunpack.c.h.s8.bf16 %v5654
    %v5805 = vunpack.c.h.s8.bf16 %v5655
    %v5806 = vunpack.c.h.s8.bf16 %v5656
    %v5807 = vunpack.c.l.s8.bf16 %v5657
    %v5808 = vunpack.c.l.s8.bf16 %v5658
    %v5809 = vunpack.c.l.s8.bf16 %v5659
    %v5810 = vunpack.c.l.s8.bf16 %v5660
    %v5811 = vunpack.c.l.s8.bf16 %v5661
    %v5812 = vunpack.c.l.s8.bf16 %v5662
    %v5813 = vunpack.c.h.s8.bf16 %v5657
    %v5814 = vunpack.c.h.s8.bf16 %v5658
    %v5815 = vunpack.c.h.s8.bf16 %v5659
    %v5816 = vunpack.c.h.s8.bf16 %v5660
    %v5817 = vunpack.c.h.s8.bf16 %v5661
    %v5818 = vunpack.c.h.s8.bf16 %v5662
    %v5819 = vunpack.c.l.s8.bf16 %v5663
    %v5820 = vunpack.c.l.s8.bf16 %v5664
    %v5821 = vunpack.c.l.s8.bf16 %v5665
    %v5822 = vunpack.c.l.s8.bf16 %v5666
    %v5823 = vunpack.c.l.s8.bf16 %v5667
    %v5824 = vunpack.c.l.s8.bf16 %v5668
    %v5825 = vunpack.c.h.s8.bf16 %v5663
    %v5826 = vunpack.c.h.s8.bf16 %v5664
    %v5827 = vunpack.c.h.s8.bf16 %v5665
    %v5828 = vunpack.c.h.s8.bf16 %v5666
    %v5829 = vunpack.c.h.s8.bf16 %v5667
    %v5830 = vunpack.c.h.s8.bf16 %v5668
    %v5831 = vunpack.c.l.s8.bf16 %v5669
    %v5832 = vunpack.c.l.s8.bf16 %v5670
    %v5833 = vunpack.c.l.s8.bf16 %v5671
    %v5834 = vunpack.c.l.s8.bf16 %v5672
    %v5835 = vunpack.c.l.s8.bf16 %v5673
    %v5836 = vunpack.c.l.s8.bf16 %v5674
    %v5837 = vunpack.c.h.s8.bf16 %v5669
    %v5838 = vunpack.c.h.s8.bf16 %v5670
    %v5839 = vunpack.c.h.s8.bf16 %v5671
    %v5840 = vunpack.c.h.s8.bf16 %v5672
    %v5841 = vunpack.c.h.s8.bf16 %v5673
    %v5842 = vunpack.c.h.s8.bf16 %v5674
    %v5843 = vunpack.c.l.s8.bf16 %v5675
    %v5844 = vunpack.c.l.s8.bf16 %v5676
    %v5845 = vunpack.c.l.s8.bf16 %v5677
    %v5846 = vunpack.c.l.s8.bf16 %v5678
    %v5847 = vunpack.c.l.s8.bf16 %v5679
    %v5848 = vunpack.c.l.s8.bf16 %v5680
    %v5849 = vunpack.c.h.s8.bf16 %v5675
    %v5850 = vunpack.c.h.s8.bf16 %v5676
    %v5851 = vunpack.c.h.s8.bf16 %v5677
    %v5852 = vunpack.c.h.s8.bf16 %v5678
    %v5853 = vunpack.c.h.s8.bf16 %v5679
    %v5854 = vunpack.c.h.s8.bf16 %v5680
    %v5855 = vunpack.c.l.s8.bf16 %v5681
    %v5856 = vunpack.c.l.s8.bf16 %v5682
    %v5857 = vunpack.c.l.s8.bf16 %v5683
    %v5858 = vunpack.c.l.s8.bf16 %v5684
    %v5859 = vunpack.c.l.s8.bf16 %v5685
    %v5860 = vunpack.c.l.s8.bf16 %v5686
    %v5861 = vunpack.c.h.s8.bf16 %v5681
    %v5862 = vunpack.c.h.s8.bf16 %v5682
    %v5863 = vunpack.c.h.s8.bf16 %v5683
    %v5864 = vunpack.c.h.s8.bf16 %v5684
    %v5865 = vunpack.c.h.s8.bf16 %v5685
    %v5866 = vunpack.c.h.s8.bf16 %v5686
    %v5867 = vunpack.c.l.s8.bf16 %v5687
    %v5868 = vunpack.c.l.s8.bf16 %v5688
    %v5869 = vunpack.c.l.s8.bf16 %v5689
    %v5870 = vunpack.c.l.s8.bf16 %v5690
    %v5871 = vunpack.c.l.s8.bf16 %v5691
    %v5872 = vunpack.c.l.s8.bf16 %v5692
    %v5873 = vunpack.c.h.s8.bf16 %v5687
    %v5874 = vunpack.c.h.s8.bf16 %v5688
    %v5875 = vunpack.c.h.s8.bf16 %v5689
    %v5876 = vunpack.c.h.s8.bf16 %v5690
    %v5877 = vunpack.c.h.s8.bf16 %v5691
    %v5878 = vunpack.c.h.s8.bf16 %v5692
    %v5879 = vunpack.c.l.s8.bf16 %v5693
    %v5880 = vunpack.c.l.s8.bf16 %v5694
    %v5881 = vunpack.c.l.s8.bf16 %v5695
    %v5882 = vunpack.c.l.s8.bf16 %v5696
    %v5883 = vunpack.c.l.s8.bf16 %v5697
    %v5884 = vunpack.c.l.s8.bf16 %v5698
    %v5885 = vunpack.c.h.s8.bf16 %v5693
    %v5886 = vunpack.c.h.s8.bf16 %v5694
    %v5887 = vunpack.c.h.s8.bf16 %v5695
    %v5888 = vunpack.c.h.s8.bf16 %v5696
    %v5889 = vunpack.c.h.s8.bf16 %v5697
    %v5890 = vunpack.c.h.s8.bf16 %v5698
    %v5891 = vunpack.c.l.s8.bf16 %v5699
    %v5892 = vunpack.c.l.s8.bf16 %v5700
    %v5893 = vunpack.c.l.s8.bf16 %v5701
    %v5894 = vunpack.c.l.s8.bf16 %v5702
    %v5895 = vunpack.c.l.s8.bf16 %v5703
    %v5896 = vunpack.c.l.s8.bf16 %v5704
    %v5897 = vunpack.c.h.s8.bf16 %v5699
    %v5898 = vunpack.c.h.s8.bf16 %v5700
    %v5899 = vunpack.c.h.s8.bf16 %v5701
    %v5900 = vunpack.c.h.s8.bf16 %v5702
    %v5901 = vunpack.c.h.s8.bf16 %v5703
    %v5902 = vunpack.c.h.s8.bf16 %v5704
    %v5903 = vunpack.c.l.s8.bf16 %v5705
    %v5904 = vunpack.c.l.s8.bf16 %v5706
    %v5905 = vunpack.c.l.s8.bf16 %v5707
    %v5906 = vunpack.c.l.s8.bf16 %v5708
    %v5907 = vunpack.c.l.s8.bf16 %v5709
    %v5908 = vunpack.c.l.s8.bf16 %v5710
    %v5909 = vunpack.c.h.s8.bf16 %v5705
    %v5910 = vunpack.c.h.s8.bf16 %v5706
    %v5911 = vunpack.c.h.s8.bf16 %v5707
    %v5912 = vunpack.c.h.s8.bf16 %v5708
    %v5913 = vunpack.c.h.s8.bf16 %v5709
    %v5914 = vunpack.c.h.s8.bf16 %v5710
    %v5915 = vunpack.c.l.s8.bf16 %v5711
    %v5916 = vunpack.c.l.s8.bf16 %v5712
    %v5917 = vunpack.c.l.s8.bf16 %v5713
    %v5918 = vunpack.c.l.s8.bf16 %v5714
    %v5919 = vunpack.c.l.s8.bf16 %v5715
    %v5920 = vunpack.c.l.s8.bf16 %v5716
    %v5921 = vunpack.c.h.s8.bf16 %v5711
    %v5922 = vunpack.c.h.s8.bf16 %v5712
    %v5923 = vunpack.c.h.s8.bf16 %v5713
    %v5924 = vunpack.c.h.s8.bf16 %v5714
    %v5925 = vunpack.c.h.s8.bf16 %v5715
    %v5926 = vunpack.c.h.s8.bf16 %v5716
    %v5927 = vunpack.c.l.s8.bf16 %v5717
    %v5928 = vunpack.c.l.s8.bf16 %v5718
    %v5929 = vunpack.c.l.s8.bf16 %v5719
    %v5930 = vunpack.c.l.s8.bf16 %v5720
    %v5931 = vunpack.c.l.s8.bf16 %v5721
    %v5932 = vunpack.c.l.s8.bf16 %v5722
    %v5933 = vunpack.c.h.s8.bf16 %v5717
    %v5934 = vunpack.c.h.s8.bf16 %v5718
    %v5935 = vunpack.c.h.s8.bf16 %v5719
    %v5936 = vunpack.c.h.s8.bf16 %v5720
    %v5937 = vunpack.c.h.s8.bf16 %v5721
    %v5938 = vunpack.c.h.s8.bf16 %v5722
    %v5939 = vunpack.c.l.s8.bf16 %v5723
    %v5940 = vunpack.c.l.s8.bf16 %v5724
    %v5941 = vunpack.c.l.s8.bf16 %v5725
    %v5942 = vunpack.c.l.s8.bf16 %v5726
    %v5943 = vunpack.c.l.s8.bf16 %v5727
    %v5944 = vunpack.c.l.s8.bf16 %v5728
    %v5945 = vunpack.c.h.s8.bf16 %v5723
    %v5946 = vunpack.c.h.s8.bf16 %v5724
    %v5947 = vunpack.c.h.s8.bf16 %v5725
    %v5948 = vunpack.c.h.s8.bf16 %v5726
    %v5949 = vunpack.c.h.s8.bf16 %v5727
    %v5950 = vunpack.c.h.s8.bf16 %v5728
    %v5951 = vunpack.c.l.s8.bf16 %v5729
    %v5952 = vunpack.c.l.s8.bf16 %v5730
    %v5953 = vunpack.c.l.s8.bf16 %v5731
    %v5954 = vunpack.c.l.s8.bf16 %v5732
    %v5955 = vunpack.c.l.s8.bf16 %v5733
    %v5956 = vunpack.c.l.s8.bf16 %v5734
    %v5957 = vunpack.c.h.s8.bf16 %v5729
    %v5958 = vunpack.c.h.s8.bf16 %v5730
    %v5959 = vunpack.c.h.s8.bf16 %v5731
    %v5960 = vunpack.c.h.s8.bf16 %v5732
    %v5961 = vunpack.c.h.s8.bf16 %v5733
    %v5962 = vunpack.c.h.s8.bf16 %v5734
    %v5963 = vunpack.c.l.s8.bf16 %v5735
    %v5964 = vunpack.c.l.s8.bf16 %v5736
    %v5965 = vunpack.c.l.s8.bf16 %v5737
    %v5966 = vunpack.c.l.s8.bf16 %v5738
    %v5967 = vunpack.c.l.s8.bf16 %v5739
    %v5968 = vunpack.c.l.s8.bf16 %v5740
    %v5969 = vunpack.c.h.s8.bf16 %v5735
    %v5970 = vunpack.c.h.s8.bf16 %v5736
    %v5971 = vunpack.c.h.s8.bf16 %v5737
    %v5972 = vunpack.c.h.s8.bf16 %v5738
    %v5973 = vunpack.c.h.s8.bf16 %v5739
    %v5974 = vunpack.c.h.s8.bf16 %v5740
    %v5975 = vunpack.c.l.s8.bf16 %v5741
    %v5976 = vunpack.c.l.s8.bf16 %v5742
    %v5977 = vunpack.c.l.s8.bf16 %v5743
    %v5978 = vunpack.c.l.s8.bf16 %v5744
    %v5979 = vunpack.c.l.s8.bf16 %v5745
    %v5980 = vunpack.c.l.s8.bf16 %v5746
    %v5981 = vunpack.c.h.s8.bf16 %v5741
    %v5982 = vunpack.c.h.s8.bf16 %v5742
    %v5983 = vunpack.c.h.s8.bf16 %v5743
    %v5984 = vunpack.c.h.s8.bf16 %v5744
    %v5985 = vunpack.c.h.s8.bf16 %v5745
    %v5986 = vunpack.c.h.s8.bf16 %v5746
    %v5987 = vunpack.c.l.s8.bf16 %v5747
    %v5988 = vunpack.c.l.s8.bf16 %v5748
    %v5989 = vunpack.c.l.s8.bf16 %v5749
    %v5990 = vunpack.c.l.s8.bf16 %v5750
    %v5991 = vunpack.c.l.s8.bf16 %v5751
    %v5992 = vunpack.c.l.s8.bf16 %v5752
    %v5993 = vunpack.c.h.s8.bf16 %v5747
    %v5994 = vunpack.c.h.s8.bf16 %v5748
    %v5995 = vunpack.c.h.s8.bf16 %v5749
    %v5996 = vunpack.c.h.s8.bf16 %v5750
    %v5997 = vunpack.c.h.s8.bf16 %v5751
    %v5998 = vunpack.c.h.s8.bf16 %v5752
    %v5999 = vunpack.c.l.s8.bf16 %v5753
    %v6000 = vunpack.c.l.s8.bf16 %v5754
    %v6001 = vunpack.c.l.s8.bf16 %v5755
    %v6002 = vunpack.c.l.s8.bf16 %v5756
    %v6003 = vunpack.c.l.s8.bf16 %v5757
    %v6004 = vunpack.c.l.s8.bf16 %v5758
    %v6005 = vunpack.c.h.s8.bf16 %v5753
    %v6006 = vunpack.c.h.s8.bf16 %v5754
    %v6007 = vunpack.c.h.s8.bf16 %v5755
    %v6008 = vunpack.c.h.s8.bf16 %v5756
    %v6009 = vunpack.c.h.s8.bf16 %v5757
    %v6010 = vunpack.c.h.s8.bf16 %v5758
    %v6011 = vunpack.c.l.s8.bf16 %v5759
    %v6012 = vunpack.c.l.s8.bf16 %v5760
    %v6013 = vunpack.c.l.s8.bf16 %v5761
    %v6014 = vunpack.c.l.s8.bf16 %v5762
    %v6015 = vunpack.c.l.s8.bf16 %v5763
    %v6016 = vunpack.c.l.s8.bf16 %v5764
    %v6017 = vunpack.c.h.s8.bf16 %v5759
    %v6018 = vunpack.c.h.s8.bf16 %v5760
    %v6019 = vunpack.c.h.s8.bf16 %v5761
    %v6020 = vunpack.c.h.s8.bf16 %v5762
    %v6021 = vunpack.c.h.s8.bf16 %v5763
    %v6022 = vunpack.c.h.s8.bf16 %v5764
    %v6023 = vunpack.c.l.s8.bf16 %v5765
    %v6024 = vunpack.c.l.s8.bf16 %v5766
    %v6025 = vunpack.c.l.s8.bf16 %v5767
    %v6026 = vunpack.c.l.s8.bf16 %v5768
    %v6027 = vunpack.c.l.s8.bf16 %v5769
    %v6028 = vunpack.c.l.s8.bf16 %v5770
    %v6029 = vunpack.c.h.s8.bf16 %v5765
    %v6030 = vunpack.c.h.s8.bf16 %v5766
    %v6031 = vunpack.c.h.s8.bf16 %v5767
    %v6032 = vunpack.c.h.s8.bf16 %v5768
    %v6033 = vunpack.c.h.s8.bf16 %v5769
    %v6034 = vunpack.c.h.s8.bf16 %v5770
    %v6035 = vunpack.c.l.s8.bf16 %v5771
    %v6036 = vunpack.c.l.s8.bf16 %v5772
    %v6037 = vunpack.c.l.s8.bf16 %v5773
    %v6038 = vunpack.c.l.s8.bf16 %v5774
    %v6039 = vunpack.c.l.s8.bf16 %v5775
    %v6040 = vunpack.c.l.s8.bf16 %v5776
    %v6041 = vunpack.c.h.s8.bf16 %v5771
    %v6042 = vunpack.c.h.s8.bf16 %v5772
    %v6043 = vunpack.c.h.s8.bf16 %v5773
    %v6044 = vunpack.c.h.s8.bf16 %v5774
    %v6045 = vunpack.c.h.s8.bf16 %v5775
    %v6046 = vunpack.c.h.s8.bf16 %v5776
    %v6047 = vunpack.c.l.s8.bf16 %v5777
    %v6048 = vunpack.c.l.s8.bf16 %v5778
    %v6049 = vunpack.c.l.s8.bf16 %v5779
    %v6050 = vunpack.c.l.s8.bf16 %v5780
    %v6051 = vunpack.c.l.s8.bf16 %v5781
    %v6052 = vunpack.c.l.s8.bf16 %v5782
    %v6053 = vunpack.c.h.s8.bf16 %v5777
    %v6054 = vunpack.c.h.s8.bf16 %v5778
    %v6055 = vunpack.c.h.s8.bf16 %v5779
    %v6056 = vunpack.c.h.s8.bf16 %v5780
    %v6057 = vunpack.c.h.s8.bf16 %v5781
    %v6058 = vunpack.c.h.s8.bf16 %v5782
    %v6059 = vunpack.c.l.s8.bf16 %v5783
    %v6060 = vunpack.c.l.s8.bf16 %v5784
    %v6061 = vunpack.c.l.s8.bf16 %v5785
    %v6062 = vunpack.c.l.s8.bf16 %v5786
    %v6063 = vunpack.c.l.s8.bf16 %v5787
    %v6064 = vunpack.c.l.s8.bf16 %v5788
    %v6065 = vunpack.c.h.s8.bf16 %v5783
    %v6066 = vunpack.c.h.s8.bf16 %v5784
    %v6067 = vunpack.c.h.s8.bf16 %v5785
    %v6068 = vunpack.c.h.s8.bf16 %v5786
    %v6069 = vunpack.c.h.s8.bf16 %v5787
    %v6070 = vunpack.c.h.s8.bf16 %v5788
    %v6071 = vunpack.c.l.s8.bf16 %v5789
    %v6072 = vunpack.c.l.s8.bf16 %v5790
    %v6073 = vunpack.c.l.s8.bf16 %v5791
    %v6074 = vunpack.c.l.s8.bf16 %v5792
    %v6075 = vunpack.c.l.s8.bf16 %v5793
    %v6076 = vunpack.c.l.s8.bf16 %v5794
    %v6077 = vunpack.c.h.s8.bf16 %v5789
    %v6078 = vunpack.c.h.s8.bf16 %v5790
    %v6079 = vunpack.c.h.s8.bf16 %v5791
    %v6080 = vunpack.c.h.s8.bf16 %v5792
    %v6081 = vunpack.c.h.s8.bf16 %v5793
    %v6082 = vunpack.c.h.s8.bf16 %v5794
    %v6083 = vpack.c.bf16 %v5644, %v5644
    %v6084 = vpack.c.bf16 %v5645, %v5645
    %v6085 = vpack.c.bf16 %v5646, %v5646
    %v6086 = vpack.c.bf16 %v5647, %v5647
    %v6087 = vpack.c.bf16 %v5648, %v5648
    %v6088 = vpack.c.bf16 %v5649, %v5649
    %6089 = vmatprep.subr.bf16.mxu0 %v5796
    %6090 = vmatpush1.bf16.msra.mxu0 %v5795
    %6091 = vmatprep.subr.bf16.mxu0 %v5802
    %6092 = vmatpush1.bf16.msra.mxu0 %v5801
    %6093 = vmatprep.subr.bf16.mxu0 %v5808
    %6094 = vmatpush1.bf16.msra.mxu0 %v5807
    %6095 = vmatprep.subr.bf16.mxu0 %v5814
    %6096 = vmatpush1.bf16.msra.mxu0 %v5813
    %6097 = vmatprep.subr.bf16.mxu0 %v5820
    %6098 = vmatpush1.bf16.msra.mxu0 %v5819
    %6099 = vmatprep.subr.bf16.mxu0 %v5826
    %6100 = vmatpush1.bf16.msra.mxu0 %v5825
    %6101 = vmatprep.subr.bf16.mxu0 %v5832
    %6102 = vmatpush1.bf16.msra.mxu0 %v5831
    %6103 = vmatprep.subr.bf16.mxu0 %v5838
    %6104 = vmatpush1.bf16.msra.mxu0 %v5837
    %6105 = vmatprep.subr.bf16.mxu0 %v5844
    %6106 = vmatpush1.bf16.msra.mxu0 %v5843
    %6107 = vmatprep.subr.bf16.mxu0 %v5850
    %6108 = vmatpush1.bf16.msra.mxu0 %v5849
    %6109 = vmatprep.subr.bf16.mxu0 %v5856
    %6110 = vmatpush1.bf16.msra.mxu0 %v5855
    %6111 = vmatprep.subr.bf16.mxu0 %v5862
    %6112 = vmatpush1.bf16.msra.mxu0 %v5861
    %6113 = vmatprep.subr.bf16.mxu0 %v5868
    %6114 = vmatpush1.bf16.msra.mxu0 %v5867
    %6115 = vmatprep.subr.bf16.mxu0 %v5874
    %6116 = vmatpush1.bf16.msra.mxu0 %v5873
    %6117 = vmatprep.subr.bf16.mxu0 %v5880
    %6118 = vmatpush1.bf16.msra.mxu0 %v5879
    %6119 = vmatprep.subr.bf16.mxu0 %v5886
    %6120 = vmatpush1.bf16.msra.mxu0 %v5885
    %6121 = vmatprep.mubr.bf16.mxu0 %v6084
    %6122 = vmatmul.mubr.bf16.gmra.mrb[0].mxu0 %v6083
    %v6123 = vpop.f32.mrb[0].mxu0
    %v6124 = vadd.f32 0.0, %v6123
    %v6125 = vpop.f32.mrb[0].mxu0
    %v6126 = vadd.f32 0.0, %v6125
    %v6127 = vpop.f32.mrb[0].mxu0
    %v6128 = vpop.f32.mrb[0].mxu0
    %6129 = vdwg.mxu0
    %6130 = vmatprep.subr.bf16.mxu0 %v5892
    %6131 = vmatpush1.bf16.msra.mxu0 %v5891
    %6132 = vmatprep.subr.bf16.mxu0 %v5898
    %6133 = vmatpush1.bf16.msra.mxu0 %v5897
    %6134 = vmatprep.subr.bf16.mxu0 %v5904
    %6135 = vmatpush1.bf16.msra.mxu0 %v5903
    %6136 = vmatprep.subr.bf16.mxu0 %v5910
    %6137 = vmatpush1.bf16.msra.mxu0 %v5909
    %6138 = vmatprep.subr.bf16.mxu0 %v5916
    %6139 = vmatpush1.bf16.msra.mxu0 %v5915
    %6140 = vmatprep.subr.bf16.mxu0 %v5922
    %6141 = vmatpush1.bf16.msra.mxu0 %v5921
    %6142 = vmatprep.subr.bf16.mxu0 %v5928
    %6143 = vmatpush1.bf16.msra.mxu0 %v5927
    %6144 = vmatprep.subr.bf16.mxu0 %v5934
    %6145 = vmatpush1.bf16.msra.mxu0 %v5933
    %6146 = vmatprep.subr.bf16.mxu0 %v5940
    %6147 = vmatpush1.bf16.msra.mxu0 %v5939
    %6148 = vmatprep.subr.bf16.mxu0 %v5946
    %6149 = vmatpush1.bf16.msra.mxu0 %v5945
    %6150 = vmatprep.subr.bf16.mxu0 %v5952
    %6151 = vmatpush1.bf16.msra.mxu0 %v5951
    %6152 = vmatprep.subr.bf16.mxu0 %v5958
    %6153 = vmatpush1.bf16.msra.mxu0 %v5957
    %6154 = vmatprep.subr.bf16.mxu0 %v5964
    %6155 = vmatpush1.bf16.msra.mxu0 %v5963
    %6156 = vmatprep.subr.bf16.mxu0 %v5970
    %6157 = vmatpush1.bf16.msra.mxu0 %v5969
    %6158 = vmatprep.subr.bf16.mxu0 %v5976
    %6159 = vmatpush1.bf16.msra.mxu0 %v5975
    %6160 = vmatprep.subr.bf16.mxu0 %v5982
    %6161 = vmatpush1.bf16.msra.mxu0 %v5981
    %6162 = vmatprep.mubr.bf16.mxu0 %v6086
    %6163 = vmatmul.mubr.bf16.gmra.mrb[0].mxu0 %v6085
    %v6164 = vpop.f32.mrb[0].mxu0
    %v6165 = vadd.f32 %v6124, %v6164
    %v6166 = vpop.f32.mrb[0].mxu0
    %v6167 = vadd.f32 %v6126, %v6166
    %v6168 = vpop.f32.mrb[0].mxu0
    %v6169 = vpop.f32.mrb[0].mxu0
    %6170 = vdwg.mxu0
    %6171 = vmatprep.subr.bf16.mxu0 %v5988
    %6172 = vmatpush1.bf16.msra.mxu0 %v5987
    %6173 = vmatprep.subr.bf16.mxu0 %v5994
    %6174 = vmatpush1.bf16.msra.mxu0 %v5993
    %6175 = vmatprep.subr.bf16.mxu0 %v6000
    %6176 = vmatpush1.bf16.msra.mxu0 %v5999
    %6177 = vmatprep.subr.bf16.mxu0 %v6006
    %6178 = vmatpush1.bf16.msra.mxu0 %v6005
    %6179 = vmatprep.subr.bf16.mxu0 %v6012
    %6180 = vmatpush1.bf16.msra.mxu0 %v6011
    %6181 = vmatprep.subr.bf16.mxu0 %v6018
    %6182 = vmatpush1.bf16.msra.mxu0 %v6017
    %6183 = vmatprep.subr.bf16.mxu0 %v6024
    %6184 = vmatpush1.bf16.msra.mxu0 %v6023
    %6185 = vmatprep.subr.bf16.mxu0 %v6030
    %6186 = vmatpush1.bf16.msra.mxu0 %v6029
    %6187 = vmatprep.subr.bf16.mxu0 %v6036
    %6188 = vmatpush1.bf16.msra.mxu0 %v6035
    %6189 = vmatprep.subr.bf16.mxu0 %v6042
    %6190 = vmatpush1.bf16.msra.mxu0 %v6041
    %6191 = vmatprep.subr.bf16.mxu0 %v6048
    %6192 = vmatpush1.bf16.msra.mxu0 %v6047
    %6193 = vmatprep.subr.bf16.mxu0 %v6054
    %6194 = vmatpush1.bf16.msra.mxu0 %v6053
    %6195 = vmatprep.subr.bf16.mxu0 %v6060
    %6196 = vmatpush1.bf16.msra.mxu0 %v6059
    %6197 = vmatprep.subr.bf16.mxu0 %v6066
    %6198 = vmatpush1.bf16.msra.mxu0 %v6065
    %6199 = vmatprep.subr.bf16.mxu0 %v6072
    %6200 = vmatpush1.bf16.msra.mxu0 %v6071
    %6201 = vmatprep.subr.bf16.mxu0 %v6078
    %6202 = vmatpush1.bf16.msra.mxu0 %v6077
    %6203 = vmatprep.mubr.bf16.mxu0 %v6088
    %6204 = vmatmul.mubr.bf16.gmra.mrb[0].mxu0 %v6087
    %v6205 = vpop.f32.mrb[0].mxu0
    %v6206 = vadd.f32 %v6165, %v6205
    %v6207 = vpop.f32.mrb[0].mxu0
    %v6208 = vadd.f32 %v6167, %v6207
    %v6209 = vpop.f32.mrb[0].mxu0
    %v6210 = vpop.f32.mrb[0].mxu0
    %6211 = vdwg.mxu0
    %6212 = vmatprep.subr.bf16.mxu0 %v5798
    %6213 = vmatpush1.bf16.msra.mxu0 %v5797
    %6214 = vmatprep.subr.bf16.mxu0 %v5804
    %6215 = vmatpush1.bf16.msra.mxu0 %v5803
    %6216 = vmatprep.subr.bf16.mxu0 %v5810
    %6217 = vmatpush1.bf16.msra.mxu0 %v5809
    %6218 = vmatprep.subr.bf16.mxu0 %v5816
    %6219 = vmatpush1.bf16.msra.mxu0 %v5815
    %6220 = vmatprep.subr.bf16.mxu0 %v5822
    %6221 = vmatpush1.bf16.msra.mxu0 %v5821
    %6222 = vmatprep.subr.bf16.mxu0 %v5828
    %6223 = vmatpush1.bf16.msra.mxu0 %v5827
    %6224 = vmatprep.subr.bf16.mxu0 %v5834
    %6225 = vmatpush1.bf16.msra.mxu0 %v5833
    %6226 = vmatprep.subr.bf16.mxu0 %v5840
    %6227 = vmatpush1.bf16.msra.mxu0 %v5839
    %6228 = vmatprep.subr.bf16.mxu0 %v5846
    %6229 = vmatpush1.bf16.msra.mxu0 %v5845
    %6230 = vmatprep.subr.bf16.mxu0 %v5852
    %6231 = vmatpush1.bf16.msra.mxu0 %v5851
    %6232 = vmatprep.subr.bf16.mxu0 %v5858
    %6233 = vmatpush1.bf16.msra.mxu0 %v5857
    %6234 = vmatprep.subr.bf16.mxu0 %v5864
    %6235 = vmatpush1.bf16.msra.mxu0 %v5863
    %6236 = vmatprep.subr.bf16.mxu0 %v5870
    %6237 = vmatpush1.bf16.msra.mxu0 %v5869
    %6238 = vmatprep.subr.bf16.mxu0 %v5876
    %6239 = vmatpush1.bf16.msra.mxu0 %v5875
    %6240 = vmatprep.subr.bf16.mxu0 %v5882
    %6241 = vmatpush1.bf16.msra.mxu0 %v5881
    %6242 = vmatprep.subr.bf16.mxu0 %v5888
    %6243 = vmatpush1.bf16.msra.mxu0 %v5887
    %6244 = vmatprep.mubr.bf16.mxu0 %v6084
    %6245 = vmatmul.mubr.bf16.gmra.mrb[0].mxu0 %v6083
    %v6246 = vpop.f32.mrb[0].mxu0
    %v6247 = vadd.f32 0.0, %v6246
    %v6248 = vpop.f32.mrb[0].mxu0
    %v6249 = vadd.f32 0.0, %v6248
    %v6250 = vpop.f32.mrb[0].mxu0
    %v6251 = vpop.f32.mrb[0].mxu0
    %6252 = vdwg.mxu0
    %6253 = vmatprep.subr.bf16.mxu0 %v5894
    %6254 = vmatpush1.bf16.msra.mxu0 %v5893
    %6255 = vmatprep.subr.bf16.mxu0 %v5900
    %6256 = vmatpush1.bf16.msra.mxu0 %v5899
    %6257 = vmatprep.subr.bf16.mxu0 %v5906
    %6258 = vmatpush1.bf16.msra.mxu0 %v5905
    %6259 = vmatprep.subr.bf16.mxu0 %v5912
    %6260 = vmatpush1.bf16.msra.mxu0 %v5911
    %6261 = vmatprep.subr.bf16.mxu0 %v5918
    %6262 = vmatpush1.bf16.msra.mxu0 %v5917
    %6263 = vmatprep.subr.bf16.mxu0 %v5924
    %6264 = vmatpush1.bf16.msra.mxu0 %v5923
    %6265 = vmatprep.subr.bf16.mxu0 %v5930
    %6266 = vmatpush1.bf16.msra.mxu0 %v5929
    %6267 = vmatprep.subr.bf16.mxu0 %v5936
    %6268 = vmatpush1.bf16.msra.mxu0 %v5935
    %6269 = vmatprep.subr.bf16.mxu0 %v5942
    %6270 = vmatpush1.bf16.msra.mxu0 %v5941
    %6271 = vmatprep.subr.bf16.mxu0 %v5948
    %6272 = vmatpush1.bf16.msra.mxu0 %v5947
    %6273 = vmatprep.subr.bf16.mxu0 %v5954
    %6274 = vmatpush1.bf16.msra.mxu0 %v5953
    %6275 = vmatprep.subr.bf16.mxu0 %v5960
    %6276 = vmatpush1.bf16.msra.mxu0 %v5959
    %6277 = vmatprep.subr.bf16.mxu0 %v5966
    %6278 = vmatpush1.bf16.msra.mxu0 %v5965
    %6279 = vmatprep.subr.bf16.mxu0 %v5972
    %6280 = vmatpush1.bf16.msra.mxu0 %v5971
    %6281 = vmatprep.subr.bf16.mxu0 %v5978
    %6282 = vmatpush1.bf16.msra.mxu0 %v5977
    %6283 = vmatprep.subr.bf16.mxu0 %v5984
    %6284 = vmatpush1.bf16.msra.mxu0 %v5983
    %6285 = vmatprep.mubr.bf16.mxu0 %v6086
    %6286 = vmatmul.mubr.bf16.gmra.mrb[0].mxu0 %v6085
    %v6287 = vpop.f32.mrb[0].mxu0
    %v6288 = vadd.f32 %v6247, %v6287
    %v6289 = vpop.f32.mrb[0].mxu0
    %v6290 = vadd.f32 %v6249, %v6289
    %v6291 = vpop.f32.mrb[0].mxu0
    %v6292 = vpop.f32.mrb[0].mxu0
    %6293 = vdwg.mxu0
    %6294 = vmatprep.subr.bf16.mxu0 %v5990
    %6295 = vmatpush1.bf16.msra.mxu0 %v5989
    %6296 = vmatprep.subr.bf16.mxu0 %v5996
    %6297 = vmatpush1.bf16.msra.mxu0 %v5995
    %6298 = vmatprep.subr.bf16.mxu0 %v6002
    %6299 = vmatpush1.bf16.msra.mxu0 %v6001
    %6300 = vmatprep.subr.bf16.mxu0 %v6008
    %6301 = vmatpush1.bf16.msra.mxu0 %v6007
    %6302 = vmatprep.subr.bf16.mxu0 %v6014
    %6303 = vmatpush1.bf16.msra.mxu0 %v6013
    %6304 = vmatprep.subr.bf16.mxu0 %v6020
    %6305 = vmatpush1.bf16.msra.mxu0 %v6019
    %6306 = vmatprep.subr.bf16.mxu0 %v6026
    %6307 = vmatpush1.bf16.msra.mxu0 %v6025
    %6308 = vmatprep.subr.bf16.mxu0 %v6032
    %6309 = vmatpush1.bf16.msra.mxu0 %v6031
    %6310 = vmatprep.subr.bf16.mxu0 %v6038
    %6311 = vmatpush1.bf16.msra.mxu0 %v6037
    %6312 = vmatprep.subr.bf16.mxu0 %v6044
    %6313 = vmatpush1.bf16.msra.mxu0 %v6043
    %6314 = vmatprep.subr.bf16.mxu0 %v6050
    %6315 = vmatpush1.bf16.msra.mxu0 %v6049
    %6316 = vmatprep.subr.bf16.mxu0 %v6056
    %6317 = vmatpush1.bf16.msra.mxu0 %v6055
    %6318 = vmatprep.subr.bf16.mxu0 %v6062
    %6319 = vmatpush1.bf16.msra.mxu0 %v6061
    %6320 = vmatprep.subr.bf16.mxu0 %v6068
    %6321 = vmatpush1.bf16.msra.mxu0 %v6067
    %6322 = vmatprep.subr.bf16.mxu0 %v6074
    %6323 = vmatpush1.bf16.msra.mxu0 %v6073
    %6324 = vmatprep.subr.bf16.mxu0 %v6080
    %6325 = vmatpush1.bf16.msra.mxu0 %v6079
    %6326 = vmatprep.mubr.bf16.mxu0 %v6088
    %6327 = vmatmul.mubr.bf16.gmra.mrb[0].mxu0 %v6087
    %v6328 = vpop.f32.mrb[0].mxu0
    %v6329 = vadd.f32 %v6288, %v6328
    %v6330 = vpop.f32.mrb[0].mxu0
    %v6331 = vadd.f32 %v6290, %v6330
    %v6332 = vpop.f32.mrb[0].mxu0
    %v6333 = vpop.f32.mrb[0].mxu0
    %6334 = vdwg.mxu0
    %6335 = vmatprep.subr.bf16.mxu0 %v5800
    %6336 = vmatpush1.bf16.msra.mxu0 %v5799
    %6337 = vmatprep.subr.bf16.mxu0 %v5806
    %6338 = vmatpush1.bf16.msra.mxu0 %v5805
    %6339 = vmatprep.subr.bf16.mxu0 %v5812
    %6340 = vmatpush1.bf16.msra.mxu0 %v5811
    %6341 = vmatprep.subr.bf16.mxu0 %v5818
    %6342 = vmatpush1.bf16.msra.mxu0 %v5817
    %6343 = vmatprep.subr.bf16.mxu0 %v5824
    %6344 = vmatpush1.bf16.msra.mxu0 %v5823
    %6345 = vmatprep.subr.bf16.mxu0 %v5830
    %6346 = vmatpush1.bf16.msra.mxu0 %v5829
    %6347 = vmatprep.subr.bf16.mxu0 %v5836
    %6348 = vmatpush1.bf16.msra.mxu0 %v5835
    %6349 = vmatprep.subr.bf16.mxu0 %v5842
    %6350 = vmatpush1.bf16.msra.mxu0 %v5841
    %6351 = vmatprep.subr.bf16.mxu0 %v5848
    %6352 = vmatpush1.bf16.msra.mxu0 %v5847
    %6353 = vmatprep.subr.bf16.mxu0 %v5854
    %6354 = vmatpush1.bf16.msra.mxu0 %v5853
    %6355 = vmatprep.subr.bf16.mxu0 %v5860
    %6356 = vmatpush1.bf16.msra.mxu0 %v5859
    %6357 = vmatprep.subr.bf16.mxu0 %v5866
    %6358 = vmatpush1.bf16.msra.mxu0 %v5865
    %6359 = vmatprep.subr.bf16.mxu0 %v5872
    %6360 = vmatpush1.bf16.msra.mxu0 %v5871
    %6361 = vmatprep.subr.bf16.mxu0 %v5878
    %6362 = vmatpush1.bf16.msra.mxu0 %v5877
    %6363 = vmatprep.subr.bf16.mxu0 %v5884
    %6364 = vmatpush1.bf16.msra.mxu0 %v5883
    %6365 = vmatprep.subr.bf16.mxu0 %v5890
    %6366 = vmatpush1.bf16.msra.mxu0 %v5889
    %6367 = vmatprep.mubr.bf16.mxu0 %v6084
    %6368 = vmatmul.mubr.bf16.gmra.mrb[0].mxu0 %v6083
    %v6369 = vpop.f32.mrb[0].mxu0
    %v6370 = vadd.f32 0.0, %v6369
    %v6371 = vpop.f32.mrb[0].mxu0
    %v6372 = vadd.f32 0.0, %v6371
    %v6373 = vpop.f32.mrb[0].mxu0
    %v6374 = vpop.f32.mrb[0].mxu0
    %6375 = vdwg.mxu0
    %6376 = vmatprep.subr.bf16.mxu0 %v5896
    %6377 = vmatpush1.bf16.msra.mxu0 %v5895
    %6378 = vmatprep.subr.bf16.mxu0 %v5902
    %6379 = vmatpush1.bf16.msra.mxu0 %v5901
    %6380 = vmatprep.subr.bf16.mxu0 %v5908
    %6381 = vmatpush1.bf16.msra.mxu0 %v5907
    %6382 = vmatprep.subr.bf16.mxu0 %v5914
    %6383 = vmatpush1.bf16.msra.mxu0 %v5913
    %6384 = vmatprep.subr.bf16.mxu0 %v5920
    %6385 = vmatpush1.bf16.msra.mxu0 %v5919
    %6386 = vmatprep.subr.bf16.mxu0 %v5926
    %6387 = vmatpush1.bf16.msra.mxu0 %v5925
    %6388 = vmatprep.subr.bf16.mxu0 %v5932
    %6389 = vmatpush1.bf16.msra.mxu0 %v5931
    %6390 = vmatprep.subr.bf16.mxu0 %v5938
    %6391 = vmatpush1.bf16.msra.mxu0 %v5937
    %6392 = vmatprep.subr.bf16.mxu0 %v5944
    %6393 = vmatpush1.bf16.msra.mxu0 %v5943
    %6394 = vmatprep.subr.bf16.mxu0 %v5950
    %6395 = vmatpush1.bf16.msra.mxu0 %v5949
    %6396 = vmatprep.subr.bf16.mxu0 %v5956
    %6397 = vmatpush1.bf16.msra.mxu0 %v5955
    %6398 = vmatprep.subr.bf16.mxu0 %v5962
    %6399 = vmatpush1.bf16.msra.mxu0 %v5961
    %6400 = vmatprep.subr.bf16.mxu0 %v5968
    %6401 = vmatpush1.bf16.msra.mxu0 %v5967
    %6402 = vmatprep.subr.bf16.mxu0 %v5974
    %6403 = vmatpush1.bf16.msra.mxu0 %v5973
    %6404 = vmatprep.subr.bf16.mxu0 %v5980
    %6405 = vmatpush1.bf16.msra.mxu0 %v5979
    %6406 = vmatprep.subr.bf16.mxu0 %v5986
    %6407 = vmatpush1.bf16.msra.mxu0 %v5985
    %6408 = vmatprep.mubr.bf16.mxu0 %v6086
    %6409 = vmatmul.mubr.bf16.gmra.mrb[0].mxu0 %v6085
    %v6410 = vpop.f32.mrb[0].mxu0
    %v6411 = vadd.f32 %v6370, %v6410
    %v6412 = vpop.f32.mrb[0].mxu0
    %v6413 = vadd.f32 %v6372, %v6412
    %v6414 = vpop.f32.mrb[0].mxu0
    %v6415 = vpop.f32.mrb[0].mxu0
    %6416 = vdwg.mxu0
    %6417 = vmatprep.subr.bf16.mxu0 %v5992
    %6418 = vmatpush1.bf16.msra.mxu0 %v5991
    %6419 = vmatprep.subr.bf16.mxu0 %v5998
    %6420 = vmatpush1.bf16.msra.mxu0 %v5997
    %6421 = vmatprep.subr.bf16.mxu0 %v6004
    %6422 = vmatpush1.bf16.msra.mxu0 %v6003
    %6423 = vmatprep.subr.bf16.mxu0 %v6010
    %6424 = vmatpush1.bf16.msra.mxu0 %v6009
    %6425 = vmatprep.subr.bf16.mxu0 %v6016
    %6426 = vmatpush1.bf16.msra.mxu0 %v6015
    %6427 = vmatprep.subr.bf16.mxu0 %v6022
    %6428 = vmatpush1.bf16.msra.mxu0 %v6021
    %6429 = vmatprep.subr.bf16.mxu0 %v6028
    %6430 = vmatpush1.bf16.msra.mxu0 %v6027
    %6431 = vmatprep.subr.bf16.mxu0 %v6034
    %6432 = vmatpush1.bf16.msra.mxu0 %v6033
    %6433 = vmatprep.subr.bf16.mxu0 %v6040
    %6434 = vmatpush1.bf16.msra.mxu0 %v6039
    %6435 = vmatprep.subr.bf16.mxu0 %v6046
    %6436 = vmatpush1.bf16.msra.mxu0 %v6045
    %6437 = vmatprep.subr.bf16.mxu0 %v6052
    %6438 = vmatpush1.bf16.msra.mxu0 %v6051
    %6439 = vmatprep.subr.bf16.mxu0 %v6058
    %6440 = vmatpush1.bf16.msra.mxu0 %v6057
    %6441 = vmatprep.subr.bf16.mxu0 %v6064
    %6442 = vmatpush1.bf16.msra.mxu0 %v6063
    %6443 = vmatprep.subr.bf16.mxu0 %v6070
    %6444 = vmatpush1.bf16.msra.mxu0 %v6069
    %6445 = vmatprep.subr.bf16.mxu0 %v6076
    %6446 = vmatpush1.bf16.msra.mxu0 %v6075
    %6447 = vmatprep.subr.bf16.mxu0 %v6082
    %6448 = vmatpush1.bf16.msra.mxu0 %v6081
    %6449 = vmatprep.mubr.bf16.mxu0 %v6088
    %6450 = vmatmul.mubr.bf16.gmra.mrb[0].mxu0 %v6087
    %v6451 = vpop.f32.mrb[0].mxu0
    %v6452 = vadd.f32 %v6411, %v6451
    %v6453 = vpop.f32.mrb[0].mxu0
    %v6454 = vadd.f32 %v6413, %v6453
    %v6455 = vpop.f32.mrb[0].mxu0
    %v6456 = vpop.f32.mrb[0].mxu0
    %6457 = vdwg.mxu0
    %v6459 = vlaneseq
    %v6460 = vshrl.u32 %v6459, 7
    %v6461 = vsub.s32 0, %v6460
    %v6462 = vrot.slane %v5650, %v6461
    %v6463 = vlaneseq
    %v6464 = vshrl.u32 %v6463, 7
    %v6465 = vsub.s32 1, %v6464
    %v6466 = vrot.slane %v5650, %v6465
    %v6467 = vlaneseq
    %v6468 = vshrl.u32 %v6467, 7
    %v6469 = vsub.s32 2, %v6468
    %v6470 = vrot.slane %v5650, %v6469
    %v6471 = vlaneseq
    %v6472 = vshrl.u32 %v6471, 7
    %v6473 = vsub.s32 3, %v6472
    %v6474 = vrot.slane %v5650, %v6473
    %v6475 = vlaneseq
    %v6476 = vshrl.u32 %v6475, 7
    %v6477 = vsub.s32 4, %v6476
    %v6478 = vrot.slane %v5650, %v6477
    %v6479 = vlaneseq
    %v6480 = vshrl.u32 %v6479, 7
    %v6481 = vsub.s32 5, %v6480
    %v6482 = vrot.slane %v5650, %v6481
    %v6489 = vmul.f32 %v6206, %v6462
    %v6490 = vmul.f32 %v6208, %v6466
    %v6491 = vmul.f32 %v6329, %v6470
    %v6492 = vmul.f32 %v6331, %v6474
    %v6493 = vmul.f32 %v6452, %v6478
    %v6494 = vmul.f32 %v6454, %v6482
    %v6495 = vld [vmem:[#allocation2 + $0x30] sm:$0x3f]
    %v6497 = vlaneseq
    %v6498 = vshrl.u32 %v6497, 7
    %v6499 = vsub.s32 0, %v6498
    %v6500 = vrot.slane %v6495, %v6499
    %v6501 = vlaneseq
    %v6502 = vshrl.u32 %v6501, 7
    %v6503 = vsub.s32 1, %v6502
    %v6504 = vrot.slane %v6495, %v6503
    %v6505 = vlaneseq
    %v6506 = vshrl.u32 %v6505, 7
    %v6507 = vsub.s32 2, %v6506
    %v6508 = vrot.slane %v6495, %v6507
    %v6509 = vlaneseq
    %v6510 = vshrl.u32 %v6509, 7
    %v6511 = vsub.s32 3, %v6510
    %v6512 = vrot.slane %v6495, %v6511
    %v6513 = vlaneseq
    %v6514 = vshrl.u32 %v6513, 7
    %v6515 = vsub.s32 4, %v6514
    %v6516 = vrot.slane %v6495, %v6515
    %v6517 = vlaneseq
    %v6518 = vshrl.u32 %v6517, 7
    %v6519 = vsub.s32 5, %v6518
    %v6520 = vrot.slane %v6495, %v6519
    %v6527 = vadd.f32 %v6489, %v6500
    %v6528 = vadd.f32 %v6490, %v6504
    %v6529 = vadd.f32 %v6491, %v6508
    %v6530 = vadd.f32 %v6492, %v6512
    %v6531 = vadd.f32 %v6493, %v6516
    %v6532 = vadd.f32 %v6494, %v6520
    %v6533 = vld [vmem:[#allocation2 + $0x86] sm:$0x3f]
    %v6534 = vld [vmem:[#allocation13] sm:$0xff]
    %v6535 = vld [vmem:[#allocation13 + $0x8] sm:$0xff]
    %v6536 = vld [vmem:[#allocation13 + $0x10] sm:$0xff]
    %v6537 = vld [vmem:[#allocation13 + $0x18] sm:$0xff]
    %v6538 = vld [vmem:[#allocation13 + $0x20] sm:$0xff]
    %v6539 = vld [vmem:[#allocation13 + $0x28] sm:$0xff]
    %v6540 = vld [vmem:[#allocation13 + $0x30] sm:$0xff]
    %v6541 = vld [vmem:[#allocation13 + $0x38] sm:$0xff]
    %v6542 = vld [vmem:[#allocation13 + $0x40] sm:$0xff]
    %v6543 = vld [vmem:[#allocation13 + $0x48] sm:$0xff]
    %v6544 = vld [vmem:[#allocation13 + $0x50] sm:$0xff]
    %v6545 = vld [vmem:[#allocation13 + $0x58] sm:$0xff]
    %v6546 = vld [vmem:[#allocation13 + $0x60] sm:$0xff]
    %v6547 = vld [vmem:[#allocation13 + $0x68] sm:$0xff]
    %v6548 = vld [vmem:[#allocation13 + $0x70] sm:$0xff]
    %v6549 = vld [vmem:[#allocation13 + $0x78] sm:$0xff]
    %v6550 = vld [vmem:[#allocation13 + $0x80] sm:$0xff]
    %v6551 = vld [vmem:[#allocation13 + $0x88] sm:$0xff]
    %v6552 = vld [vmem:[#allocation13 + $0x90] sm:$0xff]
    %v6553 = vld [vmem:[#allocation13 + $0x98] sm:$0xff]
    %v6554 = vld [vmem:[#allocation13 + $0xa0] sm:$0xff]
    %v6555 = vld [vmem:[#allocation13 + $0xa8] sm:$0xff]
    %v6556 = vld [vmem:[#allocation13 + $0xb0] sm:$0xff]
    %v6557 = vld [vmem:[#allocation13 + $0xb8] sm:$0xff]
    %v6558 = vld [vmem:[#allocation13 + $0xc0] sm:$0xff]
    %v6559 = vld [vmem:[#allocation13 + $0xc8] sm:$0xff]
    %v6560 = vld [vmem:[#allocation13 + $0xd0] sm:$0xff]
    %v6561 = vld [vmem:[#allocation13 + $0xd8] sm:$0xff]
    %v6562 = vld [vmem:[#allocation13 + $0xe0] sm:$0xff]
    %v6563 = vld [vmem:[#allocation13 + $0xe8] sm:$0xff]
    %v6564 = vld [vmem:[#allocation13 + $0xf0] sm:$0xff]
    %v6565 = vld [vmem:[#allocation13 + $0xf8] sm:$0xff]
    %v6566 = vld [vmem:[#allocation13 + $0x100] sm:$0xff]
    %v6567 = vld [vmem:[#allocation13 + $0x108] sm:$0xff]
    %v6568 = vld [vmem:[#allocation13 + $0x110] sm:$0xff]
    %v6569 = vld [vmem:[#allocation13 + $0x118] sm:$0xff]
    %v6570 = vld [vmem:[#allocation13 + $0x120] sm:$0xff]
    %v6571 = vld [vmem:[#allocation13 + $0x128] sm:$0xff]
    %v6572 = vld [vmem:[#allocation13 + $0x130] sm:$0xff]
    %v6573 = vld [vmem:[#allocation13 + $0x138] sm:$0xff]
    %v6574 = vld [vmem:[#allocation13 + $0x140] sm:$0xff]
    %v6575 = vld [vmem:[#allocation13 + $0x148] sm:$0xff]
    %v6576 = vld [vmem:[#allocation13 + $0x150] sm:$0xff]
    %v6577 = vld [vmem:[#allocation13 + $0x158] sm:$0xff]
    %v6578 = vld [vmem:[#allocation13 + $0x160] sm:$0xff]
    %v6579 = vld [vmem:[#allocation13 + $0x168] sm:$0xff]
    %v6580 = vld [vmem:[#allocation13 + $0x170] sm:$0xff]
    %v6581 = vld [vmem:[#allocation13 + $0x178] sm:$0xff]
    %v6582 = vld [vmem:[#allocation13 + $0x180] sm:$0xff]
    %v6583 = vld [vmem:[#allocation13 + $0x188] sm:$0xff]
    %v6584 = vld [vmem:[#allocation13 + $0x190] sm:$0xff]
    %v6585 = vld [vmem:[#allocation13 + $0x198] sm:$0xff]
    %v6586 = vld [vmem:[#allocation13 + $0x1a0] sm:$0xff]
    %v6587 = vld [vmem:[#allocation13 + $0x1a8] sm:$0xff]
    %v6588 = vld [vmem:[#allocation13 + $0x1b0] sm:$0xff]
    %v6589 = vld [vmem:[#allocation13 + $0x1b8] sm:$0xff]
    %v6590 = vld [vmem:[#allocation13 + $0x1c0] sm:$0xff]
    %v6591 = vld [vmem:[#allocation13 + $0x1c8] sm:$0xff]
    %v6592 = vld [vmem:[#allocation13 + $0x1d0] sm:$0xff]
    %v6593 = vld [vmem:[#allocation13 + $0x1d8] sm:$0xff]
    %v6594 = vld [vmem:[#allocation13 + $0x1e0] sm:$0xff]
    %v6595 = vld [vmem:[#allocation13 + $0x1e8] sm:$0xff]
    %v6596 = vld [vmem:[#allocation13 + $0x1f0] sm:$0xff]
    %v6597 = vld [vmem:[#allocation13 + $0x1f8] sm:$0xff]
    %v6598 = vld [vmem:[#allocation13 + $0x200] sm:$0xff]
    %v6599 = vld [vmem:[#allocation13 + $0x208] sm:$0xff]
    %v6600 = vld [vmem:[#allocation13 + $0x210] sm:$0xff]
    %v6601 = vld [vmem:[#allocation13 + $0x218] sm:$0xff]
    %v6602 = vld [vmem:[#allocation13 + $0x220] sm:$0xff]
    %v6603 = vld [vmem:[#allocation13 + $0x228] sm:$0xff]
    %v6604 = vld [vmem:[#allocation13 + $0x230] sm:$0xff]
    %v6605 = vld [vmem:[#allocation13 + $0x238] sm:$0xff]
    %v6606 = vld [vmem:[#allocation13 + $0x240] sm:$0xff]
    %v6607 = vld [vmem:[#allocation13 + $0x248] sm:$0xff]
    %v6608 = vld [vmem:[#allocation13 + $0x250] sm:$0xff]
    %v6609 = vld [vmem:[#allocation13 + $0x258] sm:$0xff]
    %v6610 = vld [vmem:[#allocation13 + $0x260] sm:$0xff]
    %v6611 = vld [vmem:[#allocation13 + $0x268] sm:$0xff]
    %v6612 = vld [vmem:[#allocation13 + $0x270] sm:$0xff]
    %v6613 = vld [vmem:[#allocation13 + $0x278] sm:$0xff]
    %v6614 = vld [vmem:[#allocation13 + $0x280] sm:$0xff]
    %v6615 = vld [vmem:[#allocation13 + $0x288] sm:$0xff]
    %v6616 = vld [vmem:[#allocation13 + $0x290] sm:$0xff]
    %v6617 = vld [vmem:[#allocation13 + $0x298] sm:$0xff]
    %v6618 = vld [vmem:[#allocation13 + $0x2a0] sm:$0xff]
    %v6619 = vld [vmem:[#allocation13 + $0x2a8] sm:$0xff]
    %v6620 = vld [vmem:[#allocation13 + $0x2b0] sm:$0xff]
    %v6621 = vld [vmem:[#allocation13 + $0x2b8] sm:$0xff]
    %v6622 = vld [vmem:[#allocation13 + $0x2c0] sm:$0xff]
    %v6623 = vld [vmem:[#allocation13 + $0x2c8] sm:$0xff]
    %v6624 = vld [vmem:[#allocation13 + $0x2d0] sm:$0xff]
    %v6625 = vld [vmem:[#allocation13 + $0x2d8] sm:$0xff]
    %v6626 = vld [vmem:[#allocation13 + $0x2e0] sm:$0xff]
    %v6627 = vld [vmem:[#allocation13 + $0x2e8] sm:$0xff]
    %v6628 = vld [vmem:[#allocation13 + $0x2f0] sm:$0xff]
    %v6629 = vld [vmem:[#allocation13 + $0x2f8] sm:$0xff]
    %v6630 = vld [vmem:[#allocation13 + $0x300] sm:$0xff]
    %v6631 = vld [vmem:[#allocation13 + $0x308] sm:$0xff]
    %v6632 = vld [vmem:[#allocation13 + $0x310] sm:$0xff]
    %v6633 = vld [vmem:[#allocation13 + $0x318] sm:$0xff]
    %v6634 = vld [vmem:[#allocation13 + $0x320] sm:$0xff]
    %v6635 = vld [vmem:[#allocation13 + $0x328] sm:$0xff]
    %v6636 = vld [vmem:[#allocation13 + $0x330] sm:$0xff]
    %v6637 = vld [vmem:[#allocation13 + $0x338] sm:$0xff]
    %v6638 = vld [vmem:[#allocation13 + $0x340] sm:$0xff]
    %v6639 = vld [vmem:[#allocation13 + $0x348] sm:$0xff]
    %v6640 = vld [vmem:[#allocation13 + $0x350] sm:$0xff]
    %v6641 = vld [vmem:[#allocation13 + $0x358] sm:$0xff]
    %v6642 = vld [vmem:[#allocation13 + $0x360] sm:$0xff]
    %v6643 = vld [vmem:[#allocation13 + $0x368] sm:$0xff]
    %v6644 = vld [vmem:[#allocation13 + $0x370] sm:$0xff]
    %v6645 = vld [vmem:[#allocation13 + $0x378] sm:$0xff]
    %v6646 = vld [vmem:[#allocation13 + $0x380] sm:$0xff]
    %v6647 = vld [vmem:[#allocation13 + $0x388] sm:$0xff]
    %v6648 = vld [vmem:[#allocation13 + $0x390] sm:$0xff]
    %v6649 = vld [vmem:[#allocation13 + $0x398] sm:$0xff]
    %v6650 = vld [vmem:[#allocation13 + $0x3a0] sm:$0xff]
    %v6651 = vld [vmem:[#allocation13 + $0x3a8] sm:$0xff]
    %v6652 = vld [vmem:[#allocation13 + $0x3b0] sm:$0xff]
    %v6653 = vld [vmem:[#allocation13 + $0x3b8] sm:$0xff]
    %v6654 = vld [vmem:[#allocation13 + $0x3c0] sm:$0xff]
    %v6655 = vld [vmem:[#allocation13 + $0x3c8] sm:$0xff]
    %v6656 = vld [vmem:[#allocation13 + $0x3d0] sm:$0xff]
    %v6657 = vld [vmem:[#allocation13 + $0x3d8] sm:$0xff]
    %v6658 = vld [vmem:[#allocation13 + $0x3e0] sm:$0xff]
    %v6659 = vld [vmem:[#allocation13 + $0x3e8] sm:$0xff]
    %v6660 = vld [vmem:[#allocation13 + $0x3f0] sm:$0xff]
    %v6661 = vld [vmem:[#allocation13 + $0x3f8] sm:$0xff]
    %v6662 = vld [vmem:[#allocation13 + $0x400] sm:$0xff]
    %v6663 = vld [vmem:[#allocation13 + $0x408] sm:$0xff]
    %v6664 = vld [vmem:[#allocation13 + $0x410] sm:$0xff]
    %v6665 = vld [vmem:[#allocation13 + $0x418] sm:$0xff]
    %v6666 = vld [vmem:[#allocation13 + $0x420] sm:$0xff]
    %v6667 = vld [vmem:[#allocation13 + $0x428] sm:$0xff]
    %v6668 = vld [vmem:[#allocation13 + $0x430] sm:$0xff]
    %v6669 = vld [vmem:[#allocation13 + $0x438] sm:$0xff]
    %v6670 = vld [vmem:[#allocation13 + $0x440] sm:$0xff]
    %v6671 = vld [vmem:[#allocation13 + $0x448] sm:$0xff]
    %v6672 = vld [vmem:[#allocation13 + $0x450] sm:$0xff]
    %v6673 = vld [vmem:[#allocation13 + $0x458] sm:$0xff]
    %v6674 = vld [vmem:[#allocation13 + $0x460] sm:$0xff]
    %v6675 = vld [vmem:[#allocation13 + $0x468] sm:$0xff]
    %v6676 = vld [vmem:[#allocation13 + $0x470] sm:$0xff]
    %v6677 = vld [vmem:[#allocation13 + $0x478] sm:$0xff]
    %v6678 = vunpack.c.l.s8.bf16 %v6534
    %v6679 = vunpack.c.l.s8.bf16 %v6535
    %v6680 = vunpack.c.l.s8.bf16 %v6536
    %v6681 = vunpack.c.l.s8.bf16 %v6537
    %v6682 = vunpack.c.l.s8.bf16 %v6538
    %v6683 = vunpack.c.l.s8.bf16 %v6539
    %v6684 = vunpack.c.h.s8.bf16 %v6534
    %v6685 = vunpack.c.h.s8.bf16 %v6535
    %v6686 = vunpack.c.h.s8.bf16 %v6536
    %v6687 = vunpack.c.h.s8.bf16 %v6537
    %v6688 = vunpack.c.h.s8.bf16 %v6538
    %v6689 = vunpack.c.h.s8.bf16 %v6539
    %v6690 = vunpack.c.l.s8.bf16 %v6540
    %v6691 = vunpack.c.l.s8.bf16 %v6541
    %v6692 = vunpack.c.l.s8.bf16 %v6542
    %v6693 = vunpack.c.l.s8.bf16 %v6543
    %v6694 = vunpack.c.l.s8.bf16 %v6544
    %v6695 = vunpack.c.l.s8.bf16 %v6545
    %v6696 = vunpack.c.h.s8.bf16 %v6540
    %v6697 = vunpack.c.h.s8.bf16 %v6541
    %v6698 = vunpack.c.h.s8.bf16 %v6542
    %v6699 = vunpack.c.h.s8.bf16 %v6543
    %v6700 = vunpack.c.h.s8.bf16 %v6544
    %v6701 = vunpack.c.h.s8.bf16 %v6545
    %v6702 = vunpack.c.l.s8.bf16 %v6546
    %v6703 = vunpack.c.l.s8.bf16 %v6547
    %v6704 = vunpack.c.l.s8.bf16 %v6548
    %v6705 = vunpack.c.l.s8.bf16 %v6549
    %v6706 = vunpack.c.l.s8.bf16 %v6550
    %v6707 = vunpack.c.l.s8.bf16 %v6551
    %v6708 = vunpack.c.h.s8.bf16 %v6546
    %v6709 = vunpack.c.h.s8.bf16 %v6547
    %v6710 = vunpack.c.h.s8.bf16 %v6548
    %v6711 = vunpack.c.h.s8.bf16 %v6549
    %v6712 = vunpack.c.h.s8.bf16 %v6550
    %v6713 = vunpack.c.h.s8.bf16 %v6551
    %v6714 = vunpack.c.l.s8.bf16 %v6552
    %v6715 = vunpack.c.l.s8.bf16 %v6553
    %v6716 = vunpack.c.l.s8.bf16 %v6554
    %v6717 = vunpack.c.l.s8.bf16 %v6555
    %v6718 = vunpack.c.l.s8.bf16 %v6556
    %v6719 = vunpack.c.l.s8.bf16 %v6557
    %v6720 = vunpack.c.h.s8.bf16 %v6552
    %v6721 = vunpack.c.h.s8.bf16 %v6553
    %v6722 = vunpack.c.h.s8.bf16 %v6554
    %v6723 = vunpack.c.h.s8.bf16 %v6555
    %v6724 = vunpack.c.h.s8.bf16 %v6556
    %v6725 = vunpack.c.h.s8.bf16 %v6557
    %v6726 = vunpack.c.l.s8.bf16 %v6558
    %v6727 = vunpack.c.l.s8.bf16 %v6559
    %v6728 = vunpack.c.l.s8.bf16 %v6560
    %v6729 = vunpack.c.l.s8.bf16 %v6561
    %v6730 = vunpack.c.l.s8.bf16 %v6562
    %v6731 = vunpack.c.l.s8.bf16 %v6563
    %v6732 = vunpack.c.h.s8.bf16 %v6558
    %v6733 = vunpack.c.h.s8.bf16 %v6559
    %v6734 = vunpack.c.h.s8.bf16 %v6560
    %v6735 = vunpack.c.h.s8.bf16 %v6561
    %v6736 = vunpack.c.h.s8.bf16 %v6562
    %v6737 = vunpack.c.h.s8.bf16 %v6563
    %v6738 = vunpack.c.l.s8.bf16 %v6564
    %v6739 = vunpack.c.l.s8.bf16 %v6565
    %v6740 = vunpack.c.l.s8.bf16 %v6566
    %v6741 = vunpack.c.l.s8.bf16 %v6567
    %v6742 = vunpack.c.l.s8.bf16 %v6568
    %v6743 = vunpack.c.l.s8.bf16 %v6569
    %v6744 = vunpack.c.h.s8.bf16 %v6564
    %v6745 = vunpack.c.h.s8.bf16 %v6565
    %v6746 = vunpack.c.h.s8.bf16 %v6566
    %v6747 = vunpack.c.h.s8.bf16 %v6567
    %v6748 = vunpack.c.h.s8.bf16 %v6568
    %v6749 = vunpack.c.h.s8.bf16 %v6569
    %v6750 = vunpack.c.l.s8.bf16 %v6570
    %v6751 = vunpack.c.l.s8.bf16 %v6571
    %v6752 = vunpack.c.l.s8.bf16 %v6572
    %v6753 = vunpack.c.l.s8.bf16 %v6573
    %v6754 = vunpack.c.l.s8.bf16 %v6574
    %v6755 = vunpack.c.l.s8.bf16 %v6575
    %v6756 = vunpack.c.h.s8.bf16 %v6570
    %v6757 = vunpack.c.h.s8.bf16 %v6571
    %v6758 = vunpack.c.h.s8.bf16 %v6572
    %v6759 = vunpack.c.h.s8.bf16 %v6573
    %v6760 = vunpack.c.h.s8.bf16 %v6574
    %v6761 = vunpack.c.h.s8.bf16 %v6575
    %v6762 = vunpack.c.l.s8.bf16 %v6576
    %v6763 = vunpack.c.l.s8.bf16 %v6577
    %v6764 = vunpack.c.l.s8.bf16 %v6578
    %v6765 = vunpack.c.l.s8.bf16 %v6579
    %v6766 = vunpack.c.l.s8.bf16 %v6580
    %v6767 = vunpack.c.l.s8.bf16 %v6581
    %v6768 = vunpack.c.h.s8.bf16 %v6576
    %v6769 = vunpack.c.h.s8.bf16 %v6577
    %v6770 = vunpack.c.h.s8.bf16 %v6578
    %v6771 = vunpack.c.h.s8.bf16 %v6579
    %v6772 = vunpack.c.h.s8.bf16 %v6580
    %v6773 = vunpack.c.h.s8.bf16 %v6581
    %v6774 = vunpack.c.l.s8.bf16 %v6582
    %v6775 = vunpack.c.l.s8.bf16 %v6583
    %v6776 = vunpack.c.l.s8.bf16 %v6584
    %v6777 = vunpack.c.l.s8.bf16 %v6585
    %v6778 = vunpack.c.l.s8.bf16 %v6586
    %v6779 = vunpack.c.l.s8.bf16 %v6587
    %v6780 = vunpack.c.h.s8.bf16 %v6582
    %v6781 = vunpack.c.h.s8.bf16 %v6583
    %v6782 = vunpack.c.h.s8.bf16 %v6584
    %v6783 = vunpack.c.h.s8.bf16 %v6585
    %v6784 = vunpack.c.h.s8.bf16 %v6586
    %v6785 = vunpack.c.h.s8.bf16 %v6587
    %v6786 = vunpack.c.l.s8.bf16 %v6588
    %v6787 = vunpack.c.l.s8.bf16 %v6589
    %v6788 = vunpack.c.l.s8.bf16 %v6590
    %v6789 = vunpack.c.l.s8.bf16 %v6591
    %v6790 = vunpack.c.l.s8.bf16 %v6592
    %v6791 = vunpack.c.l.s8.bf16 %v6593
    %v6792 = vunpack.c.h.s8.bf16 %v6588
    %v6793 = vunpack.c.h.s8.bf16 %v6589
    %v6794 = vunpack.c.h.s8.bf16 %v6590
    %v6795 = vunpack.c.h.s8.bf16 %v6591
    %v6796 = vunpack.c.h.s8.bf16 %v6592
    %v6797 = vunpack.c.h.s8.bf16 %v6593
    %v6798 = vunpack.c.l.s8.bf16 %v6594
    %v6799 = vunpack.c.l.s8.bf16 %v6595
    %v6800 = vunpack.c.l.s8.bf16 %v6596
    %v6801 = vunpack.c.l.s8.bf16 %v6597
    %v6802 = vunpack.c.l.s8.bf16 %v6598
    %v6803 = vunpack.c.l.s8.bf16 %v6599
    %v6804 = vunpack.c.h.s8.bf16 %v6594
    %v6805 = vunpack.c.h.s8.bf16 %v6595
    %v6806 = vunpack.c.h.s8.bf16 %v6596
    %v6807 = vunpack.c.h.s8.bf16 %v6597
    %v6808 = vunpack.c.h.s8.bf16 %v6598
    %v6809 = vunpack.c.h.s8.bf16 %v6599
    %v6810 = vunpack.c.l.s8.bf16 %v6600
    %v6811 = vunpack.c.l.s8.bf16 %v6601
    %v6812 = vunpack.c.l.s8.bf16 %v6602
    %v6813 = vunpack.c.l.s8.bf16 %v6603
    %v6814 = vunpack.c.l.s8.bf16 %v6604
    %v6815 = vunpack.c.l.s8.bf16 %v6605
    %v6816 = vunpack.c.h.s8.bf16 %v6600
    %v6817 = vunpack.c.h.s8.bf16 %v6601
    %v6818 = vunpack.c.h.s8.bf16 %v6602
    %v6819 = vunpack.c.h.s8.bf16 %v6603
    %v6820 = vunpack.c.h.s8.bf16 %v6604
    %v6821 = vunpack.c.h.s8.bf16 %v6605
    %v6822 = vunpack.c.l.s8.bf16 %v6606
    %v6823 = vunpack.c.l.s8.bf16 %v6607
    %v6824 = vunpack.c.l.s8.bf16 %v6608
    %v6825 = vunpack.c.l.s8.bf16 %v6609
    %v6826 = vunpack.c.l.s8.bf16 %v6610
    %v6827 = vunpack.c.l.s8.bf16 %v6611
    %v6828 = vunpack.c.h.s8.bf16 %v6606
    %v6829 = vunpack.c.h.s8.bf16 %v6607
    %v6830 = vunpack.c.h.s8.bf16 %v6608
    %v6831 = vunpack.c.h.s8.bf16 %v6609
    %v6832 = vunpack.c.h.s8.bf16 %v6610
    %v6833 = vunpack.c.h.s8.bf16 %v6611
    %v6834 = vunpack.c.l.s8.bf16 %v6612
    %v6835 = vunpack.c.l.s8.bf16 %v6613
    %v6836 = vunpack.c.l.s8.bf16 %v6614
    %v6837 = vunpack.c.l.s8.bf16 %v6615
    %v6838 = vunpack.c.l.s8.bf16 %v6616
    %v6839 = vunpack.c.l.s8.bf16 %v6617
    %v6840 = vunpack.c.h.s8.bf16 %v6612
    %v6841 = vunpack.c.h.s8.bf16 %v6613
    %v6842 = vunpack.c.h.s8.bf16 %v6614
    %v6843 = vunpack.c.h.s8.bf16 %v6615
    %v6844 = vunpack.c.h.s8.bf16 %v6616
    %v6845 = vunpack.c.h.s8.bf16 %v6617
    %v6846 = vunpack.c.l.s8.bf16 %v6618
    %v6847 = vunpack.c.l.s8.bf16 %v6619
    %v6848 = vunpack.c.l.s8.bf16 %v6620
    %v6849 = vunpack.c.l.s8.bf16 %v6621
    %v6850 = vunpack.c.l.s8.bf16 %v6622
    %v6851 = vunpack.c.l.s8.bf16 %v6623
    %v6852 = vunpack.c.h.s8.bf16 %v6618
    %v6853 = vunpack.c.h.s8.bf16 %v6619
    %v6854 = vunpack.c.h.s8.bf16 %v6620
    %v6855 = vunpack.c.h.s8.bf16 %v6621
    %v6856 = vunpack.c.h.s8.bf16 %v6622
    %v6857 = vunpack.c.h.s8.bf16 %v6623
    %v6858 = vunpack.c.l.s8.bf16 %v6624
    %v6859 = vunpack.c.l.s8.bf16 %v6625
    %v6860 = vunpack.c.l.s8.bf16 %v6626
    %v6861 = vunpack.c.l.s8.bf16 %v6627
    %v6862 = vunpack.c.l.s8.bf16 %v6628
    %v6863 = vunpack.c.l.s8.bf16 %v6629
    %v6864 = vunpack.c.h.s8.bf16 %v6624
    %v6865 = vunpack.c.h.s8.bf16 %v6625
    %v6866 = vunpack.c.h.s8.bf16 %v6626
    %v6867 = vunpack.c.h.s8.bf16 %v6627
    %v6868 = vunpack.c.h.s8.bf16 %v6628
    %v6869 = vunpack.c.h.s8.bf16 %v6629
    %v6870 = vunpack.c.l.s8.bf16 %v6630
    %v6871 = vunpack.c.l.s8.bf16 %v6631
    %v6872 = vunpack.c.l.s8.bf16 %v6632
    %v6873 = vunpack.c.l.s8.bf16 %v6633
    %v6874 = vunpack.c.l.s8.bf16 %v6634
    %v6875 = vunpack.c.l.s8.bf16 %v6635
    %v6876 = vunpack.c.h.s8.bf16 %v6630
    %v6877 = vunpack.c.h.s8.bf16 %v6631
    %v6878 = vunpack.c.h.s8.bf16 %v6632
    %v6879 = vunpack.c.h.s8.bf16 %v6633
    %v6880 = vunpack.c.h.s8.bf16 %v6634
    %v6881 = vunpack.c.h.s8.bf16 %v6635
    %v6882 = vunpack.c.l.s8.bf16 %v6636
    %v6883 = vunpack.c.l.s8.bf16 %v6637
    %v6884 = vunpack.c.l.s8.bf16 %v6638
    %v6885 = vunpack.c.l.s8.bf16 %v6639
    %v6886 = vunpack.c.l.s8.bf16 %v6640
    %v6887 = vunpack.c.l.s8.bf16 %v6641
    %v6888 = vunpack.c.h.s8.bf16 %v6636
    %v6889 = vunpack.c.h.s8.bf16 %v6637
    %v6890 = vunpack.c.h.s8.bf16 %v6638
    %v6891 = vunpack.c.h.s8.bf16 %v6639
    %v6892 = vunpack.c.h.s8.bf16 %v6640
    %v6893 = vunpack.c.h.s8.bf16 %v6641
    %v6894 = vunpack.c.l.s8.bf16 %v6642
    %v6895 = vunpack.c.l.s8.bf16 %v6643
    %v6896 = vunpack.c.l.s8.bf16 %v6644
    %v6897 = vunpack.c.l.s8.bf16 %v6645
    %v6898 = vunpack.c.l.s8.bf16 %v6646
    %v6899 = vunpack.c.l.s8.bf16 %v6647
    %v6900 = vunpack.c.h.s8.bf16 %v6642
    %v6901 = vunpack.c.h.s8.bf16 %v6643
    %v6902 = vunpack.c.h.s8.bf16 %v6644
    %v6903 = vunpack.c.h.s8.bf16 %v6645
    %v6904 = vunpack.c.h.s8.bf16 %v6646
    %v6905 = vunpack.c.h.s8.bf16 %v6647
    %v6906 = vunpack.c.l.s8.bf16 %v6648
    %v6907 = vunpack.c.l.s8.bf16 %v6649
    %v6908 = vunpack.c.l.s8.bf16 %v6650
    %v6909 = vunpack.c.l.s8.bf16 %v6651
    %v6910 = vunpack.c.l.s8.bf16 %v6652
    %v6911 = vunpack.c.l.s8.bf16 %v6653
    %v6912 = vunpack.c.h.s8.bf16 %v6648
    %v6913 = vunpack.c.h.s8.bf16 %v6649
    %v6914 = vunpack.c.h.s8.bf16 %v6650
    %v6915 = vunpack.c.h.s8.bf16 %v6651
    %v6916 = vunpack.c.h.s8.bf16 %v6652
    %v6917 = vunpack.c.h.s8.bf16 %v6653
    %v6918 = vunpack.c.l.s8.bf16 %v6654
    %v6919 = vunpack.c.l.s8.bf16 %v6655
    %v6920 = vunpack.c.l.s8.bf16 %v6656
    %v6921 = vunpack.c.l.s8.bf16 %v6657
    %v6922 = vunpack.c.l.s8.bf16 %v6658
    %v6923 = vunpack.c.l.s8.bf16 %v6659
    %v6924 = vunpack.c.h.s8.bf16 %v6654
    %v6925 = vunpack.c.h.s8.bf16 %v6655
    %v6926 = vunpack.c.h.s8.bf16 %v6656
    %v6927 = vunpack.c.h.s8.bf16 %v6657
    %v6928 = vunpack.c.h.s8.bf16 %v6658
    %v6929 = vunpack.c.h.s8.bf16 %v6659
    %v6930 = vunpack.c.l.s8.bf16 %v6660
    %v6931 = vunpack.c.l.s8.bf16 %v6661
    %v6932 = vunpack.c.l.s8.bf16 %v6662
    %v6933 = vunpack.c.l.s8.bf16 %v6663
    %v6934 = vunpack.c.l.s8.bf16 %v6664
    %v6935 = vunpack.c.l.s8.bf16 %v6665
    %v6936 = vunpack.c.h.s8.bf16 %v6660
    %v6937 = vunpack.c.h.s8.bf16 %v6661
    %v6938 = vunpack.c.h.s8.bf16 %v6662
    %v6939 = vunpack.c.h.s8.bf16 %v6663
    %v6940 = vunpack.c.h.s8.bf16 %v6664
    %v6941 = vunpack.c.h.s8.bf16 %v6665
    %v6942 = vunpack.c.l.s8.bf16 %v6666
    %v6943 = vunpack.c.l.s8.bf16 %v6667
    %v6944 = vunpack.c.l.s8.bf16 %v6668
    %v6945 = vunpack.c.l.s8.bf16 %v6669
    %v6946 = vunpack.c.l.s8.bf16 %v6670
    %v6947 = vunpack.c.l.s8.bf16 %v6671
    %v6948 = vunpack.c.h.s8.bf16 %v6666
    %v6949 = vunpack.c.h.s8.bf16 %v6667
    %v6950 = vunpack.c.h.s8.bf16 %v6668
    %v6951 = vunpack.c.h.s8.bf16 %v6669
    %v6952 = vunpack.c.h.s8.bf16 %v6670
    %v6953 = vunpack.c.h.s8.bf16 %v6671
    %v6954 = vunpack.c.l.s8.bf16 %v6672
    %v6955 = vunpack.c.l.s8.bf16 %v6673
    %v6956 = vunpack.c.l.s8.bf16 %v6674
    %v6957 = vunpack.c.l.s8.bf16 %v6675
    %v6958 = vunpack.c.l.s8.bf16 %v6676
    %v6959 = vunpack.c.l.s8.bf16 %v6677
    %v6960 = vunpack.c.h.s8.bf16 %v6672
    %v6961 = vunpack.c.h.s8.bf16 %v6673
    %v6962 = vunpack.c.h.s8.bf16 %v6674
    %v6963 = vunpack.c.h.s8.bf16 %v6675
    %v6964 = vunpack.c.h.s8.bf16 %v6676
    %v6965 = vunpack.c.h.s8.bf16 %v6677
    %v6966 = vpack.c.bf16 %v6527, %v6527
    %v6967 = vpack.c.bf16 %v6528, %v6528
    %v6968 = vpack.c.bf16 %v6529, %v6529
    %v6969 = vpack.c.bf16 %v6530, %v6530
    %v6970 = vpack.c.bf16 %v6531, %v6531
    %v6971 = vpack.c.bf16 %v6532, %v6532
    %6972 = vmatprep.subr.bf16.mxu0 %v6679
    %6973 = vmatpush1.bf16.msra.mxu0 %v6678
    %6974 = vmatprep.subr.bf16.mxu0 %v6685
    %6975 = vmatpush1.bf16.msra.mxu0 %v6684
    %6976 = vmatprep.subr.bf16.mxu0 %v6691
    %6977 = vmatpush1.bf16.msra.mxu0 %v6690
    %6978 = vmatprep.subr.bf16.mxu0 %v6697
    %6979 = vmatpush1.bf16.msra.mxu0 %v6696
    %6980 = vmatprep.subr.bf16.mxu0 %v6703
    %6981 = vmatpush1.bf16.msra.mxu0 %v6702
    %6982 = vmatprep.subr.bf16.mxu0 %v6709
    %6983 = vmatpush1.bf16.msra.mxu0 %v6708
    %6984 = vmatprep.subr.bf16.mxu0 %v6715
    %6985 = vmatpush1.bf16.msra.mxu0 %v6714
    %6986 = vmatprep.subr.bf16.mxu0 %v6721
    %6987 = vmatpush1.bf16.msra.mxu0 %v6720
    %6988 = vmatprep.subr.bf16.mxu0 %v6727
    %6989 = vmatpush1.bf16.msra.mxu0 %v6726
    %6990 = vmatprep.subr.bf16.mxu0 %v6733
    %6991 = vmatpush1.bf16.msra.mxu0 %v6732
    %6992 = vmatprep.subr.bf16.mxu0 %v6739
    %6993 = vmatpush1.bf16.msra.mxu0 %v6738
    %6994 = vmatprep.subr.bf16.mxu0 %v6745
    %6995 = vmatpush1.bf16.msra.mxu0 %v6744
    %6996 = vmatprep.subr.bf16.mxu0 %v6751
    %6997 = vmatpush1.bf16.msra.mxu0 %v6750
    %6998 = vmatprep.subr.bf16.mxu0 %v6757
    %6999 = vmatpush1.bf16.msra.mxu0 %v6756
    %7000 = vmatprep.subr.bf16.mxu0 %v6763
    %7001 = vmatpush1.bf16.msra.mxu0 %v6762
    %7002 = vmatprep.subr.bf16.mxu0 %v6769
    %7003 = vmatpush1.bf16.msra.mxu0 %v6768
    %7004 = vmatprep.mubr.bf16.mxu0 %v6967
    %7005 = vmatmul.mubr.bf16.gmra.mrb[0].mxu0 %v6966
    %v7006 = vpop.f32.mrb[0].mxu0
    %v7007 = vadd.f32 0.0, %v7006
    %v7008 = vpop.f32.mrb[0].mxu0
    %v7009 = vadd.f32 0.0, %v7008
    %v7010 = vpop.f32.mrb[0].mxu0
    %v7011 = vpop.f32.mrb[0].mxu0
    %7012 = vdwg.mxu0
    %7013 = vmatprep.subr.bf16.mxu0 %v6775
    %7014 = vmatpush1.bf16.msra.mxu0 %v6774
    %7015 = vmatprep.subr.bf16.mxu0 %v6781
    %7016 = vmatpush1.bf16.msra.mxu0 %v6780
    %7017 = vmatprep.subr.bf16.mxu0 %v6787
    %7018 = vmatpush1.bf16.msra.mxu0 %v6786
    %7019 = vmatprep.subr.bf16.mxu0 %v6793
    %7020 = vmatpush1.bf16.msra.mxu0 %v6792
    %7021 = vmatprep.subr.bf16.mxu0 %v6799
    %7022 = vmatpush1.bf16.msra.mxu0 %v6798
    %7023 = vmatprep.subr.bf16.mxu0 %v6805
    %7024 = vmatpush1.bf16.msra.mxu0 %v6804
    %7025 = vmatprep.subr.bf16.mxu0 %v6811
    %7026 = vmatpush1.bf16.msra.mxu0 %v6810
    %7027 = vmatprep.subr.bf16.mxu0 %v6817
    %7028 = vmatpush1.bf16.msra.mxu0 %v6816
    %7029 = vmatprep.subr.bf16.mxu0 %v6823
    %7030 = vmatpush1.bf16.msra.mxu0 %v6822
    %7031 = vmatprep.subr.bf16.mxu0 %v6829
    %7032 = vmatpush1.bf16.msra.mxu0 %v6828
    %7033 = vmatprep.subr.bf16.mxu0 %v6835
    %7034 = vmatpush1.bf16.msra.mxu0 %v6834
    %7035 = vmatprep.subr.bf16.mxu0 %v6841
    %7036 = vmatpush1.bf16.msra.mxu0 %v6840
    %7037 = vmatprep.subr.bf16.mxu0 %v6847
    %7038 = vmatpush1.bf16.msra.mxu0 %v6846
    %7039 = vmatprep.subr.bf16.mxu0 %v6853
    %7040 = vmatpush1.bf16.msra.mxu0 %v6852
    %7041 = vmatprep.subr.bf16.mxu0 %v6859
    %7042 = vmatpush1.bf16.msra.mxu0 %v6858
    %7043 = vmatprep.subr.bf16.mxu0 %v6865
    %7044 = vmatpush1.bf16.msra.mxu0 %v6864
    %7045 = vmatprep.mubr.bf16.mxu0 %v6969
    %7046 = vmatmul.mubr.bf16.gmra.mrb[0].mxu0 %v6968
    %v7047 = vpop.f32.mrb[0].mxu0
    %v7048 = vadd.f32 %v7007, %v7047
    %v7049 = vpop.f32.mrb[0].mxu0
    %v7050 = vadd.f32 %v7009, %v7049
    %v7051 = vpop.f32.mrb[0].mxu0
    %v7052 = vpop.f32.mrb[0].mxu0
    %7053 = vdwg.mxu0
    %7054 = vmatprep.subr.bf16.mxu0 %v6871
    %7055 = vmatpush1.bf16.msra.mxu0 %v6870
    %7056 = vmatprep.subr.bf16.mxu0 %v6877
    %7057 = vmatpush1.bf16.msra.mxu0 %v6876
    %7058 = vmatprep.subr.bf16.mxu0 %v6883
    %7059 = vmatpush1.bf16.msra.mxu0 %v6882
    %7060 = vmatprep.subr.bf16.mxu0 %v6889
    %7061 = vmatpush1.bf16.msra.mxu0 %v6888
    %7062 = vmatprep.subr.bf16.mxu0 %v6895
    %7063 = vmatpush1.bf16.msra.mxu0 %v6894
    %7064 = vmatprep.subr.bf16.mxu0 %v6901
    %7065 = vmatpush1.bf16.msra.mxu0 %v6900
    %7066 = vmatprep.subr.bf16.mxu0 %v6907
    %7067 = vmatpush1.bf16.msra.mxu0 %v6906
    %7068 = vmatprep.subr.bf16.mxu0 %v6913
    %7069 = vmatpush1.bf16.msra.mxu0 %v6912
    %7070 = vmatprep.subr.bf16.mxu0 %v6919
    %7071 = vmatpush1.bf16.msra.mxu0 %v6918
    %7072 = vmatprep.subr.bf16.mxu0 %v6925
    %7073 = vmatpush1.bf16.msra.mxu0 %v6924
    %7074 = vmatprep.subr.bf16.mxu0 %v6931
    %7075 = vmatpush1.bf16.msra.mxu0 %v6930
    %7076 = vmatprep.subr.bf16.mxu0 %v6937
    %7077 = vmatpush1.bf16.msra.mxu0 %v6936
    %7078 = vmatprep.subr.bf16.mxu0 %v6943
    %7079 = vmatpush1.bf16.msra.mxu0 %v6942
    %7080 = vmatprep.subr.bf16.mxu0 %v6949
    %7081 = vmatpush1.bf16.msra.mxu0 %v6948
    %7082 = vmatprep.subr.bf16.mxu0 %v6955
    %7083 = vmatpush1.bf16.msra.mxu0 %v6954
    %7084 = vmatprep.subr.bf16.mxu0 %v6961
    %7085 = vmatpush1.bf16.msra.mxu0 %v6960
    %7086 = vmatprep.mubr.bf16.mxu0 %v6971
    %7087 = vmatmul.mubr.bf16.gmra.mrb[0].mxu0 %v6970
    %v7088 = vpop.f32.mrb[0].mxu0
    %v7089 = vadd.f32 %v7048, %v7088
    %v7090 = vpop.f32.mrb[0].mxu0
    %v7091 = vadd.f32 %v7050, %v7090
    %v7092 = vpop.f32.mrb[0].mxu0
    %v7093 = vpop.f32.mrb[0].mxu0
    %7094 = vdwg.mxu0
    %7095 = vmatprep.subr.bf16.mxu0 %v6681
    %7096 = vmatpush1.bf16.msra.mxu0 %v6680
    %7097 = vmatprep.subr.bf16.mxu0 %v6687
    %7098 = vmatpush1.bf16.msra.mxu0 %v6686
    %7099 = vmatprep.subr.bf16.mxu0 %v6693
    %7100 = vmatpush1.bf16.msra.mxu0 %v6692
    %7101 = vmatprep.subr.bf16.mxu0 %v6699
    %7102 = vmatpush1.bf16.msra.mxu0 %v6698
    %7103 = vmatprep.subr.bf16.mxu0 %v6705
    %7104 = vmatpush1.bf16.msra.mxu0 %v6704
    %7105 = vmatprep.subr.bf16.mxu0 %v6711
    %7106 = vmatpush1.bf16.msra.mxu0 %v6710
    %7107 = vmatprep.subr.bf16.mxu0 %v6717
    %7108 = vmatpush1.bf16.msra.mxu0 %v6716
    %7109 = vmatprep.subr.bf16.mxu0 %v6723
    %7110 = vmatpush1.bf16.msra.mxu0 %v6722
    %7111 = vmatprep.subr.bf16.mxu0 %v6729
    %7112 = vmatpush1.bf16.msra.mxu0 %v6728
    %7113 = vmatprep.subr.bf16.mxu0 %v6735
    %7114 = vmatpush1.bf16.msra.mxu0 %v6734
    %7115 = vmatprep.subr.bf16.mxu0 %v6741
    %7116 = vmatpush1.bf16.msra.mxu0 %v6740
    %7117 = vmatprep.subr.bf16.mxu0 %v6747
    %7118 = vmatpush1.bf16.msra.mxu0 %v6746
    %7119 = vmatprep.subr.bf16.mxu0 %v6753
    %7120 = vmatpush1.bf16.msra.mxu0 %v6752
    %7121 = vmatprep.subr.bf16.mxu0 %v6759
    %7122 = vmatpush1.bf16.msra.mxu0 %v6758
    %7123 = vmatprep.subr.bf16.mxu0 %v6765
    %7124 = vmatpush1.bf16.msra.mxu0 %v6764
    %7125 = vmatprep.subr.bf16.mxu0 %v6771
    %7126 = vmatpush1.bf16.msra.mxu0 %v6770
    %7127 = vmatprep.mubr.bf16.mxu0 %v6967
    %7128 = vmatmul.mubr.bf16.gmra.mrb[0].mxu0 %v6966
    %v7129 = vpop.f32.mrb[0].mxu0
    %v7130 = vadd.f32 0.0, %v7129
    %v7131 = vpop.f32.mrb[0].mxu0
    %v7132 = vadd.f32 0.0, %v7131
    %v7133 = vpop.f32.mrb[0].mxu0
    %v7134 = vpop.f32.mrb[0].mxu0
    %7135 = vdwg.mxu0
    %7136 = vmatprep.subr.bf16.mxu0 %v6777
    %7137 = vmatpush1.bf16.msra.mxu0 %v6776
    %7138 = vmatprep.subr.bf16.mxu0 %v6783
    %7139 = vmatpush1.bf16.msra.mxu0 %v6782
    %7140 = vmatprep.subr.bf16.mxu0 %v6789
    %7141 = vmatpush1.bf16.msra.mxu0 %v6788
    %7142 = vmatprep.subr.bf16.mxu0 %v6795
    %7143 = vmatpush1.bf16.msra.mxu0 %v6794
    %7144 = vmatprep.subr.bf16.mxu0 %v6801
    %7145 = vmatpush1.bf16.msra.mxu0 %v6800
    %7146 = vmatprep.subr.bf16.mxu0 %v6807
    %7147 = vmatpush1.bf16.msra.mxu0 %v6806
    %7148 = vmatprep.subr.bf16.mxu0 %v6813
    %7149 = vmatpush1.bf16.msra.mxu0 %v6812
    %7150 = vmatprep.subr.bf16.mxu0 %v6819
    %7151 = vmatpush1.bf16.msra.mxu0 %v6818
    %7152 = vmatprep.subr.bf16.mxu0 %v6825
    %7153 = vmatpush1.bf16.msra.mxu0 %v6824
    %7154 = vmatprep.subr.bf16.mxu0 %v6831
    %7155 = vmatpush1.bf16.msra.mxu0 %v6830
    %7156 = vmatprep.subr.bf16.mxu0 %v6837
    %7157 = vmatpush1.bf16.msra.mxu0 %v6836
    %7158 = vmatprep.subr.bf16.mxu0 %v6843
    %7159 = vmatpush1.bf16.msra.mxu0 %v6842
    %7160 = vmatprep.subr.bf16.mxu0 %v6849
    %7161 = vmatpush1.bf16.msra.mxu0 %v6848
    %7162 = vmatprep.subr.bf16.mxu0 %v6855
    %7163 = vmatpush1.bf16.msra.mxu0 %v6854
    %7164 = vmatprep.subr.bf16.mxu0 %v6861
    %7165 = vmatpush1.bf16.msra.mxu0 %v6860
    %7166 = vmatprep.subr.bf16.mxu0 %v6867
    %7167 = vmatpush1.bf16.msra.mxu0 %v6866
    %7168 = vmatprep.mubr.bf16.mxu0 %v6969
    %7169 = vmatmul.mubr.bf16.gmra.mrb[0].mxu0 %v6968
    %v7170 = vpop.f32.mrb[0].mxu0
    %v7171 = vadd.f32 %v7130, %v7170
    %v7172 = vpop.f32.mrb[0].mxu0
    %v7173 = vadd.f32 %v7132, %v7172
    %v7174 = vpop.f32.mrb[0].mxu0
    %v7175 = vpop.f32.mrb[0].mxu0
    %7176 = vdwg.mxu0
    %7177 = vmatprep.subr.bf16.mxu0 %v6873
    %7178 = vmatpush1.bf16.msra.mxu0 %v6872
    %7179 = vmatprep.subr.bf16.mxu0 %v6879
    %7180 = vmatpush1.bf16.msra.mxu0 %v6878
    %7181 = vmatprep.subr.bf16.mxu0 %v6885
    %7182 = vmatpush1.bf16.msra.mxu0 %v6884
    %7183 = vmatprep.subr.bf16.mxu0 %v6891
    %7184 = vmatpush1.bf16.msra.mxu0 %v6890
    %7185 = vmatprep.subr.bf16.mxu0 %v6897
    %7186 = vmatpush1.bf16.msra.mxu0 %v6896
    %7187 = vmatprep.subr.bf16.mxu0 %v6903
    %7188 = vmatpush1.bf16.msra.mxu0 %v6902
    %7189 = vmatprep.subr.bf16.mxu0 %v6909
    %7190 = vmatpush1.bf16.msra.mxu0 %v6908
    %7191 = vmatprep.subr.bf16.mxu0 %v6915
    %7192 = vmatpush1.bf16.msra.mxu0 %v6914
    %7193 = vmatprep.subr.bf16.mxu0 %v6921
    %7194 = vmatpush1.bf16.msra.mxu0 %v6920
    %7195 = vmatprep.subr.bf16.mxu0 %v6927
    %7196 = vmatpush1.bf16.msra.mxu0 %v6926
    %7197 = vmatprep.subr.bf16.mxu0 %v6933
    %7198 = vmatpush1.bf16.msra.mxu0 %v6932
    %7199 = vmatprep.subr.bf16.mxu0 %v6939
    %7200 = vmatpush1.bf16.msra.mxu0 %v6938
    %7201 = vmatprep.subr.bf16.mxu0 %v6945
    %7202 = vmatpush1.bf16.msra.mxu0 %v6944
    %7203 = vmatprep.subr.bf16.mxu0 %v6951
    %7204 = vmatpush1.bf16.msra.mxu0 %v6950
    %7205 = vmatprep.subr.bf16.mxu0 %v6957
    %7206 = vmatpush1.bf16.msra.mxu0 %v6956
    %7207 = vmatprep.subr.bf16.mxu0 %v6963
    %7208 = vmatpush1.bf16.msra.mxu0 %v6962
    %7209 = vmatprep.mubr.bf16.mxu0 %v6971
    %7210 = vmatmul.mubr.bf16.gmra.mrb[0].mxu0 %v6970
    %v7211 = vpop.f32.mrb[0].mxu0
    %v7212 = vadd.f32 %v7171, %v7211
    %v7213 = vpop.f32.mrb[0].mxu0
    %v7214 = vadd.f32 %v7173, %v7213
    %v7215 = vpop.f32.mrb[0].mxu0
    %v7216 = vpop.f32.mrb[0].mxu0
    %7217 = vdwg.mxu0
    %7218 = vmatprep.subr.bf16.mxu0 %v6683
    %7219 = vmatpush1.bf16.msra.mxu0 %v6682
    %7220 = vmatprep.subr.bf16.mxu0 %v6689
    %7221 = vmatpush1.bf16.msra.mxu0 %v6688
    %7222 = vmatprep.subr.bf16.mxu0 %v6695
    %7223 = vmatpush1.bf16.msra.mxu0 %v6694
    %7224 = vmatprep.subr.bf16.mxu0 %v6701
    %7225 = vmatpush1.bf16.msra.mxu0 %v6700
    %7226 = vmatprep.subr.bf16.mxu0 %v6707
    %7227 = vmatpush1.bf16.msra.mxu0 %v6706
    %7228 = vmatprep.subr.bf16.mxu0 %v6713
    %7229 = vmatpush1.bf16.msra.mxu0 %v6712
    %7230 = vmatprep.subr.bf16.mxu0 %v6719
    %7231 = vmatpush1.bf16.msra.mxu0 %v6718
    %7232 = vmatprep.subr.bf16.mxu0 %v6725
    %7233 = vmatpush1.bf16.msra.mxu0 %v6724
    %7234 = vmatprep.subr.bf16.mxu0 %v6731
    %7235 = vmatpush1.bf16.msra.mxu0 %v6730
    %7236 = vmatprep.subr.bf16.mxu0 %v6737
    %7237 = vmatpush1.bf16.msra.mxu0 %v6736
    %7238 = vmatprep.subr.bf16.mxu0 %v6743
    %7239 = vmatpush1.bf16.msra.mxu0 %v6742
    %7240 = vmatprep.subr.bf16.mxu0 %v6749
    %7241 = vmatpush1.bf16.msra.mxu0 %v6748
    %7242 = vmatprep.subr.bf16.mxu0 %v6755
    %7243 = vmatpush1.bf16.msra.mxu0 %v6754
    %7244 = vmatprep.subr.bf16.mxu0 %v6761
    %7245 = vmatpush1.bf16.msra.mxu0 %v6760
    %7246 = vmatprep.subr.bf16.mxu0 %v6767
    %7247 = vmatpush1.bf16.msra.mxu0 %v6766
    %7248 = vmatprep.subr.bf16.mxu0 %v6773
    %7249 = vmatpush1.bf16.msra.mxu0 %v6772
    %7250 = vmatprep.mubr.bf16.mxu0 %v6967
    %7251 = vmatmul.mubr.bf16.gmra.mrb[0].mxu0 %v6966
    %v7252 = vpop.f32.mrb[0].mxu0
    %v7253 = vadd.f32 0.0, %v7252
    %v7254 = vpop.f32.mrb[0].mxu0
    %v7255 = vadd.f32 0.0, %v7254
    %v7256 = vpop.f32.mrb[0].mxu0
    %v7257 = vpop.f32.mrb[0].mxu0
    %7258 = vdwg.mxu0
    %7259 = vmatprep.subr.bf16.mxu0 %v6779
    %7260 = vmatpush1.bf16.msra.mxu0 %v6778
    %7261 = vmatprep.subr.bf16.mxu0 %v6785
    %7262 = vmatpush1.bf16.msra.mxu0 %v6784
    %7263 = vmatprep.subr.bf16.mxu0 %v6791
    %7264 = vmatpush1.bf16.msra.mxu0 %v6790
    %7265 = vmatprep.subr.bf16.mxu0 %v6797
    %7266 = vmatpush1.bf16.msra.mxu0 %v6796
    %7267 = vmatprep.subr.bf16.mxu0 %v6803
    %7268 = vmatpush1.bf16.msra.mxu0 %v6802
    %7269 = vmatprep.subr.bf16.mxu0 %v6809
    %7270 = vmatpush1.bf16.msra.mxu0 %v6808
    %7271 = vmatprep.subr.bf16.mxu0 %v6815
    %7272 = vmatpush1.bf16.msra.mxu0 %v6814
    %7273 = vmatprep.subr.bf16.mxu0 %v6821
    %7274 = vmatpush1.bf16.msra.mxu0 %v6820
    %7275 = vmatprep.subr.bf16.mxu0 %v6827
    %7276 = vmatpush1.bf16.msra.mxu0 %v6826
    %7277 = vmatprep.subr.bf16.mxu0 %v6833
    %7278 = vmatpush1.bf16.msra.mxu0 %v6832
    %7279 = vmatprep.subr.bf16.mxu0 %v6839
    %7280 = vmatpush1.bf16.msra.mxu0 %v6838
    %7281 = vmatprep.subr.bf16.mxu0 %v6845
    %7282 = vmatpush1.bf16.msra.mxu0 %v6844
    %7283 = vmatprep.subr.bf16.mxu0 %v6851
    %7284 = vmatpush1.bf16.msra.mxu0 %v6850
    %7285 = vmatprep.subr.bf16.mxu0 %v6857
    %7286 = vmatpush1.bf16.msra.mxu0 %v6856
    %7287 = vmatprep.subr.bf16.mxu0 %v6863
    %7288 = vmatpush1.bf16.msra.mxu0 %v6862
    %7289 = vmatprep.subr.bf16.mxu0 %v6869
    %7290 = vmatpush1.bf16.msra.mxu0 %v6868
    %7291 = vmatprep.mubr.bf16.mxu0 %v6969
    %7292 = vmatmul.mubr.bf16.gmra.mrb[0].mxu0 %v6968
    %v7293 = vpop.f32.mrb[0].mxu0
    %v7294 = vadd.f32 %v7253, %v7293
    %v7295 = vpop.f32.mrb[0].mxu0
    %v7296 = vadd.f32 %v7255, %v7295
    %v7297 = vpop.f32.mrb[0].mxu0
    %v7298 = vpop.f32.mrb[0].mxu0
    %7299 = vdwg.mxu0
    %7300 = vmatprep.subr.bf16.mxu0 %v6875
    %7301 = vmatpush1.bf16.msra.mxu0 %v6874
    %7302 = vmatprep.subr.bf16.mxu0 %v6881
    %7303 = vmatpush1.bf16.msra.mxu0 %v6880
    %7304 = vmatprep.subr.bf16.mxu0 %v6887
    %7305 = vmatpush1.bf16.msra.mxu0 %v6886
    %7306 = vmatprep.subr.bf16.mxu0 %v6893
    %7307 = vmatpush1.bf16.msra.mxu0 %v6892
    %7308 = vmatprep.subr.bf16.mxu0 %v6899
    %7309 = vmatpush1.bf16.msra.mxu0 %v6898
    %7310 = vmatprep.subr.bf16.mxu0 %v6905
    %7311 = vmatpush1.bf16.msra.mxu0 %v6904
    %7312 = vmatprep.subr.bf16.mxu0 %v6911
    %7313 = vmatpush1.bf16.msra.mxu0 %v6910
    %7314 = vmatprep.subr.bf16.mxu0 %v6917
    %7315 = vmatpush1.bf16.msra.mxu0 %v6916
    %7316 = vmatprep.subr.bf16.mxu0 %v6923
    %7317 = vmatpush1.bf16.msra.mxu0 %v6922
    %7318 = vmatprep.subr.bf16.mxu0 %v6929
    %7319 = vmatpush1.bf16.msra.mxu0 %v6928
    %7320 = vmatprep.subr.bf16.mxu0 %v6935
    %7321 = vmatpush1.bf16.msra.mxu0 %v6934
    %7322 = vmatprep.subr.bf16.mxu0 %v6941
    %7323 = vmatpush1.bf16.msra.mxu0 %v6940
    %7324 = vmatprep.subr.bf16.mxu0 %v6947
    %7325 = vmatpush1.bf16.msra.mxu0 %v6946
    %7326 = vmatprep.subr.bf16.mxu0 %v6953
    %7327 = vmatpush1.bf16.msra.mxu0 %v6952
    %7328 = vmatprep.subr.bf16.mxu0 %v6959
    %7329 = vmatpush1.bf16.msra.mxu0 %v6958
    %7330 = vmatprep.subr.bf16.mxu0 %v6965
    %7331 = vmatpush1.bf16.msra.mxu0 %v6964
    %7332 = vmatprep.mubr.bf16.mxu0 %v6971
    %7333 = vmatmul.mubr.bf16.gmra.mrb[0].mxu0 %v6970
    %v7334 = vpop.f32.mrb[0].mxu0
    %v7335 = vadd.f32 %v7294, %v7334
    %v7336 = vpop.f32.mrb[0].mxu0
    %v7337 = vadd.f32 %v7296, %v7336
    %v7338 = vpop.f32.mrb[0].mxu0
    %v7339 = vpop.f32.mrb[0].mxu0
    %7340 = vdwg.mxu0
    %v7342 = vlaneseq
    %v7343 = vshrl.u32 %v7342, 7
    %v7344 = vsub.s32 0, %v7343
    %v7345 = vrot.slane %v6533, %v7344
    %v7346 = vlaneseq
    %v7347 = vshrl.u32 %v7346, 7
    %v7348 = vsub.s32 1, %v7347
    %v7349 = vrot.slane %v6533, %v7348
    %v7350 = vlaneseq
    %v7351 = vshrl.u32 %v7350, 7
    %v7352 = vsub.s32 2, %v7351
    %v7353 = vrot.slane %v6533, %v7352
    %v7354 = vlaneseq
    %v7355 = vshrl.u32 %v7354, 7
    %v7356 = vsub.s32 3, %v7355
    %v7357 = vrot.slane %v6533, %v7356
    %v7358 = vlaneseq
    %v7359 = vshrl.u32 %v7358, 7
    %v7360 = vsub.s32 4, %v7359
    %v7361 = vrot.slane %v6533, %v7360
    %v7362 = vlaneseq
    %v7363 = vshrl.u32 %v7362, 7
    %v7364 = vsub.s32 5, %v7363
    %v7365 = vrot.slane %v6533, %v7364
    %v7372 = vmul.f32 %v7089, %v7345
    %v7373 = vmul.f32 %v7091, %v7349
    %v7374 = vmul.f32 %v7212, %v7353
    %v7375 = vmul.f32 %v7214, %v7357
    %v7376 = vmul.f32 %v7335, %v7361
    %v7377 = vmul.f32 %v7337, %v7365
    %v7378 = vadd.f32 %v5531, %v7372
    %v7379 = vadd.f32 %v5532, %v7373
    %v7380 = vadd.f32 %v5533, %v7374
    %v7381 = vadd.f32 %v5534, %v7375
    %v7382 = vadd.f32 %v5535, %v7376
    %v7383 = vadd.f32 %v5536, %v7377
    %v7384 = vld [vmem:[#allocation2 + $0x36] sm:$0x3f]
    %v7386 = vlaneseq
    %v7387 = vshrl.u32 %v7386, 7
    %v7388 = vsub.s32 0, %v7387
    %v7389 = vrot.slane %v7384, %v7388
    %v7390 = vlaneseq
    %v7391 = vshrl.u32 %v7390, 7
    %v7392 = vsub.s32 1, %v7391
    %v7393 = vrot.slane %v7384, %v7392
    %v7394 = vlaneseq
    %v7395 = vshrl.u32 %v7394, 7
    %v7396 = vsub.s32 2, %v7395
    %v7397 = vrot.slane %v7384, %v7396
    %v7398 = vlaneseq
    %v7399 = vshrl.u32 %v7398, 7
    %v7400 = vsub.s32 3, %v7399
    %v7401 = vrot.slane %v7384, %v7400
    %v7402 = vlaneseq
    %v7403 = vshrl.u32 %v7402, 7
    %v7404 = vsub.s32 4, %v7403
    %v7405 = vrot.slane %v7384, %v7404
    %v7406 = vlaneseq
    %v7407 = vshrl.u32 %v7406, 7
    %v7408 = vsub.s32 5, %v7407
    %v7409 = vrot.slane %v7384, %v7408
    %v7416 = vadd.f32 %v7378, %v7389
    %v7417 = vadd.f32 %v7379, %v7393
    %v7418 = vadd.f32 %v7380, %v7397
    %v7419 = vadd.f32 %v7381, %v7401
    %v7420 = vadd.f32 %v7382, %v7405
    %v7421 = vadd.f32 %v7383, %v7409
    %v7422 = vld [vmem:[#allocation2 + $0x3c] sm:$0x3f]
    %v7423 = vld [vmem:[#allocation2 + $0x42] sm:$0x3f]
    %v7424 = vadd.f32 %v7416, %v7417
    %v7425 = vadd.f32 %v7424, %v7418
    %v7426 = vadd.f32 %v7425, %v7419
    %v7427 = vadd.f32 %v7426, %v7420
    %v7428 = vadd.f32 %v7427, %v7421
    %7429 = vadd.xlane.f32.xlu0 %v7428
    %v7430 = vpop.xlane.xlu0 %7429
    %v7431 = vmul.f32 %v7430, %v5546
    %v7432 = vsub.f32 %v7416, %v7431
    %v7433 = vsub.f32 %v7417, %v7431
    %v7434 = vsub.f32 %v7418, %v7431
    %v7435 = vsub.f32 %v7419, %v7431
    %v7436 = vsub.f32 %v7420, %v7431
    %v7437 = vsub.f32 %v7421, %v7431
    %v7438 = vmul.f32 %v7432, %v7432
    %v7439 = vmul.f32 %v7433, %v7433
    %v7440 = vmul.f32 %v7434, %v7434
    %v7441 = vmul.f32 %v7435, %v7435
    %v7442 = vmul.f32 %v7436, %v7436
    %v7443 = vmul.f32 %v7437, %v7437
    %v7444 = vadd.f32 %v7438, %v7439
    %v7445 = vadd.f32 %v7444, %v7440
    %v7446 = vadd.f32 %v7445, %v7441
    %v7447 = vadd.f32 %v7446, %v7442
    %v7448 = vadd.f32 %v7447, %v7443
    %7449 = vadd.xlane.f32.xlu0 %v7448
    %v7450 = vpop.xlane.xlu0 %7449
    %v7451 = vmul.f32 %v7450, %v5546
    %v7452 = vadd.f32 %v7451, 1e-05
    %v7453 = vrsqrt.pop %v7452
    %v7454 = vmul.f32 %v7432, %v7453
    %v7455 = vmul.f32 %v7433, %v7453
    %v7456 = vmul.f32 %v7434, %v7453
    %v7457 = vmul.f32 %v7435, %v7453
    %v7458 = vmul.f32 %v7436, %v7453
    %v7459 = vmul.f32 %v7437, %v7453
    %v7461 = vlaneseq
    %v7462 = vshrl.u32 %v7461, 7
    %v7463 = vsub.s32 0, %v7462
    %v7464 = vrot.slane %v7422, %v7463
    %v7465 = vlaneseq
    %v7466 = vshrl.u32 %v7465, 7
    %v7467 = vsub.s32 1, %v7466
    %v7468 = vrot.slane %v7422, %v7467
    %v7469 = vlaneseq
    %v7470 = vshrl.u32 %v7469, 7
    %v7471 = vsub.s32 2, %v7470
    %v7472 = vrot.slane %v7422, %v7471
    %v7473 = vlaneseq
    %v7474 = vshrl.u32 %v7473, 7
    %v7475 = vsub.s32 3, %v7474
    %v7476 = vrot.slane %v7422, %v7475
    %v7477 = vlaneseq
    %v7478 = vshrl.u32 %v7477, 7
    %v7479 = vsub.s32 4, %v7478
    %v7480 = vrot.slane %v7422, %v7479
    %v7481 = vlaneseq
    %v7482 = vshrl.u32 %v7481, 7
    %v7483 = vsub.s32 5, %v7482
    %v7484 = vrot.slane %v7422, %v7483
    %v7491 = vmul.f32 %v7454, %v7464
    %v7492 = vmul.f32 %v7455, %v7468
    %v7493 = vmul.f32 %v7456, %v7472
    %v7494 = vmul.f32 %v7457, %v7476
    %v7495 = vmul.f32 %v7458, %v7480
    %v7496 = vmul.f32 %v7459, %v7484
    %v7498 = vlaneseq
    %v7499 = vshrl.u32 %v7498, 7
    %v7500 = vsub.s32 0, %v7499
    %v7501 = vrot.slane %v7423, %v7500
    %v7502 = vlaneseq
    %v7503 = vshrl.u32 %v7502, 7
    %v7504 = vsub.s32 1, %v7503
    %v7505 = vrot.slane %v7423, %v7504
    %v7506 = vlaneseq
    %v7507 = vshrl.u32 %v7506, 7
    %v7508 = vsub.s32 2, %v7507
    %v7509 = vrot.slane %v7423, %v7508
    %v7510 = vlaneseq
    %v7511 = vshrl.u32 %v7510, 7
    %v7512 = vsub.s32 3, %v7511
    %v7513 = vrot.slane %v7423, %v7512
    %v7514 = vlaneseq
    %v7515 = vshrl.u32 %v7514, 7
    %v7516 = vsub.s32 4, %v7515
    %v7517 = vrot.slane %v7423, %v7516
    %v7518 = vlaneseq
    %v7519 = vshrl.u32 %v7518, 7
    %v7520 = vsub.s32 5, %v7519
    %v7521 = vrot.slane %v7423, %v7520
    %v7528 = vadd.f32 %v7491, %v7501
    %v7529 = vadd.f32 %v7492, %v7505
    %v7530 = vadd.f32 %v7493, %v7509
    %v7531 = vadd.f32 %v7494, %v7513
    %v7532 = vadd.f32 %v7495, %v7517
    %v7533 = vadd.f32 %v7496, %v7521
    %v7534 = vld [vmem:[#allocation2 + $0x8c] sm:$0xff]
    %v7535 = vld [vmem:[#allocation15] sm:$0xff]
    %v7536 = vld [vmem:[#allocation15 + $0x8] sm:$0xff]
    %v7537 = vld [vmem:[#allocation15 + $0x10] sm:$0xff]
    %v7538 = vld [vmem:[#allocation15 + $0x18] sm:$0xff]
    %v7539 = vld [vmem:[#allocation15 + $0x20] sm:$0xff]
    %v7540 = vld [vmem:[#allocation15 + $0x28] sm:$0xff]
    %v7541 = vld [vmem:[#allocation15 + $0x30] sm:$0xff]
    %v7542 = vld [vmem:[#allocation15 + $0x38] sm:$0xff]
    %v7543 = vld [vmem:[#allocation15 + $0x40] sm:$0xff]
    %v7544 = vld [vmem:[#allocation15 + $0x48] sm:$0xff]
    %v7545 = vld [vmem:[#allocation15 + $0x50] sm:$0xff]
    %v7546 = vld [vmem:[#allocation15 + $0x58] sm:$0xff]
    %v7547 = vld [vmem:[#allocation15 + $0x60] sm:$0xff]
    %v7548 = vld [vmem:[#allocation15 + $0x68] sm:$0xff]
    %v7549 = vld [vmem:[#allocation15 + $0x70] sm:$0xff]
    %v7550 = vld [vmem:[#allocation15 + $0x78] sm:$0xff]
    %v7551 = vld [vmem:[#allocation15 + $0x80] sm:$0xff]
    %v7552 = vld [vmem:[#allocation15 + $0x88] sm:$0xff]
    %v7553 = vld [vmem:[#allocation15 + $0x90] sm:$0xff]
    %v7554 = vld [vmem:[#allocation15 + $0x98] sm:$0xff]
    %v7555 = vld [vmem:[#allocation15 + $0xa0] sm:$0xff]
    %v7556 = vld [vmem:[#allocation15 + $0xa8] sm:$0xff]
    %v7557 = vld [vmem:[#allocation15 + $0xb0] sm:$0xff]
    %v7558 = vld [vmem:[#allocation15 + $0xb8] sm:$0xff]
    %v7559 = vld [vmem:[#allocation15 + $0xc0] sm:$0xff]
    %v7560 = vld [vmem:[#allocation15 + $0xc8] sm:$0xff]
    %v7561 = vld [vmem:[#allocation15 + $0xd0] sm:$0xff]
    %v7562 = vld [vmem:[#allocation15 + $0xd8] sm:$0xff]
    %v7563 = vld [vmem:[#allocation15 + $0xe0] sm:$0xff]
    %v7564 = vld [vmem:[#allocation15 + $0xe8] sm:$0xff]
    %v7565 = vld [vmem:[#allocation15 + $0xf0] sm:$0xff]
    %v7566 = vld [vmem:[#allocation15 + $0xf8] sm:$0xff]
    %v7567 = vld [vmem:[#allocation15 + $0x100] sm:$0xff]
    %v7568 = vld [vmem:[#allocation15 + $0x108] sm:$0xff]
    %v7569 = vld [vmem:[#allocation15 + $0x110] sm:$0xff]
    %v7570 = vld [vmem:[#allocation15 + $0x118] sm:$0xff]
    %v7571 = vld [vmem:[#allocation15 + $0x120] sm:$0xff]
    %v7572 = vld [vmem:[#allocation15 + $0x128] sm:$0xff]
    %v7573 = vld [vmem:[#allocation15 + $0x130] sm:$0xff]
    %v7574 = vld [vmem:[#allocation15 + $0x138] sm:$0xff]
    %v7575 = vld [vmem:[#allocation15 + $0x140] sm:$0xff]
    %v7576 = vld [vmem:[#allocation15 + $0x148] sm:$0xff]
    %v7577 = vld [vmem:[#allocation15 + $0x150] sm:$0xff]
    %v7578 = vld [vmem:[#allocation15 + $0x158] sm:$0xff]
    %v7579 = vld [vmem:[#allocation15 + $0x160] sm:$0xff]
    %v7580 = vld [vmem:[#allocation15 + $0x168] sm:$0xff]
    %v7581 = vld [vmem:[#allocation15 + $0x170] sm:$0xff]
    %v7582 = vld [vmem:[#allocation15 + $0x178] sm:$0xff]
    %v7583 = vld [vmem:[#allocation15 + $0x180] sm:$0xff]
    %v7584 = vld [vmem:[#allocation15 + $0x188] sm:$0xff]
    %v7585 = vld [vmem:[#allocation15 + $0x190] sm:$0xff]
    %v7586 = vld [vmem:[#allocation15 + $0x198] sm:$0xff]
    %v7587 = vld [vmem:[#allocation15 + $0x1a0] sm:$0xff]
    %v7588 = vld [vmem:[#allocation15 + $0x1a8] sm:$0xff]
    %v7589 = vld [vmem:[#allocation15 + $0x1b0] sm:$0xff]
    %v7590 = vld [vmem:[#allocation15 + $0x1b8] sm:$0xff]
    %v7591 = vld [vmem:[#allocation15 + $0x1c0] sm:$0xff]
    %v7592 = vld [vmem:[#allocation15 + $0x1c8] sm:$0xff]
    %v7593 = vld [vmem:[#allocation15 + $0x1d0] sm:$0xff]
    %v7594 = vld [vmem:[#allocation15 + $0x1d8] sm:$0xff]
    %v7595 = vld [vmem:[#allocation15 + $0x1e0] sm:$0xff]
    %v7596 = vld [vmem:[#allocation15 + $0x1e8] sm:$0xff]
    %v7597 = vld [vmem:[#allocation15 + $0x1f0] sm:$0xff]
    %v7598 = vld [vmem:[#allocation15 + $0x1f8] sm:$0xff]
    %v7599 = vld [vmem:[#allocation15 + $0x200] sm:$0xff]
    %v7600 = vld [vmem:[#allocation15 + $0x208] sm:$0xff]
    %v7601 = vld [vmem:[#allocation15 + $0x210] sm:$0xff]
    %v7602 = vld [vmem:[#allocation15 + $0x218] sm:$0xff]
    %v7603 = vld [vmem:[#allocation15 + $0x220] sm:$0xff]
    %v7604 = vld [vmem:[#allocation15 + $0x228] sm:$0xff]
    %v7605 = vld [vmem:[#allocation15 + $0x230] sm:$0xff]
    %v7606 = vld [vmem:[#allocation15 + $0x238] sm:$0xff]
    %v7607 = vld [vmem:[#allocation15 + $0x240] sm:$0xff]
    %v7608 = vld [vmem:[#allocation15 + $0x248] sm:$0xff]
    %v7609 = vld [vmem:[#allocation15 + $0x250] sm:$0xff]
    %v7610 = vld [vmem:[#allocation15 + $0x258] sm:$0xff]
    %v7611 = vld [vmem:[#allocation15 + $0x260] sm:$0xff]
    %v7612 = vld [vmem:[#allocation15 + $0x268] sm:$0xff]
    %v7613 = vld [vmem:[#allocation15 + $0x270] sm:$0xff]
    %v7614 = vld [vmem:[#allocation15 + $0x278] sm:$0xff]
    %v7615 = vld [vmem:[#allocation15 + $0x280] sm:$0xff]
    %v7616 = vld [vmem:[#allocation15 + $0x288] sm:$0xff]
    %v7617 = vld [vmem:[#allocation15 + $0x290] sm:$0xff]
    %v7618 = vld [vmem:[#allocation15 + $0x298] sm:$0xff]
    %v7619 = vld [vmem:[#allocation15 + $0x2a0] sm:$0xff]
    %v7620 = vld [vmem:[#allocation15 + $0x2a8] sm:$0xff]
    %v7621 = vld [vmem:[#allocation15 + $0x2b0] sm:$0xff]
    %v7622 = vld [vmem:[#allocation15 + $0x2b8] sm:$0xff]
    %v7623 = vld [vmem:[#allocation15 + $0x2c0] sm:$0xff]
    %v7624 = vld [vmem:[#allocation15 + $0x2c8] sm:$0xff]
    %v7625 = vld [vmem:[#allocation15 + $0x2d0] sm:$0xff]
    %v7626 = vld [vmem:[#allocation15 + $0x2d8] sm:$0xff]
    %v7627 = vld [vmem:[#allocation15 + $0x2e0] sm:$0xff]
    %v7628 = vld [vmem:[#allocation15 + $0x2e8] sm:$0xff]
    %v7629 = vld [vmem:[#allocation15 + $0x2f0] sm:$0xff]
    %v7630 = vld [vmem:[#allocation15 + $0x2f8] sm:$0xff]
    %v7631 = vld [vmem:[#allocation15 + $0x300] sm:$0xff]
    %v7632 = vld [vmem:[#allocation15 + $0x308] sm:$0xff]
    %v7633 = vld [vmem:[#allocation15 + $0x310] sm:$0xff]
    %v7634 = vld [vmem:[#allocation15 + $0x318] sm:$0xff]
    %v7635 = vld [vmem:[#allocation15 + $0x320] sm:$0xff]
    %v7636 = vld [vmem:[#allocation15 + $0x328] sm:$0xff]
    %v7637 = vld [vmem:[#allocation15 + $0x330] sm:$0xff]
    %v7638 = vld [vmem:[#allocation15 + $0x338] sm:$0xff]
    %v7639 = vld [vmem:[#allocation15 + $0x340] sm:$0xff]
    %v7640 = vld [vmem:[#allocation15 + $0x348] sm:$0xff]
    %v7641 = vld [vmem:[#allocation15 + $0x350] sm:$0xff]
    %v7642 = vld [vmem:[#allocation15 + $0x358] sm:$0xff]
    %v7643 = vld [vmem:[#allocation15 + $0x360] sm:$0xff]
    %v7644 = vld [vmem:[#allocation15 + $0x368] sm:$0xff]
    %v7645 = vld [vmem:[#allocation15 + $0x370] sm:$0xff]
    %v7646 = vld [vmem:[#allocation15 + $0x378] sm:$0xff]
    %v7647 = vld [vmem:[#allocation15 + $0x380] sm:$0xff]
    %v7648 = vld [vmem:[#allocation15 + $0x388] sm:$0xff]
    %v7649 = vld [vmem:[#allocation15 + $0x390] sm:$0xff]
    %v7650 = vld [vmem:[#allocation15 + $0x398] sm:$0xff]
    %v7651 = vld [vmem:[#allocation15 + $0x3a0] sm:$0xff]
    %v7652 = vld [vmem:[#allocation15 + $0x3a8] sm:$0xff]
    %v7653 = vld [vmem:[#allocation15 + $0x3b0] sm:$0xff]
    %v7654 = vld [vmem:[#allocation15 + $0x3b8] sm:$0xff]
    %v7655 = vld [vmem:[#allocation15 + $0x3c0] sm:$0xff]
    %v7656 = vld [vmem:[#allocation15 + $0x3c8] sm:$0xff]
    %v7657 = vld [vmem:[#allocation15 + $0x3d0] sm:$0xff]
    %v7658 = vld [vmem:[#allocation15 + $0x3d8] sm:$0xff]
    %v7659 = vld [vmem:[#allocation15 + $0x3e0] sm:$0xff]
    %v7660 = vld [vmem:[#allocation15 + $0x3e8] sm:$0xff]
    %v7661 = vld [vmem:[#allocation15 + $0x3f0] sm:$0xff]
    %v7662 = vld [vmem:[#allocation15 + $0x3f8] sm:$0xff]
    %v7663 = vld [vmem:[#allocation15 + $0x400] sm:$0xff]
    %v7664 = vld [vmem:[#allocation15 + $0x408] sm:$0xff]
    %v7665 = vld [vmem:[#allocation15 + $0x410] sm:$0xff]
    %v7666 = vld [vmem:[#allocation15 + $0x418] sm:$0xff]
    %v7667 = vld [vmem:[#allocation15 + $0x420] sm:$0xff]
    %v7668 = vld [vmem:[#allocation15 + $0x428] sm:$0xff]
    %v7669 = vld [vmem:[#allocation15 + $0x430] sm:$0xff]
    %v7670 = vld [vmem:[#allocation15 + $0x438] sm:$0xff]
    %v7671 = vld [vmem:[#allocation15 + $0x440] sm:$0xff]
    %v7672 = vld [vmem:[#allocation15 + $0x448] sm:$0xff]
    %v7673 = vld [vmem:[#allocation15 + $0x450] sm:$0xff]
    %v7674 = vld [vmem:[#allocation15 + $0x458] sm:$0xff]
    %v7675 = vld [vmem:[#allocation15 + $0x460] sm:$0xff]
    %v7676 = vld [vmem:[#allocation15 + $0x468] sm:$0xff]
    %v7677 = vld [vmem:[#allocation15 + $0x470] sm:$0xff]
    %v7678 = vld [vmem:[#allocation15 + $0x478] sm:$0xff]
    %v7679 = vld [vmem:[#allocation15 + $0x480] sm:$0xff]
    %v7680 = vld [vmem:[#allocation15 + $0x488] sm:$0xff]
    %v7681 = vld [vmem:[#allocation15 + $0x490] sm:$0xff]
    %v7682 = vld [vmem:[#allocation15 + $0x498] sm:$0xff]
    %v7683 = vld [vmem:[#allocation15 + $0x4a0] sm:$0xff]
    %v7684 = vld [vmem:[#allocation15 + $0x4a8] sm:$0xff]
    %v7685 = vld [vmem:[#allocation15 + $0x4b0] sm:$0xff]
    %v7686 = vld [vmem:[#allocation15 + $0x4b8] sm:$0xff]
    %v7687 = vld [vmem:[#allocation15 + $0x4c0] sm:$0xff]
    %v7688 = vld [vmem:[#allocation15 + $0x4c8] sm:$0xff]
    %v7689 = vld [vmem:[#allocation15 + $0x4d0] sm:$0xff]
    %v7690 = vld [vmem:[#allocation15 + $0x4d8] sm:$0xff]
    %v7691 = vld [vmem:[#allocation15 + $0x4e0] sm:$0xff]
    %v7692 = vld [vmem:[#allocation15 + $0x4e8] sm:$0xff]
    %v7693 = vld [vmem:[#allocation15 + $0x4f0] sm:$0xff]
    %v7694 = vld [vmem:[#allocation15 + $0x4f8] sm:$0xff]
    %v7695 = vld [vmem:[#allocation15 + $0x500] sm:$0xff]
    %v7696 = vld [vmem:[#allocation15 + $0x508] sm:$0xff]
    %v7697 = vld [vmem:[#allocation15 + $0x510] sm:$0xff]
    %v7698 = vld [vmem:[#allocation15 + $0x518] sm:$0xff]
    %v7699 = vld [vmem:[#allocation15 + $0x520] sm:$0xff]
    %v7700 = vld [vmem:[#allocation15 + $0x528] sm:$0xff]
    %v7701 = vld [vmem:[#allocation15 + $0x530] sm:$0xff]
    %v7702 = vld [vmem:[#allocation15 + $0x538] sm:$0xff]
    %v7703 = vld [vmem:[#allocation15 + $0x540] sm:$0xff]
    %v7704 = vld [vmem:[#allocation15 + $0x548] sm:$0xff]
    %v7705 = vld [vmem:[#allocation15 + $0x550] sm:$0xff]
    %v7706 = vld [vmem:[#allocation15 + $0x558] sm:$0xff]
    %v7707 = vld [vmem:[#allocation15 + $0x560] sm:$0xff]
    %v7708 = vld [vmem:[#allocation15 + $0x568] sm:$0xff]
    %v7709 = vld [vmem:[#allocation15 + $0x570] sm:$0xff]
    %v7710 = vld [vmem:[#allocation15 + $0x578] sm:$0xff]
    %v7711 = vld [vmem:[#allocation15 + $0x580] sm:$0xff]
    %v7712 = vld [vmem:[#allocation15 + $0x588] sm:$0xff]
    %v7713 = vld [vmem:[#allocation15 + $0x590] sm:$0xff]
    %v7714 = vld [vmem:[#allocation15 + $0x598] sm:$0xff]
    %v7715 = vld [vmem:[#allocation15 + $0x5a0] sm:$0xff]
    %v7716 = vld [vmem:[#allocation15 + $0x5a8] sm:$0xff]
    %v7717 = vld [vmem:[#allocation15 + $0x5b0] sm:$0xff]
    %v7718 = vld [vmem:[#allocation15 + $0x5b8] sm:$0xff]
    %v7719 = vld [vmem:[#allocation15 + $0x5c0] sm:$0xff]
    %v7720 = vld [vmem:[#allocation15 + $0x5c8] sm:$0xff]
    %v7721 = vld [vmem:[#allocation15 + $0x5d0] sm:$0xff]
    %v7722 = vld [vmem:[#allocation15 + $0x5d8] sm:$0xff]
    %v7723 = vld [vmem:[#allocation15 + $0x5e0] sm:$0xff]
    %v7724 = vld [vmem:[#allocation15 + $0x5e8] sm:$0xff]
    %v7725 = vld [vmem:[#allocation15 + $0x5f0] sm:$0xff]
    %v7726 = vld [vmem:[#allocation15 + $0x5f8] sm:$0xff]
    %v7727 = vunpack.c.l.s8.bf16 %v7535
    %v7728 = vunpack.c.l.s8.bf16 %v7536
    %v7729 = vunpack.c.l.s8.bf16 %v7537
    %v7730 = vunpack.c.l.s8.bf16 %v7538
    %v7731 = vunpack.c.l.s8.bf16 %v7539
    %v7732 = vunpack.c.l.s8.bf16 %v7540
    %v7733 = vunpack.c.l.s8.bf16 %v7541
    %v7734 = vunpack.c.l.s8.bf16 %v7542
    %v7735 = vunpack.c.h.s8.bf16 %v7535
    %v7736 = vunpack.c.h.s8.bf16 %v7536
    %v7737 = vunpack.c.h.s8.bf16 %v7537
    %v7738 = vunpack.c.h.s8.bf16 %v7538
    %v7739 = vunpack.c.h.s8.bf16 %v7539
    %v7740 = vunpack.c.h.s8.bf16 %v7540
    %v7741 = vunpack.c.h.s8.bf16 %v7541
    %v7742 = vunpack.c.h.s8.bf16 %v7542
    %v7743 = vunpack.c.l.s8.bf16 %v7543
    %v7744 = vunpack.c.l.s8.bf16 %v7544
    %v7745 = vunpack.c.l.s8.bf16 %v7545
    %v7746 = vunpack.c.l.s8.bf16 %v7546
    %v7747 = vunpack.c.l.s8.bf16 %v7547
    %v7748 = vunpack.c.l.s8.bf16 %v7548
    %v7749 = vunpack.c.l.s8.bf16 %v7549
    %v7750 = vunpack.c.l.s8.bf16 %v7550
    %v7751 = vunpack.c.h.s8.bf16 %v7543
    %v7752 = vunpack.c.h.s8.bf16 %v7544
    %v7753 = vunpack.c.h.s8.bf16 %v7545
    %v7754 = vunpack.c.h.s8.bf16 %v7546
    %v7755 = vunpack.c.h.s8.bf16 %v7547
    %v7756 = vunpack.c.h.s8.bf16 %v7548
    %v7757 = vunpack.c.h.s8.bf16 %v7549
    %v7758 = vunpack.c.h.s8.bf16 %v7550
    %v7759 = vunpack.c.l.s8.bf16 %v7551
    %v7760 = vunpack.c.l.s8.bf16 %v7552
    %v7761 = vunpack.c.l.s8.bf16 %v7553
    %v7762 = vunpack.c.l.s8.bf16 %v7554
    %v7763 = vunpack.c.l.s8.bf16 %v7555
    %v7764 = vunpack.c.l.s8.bf16 %v7556
    %v7765 = vunpack.c.l.s8.bf16 %v7557
    %v7766 = vunpack.c.l.s8.bf16 %v7558
    %v7767 = vunpack.c.h.s8.bf16 %v7551
    %v7768 = vunpack.c.h.s8.bf16 %v7552
    %v7769 = vunpack.c.h.s8.bf16 %v7553
    %v7770 = vunpack.c.h.s8.bf16 %v7554
    %v7771 = vunpack.c.h.s8.bf16 %v7555
    %v7772 = vunpack.c.h.s8.bf16 %v7556
    %v7773 = vunpack.c.h.s8.bf16 %v7557
    %v7774 = vunpack.c.h.s8.bf16 %v7558
    %v7775 = vunpack.c.l.s8.bf16 %v7559
    %v7776 = vunpack.c.l.s8.bf16 %v7560
    %v7777 = vunpack.c.l.s8.bf16 %v7561
    %v7778 = vunpack.c.l.s8.bf16 %v7562
    %v7779 = vunpack.c.l.s8.bf16 %v7563
    %v7780 = vunpack.c.l.s8.bf16 %v7564
    %v7781 = vunpack.c.l.s8.bf16 %v7565
    %v7782 = vunpack.c.l.s8.bf16 %v7566
    %v7783 = vunpack.c.h.s8.bf16 %v7559
    %v7784 = vunpack.c.h.s8.bf16 %v7560
    %v7785 = vunpack.c.h.s8.bf16 %v7561
    %v7786 = vunpack.c.h.s8.bf16 %v7562
    %v7787 = vunpack.c.h.s8.bf16 %v7563
    %v7788 = vunpack.c.h.s8.bf16 %v7564
    %v7789 = vunpack.c.h.s8.bf16 %v7565
    %v7790 = vunpack.c.h.s8.bf16 %v7566
    %v7791 = vunpack.c.l.s8.bf16 %v7567
    %v7792 = vunpack.c.l.s8.bf16 %v7568
    %v7793 = vunpack.c.l.s8.bf16 %v7569
    %v7794 = vunpack.c.l.s8.bf16 %v7570
    %v7795 = vunpack.c.l.s8.bf16 %v7571
    %v7796 = vunpack.c.l.s8.bf16 %v7572
    %v7797 = vunpack.c.l.s8.bf16 %v7573
    %v7798 = vunpack.c.l.s8.bf16 %v7574
    %v7799 = vunpack.c.h.s8.bf16 %v7567
    %v7800 = vunpack.c.h.s8.bf16 %v7568
    %v7801 = vunpack.c.h.s8.bf16 %v7569
    %v7802 = vunpack.c.h.s8.bf16 %v7570
    %v7803 = vunpack.c.h.s8.bf16 %v7571
    %v7804 = vunpack.c.h.s8.bf16 %v7572
    %v7805 = vunpack.c.h.s8.bf16 %v7573
    %v7806 = vunpack.c.h.s8.bf16 %v7574
    %v7807 = vunpack.c.l.s8.bf16 %v7575
    %v7808 = vunpack.c.l.s8.bf16 %v7576
    %v7809 = vunpack.c.l.s8.bf16 %v7577
    %v7810 = vunpack.c.l.s8.bf16 %v7578
    %v7811 = vunpack.c.l.s8.bf16 %v7579
    %v7812 = vunpack.c.l.s8.bf16 %v7580
    %v7813 = vunpack.c.l.s8.bf16 %v7581
    %v7814 = vunpack.c.l.s8.bf16 %v7582
    %v7815 = vunpack.c.h.s8.bf16 %v7575
    %v7816 = vunpack.c.h.s8.bf16 %v7576
    %v7817 = vunpack.c.h.s8.bf16 %v7577
    %v7818 = vunpack.c.h.s8.bf16 %v7578
    %v7819 = vunpack.c.h.s8.bf16 %v7579
    %v7820 = vunpack.c.h.s8.bf16 %v7580
    %v7821 = vunpack.c.h.s8.bf16 %v7581
    %v7822 = vunpack.c.h.s8.bf16 %v7582
    %v7823 = vunpack.c.l.s8.bf16 %v7583
    %v7824 = vunpack.c.l.s8.bf16 %v7584
    %v7825 = vunpack.c.l.s8.bf16 %v7585
    %v7826 = vunpack.c.l.s8.bf16 %v7586
    %v7827 = vunpack.c.l.s8.bf16 %v7587
    %v7828 = vunpack.c.l.s8.bf16 %v7588
    %v7829 = vunpack.c.l.s8.bf16 %v7589
    %v7830 = vunpack.c.l.s8.bf16 %v7590
    %v7831 = vunpack.c.h.s8.bf16 %v7583
    %v7832 = vunpack.c.h.s8.bf16 %v7584
    %v7833 = vunpack.c.h.s8.bf16 %v7585
    %v7834 = vunpack.c.h.s8.bf16 %v7586
    %v7835 = vunpack.c.h.s8.bf16 %v7587
    %v7836 = vunpack.c.h.s8.bf16 %v7588
    %v7837 = vunpack.c.h.s8.bf16 %v7589
    %v7838 = vunpack.c.h.s8.bf16 %v7590
    %v7839 = vunpack.c.l.s8.bf16 %v7591
    %v7840 = vunpack.c.l.s8.bf16 %v7592
    %v7841 = vunpack.c.l.s8.bf16 %v7593
    %v7842 = vunpack.c.l.s8.bf16 %v7594
    %v7843 = vunpack.c.l.s8.bf16 %v7595
    %v7844 = vunpack.c.l.s8.bf16 %v7596
    %v7845 = vunpack.c.l.s8.bf16 %v7597
    %v7846 = vunpack.c.l.s8.bf16 %v7598
    %v7847 = vunpack.c.h.s8.bf16 %v7591
    %v7848 = vunpack.c.h.s8.bf16 %v7592
    %v7849 = vunpack.c.h.s8.bf16 %v7593
    %v7850 = vunpack.c.h.s8.bf16 %v7594
    %v7851 = vunpack.c.h.s8.bf16 %v7595
    %v7852 = vunpack.c.h.s8.bf16 %v7596
    %v7853 = vunpack.c.h.s8.bf16 %v7597
    %v7854 = vunpack.c.h.s8.bf16 %v7598
    %v7855 = vunpack.c.l.s8.bf16 %v7599
    %v7856 = vunpack.c.l.s8.bf16 %v7600
    %v7857 = vunpack.c.l.s8.bf16 %v7601
    %v7858 = vunpack.c.l.s8.bf16 %v7602
    %v7859 = vunpack.c.l.s8.bf16 %v7603
    %v7860 = vunpack.c.l.s8.bf16 %v7604
    %v7861 = vunpack.c.l.s8.bf16 %v7605
    %v7862 = vunpack.c.l.s8.bf16 %v7606
    %v7863 = vunpack.c.h.s8.bf16 %v7599
    %v7864 = vunpack.c.h.s8.bf16 %v7600
    %v7865 = vunpack.c.h.s8.bf16 %v7601
    %v7866 = vunpack.c.h.s8.bf16 %v7602
    %v7867 = vunpack.c.h.s8.bf16 %v7603
    %v7868 = vunpack.c.h.s8.bf16 %v7604
    %v7869 = vunpack.c.h.s8.bf16 %v7605
    %v7870 = vunpack.c.h.s8.bf16 %v7606
    %v7871 = vunpack.c.l.s8.bf16 %v7607
    %v7872 = vunpack.c.l.s8.bf16 %v7608
    %v7873 = vunpack.c.l.s8.bf16 %v7609
    %v7874 = vunpack.c.l.s8.bf16 %v7610
    %v7875 = vunpack.c.l.s8.bf16 %v7611
    %v7876 = vunpack.c.l.s8.bf16 %v7612
    %v7877 = vunpack.c.l.s8.bf16 %v7613
    %v7878 = vunpack.c.l.s8.bf16 %v7614
    %v7879 = vunpack.c.h.s8.bf16 %v7607
    %v7880 = vunpack.c.h.s8.bf16 %v7608
    %v7881 = vunpack.c.h.s8.bf16 %v7609
    %v7882 = vunpack.c.h.s8.bf16 %v7610
    %v7883 = vunpack.c.h.s8.bf16 %v7611
    %v7884 = vunpack.c.h.s8.bf16 %v7612
    %v7885 = vunpack.c.h.s8.bf16 %v7613
    %v7886 = vunpack.c.h.s8.bf16 %v7614
    %v7887 = vunpack.c.l.s8.bf16 %v7615
    %v7888 = vunpack.c.l.s8.bf16 %v7616
    %v7889 = vunpack.c.l.s8.bf16 %v7617
    %v7890 = vunpack.c.l.s8.bf16 %v7618
    %v7891 = vunpack.c.l.s8.bf16 %v7619
    %v7892 = vunpack.c.l.s8.bf16 %v7620
    %v7893 = vunpack.c.l.s8.bf16 %v7621
    %v7894 = vunpack.c.l.s8.bf16 %v7622
    %v7895 = vunpack.c.h.s8.bf16 %v7615
    %v7896 = vunpack.c.h.s8.bf16 %v7616
    %v7897 = vunpack.c.h.s8.bf16 %v7617
    %v7898 = vunpack.c.h.s8.bf16 %v7618
    %v7899 = vunpack.c.h.s8.bf16 %v7619
    %v7900 = vunpack.c.h.s8.bf16 %v7620
    %v7901 = vunpack.c.h.s8.bf16 %v7621
    %v7902 = vunpack.c.h.s8.bf16 %v7622
    %v7903 = vunpack.c.l.s8.bf16 %v7623
    %v7904 = vunpack.c.l.s8.bf16 %v7624
    %v7905 = vunpack.c.l.s8.bf16 %v7625
    %v7906 = vunpack.c.l.s8.bf16 %v7626
    %v7907 = vunpack.c.l.s8.bf16 %v7627
    %v7908 = vunpack.c.l.s8.bf16 %v7628
    %v7909 = vunpack.c.l.s8.bf16 %v7629
    %v7910 = vunpack.c.l.s8.bf16 %v7630
    %v7911 = vunpack.c.h.s8.bf16 %v7623
    %v7912 = vunpack.c.h.s8.bf16 %v7624
    %v7913 = vunpack.c.h.s8.bf16 %v7625
    %v7914 = vunpack.c.h.s8.bf16 %v7626
    %v7915 = vunpack.c.h.s8.bf16 %v7627
    %v7916 = vunpack.c.h.s8.bf16 %v7628
    %v7917 = vunpack.c.h.s8.bf16 %v7629
    %v7918 = vunpack.c.h.s8.bf16 %v7630
    %v7919 = vunpack.c.l.s8.bf16 %v7631
    %v7920 = vunpack.c.l.s8.bf16 %v7632
    %v7921 = vunpack.c.l.s8.bf16 %v7633
    %v7922 = vunpack.c.l.s8.bf16 %v7634
    %v7923 = vunpack.c.l.s8.bf16 %v7635
    %v7924 = vunpack.c.l.s8.bf16 %v7636
    %v7925 = vunpack.c.l.s8.bf16 %v7637
    %v7926 = vunpack.c.l.s8.bf16 %v7638
    %v7927 = vunpack.c.h.s8.bf16 %v7631
    %v7928 = vunpack.c.h.s8.bf16 %v7632
    %v7929 = vunpack.c.h.s8.bf16 %v7633
    %v7930 = vunpack.c.h.s8.bf16 %v7634
    %v7931 = vunpack.c.h.s8.bf16 %v7635
    %v7932 = vunpack.c.h.s8.bf16 %v7636
    %v7933 = vunpack.c.h.s8.bf16 %v7637
    %v7934 = vunpack.c.h.s8.bf16 %v7638
    %v7935 = vunpack.c.l.s8.bf16 %v7639
    %v7936 = vunpack.c.l.s8.bf16 %v7640
    %v7937 = vunpack.c.l.s8.bf16 %v7641
    %v7938 = vunpack.c.l.s8.bf16 %v7642
    %v7939 = vunpack.c.l.s8.bf16 %v7643
    %v7940 = vunpack.c.l.s8.bf16 %v7644
    %v7941 = vunpack.c.l.s8.bf16 %v7645
    %v7942 = vunpack.c.l.s8.bf16 %v7646
    %v7943 = vunpack.c.h.s8.bf16 %v7639
    %v7944 = vunpack.c.h.s8.bf16 %v7640
    %v7945 = vunpack.c.h.s8.bf16 %v7641
    %v7946 = vunpack.c.h.s8.bf16 %v7642
    %v7947 = vunpack.c.h.s8.bf16 %v7643
    %v7948 = vunpack.c.h.s8.bf16 %v7644
    %v7949 = vunpack.c.h.s8.bf16 %v7645
    %v7950 = vunpack.c.h.s8.bf16 %v7646
    %v7951 = vunpack.c.l.s8.bf16 %v7647
    %v7952 = vunpack.c.l.s8.bf16 %v7648
    %v7953 = vunpack.c.l.s8.bf16 %v7649
    %v7954 = vunpack.c.l.s8.bf16 %v7650
    %v7955 = vunpack.c.l.s8.bf16 %v7651
    %v7956 = vunpack.c.l.s8.bf16 %v7652
    %v7957 = vunpack.c.l.s8.bf16 %v7653
    %v7958 = vunpack.c.l.s8.bf16 %v7654
    %v7959 = vunpack.c.h.s8.bf16 %v7647
    %v7960 = vunpack.c.h.s8.bf16 %v7648
    %v7961 = vunpack.c.h.s8.bf16 %v7649
    %v7962 = vunpack.c.h.s8.bf16 %v7650
    %v7963 = vunpack.c.h.s8.bf16 %v7651
    %v7964 = vunpack.c.h.s8.bf16 %v7652
    %v7965 = vunpack.c.h.s8.bf16 %v7653
    %v7966 = vunpack.c.h.s8.bf16 %v7654
    %v7967 = vunpack.c.l.s8.bf16 %v7655
    %v7968 = vunpack.c.l.s8.bf16 %v7656
    %v7969 = vunpack.c.l.s8.bf16 %v7657
    %v7970 = vunpack.c.l.s8.bf16 %v7658
    %v7971 = vunpack.c.l.s8.bf16 %v7659
    %v7972 = vunpack.c.l.s8.bf16 %v7660
    %v7973 = vunpack.c.l.s8.bf16 %v7661
    %v7974 = vunpack.c.l.s8.bf16 %v7662
    %v7975 = vunpack.c.h.s8.bf16 %v7655
    %v7976 = vunpack.c.h.s8.bf16 %v7656
    %v7977 = vunpack.c.h.s8.bf16 %v7657
    %v7978 = vunpack.c.h.s8.bf16 %v7658
    %v7979 = vunpack.c.h.s8.bf16 %v7659
    %v7980 = vunpack.c.h.s8.bf16 %v7660
    %v7981 = vunpack.c.h.s8.bf16 %v7661
    %v7982 = vunpack.c.h.s8.bf16 %v7662
    %v7983 = vunpack.c.l.s8.bf16 %v7663
    %v7984 = vunpack.c.l.s8.bf16 %v7664
    %v7985 = vunpack.c.l.s8.bf16 %v7665
    %v7986 = vunpack.c.l.s8.bf16 %v7666
    %v7987 = vunpack.c.l.s8.bf16 %v7667
    %v7988 = vunpack.c.l.s8.bf16 %v7668
    %v7989 = vunpack.c.l.s8.bf16 %v7669
    %v7990 = vunpack.c.l.s8.bf16 %v7670
    %v7991 = vunpack.c.h.s8.bf16 %v7663
    %v7992 = vunpack.c.h.s8.bf16 %v7664
    %v7993 = vunpack.c.h.s8.bf16 %v7665
    %v7994 = vunpack.c.h.s8.bf16 %v7666
    %v7995 = vunpack.c.h.s8.bf16 %v7667
    %v7996 = vunpack.c.h.s8.bf16 %v7668
    %v7997 = vunpack.c.h.s8.bf16 %v7669
    %v7998 = vunpack.c.h.s8.bf16 %v7670
    %v7999 = vunpack.c.l.s8.bf16 %v7671
    %v8000 = vunpack.c.l.s8.bf16 %v7672
    %v8001 = vunpack.c.l.s8.bf16 %v7673
    %v8002 = vunpack.c.l.s8.bf16 %v7674
    %v8003 = vunpack.c.l.s8.bf16 %v7675
    %v8004 = vunpack.c.l.s8.bf16 %v7676
    %v8005 = vunpack.c.l.s8.bf16 %v7677
    %v8006 = vunpack.c.l.s8.bf16 %v7678
    %v8007 = vunpack.c.h.s8.bf16 %v7671
    %v8008 = vunpack.c.h.s8.bf16 %v7672
    %v8009 = vunpack.c.h.s8.bf16 %v7673
    %v8010 = vunpack.c.h.s8.bf16 %v7674
    %v8011 = vunpack.c.h.s8.bf16 %v7675
    %v8012 = vunpack.c.h.s8.bf16 %v7676
    %v8013 = vunpack.c.h.s8.bf16 %v7677
    %v8014 = vunpack.c.h.s8.bf16 %v7678
    %v8015 = vunpack.c.l.s8.bf16 %v7679
    %v8016 = vunpack.c.l.s8.bf16 %v7680
    %v8017 = vunpack.c.l.s8.bf16 %v7681
    %v8018 = vunpack.c.l.s8.bf16 %v7682
    %v8019 = vunpack.c.l.s8.bf16 %v7683
    %v8020 = vunpack.c.l.s8.bf16 %v7684
    %v8021 = vunpack.c.l.s8.bf16 %v7685
    %v8022 = vunpack.c.l.s8.bf16 %v7686
    %v8023 = vunpack.c.h.s8.bf16 %v7679
    %v8024 = vunpack.c.h.s8.bf16 %v7680
    %v8025 = vunpack.c.h.s8.bf16 %v7681
    %v8026 = vunpack.c.h.s8.bf16 %v7682
    %v8027 = vunpack.c.h.s8.bf16 %v7683
    %v8028 = vunpack.c.h.s8.bf16 %v7684
    %v8029 = vunpack.c.h.s8.bf16 %v7685
    %v8030 = vunpack.c.h.s8.bf16 %v7686
    %v8031 = vunpack.c.l.s8.bf16 %v7687
    %v8032 = vunpack.c.l.s8.bf16 %v7688
    %v8033 = vunpack.c.l.s8.bf16 %v7689
    %v8034 = vunpack.c.l.s8.bf16 %v7690
    %v8035 = vunpack.c.l.s8.bf16 %v7691
    %v8036 = vunpack.c.l.s8.bf16 %v7692
    %v8037 = vunpack.c.l.s8.bf16 %v7693
    %v8038 = vunpack.c.l.s8.bf16 %v7694
    %v8039 = vunpack.c.h.s8.bf16 %v7687
    %v8040 = vunpack.c.h.s8.bf16 %v7688
    %v8041 = vunpack.c.h.s8.bf16 %v7689
    %v8042 = vunpack.c.h.s8.bf16 %v7690
    %v8043 = vunpack.c.h.s8.bf16 %v7691
    %v8044 = vunpack.c.h.s8.bf16 %v7692
    %v8045 = vunpack.c.h.s8.bf16 %v7693
    %v8046 = vunpack.c.h.s8.bf16 %v7694
    %v8047 = vunpack.c.l.s8.bf16 %v7695
    %v8048 = vunpack.c.l.s8.bf16 %v7696
    %v8049 = vunpack.c.l.s8.bf16 %v7697
    %v8050 = vunpack.c.l.s8.bf16 %v7698
    %v8051 = vunpack.c.l.s8.bf16 %v7699
    %v8052 = vunpack.c.l.s8.bf16 %v7700
    %v8053 = vunpack.c.l.s8.bf16 %v7701
    %v8054 = vunpack.c.l.s8.bf16 %v7702
    %v8055 = vunpack.c.h.s8.bf16 %v7695
    %v8056 = vunpack.c.h.s8.bf16 %v7696
    %v8057 = vunpack.c.h.s8.bf16 %v7697
    %v8058 = vunpack.c.h.s8.bf16 %v7698
    %v8059 = vunpack.c.h.s8.bf16 %v7699
    %v8060 = vunpack.c.h.s8.bf16 %v7700
    %v8061 = vunpack.c.h.s8.bf16 %v7701
    %v8062 = vunpack.c.h.s8.bf16 %v7702
    %v8063 = vunpack.c.l.s8.bf16 %v7703
    %v8064 = vunpack.c.l.s8.bf16 %v7704
    %v8065 = vunpack.c.l.s8.bf16 %v7705
    %v8066 = vunpack.c.l.s8.bf16 %v7706
    %v8067 = vunpack.c.l.s8.bf16 %v7707
    %v8068 = vunpack.c.l.s8.bf16 %v7708
    %v8069 = vunpack.c.l.s8.bf16 %v7709
    %v8070 = vunpack.c.l.s8.bf16 %v7710
    %v8071 = vunpack.c.h.s8.bf16 %v7703
    %v8072 = vunpack.c.h.s8.bf16 %v7704
    %v8073 = vunpack.c.h.s8.bf16 %v7705
    %v8074 = vunpack.c.h.s8.bf16 %v7706
    %v8075 = vunpack.c.h.s8.bf16 %v7707
    %v8076 = vunpack.c.h.s8.bf16 %v7708
    %v8077 = vunpack.c.h.s8.bf16 %v7709
    %v8078 = vunpack.c.h.s8.bf16 %v7710
    %v8079 = vunpack.c.l.s8.bf16 %v7711
    %v8080 = vunpack.c.l.s8.bf16 %v7712
    %v8081 = vunpack.c.l.s8.bf16 %v7713
    %v8082 = vunpack.c.l.s8.bf16 %v7714
    %v8083 = vunpack.c.l.s8.bf16 %v7715
    %v8084 = vunpack.c.l.s8.bf16 %v7716
    %v8085 = vunpack.c.l.s8.bf16 %v7717
    %v8086 = vunpack.c.l.s8.bf16 %v7718
    %v8087 = vunpack.c.h.s8.bf16 %v7711
    %v8088 = vunpack.c.h.s8.bf16 %v7712
    %v8089 = vunpack.c.h.s8.bf16 %v7713
    %v8090 = vunpack.c.h.s8.bf16 %v7714
    %v8091 = vunpack.c.h.s8.bf16 %v7715
    %v8092 = vunpack.c.h.s8.bf16 %v7716
    %v8093 = vunpack.c.h.s8.bf16 %v7717
    %v8094 = vunpack.c.h.s8.bf16 %v7718
    %v8095 = vunpack.c.l.s8.bf16 %v7719
    %v8096 = vunpack.c.l.s8.bf16 %v7720
    %v8097 = vunpack.c.l.s8.bf16 %v7721
    %v8098 = vunpack.c.l.s8.bf16 %v7722
    %v8099 = vunpack.c.l.s8.bf16 %v7723
    %v8100 = vunpack.c.l.s8.bf16 %v7724
    %v8101 = vunpack.c.l.s8.bf16 %v7725
    %v8102 = vunpack.c.l.s8.bf16 %v7726
    %v8103 = vunpack.c.h.s8.bf16 %v7719
    %v8104 = vunpack.c.h.s8.bf16 %v7720
    %v8105 = vunpack.c.h.s8.bf16 %v7721
    %v8106 = vunpack.c.h.s8.bf16 %v7722
    %v8107 = vunpack.c.h.s8.bf16 %v7723
    %v8108 = vunpack.c.h.s8.bf16 %v7724
    %v8109 = vunpack.c.h.s8.bf16 %v7725
    %v8110 = vunpack.c.h.s8.bf16 %v7726
    %v8111 = vpack.c.bf16 %v7528, %v7528
    %v8112 = vpack.c.bf16 %v7529, %v7529
    %v8113 = vpack.c.bf16 %v7530, %v7530
    %v8114 = vpack.c.bf16 %v7531, %v7531
    %v8115 = vpack.c.bf16 %v7532, %v7532
    %v8116 = vpack.c.bf16 %v7533, %v7533
    %8117 = vmatprep.subr.bf16.mxu0 %v7728
    %8118 = vmatpush1.bf16.msra.mxu0 %v7727
    %8119 = vmatprep.subr.bf16.mxu0 %v7736
    %8120 = vmatpush1.bf16.msra.mxu0 %v7735
    %8121 = vmatprep.subr.bf16.mxu0 %v7744
    %8122 = vmatpush1.bf16.msra.mxu0 %v7743
    %8123 = vmatprep.subr.bf16.mxu0 %v7752
    %8124 = vmatpush1.bf16.msra.mxu0 %v7751
    %8125 = vmatprep.subr.bf16.mxu0 %v7760
    %8126 = vmatpush1.bf16.msra.mxu0 %v7759
    %8127 = vmatprep.subr.bf16.mxu0 %v7768
    %8128 = vmatpush1.bf16.msra.mxu0 %v7767
    %8129 = vmatprep.subr.bf16.mxu0 %v7776
    %8130 = vmatpush1.bf16.msra.mxu0 %v7775
    %8131 = vmatprep.subr.bf16.mxu0 %v7784
    %8132 = vmatpush1.bf16.msra.mxu0 %v7783
    %8133 = vmatprep.subr.bf16.mxu0 %v7792
    %8134 = vmatpush1.bf16.msra.mxu0 %v7791
    %8135 = vmatprep.subr.bf16.mxu0 %v7800
    %8136 = vmatpush1.bf16.msra.mxu0 %v7799
    %8137 = vmatprep.subr.bf16.mxu0 %v7808
    %8138 = vmatpush1.bf16.msra.mxu0 %v7807
    %8139 = vmatprep.subr.bf16.mxu0 %v7816
    %8140 = vmatpush1.bf16.msra.mxu0 %v7815
    %8141 = vmatprep.subr.bf16.mxu0 %v7824
    %8142 = vmatpush1.bf16.msra.mxu0 %v7823
    %8143 = vmatprep.subr.bf16.mxu0 %v7832
    %8144 = vmatpush1.bf16.msra.mxu0 %v7831
    %8145 = vmatprep.subr.bf16.mxu0 %v7840
    %8146 = vmatpush1.bf16.msra.mxu0 %v7839
    %8147 = vmatprep.subr.bf16.mxu0 %v7848
    %8148 = vmatpush1.bf16.msra.mxu0 %v7847
    %8149 = vmatprep.mubr.bf16.mxu0 %v8112
    %8150 = vmatmul.mubr.bf16.gmra.mrb[0].mxu0 %v8111
    %v8151 = vpop.f32.mrb[0].mxu0
    %v8152 = vadd.f32 0.0, %v8151
    %v8153 = vpop.f32.mrb[0].mxu0
    %v8154 = vadd.f32 0.0, %v8153
    %v8155 = vpop.f32.mrb[0].mxu0
    %v8156 = vpop.f32.mrb[0].mxu0
    %8157 = vdwg.mxu0
    %8158 = vmatprep.subr.bf16.mxu0 %v7856
    %8159 = vmatpush1.bf16.msra.mxu0 %v7855
    %8160 = vmatprep.subr.bf16.mxu0 %v7864
    %8161 = vmatpush1.bf16.msra.mxu0 %v7863
    %8162 = vmatprep.subr.bf16.mxu0 %v7872
    %8163 = vmatpush1.bf16.msra.mxu0 %v7871
    %8164 = vmatprep.subr.bf16.mxu0 %v7880
    %8165 = vmatpush1.bf16.msra.mxu0 %v7879
    %8166 = vmatprep.subr.bf16.mxu0 %v7888
    %8167 = vmatpush1.bf16.msra.mxu0 %v7887
    %8168 = vmatprep.subr.bf16.mxu0 %v7896
    %8169 = vmatpush1.bf16.msra.mxu0 %v7895
    %8170 = vmatprep.subr.bf16.mxu0 %v7904
    %8171 = vmatpush1.bf16.msra.mxu0 %v7903
    %8172 = vmatprep.subr.bf16.mxu0 %v7912
    %8173 = vmatpush1.bf16.msra.mxu0 %v7911
    %8174 = vmatprep.subr.bf16.mxu0 %v7920
    %8175 = vmatpush1.bf16.msra.mxu0 %v7919
    %8176 = vmatprep.subr.bf16.mxu0 %v7928
    %8177 = vmatpush1.bf16.msra.mxu0 %v7927
    %8178 = vmatprep.subr.bf16.mxu0 %v7936
    %8179 = vmatpush1.bf16.msra.mxu0 %v7935
    %8180 = vmatprep.subr.bf16.mxu0 %v7944
    %8181 = vmatpush1.bf16.msra.mxu0 %v7943
    %8182 = vmatprep.subr.bf16.mxu0 %v7952
    %8183 = vmatpush1.bf16.msra.mxu0 %v7951
    %8184 = vmatprep.subr.bf16.mxu0 %v7960
    %8185 = vmatpush1.bf16.msra.mxu0 %v7959
    %8186 = vmatprep.subr.bf16.mxu0 %v7968
    %8187 = vmatpush1.bf16.msra.mxu0 %v7967
    %8188 = vmatprep.subr.bf16.mxu0 %v7976
    %8189 = vmatpush1.bf16.msra.mxu0 %v7975
    %8190 = vmatprep.mubr.bf16.mxu0 %v8114
    %8191 = vmatmul.mubr.bf16.gmra.mrb[0].mxu0 %v8113
    %v8192 = vpop.f32.mrb[0].mxu0
    %v8193 = vadd.f32 %v8152, %v8192
    %v8194 = vpop.f32.mrb[0].mxu0
    %v8195 = vadd.f32 %v8154, %v8194
    %v8196 = vpop.f32.mrb[0].mxu0
    %v8197 = vpop.f32.mrb[0].mxu0
    %8198 = vdwg.mxu0
    %8199 = vmatprep.subr.bf16.mxu0 %v7984
    %8200 = vmatpush1.bf16.msra.mxu0 %v7983
    %8201 = vmatprep.subr.bf16.mxu0 %v7992
    %8202 = vmatpush1.bf16.msra.mxu0 %v7991
    %8203 = vmatprep.subr.bf16.mxu0 %v8000
    %8204 = vmatpush1.bf16.msra.mxu0 %v7999
    %8205 = vmatprep.subr.bf16.mxu0 %v8008
    %8206 = vmatpush1.bf16.msra.mxu0 %v8007
    %8207 = vmatprep.subr.bf16.mxu0 %v8016
    %8208 = vmatpush1.bf16.msra.mxu0 %v8015
    %8209 = vmatprep.subr.bf16.mxu0 %v8024
    %8210 = vmatpush1.bf16.msra.mxu0 %v8023
    %8211 = vmatprep.subr.bf16.mxu0 %v8032
    %8212 = vmatpush1.bf16.msra.mxu0 %v8031
    %8213 = vmatprep.subr.bf16.mxu0 %v8040
    %8214 = vmatpush1.bf16.msra.mxu0 %v8039
    %8215 = vmatprep.subr.bf16.mxu0 %v8048
    %8216 = vmatpush1.bf16.msra.mxu0 %v8047
    %8217 = vmatprep.subr.bf16.mxu0 %v8056
    %8218 = vmatpush1.bf16.msra.mxu0 %v8055
    %8219 = vmatprep.subr.bf16.mxu0 %v8064
    %8220 = vmatpush1.bf16.msra.mxu0 %v8063
    %8221 = vmatprep.subr.bf16.mxu0 %v8072
    %8222 = vmatpush1.bf16.msra.mxu0 %v8071
    %8223 = vmatprep.subr.bf16.mxu0 %v8080
    %8224 = vmatpush1.bf16.msra.mxu0 %v8079
    %8225 = vmatprep.subr.bf16.mxu0 %v8088
    %8226 = vmatpush1.bf16.msra.mxu0 %v8087
    %8227 = vmatprep.subr.bf16.mxu0 %v8096
    %8228 = vmatpush1.bf16.msra.mxu0 %v8095
    %8229 = vmatprep.subr.bf16.mxu0 %v8104
    %8230 = vmatpush1.bf16.msra.mxu0 %v8103
    %8231 = vmatprep.mubr.bf16.mxu0 %v8116
    %8232 = vmatmul.mubr.bf16.gmra.mrb[0].mxu0 %v8115
    %v8233 = vpop.f32.mrb[0].mxu0
    %v8234 = vadd.f32 %v8193, %v8233
    %v8235 = vpop.f32.mrb[0].mxu0
    %v8236 = vadd.f32 %v8195, %v8235
    %v8237 = vpop.f32.mrb[0].mxu0
    %v8238 = vpop.f32.mrb[0].mxu0
    %8239 = vdwg.mxu0
    %8240 = vmatprep.subr.bf16.mxu0 %v7730
    %8241 = vmatpush1.bf16.msra.mxu0 %v7729
    %8242 = vmatprep.subr.bf16.mxu0 %v7738
    %8243 = vmatpush1.bf16.msra.mxu0 %v7737
    %8244 = vmatprep.subr.bf16.mxu0 %v7746
    %8245 = vmatpush1.bf16.msra.mxu0 %v7745
    %8246 = vmatprep.subr.bf16.mxu0 %v7754
    %8247 = vmatpush1.bf16.msra.mxu0 %v7753
    %8248 = vmatprep.subr.bf16.mxu0 %v7762
    %8249 = vmatpush1.bf16.msra.mxu0 %v7761
    %8250 = vmatprep.subr.bf16.mxu0 %v7770
    %8251 = vmatpush1.bf16.msra.mxu0 %v7769
    %8252 = vmatprep.subr.bf16.mxu0 %v7778
    %8253 = vmatpush1.bf16.msra.mxu0 %v7777
    %8254 = vmatprep.subr.bf16.mxu0 %v7786
    %8255 = vmatpush1.bf16.msra.mxu0 %v7785
    %8256 = vmatprep.subr.bf16.mxu0 %v7794
    %8257 = vmatpush1.bf16.msra.mxu0 %v7793
    %8258 = vmatprep.subr.bf16.mxu0 %v7802
    %8259 = vmatpush1.bf16.msra.mxu0 %v7801
    %8260 = vmatprep.subr.bf16.mxu0 %v7810
    %8261 = vmatpush1.bf16.msra.mxu0 %v7809
    %8262 = vmatprep.subr.bf16.mxu0 %v7818
    %8263 = vmatpush1.bf16.msra.mxu0 %v7817
    %8264 = vmatprep.subr.bf16.mxu0 %v7826
    %8265 = vmatpush1.bf16.msra.mxu0 %v7825
    %8266 = vmatprep.subr.bf16.mxu0 %v7834
    %8267 = vmatpush1.bf16.msra.mxu0 %v7833
    %8268 = vmatprep.subr.bf16.mxu0 %v7842
    %8269 = vmatpush1.bf16.msra.mxu0 %v7841
    %8270 = vmatprep.subr.bf16.mxu0 %v7850
    %8271 = vmatpush1.bf16.msra.mxu0 %v7849
    %8272 = vmatprep.mubr.bf16.mxu0 %v8112
    %8273 = vmatmul.mubr.bf16.gmra.mrb[0].mxu0 %v8111
    %v8274 = vpop.f32.mrb[0].mxu0
    %v8275 = vadd.f32 0.0, %v8274
    %v8276 = vpop.f32.mrb[0].mxu0
    %v8277 = vadd.f32 0.0, %v8276
    %v8278 = vpop.f32.mrb[0].mxu0
    %v8279 = vpop.f32.mrb[0].mxu0
    %8280 = vdwg.mxu0
    %8281 = vmatprep.subr.bf16.mxu0 %v7858
    %8282 = vmatpush1.bf16.msra.mxu0 %v7857
    %8283 = vmatprep.subr.bf16.mxu0 %v7866
    %8284 = vmatpush1.bf16.msra.mxu0 %v7865
    %8285 = vmatprep.subr.bf16.mxu0 %v7874
    %8286 = vmatpush1.bf16.msra.mxu0 %v7873
    %8287 = vmatprep.subr.bf16.mxu0 %v7882
    %8288 = vmatpush1.bf16.msra.mxu0 %v7881
    %8289 = vmatprep.subr.bf16.mxu0 %v7890
    %8290 = vmatpush1.bf16.msra.mxu0 %v7889
    %8291 = vmatprep.subr.bf16.mxu0 %v7898
    %8292 = vmatpush1.bf16.msra.mxu0 %v7897
    %8293 = vmatprep.subr.bf16.mxu0 %v7906
    %8294 = vmatpush1.bf16.msra.mxu0 %v7905
    %8295 = vmatprep.subr.bf16.mxu0 %v7914
    %8296 = vmatpush1.bf16.msra.mxu0 %v7913
    %8297 = vmatprep.subr.bf16.mxu0 %v7922
    %8298 = vmatpush1.bf16.msra.mxu0 %v7921
    %8299 = vmatprep.subr.bf16.mxu0 %v7930
    %8300 = vmatpush1.bf16.msra.mxu0 %v7929
    %8301 = vmatprep.subr.bf16.mxu0 %v7938
    %8302 = vmatpush1.bf16.msra.mxu0 %v7937
    %8303 = vmatprep.subr.bf16.mxu0 %v7946
    %8304 = vmatpush1.bf16.msra.mxu0 %v7945
    %8305 = vmatprep.subr.bf16.mxu0 %v7954
    %8306 = vmatpush1.bf16.msra.mxu0 %v7953
    %8307 = vmatprep.subr.bf16.mxu0 %v7962
    %8308 = vmatpush1.bf16.msra.mxu0 %v7961
    %8309 = vmatprep.subr.bf16.mxu0 %v7970
    %8310 = vmatpush1.bf16.msra.mxu0 %v7969
    %8311 = vmatprep.subr.bf16.mxu0 %v7978
    %8312 = vmatpush1.bf16.msra.mxu0 %v7977
    %8313 = vmatprep.mubr.bf16.mxu0 %v8114
    %8314 = vmatmul.mubr.bf16.gmra.mrb[0].mxu0 %v8113
    %v8315 = vpop.f32.mrb[0].mxu0
    %v8316 = vadd.f32 %v8275, %v8315
    %v8317 = vpop.f32.mrb[0].mxu0
    %v8318 = vadd.f32 %v8277, %v8317
    %v8319 = vpop.f32.mrb[0].mxu0
    %v8320 = vpop.f32.mrb[0].mxu0
    %8321 = vdwg.mxu0
    %8322 = vmatprep.subr.bf16.mxu0 %v7986
    %8323 = vmatpush1.bf16.msra.mxu0 %v7985
    %8324 = vmatprep.subr.bf16.mxu0 %v7994
    %8325 = vmatpush1.bf16.msra.mxu0 %v7993
    %8326 = vmatprep.subr.bf16.mxu0 %v8002
    %8327 = vmatpush1.bf16.msra.mxu0 %v8001
    %8328 = vmatprep.subr.bf16.mxu0 %v8010
    %8329 = vmatpush1.bf16.msra.mxu0 %v8009
    %8330 = vmatprep.subr.bf16.mxu0 %v8018
    %8331 = vmatpush1.bf16.msra.mxu0 %v8017
    %8332 = vmatprep.subr.bf16.mxu0 %v8026
    %8333 = vmatpush1.bf16.msra.mxu0 %v8025
    %8334 = vmatprep.subr.bf16.mxu0 %v8034
    %8335 = vmatpush1.bf16.msra.mxu0 %v8033
    %8336 = vmatprep.subr.bf16.mxu0 %v8042
    %8337 = vmatpush1.bf16.msra.mxu0 %v8041
    %8338 = vmatprep.subr.bf16.mxu0 %v8050
    %8339 = vmatpush1.bf16.msra.mxu0 %v8049
    %8340 = vmatprep.subr.bf16.mxu0 %v8058
    %8341 = vmatpush1.bf16.msra.mxu0 %v8057
    %8342 = vmatprep.subr.bf16.mxu0 %v8066
    %8343 = vmatpush1.bf16.msra.mxu0 %v8065
    %8344 = vmatprep.subr.bf16.mxu0 %v8074
    %8345 = vmatpush1.bf16.msra.mxu0 %v8073
    %8346 = vmatprep.subr.bf16.mxu0 %v8082
    %8347 = vmatpush1.bf16.msra.mxu0 %v8081
    %8348 = vmatprep.subr.bf16.mxu0 %v8090
    %8349 = vmatpush1.bf16.msra.mxu0 %v8089
    %8350 = vmatprep.subr.bf16.mxu0 %v8098
    %8351 = vmatpush1.bf16.msra.mxu0 %v8097
    %8352 = vmatprep.subr.bf16.mxu0 %v8106
    %8353 = vmatpush1.bf16.msra.mxu0 %v8105
    %8354 = vmatprep.mubr.bf16.mxu0 %v8116
    %8355 = vmatmul.mubr.bf16.gmra.mrb[0].mxu0 %v8115
    %v8356 = vpop.f32.mrb[0].mxu0
    %v8357 = vadd.f32 %v8316, %v8356
    %v8358 = vpop.f32.mrb[0].mxu0
    %v8359 = vadd.f32 %v8318, %v8358
    %v8360 = vpop.f32.mrb[0].mxu0
    %v8361 = vpop.f32.mrb[0].mxu0
    %8362 = vdwg.mxu0
    %8363 = vmatprep.subr.bf16.mxu0 %v7732
    %8364 = vmatpush1.bf16.msra.mxu0 %v7731
    %8365 = vmatprep.subr.bf16.mxu0 %v7740
    %8366 = vmatpush1.bf16.msra.mxu0 %v7739
    %8367 = vmatprep.subr.bf16.mxu0 %v7748
    %8368 = vmatpush1.bf16.msra.mxu0 %v7747
    %8369 = vmatprep.subr.bf16.mxu0 %v7756
    %8370 = vmatpush1.bf16.msra.mxu0 %v7755
    %8371 = vmatprep.subr.bf16.mxu0 %v7764
    %8372 = vmatpush1.bf16.msra.mxu0 %v7763
    %8373 = vmatprep.subr.bf16.mxu0 %v7772
    %8374 = vmatpush1.bf16.msra.mxu0 %v7771
    %8375 = vmatprep.subr.bf16.mxu0 %v7780
    %8376 = vmatpush1.bf16.msra.mxu0 %v7779
    %8377 = vmatprep.subr.bf16.mxu0 %v7788
    %8378 = vmatpush1.bf16.msra.mxu0 %v7787
    %8379 = vmatprep.subr.bf16.mxu0 %v7796
    %8380 = vmatpush1.bf16.msra.mxu0 %v7795
    %8381 = vmatprep.subr.bf16.mxu0 %v7804
    %8382 = vmatpush1.bf16.msra.mxu0 %v7803
    %8383 = vmatprep.subr.bf16.mxu0 %v7812
    %8384 = vmatpush1.bf16.msra.mxu0 %v7811
    %8385 = vmatprep.subr.bf16.mxu0 %v7820
    %8386 = vmatpush1.bf16.msra.mxu0 %v7819
    %8387 = vmatprep.subr.bf16.mxu0 %v7828
    %8388 = vmatpush1.bf16.msra.mxu0 %v7827
    %8389 = vmatprep.subr.bf16.mxu0 %v7836
    %8390 = vmatpush1.bf16.msra.mxu0 %v7835
    %8391 = vmatprep.subr.bf16.mxu0 %v7844
    %8392 = vmatpush1.bf16.msra.mxu0 %v7843
    %8393 = vmatprep.subr.bf16.mxu0 %v7852
    %8394 = vmatpush1.bf16.msra.mxu0 %v7851
    %8395 = vmatprep.mubr.bf16.mxu0 %v8112
    %8396 = vmatmul.mubr.bf16.gmra.mrb[0].mxu0 %v8111
    %v8397 = vpop.f32.mrb[0].mxu0
    %v8398 = vadd.f32 0.0, %v8397
    %v8399 = vpop.f32.mrb[0].mxu0
    %v8400 = vadd.f32 0.0, %v8399
    %v8401 = vpop.f32.mrb[0].mxu0
    %v8402 = vpop.f32.mrb[0].mxu0
    %8403 = vdwg.mxu0
    %8404 = vmatprep.subr.bf16.mxu0 %v7860
    %8405 = vmatpush1.bf16.msra.mxu0 %v7859
    %8406 = vmatprep.subr.bf16.mxu0 %v7868
    %8407 = vmatpush1.bf16.msra.mxu0 %v7867
    %8408 = vmatprep.subr.bf16.mxu0 %v7876
    %8409 = vmatpush1.bf16.msra.mxu0 %v7875
    %8410 = vmatprep.subr.bf16.mxu0 %v7884
    %8411 = vmatpush1.bf16.msra.mxu0 %v7883
    %8412 = vmatprep.subr.bf16.mxu0 %v7892
    %8413 = vmatpush1.bf16.msra.mxu0 %v7891
    %8414 = vmatprep.subr.bf16.mxu0 %v7900
    %8415 = vmatpush1.bf16.msra.mxu0 %v7899
    %8416 = vmatprep.subr.bf16.mxu0 %v7908
    %8417 = vmatpush1.bf16.msra.mxu0 %v7907
    %8418 = vmatprep.subr.bf16.mxu0 %v7916
    %8419 = vmatpush1.bf16.msra.mxu0 %v7915
    %8420 = vmatprep.subr.bf16.mxu0 %v7924
    %8421 = vmatpush1.bf16.msra.mxu0 %v7923
    %8422 = vmatprep.subr.bf16.mxu0 %v7932
    %8423 = vmatpush1.bf16.msra.mxu0 %v7931
    %8424 = vmatprep.subr.bf16.mxu0 %v7940
    %8425 = vmatpush1.bf16.msra.mxu0 %v7939
    %8426 = vmatprep.subr.bf16.mxu0 %v7948
    %8427 = vmatpush1.bf16.msra.mxu0 %v7947
    %8428 = vmatprep.subr.bf16.mxu0 %v7956
    %8429 = vmatpush1.bf16.msra.mxu0 %v7955
    %8430 = vmatprep.subr.bf16.mxu0 %v7964
    %8431 = vmatpush1.bf16.msra.mxu0 %v7963
    %8432 = vmatprep.subr.bf16.mxu0 %v7972
    %8433 = vmatpush1.bf16.msra.mxu0 %v7971
    %8434 = vmatprep.subr.bf16.mxu0 %v7980
    %8435 = vmatpush1.bf16.msra.mxu0 %v7979
    %8436 = vmatprep.mubr.bf16.mxu0 %v8114
    %8437 = vmatmul.mubr.bf16.gmra.mrb[0].mxu0 %v8113
    %v8438 = vpop.f32.mrb[0].mxu0
    %v8439 = vadd.f32 %v8398, %v8438
    %v8440 = vpop.f32.mrb[0].mxu0
    %v8441 = vadd.f32 %v8400, %v8440
    %v8442 = vpop.f32.mrb[0].mxu0
    %v8443 = vpop.f32.mrb[0].mxu0
    %8444 = vdwg.mxu0
    %8445 = vmatprep.subr.bf16.mxu0 %v7988
    %8446 = vmatpush1.bf16.msra.mxu0 %v7987
    %8447 = vmatprep.subr.bf16.mxu0 %v7996
    %8448 = vmatpush1.bf16.msra.mxu0 %v7995
    %8449 = vmatprep.subr.bf16.mxu0 %v8004
    %8450 = vmatpush1.bf16.msra.mxu0 %v8003
    %8451 = vmatprep.subr.bf16.mxu0 %v8012
    %8452 = vmatpush1.bf16.msra.mxu0 %v8011
    %8453 = vmatprep.subr.bf16.mxu0 %v8020
    %8454 = vmatpush1.bf16.msra.mxu0 %v8019
    %8455 = vmatprep.subr.bf16.mxu0 %v8028
    %8456 = vmatpush1.bf16.msra.mxu0 %v8027
    %8457 = vmatprep.subr.bf16.mxu0 %v8036
    %8458 = vmatpush1.bf16.msra.mxu0 %v8035
    %8459 = vmatprep.subr.bf16.mxu0 %v8044
    %8460 = vmatpush1.bf16.msra.mxu0 %v8043
    %8461 = vmatprep.subr.bf16.mxu0 %v8052
    %8462 = vmatpush1.bf16.msra.mxu0 %v8051
    %8463 = vmatprep.subr.bf16.mxu0 %v8060
    %8464 = vmatpush1.bf16.msra.mxu0 %v8059
    %8465 = vmatprep.subr.bf16.mxu0 %v8068
    %8466 = vmatpush1.bf16.msra.mxu0 %v8067
    %8467 = vmatprep.subr.bf16.mxu0 %v8076
    %8468 = vmatpush1.bf16.msra.mxu0 %v8075
    %8469 = vmatprep.subr.bf16.mxu0 %v8084
    %8470 = vmatpush1.bf16.msra.mxu0 %v8083
    %8471 = vmatprep.subr.bf16.mxu0 %v8092
    %8472 = vmatpush1.bf16.msra.mxu0 %v8091
    %8473 = vmatprep.subr.bf16.mxu0 %v8100
    %8474 = vmatpush1.bf16.msra.mxu0 %v8099
    %8475 = vmatprep.subr.bf16.mxu0 %v8108
    %8476 = vmatpush1.bf16.msra.mxu0 %v8107
    %8477 = vmatprep.mubr.bf16.mxu0 %v8116
    %8478 = vmatmul.mubr.bf16.gmra.mrb[0].mxu0 %v8115
    %v8479 = vpop.f32.mrb[0].mxu0
    %v8480 = vadd.f32 %v8439, %v8479
    %v8481 = vpop.f32.mrb[0].mxu0
    %v8482 = vadd.f32 %v8441, %v8481
    %v8483 = vpop.f32.mrb[0].mxu0
    %v8484 = vpop.f32.mrb[0].mxu0
    %8485 = vdwg.mxu0
    %8486 = vmatprep.subr.bf16.mxu0 %v7734
    %8487 = vmatpush1.bf16.msra.mxu0 %v7733
    %8488 = vmatprep.subr.bf16.mxu0 %v7742
    %8489 = vmatpush1.bf16.msra.mxu0 %v7741
    %8490 = vmatprep.subr.bf16.mxu0 %v7750
    %8491 = vmatpush1.bf16.msra.mxu0 %v7749
    %8492 = vmatprep.subr.bf16.mxu0 %v7758
    %8493 = vmatpush1.bf16.msra.mxu0 %v7757
    %8494 = vmatprep.subr.bf16.mxu0 %v7766
    %8495 = vmatpush1.bf16.msra.mxu0 %v7765
    %8496 = vmatprep.subr.bf16.mxu0 %v7774
    %8497 = vmatpush1.bf16.msra.mxu0 %v7773
    %8498 = vmatprep.subr.bf16.mxu0 %v7782
    %8499 = vmatpush1.bf16.msra.mxu0 %v7781
    %8500 = vmatprep.subr.bf16.mxu0 %v7790
    %8501 = vmatpush1.bf16.msra.mxu0 %v7789
    %8502 = vmatprep.subr.bf16.mxu0 %v7798
    %8503 = vmatpush1.bf16.msra.mxu0 %v7797
    %8504 = vmatprep.subr.bf16.mxu0 %v7806
    %8505 = vmatpush1.bf16.msra.mxu0 %v7805
    %8506 = vmatprep.subr.bf16.mxu0 %v7814
    %8507 = vmatpush1.bf16.msra.mxu0 %v7813
    %8508 = vmatprep.subr.bf16.mxu0 %v7822
    %8509 = vmatpush1.bf16.msra.mxu0 %v7821
    %8510 = vmatprep.subr.bf16.mxu0 %v7830
    %8511 = vmatpush1.bf16.msra.mxu0 %v7829
    %8512 = vmatprep.subr.bf16.mxu0 %v7838
    %8513 = vmatpush1.bf16.msra.mxu0 %v7837
    %8514 = vmatprep.subr.bf16.mxu0 %v7846
    %8515 = vmatpush1.bf16.msra.mxu0 %v7845
    %8516 = vmatprep.subr.bf16.mxu0 %v7854
    %8517 = vmatpush1.bf16.msra.mxu0 %v7853
    %8518 = vmatprep.mubr.bf16.mxu0 %v8112
    %8519 = vmatmul.mubr.bf16.gmra.mrb[0].mxu0 %v8111
    %v8520 = vpop.f32.mrb[0].mxu0
    %v8521 = vadd.f32 0.0, %v8520
    %v8522 = vpop.f32.mrb[0].mxu0
    %v8523 = vadd.f32 0.0, %v8522
    %v8524 = vpop.f32.mrb[0].mxu0
    %v8525 = vpop.f32.mrb[0].mxu0
    %8526 = vdwg.mxu0
    %8527 = vmatprep.subr.bf16.mxu0 %v7862
    %8528 = vmatpush1.bf16.msra.mxu0 %v7861
    %8529 = vmatprep.subr.bf16.mxu0 %v7870
    %8530 = vmatpush1.bf16.msra.mxu0 %v7869
    %8531 = vmatprep.subr.bf16.mxu0 %v7878
    %8532 = vmatpush1.bf16.msra.mxu0 %v7877
    %8533 = vmatprep.subr.bf16.mxu0 %v7886
    %8534 = vmatpush1.bf16.msra.mxu0 %v7885
    %8535 = vmatprep.subr.bf16.mxu0 %v7894
    %8536 = vmatpush1.bf16.msra.mxu0 %v7893
    %8537 = vmatprep.subr.bf16.mxu0 %v7902
    %8538 = vmatpush1.bf16.msra.mxu0 %v7901
    %8539 = vmatprep.subr.bf16.mxu0 %v7910
    %8540 = vmatpush1.bf16.msra.mxu0 %v7909
    %8541 = vmatprep.subr.bf16.mxu0 %v7918
    %8542 = vmatpush1.bf16.msra.mxu0 %v7917
    %8543 = vmatprep.subr.bf16.mxu0 %v7926
    %8544 = vmatpush1.bf16.msra.mxu0 %v7925
    %8545 = vmatprep.subr.bf16.mxu0 %v7934
    %8546 = vmatpush1.bf16.msra.mxu0 %v7933
    %8547 = vmatprep.subr.bf16.mxu0 %v7942
    %8548 = vmatpush1.bf16.msra.mxu0 %v7941
    %8549 = vmatprep.subr.bf16.mxu0 %v7950
    %8550 = vmatpush1.bf16.msra.mxu0 %v7949
    %8551 = vmatprep.subr.bf16.mxu0 %v7958
    %8552 = vmatpush1.bf16.msra.mxu0 %v7957
    %8553 = vmatprep.subr.bf16.mxu0 %v7966
    %8554 = vmatpush1.bf16.msra.mxu0 %v7965
    %8555 = vmatprep.subr.bf16.mxu0 %v7974
    %8556 = vmatpush1.bf16.msra.mxu0 %v7973
    %8557 = vmatprep.subr.bf16.mxu0 %v7982
    %8558 = vmatpush1.bf16.msra.mxu0 %v7981
    %8559 = vmatprep.mubr.bf16.mxu0 %v8114
    %8560 = vmatmul.mubr.bf16.gmra.mrb[0].mxu0 %v8113
    %v8561 = vpop.f32.mrb[0].mxu0
    %v8562 = vadd.f32 %v8521, %v8561
    %v8563 = vpop.f32.mrb[0].mxu0
    %v8564 = vadd.f32 %v8523, %v8563
    %v8565 = vpop.f32.mrb[0].mxu0
    %v8566 = vpop.f32.mrb[0].mxu0
    %8567 = vdwg.mxu0
    %8568 = vmatprep.subr.bf16.mxu0 %v7990
    %8569 = vmatpush1.bf16.msra.mxu0 %v7989
    %8570 = vmatprep.subr.bf16.mxu0 %v7998
    %8571 = vmatpush1.bf16.msra.mxu0 %v7997
    %8572 = vmatprep.subr.bf16.mxu0 %v8006
    %8573 = vmatpush1.bf16.msra.mxu0 %v8005
    %8574 = vmatprep.subr.bf16.mxu0 %v8014
    %8575 = vmatpush1.bf16.msra.mxu0 %v8013
    %8576 = vmatprep.subr.bf16.mxu0 %v8022
    %8577 = vmatpush1.bf16.msra.mxu0 %v8021
    %8578 = vmatprep.subr.bf16.mxu0 %v8030
    %8579 = vmatpush1.bf16.msra.mxu0 %v8029
    %8580 = vmatprep.subr.bf16.mxu0 %v8038
    %8581 = vmatpush1.bf16.msra.mxu0 %v8037
    %8582 = vmatprep.subr.bf16.mxu0 %v8046
    %8583 = vmatpush1.bf16.msra.mxu0 %v8045
    %8584 = vmatprep.subr.bf16.mxu0 %v8054
    %8585 = vmatpush1.bf16.msra.mxu0 %v8053
    %8586 = vmatprep.subr.bf16.mxu0 %v8062
    %8587 = vmatpush1.bf16.msra.mxu0 %v8061
    %8588 = vmatprep.subr.bf16.mxu0 %v8070
    %8589 = vmatpush1.bf16.msra.mxu0 %v8069
    %8590 = vmatprep.subr.bf16.mxu0 %v8078
    %8591 = vmatpush1.bf16.msra.mxu0 %v8077
    %8592 = vmatprep.subr.bf16.mxu0 %v8086
    %8593 = vmatpush1.bf16.msra.mxu0 %v8085
    %8594 = vmatprep.subr.bf16.mxu0 %v8094
    %8595 = vmatpush1.bf16.msra.mxu0 %v8093
    %8596 = vmatprep.subr.bf16.mxu0 %v8102
    %8597 = vmatpush1.bf16.msra.mxu0 %v8101
    %8598 = vmatprep.subr.bf16.mxu0 %v8110
    %8599 = vmatpush1.bf16.msra.mxu0 %v8109
    %8600 = vmatprep.mubr.bf16.mxu0 %v8116
    %8601 = vmatmul.mubr.bf16.gmra.mrb[0].mxu0 %v8115
    %v8602 = vpop.f32.mrb[0].mxu0
    %v8603 = vadd.f32 %v8562, %v8602
    %v8604 = vpop.f32.mrb[0].mxu0
    %v8605 = vadd.f32 %v8564, %v8604
    %v8606 = vpop.f32.mrb[0].mxu0
    %v8607 = vpop.f32.mrb[0].mxu0
    %8608 = vdwg.mxu0
    %v8610 = vlaneseq
    %v8611 = vshrl.u32 %v8610, 7
    %v8612 = vsub.s32 0, %v8611
    %v8613 = vrot.slane %v7534, %v8612
    %v8614 = vlaneseq
    %v8615 = vshrl.u32 %v8614, 7
    %v8616 = vsub.s32 1, %v8615
    %v8617 = vrot.slane %v7534, %v8616
    %v8618 = vlaneseq
    %v8619 = vshrl.u32 %v8618, 7
    %v8620 = vsub.s32 2, %v8619
    %v8621 = vrot.slane %v7534, %v8620
    %v8622 = vlaneseq
    %v8623 = vshrl.u32 %v8622, 7
    %v8624 = vsub.s32 3, %v8623
    %v8625 = vrot.slane %v7534, %v8624
    %v8626 = vlaneseq
    %v8627 = vshrl.u32 %v8626, 7
    %v8628 = vsub.s32 4, %v8627
    %v8629 = vrot.slane %v7534, %v8628
    %v8630 = vlaneseq
    %v8631 = vshrl.u32 %v8630, 7
    %v8632 = vsub.s32 5, %v8631
    %v8633 = vrot.slane %v7534, %v8632
    %v8634 = vlaneseq
    %v8635 = vshrl.u32 %v8634, 7
    %v8636 = vsub.s32 6, %v8635
    %v8637 = vrot.slane %v7534, %v8636
    %v8638 = vlaneseq
    %v8639 = vshrl.u32 %v8638, 7
    %v8640 = vsub.s32 7, %v8639
    %v8641 = vrot.slane %v7534, %v8640
    %v8650 = vmul.f32 %v8234, %v8613
    %v8651 = vmul.f32 %v8236, %v8617
    %v8652 = vmul.f32 %v8357, %v8621
    %v8653 = vmul.f32 %v8359, %v8625
    %v8654 = vmul.f32 %v8480, %v8629
    %v8655 = vmul.f32 %v8482, %v8633
    %v8656 = vmul.f32 %v8603, %v8637
    %v8657 = vmul.f32 %v8605, %v8641
    %v8658 = vld [vmem:[#allocation2 + $0x48] sm:$0xff]
    %v8660 = vlaneseq
    %v8661 = vshrl.u32 %v8660, 7
    %v8662 = vsub.s32 0, %v8661
    %v8663 = vrot.slane %v8658, %v8662
    %v8664 = vlaneseq
    %v8665 = vshrl.u32 %v8664, 7
    %v8666 = vsub.s32 1, %v8665
    %v8667 = vrot.slane %v8658, %v8666
    %v8668 = vlaneseq
    %v8669 = vshrl.u32 %v8668, 7
    %v8670 = vsub.s32 2, %v8669
    %v8671 = vrot.slane %v8658, %v8670
    %v8672 = vlaneseq
    %v8673 = vshrl.u32 %v8672, 7
    %v8674 = vsub.s32 3, %v8673
    %v8675 = vrot.slane %v8658, %v8674
    %v8676 = vlaneseq
    %v8677 = vshrl.u32 %v8676, 7
    %v8678 = vsub.s32 4, %v8677
    %v8679 = vrot.slane %v8658, %v8678
    %v8680 = vlaneseq
    %v8681 = vshrl.u32 %v8680, 7
    %v8682 = vsub.s32 5, %v8681
    %v8683 = vrot.slane %v8658, %v8682
    %v8684 = vlaneseq
    %v8685 = vshrl.u32 %v8684, 7
    %v8686 = vsub.s32 6, %v8685
    %v8687 = vrot.slane %v8658, %v8686
    %v8688 = vlaneseq
    %v8689 = vshrl.u32 %v8688, 7
    %v8690 = vsub.s32 7, %v8689
    %v8691 = vrot.slane %v8658, %v8690
    %v8700 = vadd.f32 %v8650, %v8663
    %v8701 = vadd.f32 %v8651, %v8667
    %v8702 = vadd.f32 %v8652, %v8671
    %v8703 = vadd.f32 %v8653, %v8675
    %v8704 = vadd.f32 %v8654, %v8679
    %v8705 = vadd.f32 %v8655, %v8683
    %v8706 = vadd.f32 %v8656, %v8687
    %v8707 = vadd.f32 %v8657, %v8691
    %v8708 = vmul.f32 %v8700, 0.5
    %v8709 = vmul.f32 %v8701, 0.5
    %v8710 = vmul.f32 %v8702, 0.5
    %v8711 = vmul.f32 %v8703, 0.5
    %v8712 = vmul.f32 %v8704, 0.5
    %v8713 = vmul.f32 %v8705, 0.5
    %v8714 = vmul.f32 %v8706, 0.5
    %v8715 = vmul.f32 %v8707, 0.5
    %v8716 = vmul.f32 %v8700, 0.70710677
    %v8717 = vmul.f32 %v8701, 0.70710677
    %v8718 = vmul.f32 %v8702, 0.70710677
    %v8719 = vmul.f32 %v8703, 0.70710677
    %v8720 = vmul.f32 %v8704, 0.70710677
    %v8721 = vmul.f32 %v8705, 0.70710677
    %v8722 = vmul.f32 %v8706, 0.70710677
    %v8723 = vmul.f32 %v8707, 0.70710677
    %v8724 = verf.f32.pop %v8716
    %v8725 = verf.f32.pop %v8717
    %v8726 = verf.f32.pop %v8718
    %v8727 = verf.f32.pop %v8719
    %v8728 = verf.f32.pop %v8720
    %v8729 = verf.f32.pop %v8721
    %v8730 = verf.f32.pop %v8722
    %v8731 = verf.f32.pop %v8723
    %v8732 = vadd.f32 %v8724, 1.0
    %v8733 = vadd.f32 %v8725, 1.0
    %v8734 = vadd.f32 %v8726, 1.0
    %v8735 = vadd.f32 %v8727, 1.0
    %v8736 = vadd.f32 %v8728, 1.0
    %v8737 = vadd.f32 %v8729, 1.0
    %v8738 = vadd.f32 %v8730, 1.0
    %v8739 = vadd.f32 %v8731, 1.0
    %v8740 = vmul.f32 %v8708, %v8732
    %v8741 = vmul.f32 %v8709, %v8733
    %v8742 = vmul.f32 %v8710, %v8734
    %v8743 = vmul.f32 %v8711, %v8735
    %v8744 = vmul.f32 %v8712, %v8736
    %v8745 = vmul.f32 %v8713, %v8737
    %v8746 = vmul.f32 %v8714, %v8738
    %v8747 = vmul.f32 %v8715, %v8739
    %v8748 = vld [vmem:[#allocation2 + $0x94] sm:$0x3f]
    %v8749 = vld [vmem:[#allocation16] sm:$0xff]
    %v8750 = vld [vmem:[#allocation16 + $0x8] sm:$0xff]
    %v8751 = vld [vmem:[#allocation16 + $0x10] sm:$0xff]
    %v8752 = vld [vmem:[#allocation16 + $0x18] sm:$0xff]
    %v8753 = vld [vmem:[#allocation16 + $0x20] sm:$0xff]
    %v8754 = vld [vmem:[#allocation16 + $0x28] sm:$0xff]
    %v8755 = vld [vmem:[#allocation16 + $0x30] sm:$0xff]
    %v8756 = vld [vmem:[#allocation16 + $0x38] sm:$0xff]
    %v8757 = vld [vmem:[#allocation16 + $0x40] sm:$0xff]
    %v8758 = vld [vmem:[#allocation16 + $0x48] sm:$0xff]
    %v8759 = vld [vmem:[#allocation16 + $0x50] sm:$0xff]
    %v8760 = vld [vmem:[#allocation16 + $0x58] sm:$0xff]
    %v8761 = vld [vmem:[#allocation16 + $0x60] sm:$0xff]
    %v8762 = vld [vmem:[#allocation16 + $0x68] sm:$0xff]
    %v8763 = vld [vmem:[#allocation16 + $0x70] sm:$0xff]
    %v8764 = vld [vmem:[#allocation16 + $0x78] sm:$0xff]
    %v8765 = vld [vmem:[#allocation16 + $0x80] sm:$0xff]
    %v8766 = vld [vmem:[#allocation16 + $0x88] sm:$0xff]
    %v8767 = vld [vmem:[#allocation16 + $0x90] sm:$0xff]
    %v8768 = vld [vmem:[#allocation16 + $0x98] sm:$0xff]
    %v8769 = vld [vmem:[#allocation16 + $0xa0] sm:$0xff]
    %v8770 = vld [vmem:[#allocation16 + $0xa8] sm:$0xff]
    %v8771 = vld [vmem:[#allocation16 + $0xb0] sm:$0xff]
    %v8772 = vld [vmem:[#allocation16 + $0xb8] sm:$0xff]
    %v8773 = vld [vmem:[#allocation16 + $0xc0] sm:$0xff]
    %v8774 = vld [vmem:[#allocation16 + $0xc8] sm:$0xff]
    %v8775 = vld [vmem:[#allocation16 + $0xd0] sm:$0xff]
    %v8776 = vld [vmem:[#allocation16 + $0xd8] sm:$0xff]
    %v8777 = vld [vmem:[#allocation16 + $0xe0] sm:$0xff]
    %v8778 = vld [vmem:[#allocation16 + $0xe8] sm:$0xff]
    %v8779 = vld [vmem:[#allocation16 + $0xf0] sm:$0xff]
    %v8780 = vld [vmem:[#allocation16 + $0xf8] sm:$0xff]
    %v8781 = vld [vmem:[#allocation16 + $0x100] sm:$0xff]
    %v8782 = vld [vmem:[#allocation16 + $0x108] sm:$0xff]
    %v8783 = vld [vmem:[#allocation16 + $0x110] sm:$0xff]
    %v8784 = vld [vmem:[#allocation16 + $0x118] sm:$0xff]
    %v8785 = vld [vmem:[#allocation16 + $0x120] sm:$0xff]
    %v8786 = vld [vmem:[#allocation16 + $0x128] sm:$0xff]
    %v8787 = vld [vmem:[#allocation16 + $0x130] sm:$0xff]
    %v8788 = vld [vmem:[#allocation16 + $0x138] sm:$0xff]
    %v8789 = vld [vmem:[#allocation16 + $0x140] sm:$0xff]
    %v8790 = vld [vmem:[#allocation16 + $0x148] sm:$0xff]
    %v8791 = vld [vmem:[#allocation16 + $0x150] sm:$0xff]
    %v8792 = vld [vmem:[#allocation16 + $0x158] sm:$0xff]
    %v8793 = vld [vmem:[#allocation16 + $0x160] sm:$0xff]
    %v8794 = vld [vmem:[#allocation16 + $0x168] sm:$0xff]
    %v8795 = vld [vmem:[#allocation16 + $0x170] sm:$0xff]
    %v8796 = vld [vmem:[#allocation16 + $0x178] sm:$0xff]
    %v8797 = vld [vmem:[#allocation16 + $0x180] sm:$0xff]
    %v8798 = vld [vmem:[#allocation16 + $0x188] sm:$0xff]
    %v8799 = vld [vmem:[#allocation16 + $0x190] sm:$0xff]
    %v8800 = vld [vmem:[#allocation16 + $0x198] sm:$0xff]
    %v8801 = vld [vmem:[#allocation16 + $0x1a0] sm:$0xff]
    %v8802 = vld [vmem:[#allocation16 + $0x1a8] sm:$0xff]
    %v8803 = vld [vmem:[#allocation16 + $0x1b0] sm:$0xff]
    %v8804 = vld [vmem:[#allocation16 + $0x1b8] sm:$0xff]
    %v8805 = vld [vmem:[#allocation16 + $0x1c0] sm:$0xff]
    %v8806 = vld [vmem:[#allocation16 + $0x1c8] sm:$0xff]
    %v8807 = vld [vmem:[#allocation16 + $0x1d0] sm:$0xff]
    %v8808 = vld [vmem:[#allocation16 + $0x1d8] sm:$0xff]
    %v8809 = vld [vmem:[#allocation16 + $0x1e0] sm:$0xff]
    %v8810 = vld [vmem:[#allocation16 + $0x1e8] sm:$0xff]
    %v8811 = vld [vmem:[#allocation16 + $0x1f0] sm:$0xff]
    %v8812 = vld [vmem:[#allocation16 + $0x1f8] sm:$0xff]
    %v8813 = vld [vmem:[#allocation16 + $0x200] sm:$0xff]
    %v8814 = vld [vmem:[#allocation16 + $0x208] sm:$0xff]
    %v8815 = vld [vmem:[#allocation16 + $0x210] sm:$0xff]
    %v8816 = vld [vmem:[#allocation16 + $0x218] sm:$0xff]
    %v8817 = vld [vmem:[#allocation16 + $0x220] sm:$0xff]
    %v8818 = vld [vmem:[#allocation16 + $0x228] sm:$0xff]
    %v8819 = vld [vmem:[#allocation16 + $0x230] sm:$0xff]
    %v8820 = vld [vmem:[#allocation16 + $0x238] sm:$0xff]
    %v8821 = vld [vmem:[#allocation16 + $0x240] sm:$0xff]
    %v8822 = vld [vmem:[#allocation16 + $0x248] sm:$0xff]
    %v8823 = vld [vmem:[#allocation16 + $0x250] sm:$0xff]
    %v8824 = vld [vmem:[#allocation16 + $0x258] sm:$0xff]
    %v8825 = vld [vmem:[#allocation16 + $0x260] sm:$0xff]
    %v8826 = vld [vmem:[#allocation16 + $0x268] sm:$0xff]
    %v8827 = vld [vmem:[#allocation16 + $0x270] sm:$0xff]
    %v8828 = vld [vmem:[#allocation16 + $0x278] sm:$0xff]
    %v8829 = vld [vmem:[#allocation16 + $0x280] sm:$0xff]
    %v8830 = vld [vmem:[#allocation16 + $0x288] sm:$0xff]
    %v8831 = vld [vmem:[#allocation16 + $0x290] sm:$0xff]
    %v8832 = vld [vmem:[#allocation16 + $0x298] sm:$0xff]
    %v8833 = vld [vmem:[#allocation16 + $0x2a0] sm:$0xff]
    %v8834 = vld [vmem:[#allocation16 + $0x2a8] sm:$0xff]
    %v8835 = vld [vmem:[#allocation16 + $0x2b0] sm:$0xff]
    %v8836 = vld [vmem:[#allocation16 + $0x2b8] sm:$0xff]
    %v8837 = vld [vmem:[#allocation16 + $0x2c0] sm:$0xff]
    %v8838 = vld [vmem:[#allocation16 + $0x2c8] sm:$0xff]
    %v8839 = vld [vmem:[#allocation16 + $0x2d0] sm:$0xff]
    %v8840 = vld [vmem:[#allocation16 + $0x2d8] sm:$0xff]
    %v8841 = vld [vmem:[#allocation16 + $0x2e0] sm:$0xff]
    %v8842 = vld [vmem:[#allocation16 + $0x2e8] sm:$0xff]
    %v8843 = vld [vmem:[#allocation16 + $0x2f0] sm:$0xff]
    %v8844 = vld [vmem:[#allocation16 + $0x2f8] sm:$0xff]
    %v8845 = vld [vmem:[#allocation16 + $0x300] sm:$0xff]
    %v8846 = vld [vmem:[#allocation16 + $0x308] sm:$0xff]
    %v8847 = vld [vmem:[#allocation16 + $0x310] sm:$0xff]
    %v8848 = vld [vmem:[#allocation16 + $0x318] sm:$0xff]
    %v8849 = vld [vmem:[#allocation16 + $0x320] sm:$0xff]
    %v8850 = vld [vmem:[#allocation16 + $0x328] sm:$0xff]
    %v8851 = vld [vmem:[#allocation16 + $0x330] sm:$0xff]
    %v8852 = vld [vmem:[#allocation16 + $0x338] sm:$0xff]
    %v8853 = vld [vmem:[#allocation16 + $0x340] sm:$0xff]
    %v8854 = vld [vmem:[#allocation16 + $0x348] sm:$0xff]
    %v8855 = vld [vmem:[#allocation16 + $0x350] sm:$0xff]
    %v8856 = vld [vmem:[#allocation16 + $0x358] sm:$0xff]
    %v8857 = vld [vmem:[#allocation16 + $0x360] sm:$0xff]
    %v8858 = vld [vmem:[#allocation16 + $0x368] sm:$0xff]
    %v8859 = vld [vmem:[#allocation16 + $0x370] sm:$0xff]
    %v8860 = vld [vmem:[#allocation16 + $0x378] sm:$0xff]
    %v8861 = vld [vmem:[#allocation16 + $0x380] sm:$0xff]
    %v8862 = vld [vmem:[#allocation16 + $0x388] sm:$0xff]
    %v8863 = vld [vmem:[#allocation16 + $0x390] sm:$0xff]
    %v8864 = vld [vmem:[#allocation16 + $0x398] sm:$0xff]
    %v8865 = vld [vmem:[#allocation16 + $0x3a0] sm:$0xff]
    %v8866 = vld [vmem:[#allocation16 + $0x3a8] sm:$0xff]
    %v8867 = vld [vmem:[#allocation16 + $0x3b0] sm:$0xff]
    %v8868 = vld [vmem:[#allocation16 + $0x3b8] sm:$0xff]
    %v8869 = vld [vmem:[#allocation16 + $0x3c0] sm:$0xff]
    %v8870 = vld [vmem:[#allocation16 + $0x3c8] sm:$0xff]
    %v8871 = vld [vmem:[#allocation16 + $0x3d0] sm:$0xff]
    %v8872 = vld [vmem:[#allocation16 + $0x3d8] sm:$0xff]
    %v8873 = vld [vmem:[#allocation16 + $0x3e0] sm:$0xff]
    %v8874 = vld [vmem:[#allocation16 + $0x3e8] sm:$0xff]
    %v8875 = vld [vmem:[#allocation16 + $0x3f0] sm:$0xff]
    %v8876 = vld [vmem:[#allocation16 + $0x3f8] sm:$0xff]
    %v8877 = vld [vmem:[#allocation16 + $0x400] sm:$0xff]
    %v8878 = vld [vmem:[#allocation16 + $0x408] sm:$0xff]
    %v8879 = vld [vmem:[#allocation16 + $0x410] sm:$0xff]
    %v8880 = vld [vmem:[#allocation16 + $0x418] sm:$0xff]
    %v8881 = vld [vmem:[#allocation16 + $0x420] sm:$0xff]
    %v8882 = vld [vmem:[#allocation16 + $0x428] sm:$0xff]
    %v8883 = vld [vmem:[#allocation16 + $0x430] sm:$0xff]
    %v8884 = vld [vmem:[#allocation16 + $0x438] sm:$0xff]
    %v8885 = vld [vmem:[#allocation16 + $0x440] sm:$0xff]
    %v8886 = vld [vmem:[#allocation16 + $0x448] sm:$0xff]
    %v8887 = vld [vmem:[#allocation16 + $0x450] sm:$0xff]
    %v8888 = vld [vmem:[#allocation16 + $0x458] sm:$0xff]
    %v8889 = vld [vmem:[#allocation16 + $0x460] sm:$0xff]
    %v8890 = vld [vmem:[#allocation16 + $0x468] sm:$0xff]
    %v8891 = vld [vmem:[#allocation16 + $0x470] sm:$0xff]
    %v8892 = vld [vmem:[#allocation16 + $0x478] sm:$0xff]
    %v8893 = vld [vmem:[#allocation16 + $0x480] sm:$0xff]
    %v8894 = vld [vmem:[#allocation16 + $0x488] sm:$0xff]
    %v8895 = vld [vmem:[#allocation16 + $0x490] sm:$0xff]
    %v8896 = vld [vmem:[#allocation16 + $0x498] sm:$0xff]
    %v8897 = vld [vmem:[#allocation16 + $0x4a0] sm:$0xff]
    %v8898 = vld [vmem:[#allocation16 + $0x4a8] sm:$0xff]
    %v8899 = vld [vmem:[#allocation16 + $0x4b0] sm:$0xff]
    %v8900 = vld [vmem:[#allocation16 + $0x4b8] sm:$0xff]
    %v8901 = vld [vmem:[#allocation16 + $0x4c0] sm:$0xff]
    %v8902 = vld [vmem:[#allocation16 + $0x4c8] sm:$0xff]
    %v8903 = vld [vmem:[#allocation16 + $0x4d0] sm:$0xff]
    %v8904 = vld [vmem:[#allocation16 + $0x4d8] sm:$0xff]
    %v8905 = vld [vmem:[#allocation16 + $0x4e0] sm:$0xff]
    %v8906 = vld [vmem:[#allocation16 + $0x4e8] sm:$0xff]
    %v8907 = vld [vmem:[#allocation16 + $0x4f0] sm:$0xff]
    %v8908 = vld [vmem:[#allocation16 + $0x4f8] sm:$0xff]
    %v8909 = vld [vmem:[#allocation16 + $0x500] sm:$0xff]
    %v8910 = vld [vmem:[#allocation16 + $0x508] sm:$0xff]
    %v8911 = vld [vmem:[#allocation16 + $0x510] sm:$0xff]
    %v8912 = vld [vmem:[#allocation16 + $0x518] sm:$0xff]
    %v8913 = vld [vmem:[#allocation16 + $0x520] sm:$0xff]
    %v8914 = vld [vmem:[#allocation16 + $0x528] sm:$0xff]
    %v8915 = vld [vmem:[#allocation16 + $0x530] sm:$0xff]
    %v8916 = vld [vmem:[#allocation16 + $0x538] sm:$0xff]
    %v8917 = vld [vmem:[#allocation16 + $0x540] sm:$0xff]
    %v8918 = vld [vmem:[#allocation16 + $0x548] sm:$0xff]
    %v8919 = vld [vmem:[#allocation16 + $0x550] sm:$0xff]
    %v8920 = vld [vmem:[#allocation16 + $0x558] sm:$0xff]
    %v8921 = vld [vmem:[#allocation16 + $0x560] sm:$0xff]
    %v8922 = vld [vmem:[#allocation16 + $0x568] sm:$0xff]
    %v8923 = vld [vmem:[#allocation16 + $0x570] sm:$0xff]
    %v8924 = vld [vmem:[#allocation16 + $0x578] sm:$0xff]
    %v8925 = vld [vmem:[#allocation16 + $0x580] sm:$0xff]
    %v8926 = vld [vmem:[#allocation16 + $0x588] sm:$0xff]
    %v8927 = vld [vmem:[#allocation16 + $0x590] sm:$0xff]
    %v8928 = vld [vmem:[#allocation16 + $0x598] sm:$0xff]
    %v8929 = vld [vmem:[#allocation16 + $0x5a0] sm:$0xff]
    %v8930 = vld [vmem:[#allocation16 + $0x5a8] sm:$0xff]
    %v8931 = vld [vmem:[#allocation16 + $0x5b0] sm:$0xff]
    %v8932 = vld [vmem:[#allocation16 + $0x5b8] sm:$0xff]
    %v8933 = vld [vmem:[#allocation16 + $0x5c0] sm:$0xff]
    %v8934 = vld [vmem:[#allocation16 + $0x5c8] sm:$0xff]
    %v8935 = vld [vmem:[#allocation16 + $0x5d0] sm:$0xff]
    %v8936 = vld [vmem:[#allocation16 + $0x5d8] sm:$0xff]
    %v8937 = vld [vmem:[#allocation16 + $0x5e0] sm:$0xff]
    %v8938 = vld [vmem:[#allocation16 + $0x5e8] sm:$0xff]
    %v8939 = vld [vmem:[#allocation16 + $0x5f0] sm:$0xff]
    %v8940 = vld [vmem:[#allocation16 + $0x5f8] sm:$0xff]
    %v8941 = vunpack.c.l.s8.bf16 %v8749
    %v8942 = vunpack.c.l.s8.bf16 %v8750
    %v8943 = vunpack.c.l.s8.bf16 %v8751
    %v8944 = vunpack.c.l.s8.bf16 %v8752
    %v8945 = vunpack.c.l.s8.bf16 %v8753
    %v8946 = vunpack.c.l.s8.bf16 %v8754
    %v8947 = vunpack.c.h.s8.bf16 %v8749
    %v8948 = vunpack.c.h.s8.bf16 %v8750
    %v8949 = vunpack.c.h.s8.bf16 %v8751
    %v8950 = vunpack.c.h.s8.bf16 %v8752
    %v8951 = vunpack.c.h.s8.bf16 %v8753
    %v8952 = vunpack.c.h.s8.bf16 %v8754
    %v8953 = vunpack.c.l.s8.bf16 %v8755
    %v8954 = vunpack.c.l.s8.bf16 %v8756
    %v8955 = vunpack.c.l.s8.bf16 %v8757
    %v8956 = vunpack.c.l.s8.bf16 %v8758
    %v8957 = vunpack.c.l.s8.bf16 %v8759
    %v8958 = vunpack.c.l.s8.bf16 %v8760
    %v8959 = vunpack.c.h.s8.bf16 %v8755
    %v8960 = vunpack.c.h.s8.bf16 %v8756
    %v8961 = vunpack.c.h.s8.bf16 %v8757
    %v8962 = vunpack.c.h.s8.bf16 %v8758
    %v8963 = vunpack.c.h.s8.bf16 %v8759
    %v8964 = vunpack.c.h.s8.bf16 %v8760
    %v8965 = vunpack.c.l.s8.bf16 %v8761
    %v8966 = vunpack.c.l.s8.bf16 %v8762
    %v8967 = vunpack.c.l.s8.bf16 %v8763
    %v8968 = vunpack.c.l.s8.bf16 %v8764
    %v8969 = vunpack.c.l.s8.bf16 %v8765
    %v8970 = vunpack.c.l.s8.bf16 %v8766
    %v8971 = vunpack.c.h.s8.bf16 %v8761
    %v8972 = vunpack.c.h.s8.bf16 %v8762
    %v8973 = vunpack.c.h.s8.bf16 %v8763
    %v8974 = vunpack.c.h.s8.bf16 %v8764
    %v8975 = vunpack.c.h.s8.bf16 %v8765
    %v8976 = vunpack.c.h.s8.bf16 %v8766
    %v8977 = vunpack.c.l.s8.bf16 %v8767
    %v8978 = vunpack.c.l.s8.bf16 %v8768
    %v8979 = vunpack.c.l.s8.bf16 %v8769
    %v8980 = vunpack.c.l.s8.bf16 %v8770
    %v8981 = vunpack.c.l.s8.bf16 %v8771
    %v8982 = vunpack.c.l.s8.bf16 %v8772
    %v8983 = vunpack.c.h.s8.bf16 %v8767
    %v8984 = vunpack.c.h.s8.bf16 %v8768
    %v8985 = vunpack.c.h.s8.bf16 %v8769
    %v8986 = vunpack.c.h.s8.bf16 %v8770
    %v8987 = vunpack.c.h.s8.bf16 %v8771
    %v8988 = vunpack.c.h.s8.bf16 %v8772
    %v8989 = vunpack.c.l.s8.bf16 %v8773
    %v8990 = vunpack.c.l.s8.bf16 %v8774
    %v8991 = vunpack.c.l.s8.bf16 %v8775
    %v8992 = vunpack.c.l.s8.bf16 %v8776
    %v8993 = vunpack.c.l.s8.bf16 %v8777
    %v8994 = vunpack.c.l.s8.bf16 %v8778
    %v8995 = vunpack.c.h.s8.bf16 %v8773
    %v8996 = vunpack.c.h.s8.bf16 %v8774
    %v8997 = vunpack.c.h.s8.bf16 %v8775
    %v8998 = vunpack.c.h.s8.bf16 %v8776
    %v8999 = vunpack.c.h.s8.bf16 %v8777
    %v9000 = vunpack.c.h.s8.bf16 %v8778
    %v9001 = vunpack.c.l.s8.bf16 %v8779
    %v9002 = vunpack.c.l.s8.bf16 %v8780
    %v9003 = vunpack.c.l.s8.bf16 %v8781
    %v9004 = vunpack.c.l.s8.bf16 %v8782
    %v9005 = vunpack.c.l.s8.bf16 %v8783
    %v9006 = vunpack.c.l.s8.bf16 %v8784
    %v9007 = vunpack.c.h.s8.bf16 %v8779
    %v9008 = vunpack.c.h.s8.bf16 %v8780
    %v9009 = vunpack.c.h.s8.bf16 %v8781
    %v9010 = vunpack.c.h.s8.bf16 %v8782
    %v9011 = vunpack.c.h.s8.bf16 %v8783
    %v9012 = vunpack.c.h.s8.bf16 %v8784
    %v9013 = vunpack.c.l.s8.bf16 %v8785
    %v9014 = vunpack.c.l.s8.bf16 %v8786
    %v9015 = vunpack.c.l.s8.bf16 %v8787
    %v9016 = vunpack.c.l.s8.bf16 %v8788
    %v9017 = vunpack.c.l.s8.bf16 %v8789
    %v9018 = vunpack.c.l.s8.bf16 %v8790
    %v9019 = vunpack.c.h.s8.bf16 %v8785
    %v9020 = vunpack.c.h.s8.bf16 %v8786
    %v9021 = vunpack.c.h.s8.bf16 %v8787
    %v9022 = vunpack.c.h.s8.bf16 %v8788
    %v9023 = vunpack.c.h.s8.bf16 %v8789
    %v9024 = vunpack.c.h.s8.bf16 %v8790
    %v9025 = vunpack.c.l.s8.bf16 %v8791
    %v9026 = vunpack.c.l.s8.bf16 %v8792
    %v9027 = vunpack.c.l.s8.bf16 %v8793
    %v9028 = vunpack.c.l.s8.bf16 %v8794
    %v9029 = vunpack.c.l.s8.bf16 %v8795
    %v9030 = vunpack.c.l.s8.bf16 %v8796
    %v9031 = vunpack.c.h.s8.bf16 %v8791
    %v9032 = vunpack.c.h.s8.bf16 %v8792
    %v9033 = vunpack.c.h.s8.bf16 %v8793
    %v9034 = vunpack.c.h.s8.bf16 %v8794
    %v9035 = vunpack.c.h.s8.bf16 %v8795
    %v9036 = vunpack.c.h.s8.bf16 %v8796
    %v9037 = vunpack.c.l.s8.bf16 %v8797
    %v9038 = vunpack.c.l.s8.bf16 %v8798
    %v9039 = vunpack.c.l.s8.bf16 %v8799
    %v9040 = vunpack.c.l.s8.bf16 %v8800
    %v9041 = vunpack.c.l.s8.bf16 %v8801
    %v9042 = vunpack.c.l.s8.bf16 %v8802
    %v9043 = vunpack.c.h.s8.bf16 %v8797
    %v9044 = vunpack.c.h.s8.bf16 %v8798
    %v9045 = vunpack.c.h.s8.bf16 %v8799
    %v9046 = vunpack.c.h.s8.bf16 %v8800
    %v9047 = vunpack.c.h.s8.bf16 %v8801
    %v9048 = vunpack.c.h.s8.bf16 %v8802
    %v9049 = vunpack.c.l.s8.bf16 %v8803
    %v9050 = vunpack.c.l.s8.bf16 %v8804
    %v9051 = vunpack.c.l.s8.bf16 %v8805
    %v9052 = vunpack.c.l.s8.bf16 %v8806
    %v9053 = vunpack.c.l.s8.bf16 %v8807
    %v9054 = vunpack.c.l.s8.bf16 %v8808
    %v9055 = vunpack.c.h.s8.bf16 %v8803
    %v9056 = vunpack.c.h.s8.bf16 %v8804
    %v9057 = vunpack.c.h.s8.bf16 %v8805
    %v9058 = vunpack.c.h.s8.bf16 %v8806
    %v9059 = vunpack.c.h.s8.bf16 %v8807
    %v9060 = vunpack.c.h.s8.bf16 %v8808
    %v9061 = vunpack.c.l.s8.bf16 %v8809
    %v9062 = vunpack.c.l.s8.bf16 %v8810
    %v9063 = vunpack.c.l.s8.bf16 %v8811
    %v9064 = vunpack.c.l.s8.bf16 %v8812
    %v9065 = vunpack.c.l.s8.bf16 %v8813
    %v9066 = vunpack.c.l.s8.bf16 %v8814
    %v9067 = vunpack.c.h.s8.bf16 %v8809
    %v9068 = vunpack.c.h.s8.bf16 %v8810
    %v9069 = vunpack.c.h.s8.bf16 %v8811
    %v9070 = vunpack.c.h.s8.bf16 %v8812
    %v9071 = vunpack.c.h.s8.bf16 %v8813
    %v9072 = vunpack.c.h.s8.bf16 %v8814
    %v9073 = vunpack.c.l.s8.bf16 %v8815
    %v9074 = vunpack.c.l.s8.bf16 %v8816
    %v9075 = vunpack.c.l.s8.bf16 %v8817
    %v9076 = vunpack.c.l.s8.bf16 %v8818
    %v9077 = vunpack.c.l.s8.bf16 %v8819
    %v9078 = vunpack.c.l.s8.bf16 %v8820
    %v9079 = vunpack.c.h.s8.bf16 %v8815
    %v9080 = vunpack.c.h.s8.bf16 %v8816
    %v9081 = vunpack.c.h.s8.bf16 %v8817
    %v9082 = vunpack.c.h.s8.bf16 %v8818
    %v9083 = vunpack.c.h.s8.bf16 %v8819
    %v9084 = vunpack.c.h.s8.bf16 %v8820
    %v9085 = vunpack.c.l.s8.bf16 %v8821
    %v9086 = vunpack.c.l.s8.bf16 %v8822
    %v9087 = vunpack.c.l.s8.bf16 %v8823
    %v9088 = vunpack.c.l.s8.bf16 %v8824
    %v9089 = vunpack.c.l.s8.bf16 %v8825
    %v9090 = vunpack.c.l.s8.bf16 %v8826
    %v9091 = vunpack.c.h.s8.bf16 %v8821
    %v9092 = vunpack.c.h.s8.bf16 %v8822
    %v9093 = vunpack.c.h.s8.bf16 %v8823
    %v9094 = vunpack.c.h.s8.bf16 %v8824
    %v9095 = vunpack.c.h.s8.bf16 %v8825
    %v9096 = vunpack.c.h.s8.bf16 %v8826
    %v9097 = vunpack.c.l.s8.bf16 %v8827
    %v9098 = vunpack.c.l.s8.bf16 %v8828
    %v9099 = vunpack.c.l.s8.bf16 %v8829
    %v9100 = vunpack.c.l.s8.bf16 %v8830
    %v9101 = vunpack.c.l.s8.bf16 %v8831
    %v9102 = vunpack.c.l.s8.bf16 %v8832
    %v9103 = vunpack.c.h.s8.bf16 %v8827
    %v9104 = vunpack.c.h.s8.bf16 %v8828
    %v9105 = vunpack.c.h.s8.bf16 %v8829
    %v9106 = vunpack.c.h.s8.bf16 %v8830
    %v9107 = vunpack.c.h.s8.bf16 %v8831
    %v9108 = vunpack.c.h.s8.bf16 %v8832
    %v9109 = vunpack.c.l.s8.bf16 %v8833
    %v9110 = vunpack.c.l.s8.bf16 %v8834
    %v9111 = vunpack.c.l.s8.bf16 %v8835
    %v9112 = vunpack.c.l.s8.bf16 %v8836
    %v9113 = vunpack.c.l.s8.bf16 %v8837
    %v9114 = vunpack.c.l.s8.bf16 %v8838
    %v9115 = vunpack.c.h.s8.bf16 %v8833
    %v9116 = vunpack.c.h.s8.bf16 %v8834
    %v9117 = vunpack.c.h.s8.bf16 %v8835
    %v9118 = vunpack.c.h.s8.bf16 %v8836
    %v9119 = vunpack.c.h.s8.bf16 %v8837
    %v9120 = vunpack.c.h.s8.bf16 %v8838
    %v9121 = vunpack.c.l.s8.bf16 %v8839
    %v9122 = vunpack.c.l.s8.bf16 %v8840
    %v9123 = vunpack.c.l.s8.bf16 %v8841
    %v9124 = vunpack.c.l.s8.bf16 %v8842
    %v9125 = vunpack.c.l.s8.bf16 %v8843
    %v9126 = vunpack.c.l.s8.bf16 %v8844
    %v9127 = vunpack.c.h.s8.bf16 %v8839
    %v9128 = vunpack.c.h.s8.bf16 %v8840
    %v9129 = vunpack.c.h.s8.bf16 %v8841
    %v9130 = vunpack.c.h.s8.bf16 %v8842
    %v9131 = vunpack.c.h.s8.bf16 %v8843
    %v9132 = vunpack.c.h.s8.bf16 %v8844
    %v9133 = vunpack.c.l.s8.bf16 %v8845
    %v9134 = vunpack.c.l.s8.bf16 %v8846
    %v9135 = vunpack.c.l.s8.bf16 %v8847
    %v9136 = vunpack.c.l.s8.bf16 %v8848
    %v9137 = vunpack.c.l.s8.bf16 %v8849
    %v9138 = vunpack.c.l.s8.bf16 %v8850
    %v9139 = vunpack.c.h.s8.bf16 %v8845
    %v9140 = vunpack.c.h.s8.bf16 %v8846
    %v9141 = vunpack.c.h.s8.bf16 %v8847
    %v9142 = vunpack.c.h.s8.bf16 %v8848
    %v9143 = vunpack.c.h.s8.bf16 %v8849
    %v9144 = vunpack.c.h.s8.bf16 %v8850
    %v9145 = vunpack.c.l.s8.bf16 %v8851
    %v9146 = vunpack.c.l.s8.bf16 %v8852
    %v9147 = vunpack.c.l.s8.bf16 %v8853
    %v9148 = vunpack.c.l.s8.bf16 %v8854
    %v9149 = vunpack.c.l.s8.bf16 %v8855
    %v9150 = vunpack.c.l.s8.bf16 %v8856
    %v9151 = vunpack.c.h.s8.bf16 %v8851
    %v9152 = vunpack.c.h.s8.bf16 %v8852
    %v9153 = vunpack.c.h.s8.bf16 %v8853
    %v9154 = vunpack.c.h.s8.bf16 %v8854
    %v9155 = vunpack.c.h.s8.bf16 %v8855
    %v9156 = vunpack.c.h.s8.bf16 %v8856
    %v9157 = vunpack.c.l.s8.bf16 %v8857
    %v9158 = vunpack.c.l.s8.bf16 %v8858
    %v9159 = vunpack.c.l.s8.bf16 %v8859
    %v9160 = vunpack.c.l.s8.bf16 %v8860
    %v9161 = vunpack.c.l.s8.bf16 %v8861
    %v9162 = vunpack.c.l.s8.bf16 %v8862
    %v9163 = vunpack.c.h.s8.bf16 %v8857
    %v9164 = vunpack.c.h.s8.bf16 %v8858
    %v9165 = vunpack.c.h.s8.bf16 %v8859
    %v9166 = vunpack.c.h.s8.bf16 %v8860
    %v9167 = vunpack.c.h.s8.bf16 %v8861
    %v9168 = vunpack.c.h.s8.bf16 %v8862
    %v9169 = vunpack.c.l.s8.bf16 %v8863
    %v9170 = vunpack.c.l.s8.bf16 %v8864
    %v9171 = vunpack.c.l.s8.bf16 %v8865
    %v9172 = vunpack.c.l.s8.bf16 %v8866
    %v9173 = vunpack.c.l.s8.bf16 %v8867
    %v9174 = vunpack.c.l.s8.bf16 %v8868
    %v9175 = vunpack.c.h.s8.bf16 %v8863
    %v9176 = vunpack.c.h.s8.bf16 %v8864
    %v9177 = vunpack.c.h.s8.bf16 %v8865
    %v9178 = vunpack.c.h.s8.bf16 %v8866
    %v9179 = vunpack.c.h.s8.bf16 %v8867
    %v9180 = vunpack.c.h.s8.bf16 %v8868
    %v9181 = vunpack.c.l.s8.bf16 %v8869
    %v9182 = vunpack.c.l.s8.bf16 %v8870
    %v9183 = vunpack.c.l.s8.bf16 %v8871
    %v9184 = vunpack.c.l.s8.bf16 %v8872
    %v9185 = vunpack.c.l.s8.bf16 %v8873
    %v9186 = vunpack.c.l.s8.bf16 %v8874
    %v9187 = vunpack.c.h.s8.bf16 %v8869
    %v9188 = vunpack.c.h.s8.bf16 %v8870
    %v9189 = vunpack.c.h.s8.bf16 %v8871
    %v9190 = vunpack.c.h.s8.bf16 %v8872
    %v9191 = vunpack.c.h.s8.bf16 %v8873
    %v9192 = vunpack.c.h.s8.bf16 %v8874
    %v9193 = vunpack.c.l.s8.bf16 %v8875
    %v9194 = vunpack.c.l.s8.bf16 %v8876
    %v9195 = vunpack.c.l.s8.bf16 %v8877
    %v9196 = vunpack.c.l.s8.bf16 %v8878
    %v9197 = vunpack.c.l.s8.bf16 %v8879
    %v9198 = vunpack.c.l.s8.bf16 %v8880
    %v9199 = vunpack.c.h.s8.bf16 %v8875
    %v9200 = vunpack.c.h.s8.bf16 %v8876
    %v9201 = vunpack.c.h.s8.bf16 %v8877
    %v9202 = vunpack.c.h.s8.bf16 %v8878
    %v9203 = vunpack.c.h.s8.bf16 %v8879
    %v9204 = vunpack.c.h.s8.bf16 %v8880
    %v9205 = vunpack.c.l.s8.bf16 %v8881
    %v9206 = vunpack.c.l.s8.bf16 %v8882
    %v9207 = vunpack.c.l.s8.bf16 %v8883
    %v9208 = vunpack.c.l.s8.bf16 %v8884
    %v9209 = vunpack.c.l.s8.bf16 %v8885
    %v9210 = vunpack.c.l.s8.bf16 %v8886
    %v9211 = vunpack.c.h.s8.bf16 %v8881
    %v9212 = vunpack.c.h.s8.bf16 %v8882
    %v9213 = vunpack.c.h.s8.bf16 %v8883
    %v9214 = vunpack.c.h.s8.bf16 %v8884
    %v9215 = vunpack.c.h.s8.bf16 %v8885
    %v9216 = vunpack.c.h.s8.bf16 %v8886
    %v9217 = vunpack.c.l.s8.bf16 %v8887
    %v9218 = vunpack.c.l.s8.bf16 %v8888
    %v9219 = vunpack.c.l.s8.bf16 %v8889
    %v9220 = vunpack.c.l.s8.bf16 %v8890
    %v9221 = vunpack.c.l.s8.bf16 %v8891
    %v9222 = vunpack.c.l.s8.bf16 %v8892
    %v9223 = vunpack.c.h.s8.bf16 %v8887
    %v9224 = vunpack.c.h.s8.bf16 %v8888
    %v9225 = vunpack.c.h.s8.bf16 %v8889
    %v9226 = vunpack.c.h.s8.bf16 %v8890
    %v9227 = vunpack.c.h.s8.bf16 %v8891
    %v9228 = vunpack.c.h.s8.bf16 %v8892
    %v9229 = vunpack.c.l.s8.bf16 %v8893
    %v9230 = vunpack.c.l.s8.bf16 %v8894
    %v9231 = vunpack.c.l.s8.bf16 %v8895
    %v9232 = vunpack.c.l.s8.bf16 %v8896
    %v9233 = vunpack.c.l.s8.bf16 %v8897
    %v9234 = vunpack.c.l.s8.bf16 %v8898
    %v9235 = vunpack.c.h.s8.bf16 %v8893
    %v9236 = vunpack.c.h.s8.bf16 %v8894
    %v9237 = vunpack.c.h.s8.bf16 %v8895
    %v9238 = vunpack.c.h.s8.bf16 %v8896
    %v9239 = vunpack.c.h.s8.bf16 %v8897
    %v9240 = vunpack.c.h.s8.bf16 %v8898
    %v9241 = vunpack.c.l.s8.bf16 %v8899
    %v9242 = vunpack.c.l.s8.bf16 %v8900
    %v9243 = vunpack.c.l.s8.bf16 %v8901
    %v9244 = vunpack.c.l.s8.bf16 %v8902
    %v9245 = vunpack.c.l.s8.bf16 %v8903
    %v9246 = vunpack.c.l.s8.bf16 %v8904
    %v9247 = vunpack.c.h.s8.bf16 %v8899
    %v9248 = vunpack.c.h.s8.bf16 %v8900
    %v9249 = vunpack.c.h.s8.bf16 %v8901
    %v9250 = vunpack.c.h.s8.bf16 %v8902
    %v9251 = vunpack.c.h.s8.bf16 %v8903
    %v9252 = vunpack.c.h.s8.bf16 %v8904
    %v9253 = vunpack.c.l.s8.bf16 %v8905
    %v9254 = vunpack.c.l.s8.bf16 %v8906
    %v9255 = vunpack.c.l.s8.bf16 %v8907
    %v9256 = vunpack.c.l.s8.bf16 %v8908
    %v9257 = vunpack.c.l.s8.bf16 %v8909
    %v9258 = vunpack.c.l.s8.bf16 %v8910
    %v9259 = vunpack.c.h.s8.bf16 %v8905
    %v9260 = vunpack.c.h.s8.bf16 %v8906
    %v9261 = vunpack.c.h.s8.bf16 %v8907
    %v9262 = vunpack.c.h.s8.bf16 %v8908
    %v9263 = vunpack.c.h.s8.bf16 %v8909
    %v9264 = vunpack.c.h.s8.bf16 %v8910
    %v9265 = vunpack.c.l.s8.bf16 %v8911
    %v9266 = vunpack.c.l.s8.bf16 %v8912
    %v9267 = vunpack.c.l.s8.bf16 %v8913
    %v9268 = vunpack.c.l.s8.bf16 %v8914
    %v9269 = vunpack.c.l.s8.bf16 %v8915
    %v9270 = vunpack.c.l.s8.bf16 %v8916
    %v9271 = vunpack.c.h.s8.bf16 %v8911
    %v9272 = vunpack.c.h.s8.bf16 %v8912
    %v9273 = vunpack.c.h.s8.bf16 %v8913
    %v9274 = vunpack.c.h.s8.bf16 %v8914
    %v9275 = vunpack.c.h.s8.bf16 %v8915
    %v9276 = vunpack.c.h.s8.bf16 %v8916
    %v9277 = vunpack.c.l.s8.bf16 %v8917
    %v9278 = vunpack.c.l.s8.bf16 %v8918
    %v9279 = vunpack.c.l.s8.bf16 %v8919
    %v9280 = vunpack.c.l.s8.bf16 %v8920
    %v9281 = vunpack.c.l.s8.bf16 %v8921
    %v9282 = vunpack.c.l.s8.bf16 %v8922
    %v9283 = vunpack.c.h.s8.bf16 %v8917
    %v9284 = vunpack.c.h.s8.bf16 %v8918
    %v9285 = vunpack.c.h.s8.bf16 %v8919
    %v9286 = vunpack.c.h.s8.bf16 %v8920
    %v9287 = vunpack.c.h.s8.bf16 %v8921
    %v9288 = vunpack.c.h.s8.bf16 %v8922
    %v9289 = vunpack.c.l.s8.bf16 %v8923
    %v9290 = vunpack.c.l.s8.bf16 %v8924
    %v9291 = vunpack.c.l.s8.bf16 %v8925
    %v9292 = vunpack.c.l.s8.bf16 %v8926
    %v9293 = vunpack.c.l.s8.bf16 %v8927
    %v9294 = vunpack.c.l.s8.bf16 %v8928
    %v9295 = vunpack.c.h.s8.bf16 %v8923
    %v9296 = vunpack.c.h.s8.bf16 %v8924
    %v9297 = vunpack.c.h.s8.bf16 %v8925
    %v9298 = vunpack.c.h.s8.bf16 %v8926
    %v9299 = vunpack.c.h.s8.bf16 %v8927
    %v9300 = vunpack.c.h.s8.bf16 %v8928
    %v9301 = vunpack.c.l.s8.bf16 %v8929
    %v9302 = vunpack.c.l.s8.bf16 %v8930
    %v9303 = vunpack.c.l.s8.bf16 %v8931
    %v9304 = vunpack.c.l.s8.bf16 %v8932
    %v9305 = vunpack.c.l.s8.bf16 %v8933
    %v9306 = vunpack.c.l.s8.bf16 %v8934
    %v9307 = vunpack.c.h.s8.bf16 %v8929
    %v9308 = vunpack.c.h.s8.bf16 %v8930
    %v9309 = vunpack.c.h.s8.bf16 %v8931
    %v9310 = vunpack.c.h.s8.bf16 %v8932
    %v9311 = vunpack.c.h.s8.bf16 %v8933
    %v9312 = vunpack.c.h.s8.bf16 %v8934
    %v9313 = vunpack.c.l.s8.bf16 %v8935
    %v9314 = vunpack.c.l.s8.bf16 %v8936
    %v9315 = vunpack.c.l.s8.bf16 %v8937
    %v9316 = vunpack.c.l.s8.bf16 %v8938
    %v9317 = vunpack.c.l.s8.bf16 %v8939
    %v9318 = vunpack.c.l.s8.bf16 %v8940
    %v9319 = vunpack.c.h.s8.bf16 %v8935
    %v9320 = vunpack.c.h.s8.bf16 %v8936
    %v9321 = vunpack.c.h.s8.bf16 %v8937
    %v9322 = vunpack.c.h.s8.bf16 %v8938
    %v9323 = vunpack.c.h.s8.bf16 %v8939
    %v9324 = vunpack.c.h.s8.bf16 %v8940
    %v9325 = vpack.c.bf16 %v8740, %v8740
    %v9326 = vpack.c.bf16 %v8741, %v8741
    %v9327 = vpack.c.bf16 %v8742, %v8742
    %v9328 = vpack.c.bf16 %v8743, %v8743
    %v9329 = vpack.c.bf16 %v8744, %v8744
    %v9330 = vpack.c.bf16 %v8745, %v8745
    %v9331 = vpack.c.bf16 %v8746, %v8746
    %v9332 = vpack.c.bf16 %v8747, %v8747
    %9333 = vmatprep.subr.bf16.mxu0 %v8942
    %9334 = vmatpush1.bf16.msra.mxu0 %v8941
    %9335 = vmatprep.subr.bf16.mxu0 %v8948
    %9336 = vmatpush1.bf16.msra.mxu0 %v8947
    %9337 = vmatprep.subr.bf16.mxu0 %v8954
    %9338 = vmatpush1.bf16.msra.mxu0 %v8953
    %9339 = vmatprep.subr.bf16.mxu0 %v8960
    %9340 = vmatpush1.bf16.msra.mxu0 %v8959
    %9341 = vmatprep.subr.bf16.mxu0 %v8966
    %9342 = vmatpush1.bf16.msra.mxu0 %v8965
    %9343 = vmatprep.subr.bf16.mxu0 %v8972
    %9344 = vmatpush1.bf16.msra.mxu0 %v8971
    %9345 = vmatprep.subr.bf16.mxu0 %v8978
    %9346 = vmatpush1.bf16.msra.mxu0 %v8977
    %9347 = vmatprep.subr.bf16.mxu0 %v8984
    %9348 = vmatpush1.bf16.msra.mxu0 %v8983
    %9349 = vmatprep.subr.bf16.mxu0 %v8990
    %9350 = vmatpush1.bf16.msra.mxu0 %v8989
    %9351 = vmatprep.subr.bf16.mxu0 %v8996
    %9352 = vmatpush1.bf16.msra.mxu0 %v8995
    %9353 = vmatprep.subr.bf16.mxu0 %v9002
    %9354 = vmatpush1.bf16.msra.mxu0 %v9001
    %9355 = vmatprep.subr.bf16.mxu0 %v9008
    %9356 = vmatpush1.bf16.msra.mxu0 %v9007
    %9357 = vmatprep.subr.bf16.mxu0 %v9014
    %9358 = vmatpush1.bf16.msra.mxu0 %v9013
    %9359 = vmatprep.subr.bf16.mxu0 %v9020
    %9360 = vmatpush1.bf16.msra.mxu0 %v9019
    %9361 = vmatprep.subr.bf16.mxu0 %v9026
    %9362 = vmatpush1.bf16.msra.mxu0 %v9025
    %9363 = vmatprep.subr.bf16.mxu0 %v9032
    %9364 = vmatpush1.bf16.msra.mxu0 %v9031
    %9365 = vmatprep.mubr.bf16.mxu0 %v9326
    %9366 = vmatmul.mubr.bf16.gmra.mrb[0].mxu0 %v9325
    %v9367 = vpop.f32.mrb[0].mxu0
    %v9368 = vadd.f32 0.0, %v9367
    %v9369 = vpop.f32.mrb[0].mxu0
    %v9370 = vadd.f32 0.0, %v9369
    %v9371 = vpop.f32.mrb[0].mxu0
    %v9372 = vpop.f32.mrb[0].mxu0
    %9373 = vdwg.mxu0
    %9374 = vmatprep.subr.bf16.mxu0 %v9038
    %9375 = vmatpush1.bf16.msra.mxu0 %v9037
    %9376 = vmatprep.subr.bf16.mxu0 %v9044
    %9377 = vmatpush1.bf16.msra.mxu0 %v9043
    %9378 = vmatprep.subr.bf16.mxu0 %v9050
    %9379 = vmatpush1.bf16.msra.mxu0 %v9049
    %9380 = vmatprep.subr.bf16.mxu0 %v9056
    %9381 = vmatpush1.bf16.msra.mxu0 %v9055
    %9382 = vmatprep.subr.bf16.mxu0 %v9062
    %9383 = vmatpush1.bf16.msra.mxu0 %v9061
    %9384 = vmatprep.subr.bf16.mxu0 %v9068
    %9385 = vmatpush1.bf16.msra.mxu0 %v9067
    %9386 = vmatprep.subr.bf16.mxu0 %v9074
    %9387 = vmatpush1.bf16.msra.mxu0 %v9073
    %9388 = vmatprep.subr.bf16.mxu0 %v9080
    %9389 = vmatpush1.bf16.msra.mxu0 %v9079
    %9390 = vmatprep.subr.bf16.mxu0 %v9086
    %9391 = vmatpush1.bf16.msra.mxu0 %v9085
    %9392 = vmatprep.subr.bf16.mxu0 %v9092
    %9393 = vmatpush1.bf16.msra.mxu0 %v9091
    %9394 = vmatprep.subr.bf16.mxu0 %v9098
    %9395 = vmatpush1.bf16.msra.mxu0 %v9097
    %9396 = vmatprep.subr.bf16.mxu0 %v9104
    %9397 = vmatpush1.bf16.msra.mxu0 %v9103
    %9398 = vmatprep.subr.bf16.mxu0 %v9110
    %9399 = vmatpush1.bf16.msra.mxu0 %v9109
    %9400 = vmatprep.subr.bf16.mxu0 %v9116
    %9401 = vmatpush1.bf16.msra.mxu0 %v9115
    %9402 = vmatprep.subr.bf16.mxu0 %v9122
    %9403 = vmatpush1.bf16.msra.mxu0 %v9121
    %9404 = vmatprep.subr.bf16.mxu0 %v9128
    %9405 = vmatpush1.bf16.msra.mxu0 %v9127
    %9406 = vmatprep.mubr.bf16.mxu0 %v9328
    %9407 = vmatmul.mubr.bf16.gmra.mrb[0].mxu0 %v9327
    %v9408 = vpop.f32.mrb[0].mxu0
    %v9409 = vadd.f32 %v9368, %v9408
    %v9410 = vpop.f32.mrb[0].mxu0
    %v9411 = vadd.f32 %v9370, %v9410
    %v9412 = vpop.f32.mrb[0].mxu0
    %v9413 = vpop.f32.mrb[0].mxu0
    %9414 = vdwg.mxu0
    %9415 = vmatprep.subr.bf16.mxu0 %v9134
    %9416 = vmatpush1.bf16.msra.mxu0 %v9133
    %9417 = vmatprep.subr.bf16.mxu0 %v9140
    %9418 = vmatpush1.bf16.msra.mxu0 %v9139
    %9419 = vmatprep.subr.bf16.mxu0 %v9146
    %9420 = vmatpush1.bf16.msra.mxu0 %v9145
    %9421 = vmatprep.subr.bf16.mxu0 %v9152
    %9422 = vmatpush1.bf16.msra.mxu0 %v9151
    %9423 = vmatprep.subr.bf16.mxu0 %v9158
    %9424 = vmatpush1.bf16.msra.mxu0 %v9157
    %9425 = vmatprep.subr.bf16.mxu0 %v9164
    %9426 = vmatpush1.bf16.msra.mxu0 %v9163
    %9427 = vmatprep.subr.bf16.mxu0 %v9170
    %9428 = vmatpush1.bf16.msra.mxu0 %v9169
    %9429 = vmatprep.subr.bf16.mxu0 %v9176
    %9430 = vmatpush1.bf16.msra.mxu0 %v9175
    %9431 = vmatprep.subr.bf16.mxu0 %v9182
    %9432 = vmatpush1.bf16.msra.mxu0 %v9181
    %9433 = vmatprep.subr.bf16.mxu0 %v9188
    %9434 = vmatpush1.bf16.msra.mxu0 %v9187
    %9435 = vmatprep.subr.bf16.mxu0 %v9194
    %9436 = vmatpush1.bf16.msra.mxu0 %v9193
    %9437 = vmatprep.subr.bf16.mxu0 %v9200
    %9438 = vmatpush1.bf16.msra.mxu0 %v9199
    %9439 = vmatprep.subr.bf16.mxu0 %v9206
    %9440 = vmatpush1.bf16.msra.mxu0 %v9205
    %9441 = vmatprep.subr.bf16.mxu0 %v9212
    %9442 = vmatpush1.bf16.msra.mxu0 %v9211
    %9443 = vmatprep.subr.bf16.mxu0 %v9218
    %9444 = vmatpush1.bf16.msra.mxu0 %v9217
    %9445 = vmatprep.subr.bf16.mxu0 %v9224
    %9446 = vmatpush1.bf16.msra.mxu0 %v9223
    %9447 = vmatprep.mubr.bf16.mxu0 %v9330
    %9448 = vmatmul.mubr.bf16.gmra.mrb[0].mxu0 %v9329
    %v9449 = vpop.f32.mrb[0].mxu0
    %v9450 = vadd.f32 %v9409, %v9449
    %v9451 = vpop.f32.mrb[0].mxu0
    %v9452 = vadd.f32 %v9411, %v9451
    %v9453 = vpop.f32.mrb[0].mxu0
    %v9454 = vpop.f32.mrb[0].mxu0
    %9455 = vdwg.mxu0
    %9456 = vmatprep.subr.bf16.mxu0 %v9230
    %9457 = vmatpush1.bf16.msra.mxu0 %v9229
    %9458 = vmatprep.subr.bf16.mxu0 %v9236
    %9459 = vmatpush1.bf16.msra.mxu0 %v9235
    %9460 = vmatprep.subr.bf16.mxu0 %v9242
    %9461 = vmatpush1.bf16.msra.mxu0 %v9241
    %9462 = vmatprep.subr.bf16.mxu0 %v9248
    %9463 = vmatpush1.bf16.msra.mxu0 %v9247
    %9464 = vmatprep.subr.bf16.mxu0 %v9254
    %9465 = vmatpush1.bf16.msra.mxu0 %v9253
    %9466 = vmatprep.subr.bf16.mxu0 %v9260
    %9467 = vmatpush1.bf16.msra.mxu0 %v9259
    %9468 = vmatprep.subr.bf16.mxu0 %v9266
    %9469 = vmatpush1.bf16.msra.mxu0 %v9265
    %9470 = vmatprep.subr.bf16.mxu0 %v9272
    %9471 = vmatpush1.bf16.msra.mxu0 %v9271
    %9472 = vmatprep.subr.bf16.mxu0 %v9278
    %9473 = vmatpush1.bf16.msra.mxu0 %v9277
    %9474 = vmatprep.subr.bf16.mxu0 %v9284
    %9475 = vmatpush1.bf16.msra.mxu0 %v9283
    %9476 = vmatprep.subr.bf16.mxu0 %v9290
    %9477 = vmatpush1.bf16.msra.mxu0 %v9289
    %9478 = vmatprep.subr.bf16.mxu0 %v9296
    %9479 = vmatpush1.bf16.msra.mxu0 %v9295
    %9480 = vmatprep.subr.bf16.mxu0 %v9302
    %9481 = vmatpush1.bf16.msra.mxu0 %v9301
    %9482 = vmatprep.subr.bf16.mxu0 %v9308
    %9483 = vmatpush1.bf16.msra.mxu0 %v9307
    %9484 = vmatprep.subr.bf16.mxu0 %v9314
    %9485 = vmatpush1.bf16.msra.mxu0 %v9313
    %9486 = vmatprep.subr.bf16.mxu0 %v9320
    %9487 = vmatpush1.bf16.msra.mxu0 %v9319
    %9488 = vmatprep.mubr.bf16.mxu0 %v9332
    %9489 = vmatmul.mubr.bf16.gmra.mrb[0].mxu0 %v9331
    %v9490 = vpop.f32.mrb[0].mxu0
    %v9491 = vadd.f32 %v9450, %v9490
    %v9492 = vpop.f32.mrb[0].mxu0
    %v9493 = vadd.f32 %v9452, %v9492
    %v9494 = vpop.f32.mrb[0].mxu0
    %v9495 = vpop.f32.mrb[0].mxu0
    %9496 = vdwg.mxu0
    %9497 = vmatprep.subr.bf16.mxu0 %v8944
    %9498 = vmatpush1.bf16.msra.mxu0 %v8943
    %9499 = vmatprep.subr.bf16.mxu0 %v8950
    %9500 = vmatpush1.bf16.msra.mxu0 %v8949
    %9501 = vmatprep.subr.bf16.mxu0 %v8956
    %9502 = vmatpush1.bf16.msra.mxu0 %v8955
    %9503 = vmatprep.subr.bf16.mxu0 %v8962
    %9504 = vmatpush1.bf16.msra.mxu0 %v8961
    %9505 = vmatprep.subr.bf16.mxu0 %v8968
    %9506 = vmatpush1.bf16.msra.mxu0 %v8967
    %9507 = vmatprep.subr.bf16.mxu0 %v8974
    %9508 = vmatpush1.bf16.msra.mxu0 %v8973
    %9509 = vmatprep.subr.bf16.mxu0 %v8980
    %9510 = vmatpush1.bf16.msra.mxu0 %v8979
    %9511 = vmatprep.subr.bf16.mxu0 %v8986
    %9512 = vmatpush1.bf16.msra.mxu0 %v8985
    %9513 = vmatprep.subr.bf16.mxu0 %v8992
    %9514 = vmatpush1.bf16.msra.mxu0 %v8991
    %9515 = vmatprep.subr.bf16.mxu0 %v8998
    %9516 = vmatpush1.bf16.msra.mxu0 %v8997
    %9517 = vmatprep.subr.bf16.mxu0 %v9004
    %9518 = vmatpush1.bf16.msra.mxu0 %v9003
    %9519 = vmatprep.subr.bf16.mxu0 %v9010
    %9520 = vmatpush1.bf16.msra.mxu0 %v9009
    %9521 = vmatprep.subr.bf16.mxu0 %v9016
    %9522 = vmatpush1.bf16.msra.mxu0 %v9015
    %9523 = vmatprep.subr.bf16.mxu0 %v9022
    %9524 = vmatpush1.bf16.msra.mxu0 %v9021
    %9525 = vmatprep.subr.bf16.mxu0 %v9028
    %9526 = vmatpush1.bf16.msra.mxu0 %v9027
    %9527 = vmatprep.subr.bf16.mxu0 %v9034
    %9528 = vmatpush1.bf16.msra.mxu0 %v9033
    %9529 = vmatprep.mubr.bf16.mxu0 %v9326
    %9530 = vmatmul.mubr.bf16.gmra.mrb[0].mxu0 %v9325
    %v9531 = vpop.f32.mrb[0].mxu0
    %v9532 = vadd.f32 0.0, %v9531
    %v9533 = vpop.f32.mrb[0].mxu0
    %v9534 = vadd.f32 0.0, %v9533
    %v9535 = vpop.f32.mrb[0].mxu0
    %v9536 = vpop.f32.mrb[0].mxu0
    %9537 = vdwg.mxu0
    %9538 = vmatprep.subr.bf16.mxu0 %v9040
    %9539 = vmatpush1.bf16.msra.mxu0 %v9039
    %9540 = vmatprep.subr.bf16.mxu0 %v9046
    %9541 = vmatpush1.bf16.msra.mxu0 %v9045
    %9542 = vmatprep.subr.bf16.mxu0 %v9052
    %9543 = vmatpush1.bf16.msra.mxu0 %v9051
    %9544 = vmatprep.subr.bf16.mxu0 %v9058
    %9545 = vmatpush1.bf16.msra.mxu0 %v9057
    %9546 = vmatprep.subr.bf16.mxu0 %v9064
    %9547 = vmatpush1.bf16.msra.mxu0 %v9063
    %9548 = vmatprep.subr.bf16.mxu0 %v9070
    %9549 = vmatpush1.bf16.msra.mxu0 %v9069
    %9550 = vmatprep.subr.bf16.mxu0 %v9076
    %9551 = vmatpush1.bf16.msra.mxu0 %v9075
    %9552 = vmatprep.subr.bf16.mxu0 %v9082
    %9553 = vmatpush1.bf16.msra.mxu0 %v9081
    %9554 = vmatprep.subr.bf16.mxu0 %v9088
    %9555 = vmatpush1.bf16.msra.mxu0 %v9087
    %9556 = vmatprep.subr.bf16.mxu0 %v9094
    %9557 = vmatpush1.bf16.msra.mxu0 %v9093
    %9558 = vmatprep.subr.bf16.mxu0 %v9100
    %9559 = vmatpush1.bf16.msra.mxu0 %v9099
    %9560 = vmatprep.subr.bf16.mxu0 %v9106
    %9561 = vmatpush1.bf16.msra.mxu0 %v9105
    %9562 = vmatprep.subr.bf16.mxu0 %v9112
    %9563 = vmatpush1.bf16.msra.mxu0 %v9111
    %9564 = vmatprep.subr.bf16.mxu0 %v9118
    %9565 = vmatpush1.bf16.msra.mxu0 %v9117
    %9566 = vmatprep.subr.bf16.mxu0 %v9124
    %9567 = vmatpush1.bf16.msra.mxu0 %v9123
    %9568 = vmatprep.subr.bf16.mxu0 %v9130
    %9569 = vmatpush1.bf16.msra.mxu0 %v9129
    %9570 = vmatprep.mubr.bf16.mxu0 %v9328
    %9571 = vmatmul.mubr.bf16.gmra.mrb[0].mxu0 %v9327
    %v9572 = vpop.f32.mrb[0].mxu0
    %v9573 = vadd.f32 %v9532, %v9572
    %v9574 = vpop.f32.mrb[0].mxu0
    %v9575 = vadd.f32 %v9534, %v9574
    %v9576 = vpop.f32.mrb[0].mxu0
    %v9577 = vpop.f32.mrb[0].mxu0
    %9578 = vdwg.mxu0
    %9579 = vmatprep.subr.bf16.mxu0 %v9136
    %9580 = vmatpush1.bf16.msra.mxu0 %v9135
    %9581 = vmatprep.subr.bf16.mxu0 %v9142
    %9582 = vmatpush1.bf16.msra.mxu0 %v9141
    %9583 = vmatprep.subr.bf16.mxu0 %v9148
    %9584 = vmatpush1.bf16.msra.mxu0 %v9147
    %9585 = vmatprep.subr.bf16.mxu0 %v9154
    %9586 = vmatpush1.bf16.msra.mxu0 %v9153
    %9587 = vmatprep.subr.bf16.mxu0 %v9160
    %9588 = vmatpush1.bf16.msra.mxu0 %v9159
    %9589 = vmatprep.subr.bf16.mxu0 %v9166
    %9590 = vmatpush1.bf16.msra.mxu0 %v9165
    %9591 = vmatprep.subr.bf16.mxu0 %v9172
    %9592 = vmatpush1.bf16.msra.mxu0 %v9171
    %9593 = vmatprep.subr.bf16.mxu0 %v9178
    %9594 = vmatpush1.bf16.msra.mxu0 %v9177
    %9595 = vmatprep.subr.bf16.mxu0 %v9184
    %9596 = vmatpush1.bf16.msra.mxu0 %v9183
    %9597 = vmatprep.subr.bf16.mxu0 %v9190
    %9598 = vmatpush1.bf16.msra.mxu0 %v9189
    %9599 = vmatprep.subr.bf16.mxu0 %v9196
    %9600 = vmatpush1.bf16.msra.mxu0 %v9195
    %9601 = vmatprep.subr.bf16.mxu0 %v9202
    %9602 = vmatpush1.bf16.msra.mxu0 %v9201
    %9603 = vmatprep.subr.bf16.mxu0 %v9208
    %9604 = vmatpush1.bf16.msra.mxu0 %v9207
    %9605 = vmatprep.subr.bf16.mxu0 %v9214
    %9606 = vmatpush1.bf16.msra.mxu0 %v9213
    %9607 = vmatprep.subr.bf16.mxu0 %v9220
    %9608 = vmatpush1.bf16.msra.mxu0 %v9219
    %9609 = vmatprep.subr.bf16.mxu0 %v9226
    %9610 = vmatpush1.bf16.msra.mxu0 %v9225
    %9611 = vmatprep.mubr.bf16.mxu0 %v9330
    %9612 = vmatmul.mubr.bf16.gmra.mrb[0].mxu0 %v9329
    %v9613 = vpop.f32.mrb[0].mxu0
    %v9614 = vadd.f32 %v9573, %v9613
    %v9615 = vpop.f32.mrb[0].mxu0
    %v9616 = vadd.f32 %v9575, %v9615
    %v9617 = vpop.f32.mrb[0].mxu0
    %v9618 = vpop.f32.mrb[0].mxu0
    %9619 = vdwg.mxu0
    %9620 = vmatprep.subr.bf16.mxu0 %v9232
    %9621 = vmatpush1.bf16.msra.mxu0 %v9231
    %9622 = vmatprep.subr.bf16.mxu0 %v9238
    %9623 = vmatpush1.bf16.msra.mxu0 %v9237
    %9624 = vmatprep.subr.bf16.mxu0 %v9244
    %9625 = vmatpush1.bf16.msra.mxu0 %v9243
    %9626 = vmatprep.subr.bf16.mxu0 %v9250
    %9627 = vmatpush1.bf16.msra.mxu0 %v9249
    %9628 = vmatprep.subr.bf16.mxu0 %v9256
    %9629 = vmatpush1.bf16.msra.mxu0 %v9255
    %9630 = vmatprep.subr.bf16.mxu0 %v9262
    %9631 = vmatpush1.bf16.msra.mxu0 %v9261
    %9632 = vmatprep.subr.bf16.mxu0 %v9268
    %9633 = vmatpush1.bf16.msra.mxu0 %v9267
    %9634 = vmatprep.subr.bf16.mxu0 %v9274
    %9635 = vmatpush1.bf16.msra.mxu0 %v9273
    %9636 = vmatprep.subr.bf16.mxu0 %v9280
    %9637 = vmatpush1.bf16.msra.mxu0 %v9279
    %9638 = vmatprep.subr.bf16.mxu0 %v9286
    %9639 = vmatpush1.bf16.msra.mxu0 %v9285
    %9640 = vmatprep.subr.bf16.mxu0 %v9292
    %9641 = vmatpush1.bf16.msra.mxu0 %v9291
    %9642 = vmatprep.subr.bf16.mxu0 %v9298
    %9643 = vmatpush1.bf16.msra.mxu0 %v9297
    %9644 = vmatprep.subr.bf16.mxu0 %v9304
    %9645 = vmatpush1.bf16.msra.mxu0 %v9303
    %9646 = vmatprep.subr.bf16.mxu0 %v9310
    %9647 = vmatpush1.bf16.msra.mxu0 %v9309
    %9648 = vmatprep.subr.bf16.mxu0 %v9316
    %9649 = vmatpush1.bf16.msra.mxu0 %v9315
    %9650 = vmatprep.subr.bf16.mxu0 %v9322
    %9651 = vmatpush1.bf16.msra.mxu0 %v9321
    %9652 = vmatprep.mubr.bf16.mxu0 %v9332
    %9653 = vmatmul.mubr.bf16.gmra.mrb[0].mxu0 %v9331
    %v9654 = vpop.f32.mrb[0].mxu0
    %v9655 = vadd.f32 %v9614, %v9654
    %v9656 = vpop.f32.mrb[0].mxu0
    %v9657 = vadd.f32 %v9616, %v9656
    %v9658 = vpop.f32.mrb[0].mxu0
    %v9659 = vpop.f32.mrb[0].mxu0
    %9660 = vdwg.mxu0
    %9661 = vmatprep.subr.bf16.mxu0 %v8946
    %9662 = vmatpush1.bf16.msra.mxu0 %v8945
    %9663 = vmatprep.subr.bf16.mxu0 %v8952
    %9664 = vmatpush1.bf16.msra.mxu0 %v8951
    %9665 = vmatprep.subr.bf16.mxu0 %v8958
    %9666 = vmatpush1.bf16.msra.mxu0 %v8957
    %9667 = vmatprep.subr.bf16.mxu0 %v8964
    %9668 = vmatpush1.bf16.msra.mxu0 %v8963
    %9669 = vmatprep.subr.bf16.mxu0 %v8970
    %9670 = vmatpush1.bf16.msra.mxu0 %v8969
    %9671 = vmatprep.subr.bf16.mxu0 %v8976
    %9672 = vmatpush1.bf16.msra.mxu0 %v8975
    %9673 = vmatprep.subr.bf16.mxu0 %v8982
    %9674 = vmatpush1.bf16.msra.mxu0 %v8981
    %9675 = vmatprep.subr.bf16.mxu0 %v8988
    %9676 = vmatpush1.bf16.msra.mxu0 %v8987
    %9677 = vmatprep.subr.bf16.mxu0 %v8994
    %9678 = vmatpush1.bf16.msra.mxu0 %v8993
    %9679 = vmatprep.subr.bf16.mxu0 %v9000
    %9680 = vmatpush1.bf16.msra.mxu0 %v8999
    %9681 = vmatprep.subr.bf16.mxu0 %v9006
    %9682 = vmatpush1.bf16.msra.mxu0 %v9005
    %9683 = vmatprep.subr.bf16.mxu0 %v9012
    %9684 = vmatpush1.bf16.msra.mxu0 %v9011
    %9685 = vmatprep.subr.bf16.mxu0 %v9018
    %9686 = vmatpush1.bf16.msra.mxu0 %v9017
    %9687 = vmatprep.subr.bf16.mxu0 %v9024
    %9688 = vmatpush1.bf16.msra.mxu0 %v9023
    %9689 = vmatprep.subr.bf16.mxu0 %v9030
    %9690 = vmatpush1.bf16.msra.mxu0 %v9029
    %9691 = vmatprep.subr.bf16.mxu0 %v9036
    %9692 = vmatpush1.bf16.msra.mxu0 %v9035
    %9693 = vmatprep.mubr.bf16.mxu0 %v9326
    %9694 = vmatmul.mubr.bf16.gmra.mrb[0].mxu0 %v9325
    %v9695 = vpop.f32.mrb[0].mxu0
    %v9696 = vadd.f32 0.0, %v9695
    %v9697 = vpop.f32.mrb[0].mxu0
    %v9698 = vadd.f32 0.0, %v9697
    %v9699 = vpop.f32.mrb[0].mxu0
    %v9700 = vpop.f32.mrb[0].mxu0
    %9701 = vdwg.mxu0
    %9702 = vmatprep.subr.bf16.mxu0 %v9042
    %9703 = vmatpush1.bf16.msra.mxu0 %v9041
    %9704 = vmatprep.subr.bf16.mxu0 %v9048
    %9705 = vmatpush1.bf16.msra.mxu0 %v9047
    %9706 = vmatprep.subr.bf16.mxu0 %v9054
    %9707 = vmatpush1.bf16.msra.mxu0 %v9053
    %9708 = vmatprep.subr.bf16.mxu0 %v9060
    %9709 = vmatpush1.bf16.msra.mxu0 %v9059
    %9710 = vmatprep.subr.bf16.mxu0 %v9066
    %9711 = vmatpush1.bf16.msra.mxu0 %v9065
    %9712 = vmatprep.subr.bf16.mxu0 %v9072
    %9713 = vmatpush1.bf16.msra.mxu0 %v9071
    %9714 = vmatprep.subr.bf16.mxu0 %v9078
    %9715 = vmatpush1.bf16.msra.mxu0 %v9077
    %9716 = vmatprep.subr.bf16.mxu0 %v9084
    %9717 = vmatpush1.bf16.msra.mxu0 %v9083
    %9718 = vmatprep.subr.bf16.mxu0 %v9090
    %9719 = vmatpush1.bf16.msra.mxu0 %v9089
    %9720 = vmatprep.subr.bf16.mxu0 %v9096
    %9721 = vmatpush1.bf16.msra.mxu0 %v9095
    %9722 = vmatprep.subr.bf16.mxu0 %v9102
    %9723 = vmatpush1.bf16.msra.mxu0 %v9101
    %9724 = vmatprep.subr.bf16.mxu0 %v9108
    %9725 = vmatpush1.bf16.msra.mxu0 %v9107
    %9726 = vmatprep.subr.bf16.mxu0 %v9114
    %9727 = vmatpush1.bf16.msra.mxu0 %v9113
    %9728 = vmatprep.subr.bf16.mxu0 %v9120
    %9729 = vmatpush1.bf16.msra.mxu0 %v9119
    %9730 = vmatprep.subr.bf16.mxu0 %v9126
    %9731 = vmatpush1.bf16.msra.mxu0 %v9125
    %9732 = vmatprep.subr.bf16.mxu0 %v9132
    %9733 = vmatpush1.bf16.msra.mxu0 %v9131
    %9734 = vmatprep.mubr.bf16.mxu0 %v9328
    %9735 = vmatmul.mubr.bf16.gmra.mrb[0].mxu0 %v9327
    %v9736 = vpop.f32.mrb[0].mxu0
    %v9737 = vadd.f32 %v9696, %v9736
    %v9738 = vpop.f32.mrb[0].mxu0
    %v9739 = vadd.f32 %v9698, %v9738
    %v9740 = vpop.f32.mrb[0].mxu0
    %v9741 = vpop.f32.mrb[0].mxu0
    %9742 = vdwg.mxu0
    %9743 = vmatprep.subr.bf16.mxu0 %v9138
    %9744 = vmatpush1.bf16.msra.mxu0 %v9137
    %9745 = vmatprep.subr.bf16.mxu0 %v9144
    %9746 = vmatpush1.bf16.msra.mxu0 %v9143
    %9747 = vmatprep.subr.bf16.mxu0 %v9150
    %9748 = vmatpush1.bf16.msra.mxu0 %v9149
    %9749 = vmatprep.subr.bf16.mxu0 %v9156
    %9750 = vmatpush1.bf16.msra.mxu0 %v9155
    %9751 = vmatprep.subr.bf16.mxu0 %v9162
    %9752 = vmatpush1.bf16.msra.mxu0 %v9161
    %9753 = vmatprep.subr.bf16.mxu0 %v9168
    %9754 = vmatpush1.bf16.msra.mxu0 %v9167
    %9755 = vmatprep.subr.bf16.mxu0 %v9174
    %9756 = vmatpush1.bf16.msra.mxu0 %v9173
    %9757 = vmatprep.subr.bf16.mxu0 %v9180
    %9758 = vmatpush1.bf16.msra.mxu0 %v9179
    %9759 = vmatprep.subr.bf16.mxu0 %v9186
    %9760 = vmatpush1.bf16.msra.mxu0 %v9185
    %9761 = vmatprep.subr.bf16.mxu0 %v9192
    %9762 = vmatpush1.bf16.msra.mxu0 %v9191
    %9763 = vmatprep.subr.bf16.mxu0 %v9198
    %9764 = vmatpush1.bf16.msra.mxu0 %v9197
    %9765 = vmatprep.subr.bf16.mxu0 %v9204
    %9766 = vmatpush1.bf16.msra.mxu0 %v9203
    %9767 = vmatprep.subr.bf16.mxu0 %v9210
    %9768 = vmatpush1.bf16.msra.mxu0 %v9209
    %9769 = vmatprep.subr.bf16.mxu0 %v9216
    %9770 = vmatpush1.bf16.msra.mxu0 %v9215
    %9771 = vmatprep.subr.bf16.mxu0 %v9222
    %9772 = vmatpush1.bf16.msra.mxu0 %v9221
    %9773 = vmatprep.subr.bf16.mxu0 %v9228
    %9774 = vmatpush1.bf16.msra.mxu0 %v9227
    %9775 = vmatprep.mubr.bf16.mxu0 %v9330
    %9776 = vmatmul.mubr.bf16.gmra.mrb[0].mxu0 %v9329
    %v9777 = vpop.f32.mrb[0].mxu0
    %v9778 = vadd.f32 %v9737, %v9777
    %v9779 = vpop.f32.mrb[0].mxu0
    %v9780 = vadd.f32 %v9739, %v9779
    %v9781 = vpop.f32.mrb[0].mxu0
    %v9782 = vpop.f32.mrb[0].mxu0
    %9783 = vdwg.mxu0
    %9784 = vmatprep.subr.bf16.mxu0 %v9234
    %9785 = vmatpush1.bf16.msra.mxu0 %v9233
    %9786 = vmatprep.subr.bf16.mxu0 %v9240
    %9787 = vmatpush1.bf16.msra.mxu0 %v9239
    %9788 = vmatprep.subr.bf16.mxu0 %v9246
    %9789 = vmatpush1.bf16.msra.mxu0 %v9245
    %9790 = vmatprep.subr.bf16.mxu0 %v9252
    %9791 = vmatpush1.bf16.msra.mxu0 %v9251
    %9792 = vmatprep.subr.bf16.mxu0 %v9258
    %9793 = vmatpush1.bf16.msra.mxu0 %v9257
    %9794 = vmatprep.subr.bf16.mxu0 %v9264
    %9795 = vmatpush1.bf16.msra.mxu0 %v9263
    %9796 = vmatprep.subr.bf16.mxu0 %v9270
    %9797 = vmatpush1.bf16.msra.mxu0 %v9269
    %9798 = vmatprep.subr.bf16.mxu0 %v9276
    %9799 = vmatpush1.bf16.msra.mxu0 %v9275
    %9800 = vmatprep.subr.bf16.mxu0 %v9282
    %9801 = vmatpush1.bf16.msra.mxu0 %v9281
    %9802 = vmatprep.subr.bf16.mxu0 %v9288
    %9803 = vmatpush1.bf16.msra.mxu0 %v9287
    %9804 = vmatprep.subr.bf16.mxu0 %v9294
    %9805 = vmatpush1.bf16.msra.mxu0 %v9293
    %9806 = vmatprep.subr.bf16.mxu0 %v9300
    %9807 = vmatpush1.bf16.msra.mxu0 %v9299
    %9808 = vmatprep.subr.bf16.mxu0 %v9306
    %9809 = vmatpush1.bf16.msra.mxu0 %v9305
    %9810 = vmatprep.subr.bf16.mxu0 %v9312
    %9811 = vmatpush1.bf16.msra.mxu0 %v9311
    %9812 = vmatprep.subr.bf16.mxu0 %v9318
    %9813 = vmatpush1.bf16.msra.mxu0 %v9317
    %9814 = vmatprep.subr.bf16.mxu0 %v9324
    %9815 = vmatpush1.bf16.msra.mxu0 %v9323
    %9816 = vmatprep.mubr.bf16.mxu0 %v9332
    %9817 = vmatmul.mubr.bf16.gmra.mrb[0].mxu0 %v9331
    %v9818 = vpop.f32.mrb[0].mxu0
    %v9819 = vadd.f32 %v9778, %v9818
    %v9820 = vpop.f32.mrb[0].mxu0
    %v9821 = vadd.f32 %v9780, %v9820
    %v9822 = vpop.f32.mrb[0].mxu0
    %v9823 = vpop.f32.mrb[0].mxu0
    %9824 = vdwg.mxu0
    %v9826 = vlaneseq
    %v9827 = vshrl.u32 %v9826, 7
    %v9828 = vsub.s32 0, %v9827
    %v9829 = vrot.slane %v8748, %v9828
    %v9830 = vlaneseq
    %v9831 = vshrl.u32 %v9830, 7
    %v9832 = vsub.s32 1, %v9831
    %v9833 = vrot.slane %v8748, %v9832
    %v9834 = vlaneseq
    %v9835 = vshrl.u32 %v9834, 7
    %v9836 = vsub.s32 2, %v9835
    %v9837 = vrot.slane %v8748, %v9836
    %v9838 = vlaneseq
    %v9839 = vshrl.u32 %v9838, 7
    %v9840 = vsub.s32 3, %v9839
    %v9841 = vrot.slane %v8748, %v9840
    %v9842 = vlaneseq
    %v9843 = vshrl.u32 %v9842, 7
    %v9844 = vsub.s32 4, %v9843
    %v9845 = vrot.slane %v8748, %v9844
    %v9846 = vlaneseq
    %v9847 = vshrl.u32 %v9846, 7
    %v9848 = vsub.s32 5, %v9847
    %v9849 = vrot.slane %v8748, %v9848
    %v9856 = vmul.f32 %v9491, %v9829
    %v9857 = vmul.f32 %v9493, %v9833
    %v9858 = vmul.f32 %v9655, %v9837
    %v9859 = vmul.f32 %v9657, %v9841
    %v9860 = vmul.f32 %v9819, %v9845
    %v9861 = vmul.f32 %v9821, %v9849
    %v9862 = vadd.f32 %v7416, %v9856
    %v9863 = vadd.f32 %v7417, %v9857
    %v9864 = vadd.f32 %v7418, %v9858
    %v9865 = vadd.f32 %v7419, %v9859
    %v9866 = vadd.f32 %v7420, %v9860
    %v9867 = vadd.f32 %v7421, %v9861
    %v9868 = vld [vmem:[#allocation2 + $0x50] sm:$0x3f]
    %v9870 = vlaneseq
    %v9871 = vshrl.u32 %v9870, 7
    %v9872 = vsub.s32 0, %v9871
    %v9873 = vrot.slane %v9868, %v9872
    %v9874 = vlaneseq
    %v9875 = vshrl.u32 %v9874, 7
    %v9876 = vsub.s32 1, %v9875
    %v9877 = vrot.slane %v9868, %v9876
    %v9878 = vlaneseq
    %v9879 = vshrl.u32 %v9878, 7
    %v9880 = vsub.s32 2, %v9879
    %v9881 = vrot.slane %v9868, %v9880
    %v9882 = vlaneseq
    %v9883 = vshrl.u32 %v9882, 7
    %v9884 = vsub.s32 3, %v9883
    %v9885 = vrot.slane %v9868, %v9884
    %v9886 = vlaneseq
    %v9887 = vshrl.u32 %v9886, 7
    %v9888 = vsub.s32 4, %v9887
    %v9889 = vrot.slane %v9868, %v9888
    %v9890 = vlaneseq
    %v9891 = vshrl.u32 %v9890, 7
    %v9892 = vsub.s32 5, %v9891
    %v9893 = vrot.slane %v9868, %v9892
    %v9900 = vadd.f32 %v9862, %v9873
    %v9901 = vadd.f32 %v9863, %v9877
    %v9902 = vadd.f32 %v9864, %v9881
    %v9903 = vadd.f32 %v9865, %v9885
    %v9904 = vadd.f32 %v9866, %v9889
    %v9905 = vadd.f32 %v9867, %v9893
    %v9906 = vld [vmem:[#allocation2 + $0x56] sm:$0x3f]
    %v9907 = vld [vmem:[#allocation2 + $0x5c] sm:$0x3f]
    %v9908 = vadd.f32 %v9900, %v9901
    %v9909 = vadd.f32 %v9908, %v9902
    %v9910 = vadd.f32 %v9909, %v9903
    %v9911 = vadd.f32 %v9910, %v9904
    %v9912 = vadd.f32 %v9911, %v9905
    %9913 = vadd.xlane.f32.xlu0 %v9912
    %v9914 = vpop.xlane.xlu0 %9913
    %v9915 = vmul.f32 %v9914, %v5546
    %v9916 = vsub.f32 %v9900, %v9915
    %v9917 = vsub.f32 %v9901, %v9915
    %v9918 = vsub.f32 %v9902, %v9915
    %v9919 = vsub.f32 %v9903, %v9915
    %v9920 = vsub.f32 %v9904, %v9915
    %v9921 = vsub.f32 %v9905, %v9915
    %v9922 = vmul.f32 %v9916, %v9916
    %v9923 = vmul.f32 %v9917, %v9917
    %v9924 = vmul.f32 %v9918, %v9918
    %v9925 = vmul.f32 %v9919, %v9919
    %v9926 = vmul.f32 %v9920, %v9920
    %v9927 = vmul.f32 %v9921, %v9921
    %v9928 = vadd.f32 %v9922, %v9923
    %v9929 = vadd.f32 %v9928, %v9924
    %v9930 = vadd.f32 %v9929, %v9925
    %v9931 = vadd.f32 %v9930, %v9926
    %v9932 = vadd.f32 %v9931, %v9927
    %9933 = vadd.xlane.f32.xlu0 %v9932
    %v9934 = vpop.xlane.xlu0 %9933
    %v9935 = vmul.f32 %v9934, %v5546
    %v9936 = vadd.f32 %v9935, 1e-05
    %v9937 = vrsqrt.pop %v9936
    %v9938 = vmul.f32 %v9916, %v9937
    %v9939 = vmul.f32 %v9917, %v9937
    %v9940 = vmul.f32 %v9918, %v9937
    %v9941 = vmul.f32 %v9919, %v9937
    %v9942 = vmul.f32 %v9920, %v9937
    %v9943 = vmul.f32 %v9921, %v9937
    %v9945 = vlaneseq
    %v9946 = vshrl.u32 %v9945, 7
    %v9947 = vsub.s32 0, %v9946
    %v9948 = vrot.slane %v9906, %v9947
    %v9949 = vlaneseq
    %v9950 = vshrl.u32 %v9949, 7
    %v9951 = vsub.s32 1, %v9950
    %v9952 = vrot.slane %v9906, %v9951
    %v9953 = vlaneseq
    %v9954 = vshrl.u32 %v9953, 7
    %v9955 = vsub.s32 2, %v9954
    %v9956 = vrot.slane %v9906, %v9955
    %v9957 = vlaneseq
    %v9958 = vshrl.u32 %v9957, 7
    %v9959 = vsub.s32 3, %v9958
    %v9960 = vrot.slane %v9906, %v9959
    %v9961 = vlaneseq
    %v9962 = vshrl.u32 %v9961, 7
    %v9963 = vsub.s32 4, %v9962
    %v9964 = vrot.slane %v9906, %v9963
    %v9965 = vlaneseq
    %v9966 = vshrl.u32 %v9965, 7
    %v9967 = vsub.s32 5, %v9966
    %v9968 = vrot.slane %v9906, %v9967
    %v9975 = vmul.f32 %v9938, %v9948
    %v9976 = vmul.f32 %v9939, %v9952
    %v9977 = vmul.f32 %v9940, %v9956
    %v9978 = vmul.f32 %v9941, %v9960
    %v9979 = vmul.f32 %v9942, %v9964
    %v9980 = vmul.f32 %v9943, %v9968
    %v9982 = vlaneseq
    %v9983 = vshrl.u32 %v9982, 7
    %v9984 = vsub.s32 0, %v9983
    %v9985 = vrot.slane %v9907, %v9984
    %v9986 = vlaneseq
    %v9987 = vshrl.u32 %v9986, 7
    %v9988 = vsub.s32 1, %v9987
    %v9989 = vrot.slane %v9907, %v9988
    %v9990 = vlaneseq
    %v9991 = vshrl.u32 %v9990, 7
    %v9992 = vsub.s32 2, %v9991
    %v9993 = vrot.slane %v9907, %v9992
    %v9994 = vlaneseq
    %v9995 = vshrl.u32 %v9994, 7
    %v9996 = vsub.s32 3, %v9995
    %v9997 = vrot.slane %v9907, %v9996
    %v9998 = vlaneseq
    %v9999 = vshrl.u32 %v9998, 7
    %v10000 = vsub.s32 4, %v9999
    %v10001 = vrot.slane %v9907, %v10000
    %v10002 = vlaneseq
    %v10003 = vshrl.u32 %v10002, 7
    %v10004 = vsub.s32 5, %v10003
    %v10005 = vrot.slane %v9907, %v10004
    %v10012 = vadd.f32 %v9975, %v9985
    %v10013 = vadd.f32 %v9976, %v9989
    %v10014 = vadd.f32 %v9977, %v9993
    %v10015 = vadd.f32 %v9978, %v9997
    %v10016 = vadd.f32 %v9979, %v10001
    %v10017 = vadd.f32 %v9980, %v10005
    %v10018 = vld [vmem:[#allocation2 + $0x9a] sm:$0x3]
    %v10019 = vld [vmem:[#allocation18] sm:$0xff]
    %v10020 = vld [vmem:[#allocation18 + $0x8] sm:$0xff]
    %v10021 = vld [vmem:[#allocation18 + $0x10] sm:$0xff]
    %v10022 = vld [vmem:[#allocation18 + $0x18] sm:$0xff]
    %v10023 = vld [vmem:[#allocation18 + $0x20] sm:$0xff]
    %v10024 = vld [vmem:[#allocation18 + $0x28] sm:$0xff]
    %v10025 = vld [vmem:[#allocation18 + $0x30] sm:$0xff]
    %v10026 = vld [vmem:[#allocation18 + $0x38] sm:$0xff]
    %v10027 = vld [vmem:[#allocation18 + $0x40] sm:$0xff]
    %v10028 = vld [vmem:[#allocation18 + $0x48] sm:$0xff]
    %v10029 = vld [vmem:[#allocation18 + $0x50] sm:$0xff]
    %v10030 = vld [vmem:[#allocation18 + $0x58] sm:$0xff]
    %v10031 = vld [vmem:[#allocation18 + $0x60] sm:$0xff]
    %v10032 = vld [vmem:[#allocation18 + $0x68] sm:$0xff]
    %v10033 = vld [vmem:[#allocation18 + $0x70] sm:$0xff]
    %v10034 = vld [vmem:[#allocation18 + $0x78] sm:$0xff]
    %v10035 = vld [vmem:[#allocation18 + $0x80] sm:$0xff]
    %v10036 = vld [vmem:[#allocation18 + $0x88] sm:$0xff]
    %v10037 = vld [vmem:[#allocation18 + $0x90] sm:$0xff]
    %v10038 = vld [vmem:[#allocation18 + $0x98] sm:$0xff]
    %v10039 = vld [vmem:[#allocation18 + $0xa0] sm:$0xff]
    %v10040 = vld [vmem:[#allocation18 + $0xa8] sm:$0xff]
    %v10041 = vld [vmem:[#allocation18 + $0xb0] sm:$0xff]
    %v10042 = vld [vmem:[#allocation18 + $0xb8] sm:$0xff]
    %v10043 = vld [vmem:[#allocation18 + $0xc0] sm:$0xff]
    %v10044 = vld [vmem:[#allocation18 + $0xc8] sm:$0xff]
    %v10045 = vld [vmem:[#allocation18 + $0xd0] sm:$0xff]
    %v10046 = vld [vmem:[#allocation18 + $0xd8] sm:$0xff]
    %v10047 = vld [vmem:[#allocation18 + $0xe0] sm:$0xff]
    %v10048 = vld [vmem:[#allocation18 + $0xe8] sm:$0xff]
    %v10049 = vld [vmem:[#allocation18 + $0xf0] sm:$0xff]
    %v10050 = vld [vmem:[#allocation18 + $0xf8] sm:$0xff]
    %v10051 = vld [vmem:[#allocation18 + $0x100] sm:$0xff]
    %v10052 = vld [vmem:[#allocation18 + $0x108] sm:$0xff]
    %v10053 = vld [vmem:[#allocation18 + $0x110] sm:$0xff]
    %v10054 = vld [vmem:[#allocation18 + $0x118] sm:$0xff]
    %v10055 = vld [vmem:[#allocation18 + $0x120] sm:$0xff]
    %v10056 = vld [vmem:[#allocation18 + $0x128] sm:$0xff]
    %v10057 = vld [vmem:[#allocation18 + $0x130] sm:$0xff]
    %v10058 = vld [vmem:[#allocation18 + $0x138] sm:$0xff]
    %v10059 = vld [vmem:[#allocation18 + $0x140] sm:$0xff]
    %v10060 = vld [vmem:[#allocation18 + $0x148] sm:$0xff]
    %v10061 = vld [vmem:[#allocation18 + $0x150] sm:$0xff]
    %v10062 = vld [vmem:[#allocation18 + $0x158] sm:$0xff]
    %v10063 = vld [vmem:[#allocation18 + $0x160] sm:$0xff]
    %v10064 = vld [vmem:[#allocation18 + $0x168] sm:$0xff]
    %v10065 = vld [vmem:[#allocation18 + $0x170] sm:$0xff]
    %v10066 = vld [vmem:[#allocation18 + $0x178] sm:$0xff]
    %v10067 = vunpack.c.l.s8.bf16 %v10019
    %v10068 = vunpack.c.l.s8.bf16 %v10020
    %v10069 = vunpack.c.h.s8.bf16 %v10019
    %v10070 = vunpack.c.h.s8.bf16 %v10020
    %v10071 = vunpack.c.l.s8.bf16 %v10021
    %v10072 = vunpack.c.l.s8.bf16 %v10022
    %v10073 = vunpack.c.h.s8.bf16 %v10021
    %v10074 = vunpack.c.h.s8.bf16 %v10022
    %v10075 = vunpack.c.l.s8.bf16 %v10023
    %v10076 = vunpack.c.l.s8.bf16 %v10024
    %v10077 = vunpack.c.h.s8.bf16 %v10023
    %v10078 = vunpack.c.h.s8.bf16 %v10024
    %v10079 = vunpack.c.l.s8.bf16 %v10025
    %v10080 = vunpack.c.l.s8.bf16 %v10026
    %v10081 = vunpack.c.h.s8.bf16 %v10025
    %v10082 = vunpack.c.h.s8.bf16 %v10026
    %v10083 = vunpack.c.l.s8.bf16 %v10027
    %v10084 = vunpack.c.l.s8.bf16 %v10028
    %v10085 = vunpack.c.h.s8.bf16 %v10027
    %v10086 = vunpack.c.h.s8.bf16 %v10028
    %v10087 = vunpack.c.l.s8.bf16 %v10029
    %v10088 = vunpack.c.l.s8.bf16 %v10030
    %v10089 = vunpack.c.h.s8.bf16 %v10029
    %v10090 = vunpack.c.h.s8.bf16 %v10030
    %v10091 = vunpack.c.l.s8.bf16 %v10031
    %v10092 = vunpack.c.l.s8.bf16 %v10032
    %v10093 = vunpack.c.h.s8.bf16 %v10031
    %v10094 = vunpack.c.h.s8.bf16 %v10032
    %v10095 = vunpack.c.l.s8.bf16 %v10033
    %v10096 = vunpack.c.l.s8.bf16 %v10034
    %v10097 = vunpack.c.h.s8.bf16 %v10033
    %v10098 = vunpack.c.h.s8.bf16 %v10034
    %v10099 = vunpack.c.l.s8.bf16 %v10035
    %v10100 = vunpack.c.l.s8.bf16 %v10036
    %v10101 = vunpack.c.h.s8.bf16 %v10035
    %v10102 = vunpack.c.h.s8.bf16 %v10036
    %v10103 = vunpack.c.l.s8.bf16 %v10037
    %v10104 = vunpack.c.l.s8.bf16 %v10038
    %v10105 = vunpack.c.h.s8.bf16 %v10037
    %v10106 = vunpack.c.h.s8.bf16 %v10038
    %v10107 = vunpack.c.l.s8.bf16 %v10039
    %v10108 = vunpack.c.l.s8.bf16 %v10040
    %v10109 = vunpack.c.h.s8.bf16 %v10039
    %v10110 = vunpack.c.h.s8.bf16 %v10040
    %v10111 = vunpack.c.l.s8.bf16 %v10041
    %v10112 = vunpack.c.l.s8.bf16 %v10042
    %v10113 = vunpack.c.h.s8.bf16 %v10041
    %v10114 = vunpack.c.h.s8.bf16 %v10042
    %v10115 = vunpack.c.l.s8.bf16 %v10043
    %v10116 = vunpack.c.l.s8.bf16 %v10044
    %v10117 = vunpack.c.h.s8.bf16 %v10043
    %v10118 = vunpack.c.h.s8.bf16 %v10044
    %v10119 = vunpack.c.l.s8.bf16 %v10045
    %v10120 = vunpack.c.l.s8.bf16 %v10046
    %v10121 = vunpack.c.h.s8.bf16 %v10045
    %v10122 = vunpack.c.h.s8.bf16 %v10046
    %v10123 = vunpack.c.l.s8.bf16 %v10047
    %v10124 = vunpack.c.l.s8.bf16 %v10048
    %v10125 = vunpack.c.h.s8.bf16 %v10047
    %v10126 = vunpack.c.h.s8.bf16 %v10048
    %v10127 = vunpack.c.l.s8.bf16 %v10049
    %v10128 = vunpack.c.l.s8.bf16 %v10050
    %v10129 = vunpack.c.h.s8.bf16 %v10049
    %v10130 = vunpack.c.h.s8.bf16 %v10050
    %v10131 = vunpack.c.l.s8.bf16 %v10051
    %v10132 = vunpack.c.l.s8.bf16 %v10052
    %v10133 = vunpack.c.h.s8.bf16 %v10051
    %v10134 = vunpack.c.h.s8.bf16 %v10052
    %v10135 = vunpack.c.l.s8.bf16 %v10053
    %v10136 = vunpack.c.l.s8.bf16 %v10054
    %v10137 = vunpack.c.h.s8.bf16 %v10053
    %v10138 = vunpack.c.h.s8.bf16 %v10054
    %v10139 = vunpack.c.l.s8.bf16 %v10055
    %v10140 = vunpack.c.l.s8.bf16 %v10056
    %v10141 = vunpack.c.h.s8.bf16 %v10055
    %v10142 = vunpack.c.h.s8.bf16 %v10056
    %v10143 = vunpack.c.l.s8.bf16 %v10057
    %v10144 = vunpack.c.l.s8.bf16 %v10058
    %v10145 = vunpack.c.h.s8.bf16 %v10057
    %v10146 = vunpack.c.h.s8.bf16 %v10058
    %v10147 = vunpack.c.l.s8.bf16 %v10059
    %v10148 = vunpack.c.l.s8.bf16 %v10060
    %v10149 = vunpack.c.h.s8.bf16 %v10059
    %v10150 = vunpack.c.h.s8.bf16 %v10060
    %v10151 = vunpack.c.l.s8.bf16 %v10061
    %v10152 = vunpack.c.l.s8.bf16 %v10062
    %v10153 = vunpack.c.h.s8.bf16 %v10061
    %v10154 = vunpack.c.h.s8.bf16 %v10062
    %v10155 = vunpack.c.l.s8.bf16 %v10063
    %v10156 = vunpack.c.l.s8.bf16 %v10064
    %v10157 = vunpack.c.h.s8.bf16 %v10063
    %v10158 = vunpack.c.h.s8.bf16 %v10064
    %v10159 = vunpack.c.l.s8.bf16 %v10065
    %v10160 = vunpack.c.l.s8.bf16 %v10066
    %v10161 = vunpack.c.h.s8.bf16 %v10065
    %v10162 = vunpack.c.h.s8.bf16 %v10066
    %v10163 = vpack.c.bf16 %v10012, %v10012
    %v10164 = vpack.c.bf16 %v10013, %v10013
    %v10165 = vpack.c.bf16 %v10014, %v10014
    %v10166 = vpack.c.bf16 %v10015, %v10015
    %v10167 = vpack.c.bf16 %v10016, %v10016
    %v10168 = vpack.c.bf16 %v10017, %v10017
    %10169 = vmatprep.subr.bf16.mxu0 %v10068
    %10170 = vmatpush1.bf16.msra.mxu0 %v10067
    %10171 = vmatprep.subr.bf16.mxu0 %v10070
    %10172 = vmatpush1.bf16.msra.mxu0 %v10069
    %10173 = vmatprep.subr.bf16.mxu0 %v10072
    %10174 = vmatpush1.bf16.msra.mxu0 %v10071
    %10175 = vmatprep.subr.bf16.mxu0 %v10074
    %10176 = vmatpush1.bf16.msra.mxu0 %v10073
    %10177 = vmatprep.subr.bf16.mxu0 %v10076
    %10178 = vmatpush1.bf16.msra.mxu0 %v10075
    %10179 = vmatprep.subr.bf16.mxu0 %v10078
    %10180 = vmatpush1.bf16.msra.mxu0 %v10077
    %10181 = vmatprep.subr.bf16.mxu0 %v10080
    %10182 = vmatpush1.bf16.msra.mxu0 %v10079
    %10183 = vmatprep.subr.bf16.mxu0 %v10082
    %10184 = vmatpush1.bf16.msra.mxu0 %v10081
    %10185 = vmatprep.subr.bf16.mxu0 %v10084
    %10186 = vmatpush1.bf16.msra.mxu0 %v10083
    %10187 = vmatprep.subr.bf16.mxu0 %v10086
    %10188 = vmatpush1.bf16.msra.mxu0 %v10085
    %10189 = vmatprep.subr.bf16.mxu0 %v10088
    %10190 = vmatpush1.bf16.msra.mxu0 %v10087
    %10191 = vmatprep.subr.bf16.mxu0 %v10090
    %10192 = vmatpush1.bf16.msra.mxu0 %v10089
    %10193 = vmatprep.subr.bf16.mxu0 %v10092
    %10194 = vmatpush1.bf16.msra.mxu0 %v10091
    %10195 = vmatprep.subr.bf16.mxu0 %v10094
    %10196 = vmatpush1.bf16.msra.mxu0 %v10093
    %10197 = vmatprep.subr.bf16.mxu0 %v10096
    %10198 = vmatpush1.bf16.msra.mxu0 %v10095
    %10199 = vmatprep.subr.bf16.mxu0 %v10098
    %10200 = vmatpush1.bf16.msra.mxu0 %v10097
    %10201 = vmatprep.mubr.bf16.mxu0 %v10164
    %10202 = vmatmul.mubr.bf16.gmra.mrb[0].mxu0 %v10163
    %v10203 = vpop.f32.mrb[0].mxu0
    %v10204 = vadd.f32 0.0, %v10203
    %v10205 = vpop.f32.mrb[0].mxu0
    %v10206 = vadd.f32 0.0, %v10205
    %v10207 = vpop.f32.mrb[0].mxu0
    %v10208 = vpop.f32.mrb[0].mxu0
    %10209 = vdwg.mxu0
    %10210 = vmatprep.subr.bf16.mxu0 %v10100
    %10211 = vmatpush1.bf16.msra.mxu0 %v10099
    %10212 = vmatprep.subr.bf16.mxu0 %v10102
    %10213 = vmatpush1.bf16.msra.mxu0 %v10101
    %10214 = vmatprep.subr.bf16.mxu0 %v10104
    %10215 = vmatpush1.bf16.msra.mxu0 %v10103
    %10216 = vmatprep.subr.bf16.mxu0 %v10106
    %10217 = vmatpush1.bf16.msra.mxu0 %v10105
    %10218 = vmatprep.subr.bf16.mxu0 %v10108
    %10219 = vmatpush1.bf16.msra.mxu0 %v10107
    %10220 = vmatprep.subr.bf16.mxu0 %v10110
    %10221 = vmatpush1.bf16.msra.mxu0 %v10109
    %10222 = vmatprep.subr.bf16.mxu0 %v10112
    %10223 = vmatpush1.bf16.msra.mxu0 %v10111
    %10224 = vmatprep.subr.bf16.mxu0 %v10114
    %10225 = vmatpush1.bf16.msra.mxu0 %v10113
    %10226 = vmatprep.subr.bf16.mxu0 %v10116
    %10227 = vmatpush1.bf16.msra.mxu0 %v10115
    %10228 = vmatprep.subr.bf16.mxu0 %v10118
    %10229 = vmatpush1.bf16.msra.mxu0 %v10117
    %10230 = vmatprep.subr.bf16.mxu0 %v10120
    %10231 = vmatpush1.bf16.msra.mxu0 %v10119
    %10232 = vmatprep.subr.bf16.mxu0 %v10122
    %10233 = vmatpush1.bf16.msra.mxu0 %v10121
    %10234 = vmatprep.subr.bf16.mxu0 %v10124
    %10235 = vmatpush1.bf16.msra.mxu0 %v10123
    %10236 = vmatprep.subr.bf16.mxu0 %v10126
    %10237 = vmatpush1.bf16.msra.mxu0 %v10125
    %10238 = vmatprep.subr.bf16.mxu0 %v10128
    %10239 = vmatpush1.bf16.msra.mxu0 %v10127
    %10240 = vmatprep.subr.bf16.mxu0 %v10130
    %10241 = vmatpush1.bf16.msra.mxu0 %v10129
    %10242 = vmatprep.mubr.bf16.mxu0 %v10166
    %10243 = vmatmul.mubr.bf16.gmra.mrb[0].mxu0 %v10165
    %v10244 = vpop.f32.mrb[0].mxu0
    %v10245 = vadd.f32 %v10204, %v10244
    %v10246 = vpop.f32.mrb[0].mxu0
    %v10247 = vadd.f32 %v10206, %v10246
    %v10248 = vpop.f32.mrb[0].mxu0
    %v10249 = vpop.f32.mrb[0].mxu0
    %10250 = vdwg.mxu0
    %10251 = vmatprep.subr.bf16.mxu0 %v10132
    %10252 = vmatpush1.bf16.msra.mxu0 %v10131
    %10253 = vmatprep.subr.bf16.mxu0 %v10134
    %10254 = vmatpush1.bf16.msra.mxu0 %v10133
    %10255 = vmatprep.subr.bf16.mxu0 %v10136
    %10256 = vmatpush1.bf16.msra.mxu0 %v10135
    %10257 = vmatprep.subr.bf16.mxu0 %v10138
    %10258 = vmatpush1.bf16.msra.mxu0 %v10137
    %10259 = vmatprep.subr.bf16.mxu0 %v10140
    %10260 = vmatpush1.bf16.msra.mxu0 %v10139
    %10261 = vmatprep.subr.bf16.mxu0 %v10142
    %10262 = vmatpush1.bf16.msra.mxu0 %v10141
    %10263 = vmatprep.subr.bf16.mxu0 %v10144
    %10264 = vmatpush1.bf16.msra.mxu0 %v10143
    %10265 = vmatprep.subr.bf16.mxu0 %v10146
    %10266 = vmatpush1.bf16.msra.mxu0 %v10145
    %10267 = vmatprep.subr.bf16.mxu0 %v10148
    %10268 = vmatpush1.bf16.msra.mxu0 %v10147
    %10269 = vmatprep.subr.bf16.mxu0 %v10150
    %10270 = vmatpush1.bf16.msra.mxu0 %v10149
    %10271 = vmatprep.subr.bf16.mxu0 %v10152
    %10272 = vmatpush1.bf16.msra.mxu0 %v10151
    %10273 = vmatprep.subr.bf16.mxu0 %v10154
    %10274 = vmatpush1.bf16.msra.mxu0 %v10153
    %10275 = vmatprep.subr.bf16.mxu0 %v10156
    %10276 = vmatpush1.bf16.msra.mxu0 %v10155
    %10277 = vmatprep.subr.bf16.mxu0 %v10158
    %10278 = vmatpush1.bf16.msra.mxu0 %v10157
    %10279 = vmatprep.subr.bf16.mxu0 %v10160
    %10280 = vmatpush1.bf16.msra.mxu0 %v10159
    %10281 = vmatprep.subr.bf16.mxu0 %v10162
    %10282 = vmatpush1.bf16.msra.mxu0 %v10161
    %10283 = vmatprep.mubr.bf16.mxu0 %v10168
    %10284 = vmatmul.mubr.bf16.gmra.mrb[0].mxu0 %v10167
    %v10285 = vpop.f32.mrb[0].mxu0
    %v10286 = vadd.f32 %v10245, %v10285
    %v10287 = vpop.f32.mrb[0].mxu0
    %v10288 = vadd.f32 %v10247, %v10287
    %v10289 = vpop.f32.mrb[0].mxu0
    %v10290 = vpop.f32.mrb[0].mxu0
    %10291 = vdwg.mxu0
    %v10293 = vlaneseq
    %v10294 = vshrl.u32 %v10293, 7
    %v10295 = vsub.s32 0, %v10294
    %v10296 = vrot.slane %v10018, %v10295
    %v10297 = vlaneseq
    %v10298 = vshrl.u32 %v10297, 7
    %v10299 = vsub.s32 1, %v10298
    %v10300 = vrot.slane %v10018, %v10299
    %v10303 = vmul.f32 %v10286, %v10296
    %v10304 = vmul.f32 %v10288, %v10300
    %10305 = vst [vmem:[%s13] sm:$0xff] %v10303
    %10306 = vst [vmem:[%s13 + $0x8] sm:$0xff] %v10304
    // Predicated region
    $region98: #{multimodal_forward.1} parent=1 // pred_check
      _
    $region99: #{multimodal_forward.1} parent=1 // pred_check_branch
      %10308 = sbr.rel (0) target = $region101
    $region100: #{multimodal_forward.1} parent=1 // pred_region
      _
    $region101: #{multimodal_forward.1} parent=1 // pred_fallthru
      _
    // Predicated region
    $region102: #{multimodal_forward.1} parent=1 // pred_check
      _
    $region103: #{multimodal_forward.1} parent=1 // pred_check_branch
      %10310 = sbr.rel (0) target = $region105
    $region104: #{multimodal_forward.1} parent=1 // pred_region
      _
    $region105: #{multimodal_forward.1} parent=1 // pred_fallthru
      _
    %10311 = vsyncpa [#allocation3], 1
    %10312 = vsyncpa [#allocation5], 1
    %10313 = vsyncpa [#allocation8], 1
    %10314 = vsyncpa [#allocation11], 1
    %10315 = vsyncpa [#allocation14], 1
    %10316 = vsyncpa [#allocation17], 1

</llo_original>
